<compile_context>
chip_gen: v7x
topology: tpu7x:2x2x1
jax: 0.10.0
libtpu: 0.0.40
codegen_flags: <defaults>
</compile_context>

<pallas_src>
import numpy as np
import jax
import jax.numpy as jnp
from jax import lax
from jax.experimental import pallas as pl
from jax.experimental.pallas import tpu as pltpu

EPSILON = float(np.finfo(np.float32).eps)
_PI = float(np.pi)
_PI_2 = float(np.pi / 2.0)


def _round_up(x, m):
    return ((x + m - 1) // m) * m


# ----------------------------------------------------------------------------
# Parameter construction (mirrors init_kernels in the PyTorch module)
# ----------------------------------------------------------------------------
def _hamming_periodic(win_len):
    n = np.arange(win_len)
    return 0.54 - 0.46 * np.cos(2.0 * np.pi * n / win_len)


def init_stft_weight(win_len, fft_len, win_type="hamming"):
    if win_type is None or win_type == "None":
        window = np.ones(win_len)
    elif win_type == "hamming":
        window = _hamming_periodic(win_len)   # get_window('hamming', fftbins=True)
    else:
        raise ValueError(f"unsupported win_type {win_type}")
    N = fft_len
    fourier_basis = np.fft.rfft(np.eye(N))[:win_len]           # (win_len, fft_len//2+1)
    real_kernel = np.real(fourier_basis)
    imag_kernel = np.imag(fourier_basis)
    kernel = np.concatenate([real_kernel, imag_kernel], 1).T    # (fft_len+2, win_len)
    kernel = kernel * window
    # conv1d weight is kernel[:, None, :]; for frames @ W we need its transpose:
    return jnp.asarray(kernel.T.astype(np.float32))             # (win_len, fft_len+2)


def _prepare_weight(weight, win_len, win_inc, R):
    """(win_len, fft_len+2) analysis matrix -> polyphase, lane-aligned,
    merged [real | imag] weight of shape (R, hop, 2*Fpad)."""
    W, F2 = weight.shape
    assert W == win_len
    nfreq = F2 // 2
    wr = weight[:, :nfreq]
    wi = weight[:, nfreq:]
    if nfreq > 128 and (nfreq - 1) % 128 == 0:
        # nfreq = 2**k + 1 (e.g. 257): keep the matmul width at 2**k and fold
        # the Nyquist bin (whose imag response is exactly 0) into the all-zero
        # imag-DC column -> no 128-column round-up waste on either output.
        Fpad = nfreq - 1
        nyq_folded = True
        wr_p = wr[:, :Fpad]
        wi_p = jnp.concatenate([wr[:, Fpad:Fpad + 1], wi[:, 1:Fpad]], axis=1)
    else:
        Fpad = _round_up(nfreq, 128)
        nyq_folded = False
        wr_p = jnp.pad(wr, ((0, 0), (0, Fpad - nfreq)))
        wi_p = jnp.pad(wi, ((0, 0), (0, Fpad - nfreq)))
    w_m = jnp.concatenate([wr_p, wi_p], axis=1)                 # (W, 2*Fpad)
    rows = R * win_inc
    if rows > W:
        w_m = jnp.pad(w_m, ((0, rows - W), (0, 0)))             # zero polyphase tail
    return w_m.reshape(R, win_inc, 2 * Fpad), Fpad, nyq_folded


# ----------------------------------------------------------------------------
# VPU-safe atan2 (Cg standard-library polynomial, max err ~1e-5 rad)
# ----------------------------------------------------------------------------
def _atan2(y, x):
    ax = jnp.abs(x)
    ay = jnp.abs(y)
    amin = jnp.minimum(ax, ay)
    amax = jnp.maximum(ax, ay)
    t = amin / jnp.maximum(amax, 1e-30)
    t2 = t * t
    p = -0.013480470
    p = p * t2 + 0.057477314
    p = p * t2 - 0.121239071
    p = p * t2 + 0.195635925
    p = p * t2 - 0.332994597
    p = p * t2 + 0.999995630
    a = p * t
    a = jnp.where(ay > ax, _PI_2 - a, a)
    a = jnp.where(x < 0.0, _PI - a, a)
    return jnp.where(y < 0.0, -a, a)


# ----------------------------------------------------------------------------
# Pallas kernel factory
# ----------------------------------------------------------------------------
def _make_kernel(*, R, tT, Fpad, nfreq, nyq_folded, cplx, with_phase, precision):
    has_halo = R > 1
    n_out = 2 if (cplx or with_phase) else 1

    def kernel(*refs):
        pos = 0
        chunks_ref = refs[pos]; pos += 1
        halo_ref = None
        if has_halo:
            halo_ref = refs[pos]; pos += 1
        w_ref = refs[pos]; pos += 1
        out_refs = refs[pos:pos + n_out]; pos += n_out
        slab_ref = refs[pos] if has_halo else None

        # Build the (tT + R - 1, hop) chunk slab in VMEM: main block + halo.
        if has_halo:
            slab_ref[0:tT, :] = chunks_ref[...]
            slab_ref[tT:tT + R - 1, :] = halo_ref[...]

        def lhs(r):
            if has_halo:
                return slab_ref[pl.ds(r, tT), :]
            return chunks_ref[...]

        # Polyphase conv1d: acc[t, f] = sum_r chunks[t + r, :] @ W[r, :, f].
        acc = jnp.zeros((tT, 2 * Fpad), jnp.float32)
        for r in range(R):
            acc = acc + jnp.dot(lhs(r), w_ref[r],
                                preferred_element_type=jnp.float32,
                                precision=precision)

        # Single transpose -> lane-dense (freq, tT); real/imag split is free.
        acc_t = acc.T                                   # (2*Fpad, tT)
        re = acc_t[:Fpad]
        im = acc_t[Fpad:2 * Fpad]

        if nyq_folded:
            # Column Fpad of the merged weight carried the Nyquist *real*
            # response; the true imag-DC response is exactly zero.
            nyq_re = im[0:1]                            # (1, tT)
            row0 = lax.broadcasted_iota(jnp.int32, (Fpad, tT), 0) == 0
            im = jnp.where(row0, 0.0, im)
            parts = ((0, re, im), (Fpad, nyq_re, jnp.zeros_like(nyq_re)))
        else:
            parts = ((0, re[:nfreq], im[:nfreq]),)

        if cplx:
            re_ref, im_ref = out_refs
            for off, rv, iv in parts:
                re_ref[pl.ds(off, rv.shape[0]), :] = rv.astype(re_ref.dtype)
                im_ref[pl.ds(off, iv.shape[0]), :] = iv.astype(im_ref.dtype)
        else:
            mags_ref = out_refs[0]
            for off, rv, iv in parts:
                pwr = jnp.maximum(rv * rv + iv * iv, EPSILON)
                mags_ref[pl.ds(off, rv.shape[0]), :] = jnp.sqrt(pwr).astype(mags_ref.dtype)
            if with_phase:
                phase_ref = out_refs[1]
                for off, rv, iv in parts:
                    ph = _atan2(iv + EPSILON, rv + EPSILON)
                    phase_ref[pl.ds(off, rv.shape[0]), :] = ph.astype(phase_ref.dtype)

    return kernel


# ----------------------------------------------------------------------------
# Wrapper: ConvSTFT.forward
# ----------------------------------------------------------------------------
def conv_stft(inputs, weight, win_len, win_inc, *, cplx=False, with_phase=True,
              tile_t=512, matmul_dtype=jnp.float32, trim_time=True):
    """inputs: (N, L) or (N, C, L); weight: (win_len, fft_len + 2).
    Returns (mags, phase) [cplx=False], (real, imag) [cplx=True], or mags only
    when with_phase=False; shapes match the PyTorch conv1d output layout."""
    orig_3d = inputs.ndim == 3
    if orig_3d:
        N0, C0, L0 = inputs.shape
        inputs = inputs.reshape(N0 * C0, L0)
    elif inputs.ndim != 2:
        raise ValueError("inputs must be (N, L) or (N, C, L)")
    inputs = inputs.astype(jnp.float32)
    N, L = inputs.shape

    W = int(win_len)
    hop = int(win_inc)
    pad = W - hop
    Lp = L + 2 * pad
    T = (Lp - W) // hop + 1
    if T <= 0:
        raise ValueError("input too short for a single frame")

    R = -(-W // hop)                                    # polyphase factor
    nfreq = weight.shape[1] // 2
    is_f32 = np.dtype(matmul_dtype) == np.float32
    precision = lax.Precision.HIGHEST if is_f32 else lax.Precision.DEFAULT

    w_poly, Fpad, nyq_folded = _prepare_weight(weight, W, hop, R)
    w_poly = w_poly.astype(matmul_dtype)

    # Frame-axis tiling: large lane-dense tiles; keep >= 2 parallel grid steps
    # when N == 1 so both v7x TensorCores get work.
    tT = min(max(128, _round_up(int(tile_t), 128)), _round_up(T, 128))
    if N == 1 and T > 128:
        tT = min(tT, max(128, _round_up(-(-T // 2), 128)))
    nT = -(-T // tT)
    T_pad = nT * tT

    # Hop-sized chunk view of the padded audio (no im2col frames array).
    C_total = T_pad + R - 1
    need = C_total * hop
    x_pad = jnp.pad(inputs, ((0, 0), (pad, pad + max(0, need - Lp))))
    x_chunks = x_pad[:, :need].reshape(N, C_total, hop).astype(matmul_dtype)

    in_specs = [pl.BlockSpec((pl.Squeezed(), tT, hop), lambda n, t: (n, t, 0))]
    operands = [x_chunks]
    if R > 1:
        # Tiny per-tile halo: the R-1 chunk rows overlapping the next tile.
        halo_idx = jnp.arange(nT)[:, None] * tT + tT + jnp.arange(R - 1)[None, :]
        halo = x_chunks[:, halo_idx, :]                 # (N, nT, R-1, hop)
        in_specs.append(pl.BlockSpec((pl.Squeezed(), pl.Squeezed(), R - 1, hop),
                                     lambda n, t: (n, t, 0, 0)))
        operands.append(halo)
    in_specs.append(pl.BlockSpec((R, hop, 2 * Fpad), lambda n, t: (0, 0, 0)))
    operands.append(w_poly)

    n_out = 2 if (cplx or with_phase) else 1
    out_shape = tuple(jax.ShapeDtypeStruct((N, nfreq, T_pad), jnp.float32)
                      for _ in range(n_out))
    out_specs = [pl.BlockSpec((pl.Squeezed(), nfreq, tT), lambda n, t: (n, 0, t))
                 for _ in range(n_out)]

    scratch_shapes = []
    if R > 1:
        scratch_shapes.append(pltpu.VMEM((tT + R - 1, hop), x_chunks.dtype))

    kernel = _make_kernel(R=R, tT=tT, Fpad=Fpad, nfreq=nfreq,
                          nyq_folded=nyq_folded, cplx=cplx,
                          with_phase=with_phase, precision=precision)

    in_bytes = int(x_chunks.dtype.itemsize) * sum(int(op.size) for op in operands)
    out_bytes = 4 * n_out * N * nfreq * T_pad
    cost = pl.CostEstimate(
        flops=int(2 * N * T_pad * (R * hop) * (2 * Fpad)),
        transcendentals=int(n_out * N * T_pad * nfreq),
        bytes_accessed=int(in_bytes + out_bytes),
    )

    outs = pl.pallas_call(
        kernel,
        out_shape=out_shape,
        grid_spec=pltpu.PrefetchScalarGridSpec(
            num_scalar_prefetch=0,
            grid=(N, nT),
            in_specs=in_specs,
            out_specs=out_specs,
            scratch_shapes=scratch_shapes,
        ),
        compiler_params=pltpu.CompilerParams(
            dimension_semantics=("parallel", "parallel"),
            # v7x has only 64 MiB VMEM per TensorCore: stay well inside it.
            vmem_limit_bytes=48 * 1024 * 1024,
        ),
        cost_estimate=cost,
    )(*operands)

    if trim_time and T_pad != T:
        # TODO(synk): let downstream consume the T_pad-padded layout directly
        # so this slice cannot become an extra HBM pass over the outputs.
        outs = tuple(o[..., :T] for o in outs)
    if orig_3d:
        outs = tuple(o.reshape(N0, C0, nfreq, o.shape[-1]) for o in outs)
    return outs if n_out > 1 else outs[0]


# ----------------------------------------------------------------------------
# Pure numpy (float64) reference of ConvSTFT.forward
# ----------------------------------------------------------------------------
def conv_stft_ref(x, w_mat, win_len, win_inc):
    x = np.asarray(x, np.float64)
    w = np.asarray(w_mat, np.float64)
    pad = win_len - win_inc
    xp = np.pad(x, ((0, 0), (pad, pad)))
    T = (xp.shape[1] - win_len) // win_inc + 1
    idx = np.arange(T)[:, None] * win_inc + np.arange(win_len)[None, :]
    frames = xp[:, idx]                                  # (N, T, W)
    s = frames @ w                                       # (N, T, 2F)
    nfreq = s.shape[-1] // 2
    r = s[..., :nfreq].transpose(0, 2, 1)
    i = s[..., nfreq:].transpose(0, 2, 1)
    mags = np.sqrt(np.maximum(r * r + i * i, EPSILON))
    phase = np.arctan2(i + EPSILON, r + EPSILON)
    return r, i, mags, phase


if __name__ == "__main__":
    # --- Config A: Nyquist-folded freq path (nfreq=129), polyphase R=4 -------
    win_len, win_inc, fft_len = 256, 64, 256
    weight = init_stft_weight(win_len, fft_len, "hamming")
    x = jax.random.normal(jax.random.PRNGKey(0), (2, 2000), dtype=jnp.float32)

    mags, phase = conv_stft(x, weight, win_len, win_inc)
    jax.block_until_ready((mags, phase))

    _, _, mags_ref, phase_ref = conv_stft_ref(np.asarray(x), np.asarray(weight),
                                              win_len, win_inc)
    assert mags.shape == mags_ref.shape and phase.shape == phase_ref.shape
    np.testing.assert_allclose(np.asarray(mags), mags_ref, rtol=1e-3, atol=1e-4)
    dphi = np.angle(np.exp(1j * (np.asarray(phase, np.float64) - phase_ref)))
    assert float(np.max(np.abs(dphi))) < 5e-2, "phase mismatch (config A)"

    # bf16 matmul-input fast path (native MXU rate on v6e/v7x, half the DMA).
    mags_bf, phase_bf = conv_stft(x, weight, win_len, win_inc,
                                  matmul_dtype=jnp.bfloat16)
    jax.block_until_ready((mags_bf, phase_bf))
    assert np.isfinite(np.asarray(mags_bf)).all()
    assert np.isfinite(np.asarray(phase_bf)).all()

    # --- Config B: tiny window, 3-D (N, C, L) input, generic-padding path ----
    win_len2, win_inc2, fft_len2 = 16, 8, 16
    weight2 = init_stft_weight(win_len2, fft_len2, "hamming")
    x2 = jax.random.normal(jax.random.PRNGKey(1), (2, 2, 200), dtype=jnp.float32)

    mags2, phase2 = conv_stft(x2, weight2, win_len2, win_inc2)
    re2, im2 = conv_stft(x2, weight2, win_len2, win_inc2, cplx=True)
    jax.block_until_ready((mags2, phase2, re2, im2))

    r_ref, i_ref, m_ref, p_ref = conv_stft_ref(
        np.asarray(x2).reshape(4, 200), np.asarray(weight2), win_len2, win_inc2)
    np.testing.assert_allclose(np.asarray(mags2).reshape(m_ref.shape), m_ref,
                               rtol=1e-3, atol=1e-4)
    np.testing.assert_allclose(np.asarray(re2).reshape(r_ref.shape), r_ref,
                               rtol=1e-3, atol=1e-4)
    np.testing.assert_allclose(np.asarray(im2).reshape(i_ref.shape), i_ref,
                               rtol=1e-3, atol=1e-4)
    dphi2 = np.angle(np.exp(1j * (np.asarray(phase2, np.float64).reshape(p_ref.shape)
                                  - p_ref)))
    assert float(np.max(np.abs(dphi2))) < 5e-2, "phase mismatch (config B)"

    print("KERNEL_OK")
</pallas_src>

<mosaic_0001>
module attributes {stable_mosaic.version = 11 : i64} {
  func.func @kernel(%arg0: i32, %arg1: i32, %arg2: memref<1x128x64xf32, #tpu.memory_space<vmem>>, %arg3: memref<1x1x3x64xf32, #tpu.memory_space<vmem>>, %arg4: memref<4x64x256xf32, #tpu.memory_space<vmem>>, %arg5: memref<1x129x128xf32, #tpu.memory_space<vmem>>, %arg6: memref<1x129x128xf32, #tpu.memory_space<vmem>>, %arg7: memref<131x64xf32, #tpu.memory_space<vmem>>) attributes {dimension_semantics = [#tpu.dimension_semantics<parallel>, #tpu.dimension_semantics<parallel>], iteration_bounds = array<i64: 2, 1>, scalar_prefetch = 0 : i64, scratch_operands = 1 : i64, tpu.core_type = #tpu.core_type<tc>, window_params = [{transform_indices = @transform_0, window_bounds = array<i64: 1, 128, 64>}, {transform_indices = @transform_1, window_bounds = array<i64: 1, 1, 3, 64>}, {pipeline_mode = #tpu.pipeline_mode<synchronous>, transform_indices = @transform_2, window_bounds = array<i64: 4, 64, 256>}, {transform_indices = @transform_3, window_bounds = array<i64: 1, 129, 128>}, {transform_indices = @transform_4, window_bounds = array<i64: 1, 129, 128>}]} {
    %c0 = arith.constant 0 : index
    %c0_0 = arith.constant 0 : index
    %c0_1 = arith.constant 0 : index
    %0 = vector.load %arg2[%c0, %c0_0, %c0_1] : memref<1x128x64xf32, #tpu.memory_space<vmem>>, vector<1x128x64xf32>
    %1 = vector.shape_cast %0 : vector<1x128x64xf32> to vector<128x64xf32>
    %c0_2 = arith.constant 0 : index
    %c0_3 = arith.constant 0 : index
    %2 = vector.load %arg7[%c0_2, %c0_3] : memref<131x64xf32, #tpu.memory_space<vmem>>, vector<128x64xf32>
    tpu.vector_store %arg7[%c0_2, %c0_3], %1 {strides = array<i32>} : memref<131x64xf32, #tpu.memory_space<vmem>>, vector<128x64xf32>,
    %c0_4 = arith.constant 0 : index
    %c0_5 = arith.constant 0 : index
    %c0_6 = arith.constant 0 : index
    %c0_7 = arith.constant 0 : index
    %3 = vector.load %arg3[%c0_4, %c0_5, %c0_6, %c0_7] : memref<1x1x3x64xf32, #tpu.memory_space<vmem>>, vector<1x1x3x64xf32>
    %4 = vector.shape_cast %3 : vector<1x1x3x64xf32> to vector<3x64xf32>
    %c128 = arith.constant 128 : index
    %c0_8 = arith.constant 0 : index
    %5 = vector.load %arg7[%c128, %c0_8] : memref<131x64xf32, #tpu.memory_space<vmem>>, vector<3x64xf32>
    tpu.vector_store %arg7[%c128, %c0_8], %4 {strides = array<i32>} : memref<131x64xf32, #tpu.memory_space<vmem>>, vector<3x64xf32>,
    %cst = arith.constant 0.000000e+00 : f32
    %6 = vector.broadcast %cst : f32 to vector<128x256xf32>
    %c0_9 = arith.constant 0 : index
    %c0_10 = arith.constant 0 : index
    %7 = vector.load %arg7[%c0_9, %c0_10] : memref<131x64xf32, #tpu.memory_space<vmem>>, vector<128x64xf32>
    %c0_11 = arith.constant 0 : index
    %c0_12 = arith.constant 0 : index
    %c0_13 = arith.constant 0 : index
    %8 = vector.load %arg4[%c0_11, %c0_12, %c0_13] : memref<4x64x256xf32, #tpu.memory_space<vmem>>, vector<1x64x256xf32>
    %9 = vector.shape_cast %8 : vector<1x64x256xf32> to vector<64x256xf32>
    %cst_14 = arith.constant dense<0.000000e+00> : vector<128x256xf32>
    %10 = tpu.matmul %7, %9, %cst_14 {dimension_numbers = #tpu.dot_dimension_numbers<[1], [0], [0], [1], [0, 0, 1, 1], [], []>, precision = #tpu.contract_precision<fp32>} : vector<128x64xf32>, vector<64x256xf32>, vector<128x256xf32> -> vector<128x256xf32>
    %11 = arith.addf %6, %10 : vector<128x256xf32>
    %c1 = arith.constant 1 : index
    %c0_15 = arith.constant 0 : index
    %12 = vector.load %arg7[%c1, %c0_15] : memref<131x64xf32, #tpu.memory_space<vmem>>, vector<128x64xf32>
    %c1_16 = arith.constant 1 : index
    %c0_17 = arith.constant 0 : index
    %c0_18 = arith.constant 0 : index
    %13 = vector.load %arg4[%c1_16, %c0_17, %c0_18] : memref<4x64x256xf32, #tpu.memory_space<vmem>>, vector<1x64x256xf32>
    %14 = vector.shape_cast %13 : vector<1x64x256xf32> to vector<64x256xf32>
    %cst_19 = arith.constant dense<0.000000e+00> : vector<128x256xf32>
    %15 = tpu.matmul %12, %14, %cst_19 {dimension_numbers = #tpu.dot_dimension_numbers<[1], [0], [0], [1], [0, 0, 1, 1], [], []>, precision = #tpu.contract_precision<fp32>} : vector<128x64xf32>, vector<64x256xf32>, vector<128x256xf32> -> vector<128x256xf32>
    %16 = arith.addf %11, %15 : vector<128x256xf32>
    %c2 = arith.constant 2 : index
    %c0_20 = arith.constant 0 : index
    %17 = vector.load %arg7[%c2, %c0_20] : memref<131x64xf32, #tpu.memory_space<vmem>>, vector<128x64xf32>
    %c2_21 = arith.constant 2 : index
    %c0_22 = arith.constant 0 : index
    %c0_23 = arith.constant 0 : index
    %18 = vector.load %arg4[%c2_21, %c0_22, %c0_23] : memref<4x64x256xf32, #tpu.memory_space<vmem>>, vector<1x64x256xf32>
    %19 = vector.shape_cast %18 : vector<1x64x256xf32> to vector<64x256xf32>
    %cst_24 = arith.constant dense<0.000000e+00> : vector<128x256xf32>
    %20 = tpu.matmul %17, %19, %cst_24 {dimension_numbers = #tpu.dot_dimension_numbers<[1], [0], [0], [1], [0, 0, 1, 1], [], []>, precision = #tpu.contract_precision<fp32>} : vector<128x64xf32>, vector<64x256xf32>, vector<128x256xf32> -> vector<128x256xf32>
    %21 = arith.addf %16, %20 : vector<128x256xf32>
    %c3 = arith.constant 3 : index
    %c0_25 = arith.constant 0 : index
    %22 = vector.load %arg7[%c3, %c0_25] : memref<131x64xf32, #tpu.memory_space<vmem>>, vector<128x64xf32>
    %c3_26 = arith.constant 3 : index
    %c0_27 = arith.constant 0 : index
    %c0_28 = arith.constant 0 : index
    %23 = vector.load %arg4[%c3_26, %c0_27, %c0_28] : memref<4x64x256xf32, #tpu.memory_space<vmem>>, vector<1x64x256xf32>
    %24 = vector.shape_cast %23 : vector<1x64x256xf32> to vector<64x256xf32>
    %cst_29 = arith.constant dense<0.000000e+00> : vector<128x256xf32>
    %25 = tpu.matmul %22, %24, %cst_29 {dimension_numbers = #tpu.dot_dimension_numbers<[1], [0], [0], [1], [0, 0, 1, 1], [], []>, precision = #tpu.contract_precision<fp32>} : vector<128x64xf32>, vector<64x256xf32>, vector<128x256xf32> -> vector<128x256xf32>
    %26 = arith.addf %21, %25 : vector<128x256xf32>
    %27 = tpu.transpose %26, [1, 0] : vector<128x256xf32> -> vector<256x128xf32>
    %28 = vector.extract_strided_slice %27 {offsets = [0, 0], sizes = [128, 128], strides = [1, 1]} : vector<256x128xf32> to vector<128x128xf32>
    %29 = vector.extract_strided_slice %27 {offsets = [128, 0], sizes = [128, 128], strides = [1, 1]} : vector<256x128xf32> to vector<128x128xf32>
    %30 = vector.extract_strided_slice %29 {offsets = [0, 0], sizes = [1, 128], strides = [1, 1]} : vector<128x128xf32> to vector<1x128xf32>
    %31 = tpu.iota {dimensions = array<i32: 0>} : vector<128x128xi32>
    %c0_i32 = arith.constant 0 : i32
    %32 = vector.broadcast %c0_i32 : i32 to vector<128x128xi32>
    %33 = arith.cmpi eq, %31, %32 : vector<128x128xi32>
    %cst_30 = arith.constant 0.000000e+00 : f32
    %34 = vector.broadcast %cst_30 : f32 to vector<128x128xf32>
    %35 = arith.select %33, %34, %29 : vector<128x128xi1>, vector<128x128xf32>
    %cst_31 = arith.constant 0.000000e+00 : f32
    %36 = vector.broadcast %cst_31 : f32 to vector<1x128xf32>
    %37 = arith.mulf %28, %28 : vector<128x128xf32>
    %38 = arith.mulf %35, %35 : vector<128x128xf32>
    %39 = arith.addf %37, %38 : vector<128x128xf32>
    %cst_32 = arith.constant 1.1920929E-7 : f32
    %40 = vector.broadcast %cst_32 : f32 to vector<128x128xf32>
    %41 = arith.maximumf %39, %40 : vector<128x128xf32>
    %42 = math.sqrt %41 : vector<128x128xf32>
    %c0_33 = arith.constant 0 : index
    %c0_34 = arith.constant 0 : index
    %c0_35 = arith.constant 0 : index
    %43 = vector.load %arg5[%c0_33, %c0_34, %c0_35] : memref<1x129x128xf32, #tpu.memory_space<vmem>>, vector<1x128x128xf32>
    %44 = vector.shape_cast %43 : vector<1x128x128xf32> to vector<128x128xf32>
    %45 = vector.shape_cast %42 : vector<128x128xf32> to vector<1x128x128xf32>
    tpu.vector_store %arg5[%c0_33, %c0_34, %c0_35], %45 {strides = array<i32>} : memref<1x129x128xf32, #tpu.memory_space<vmem>>, vector<1x128x128xf32>,
    %46 = arith.mulf %30, %30 : vector<1x128xf32>
    %47 = arith.mulf %36, %36 : vector<1x128xf32>
    %48 = arith.addf %46, %47 : vector<1x128xf32>
    %cst_36 = arith.constant 1.1920929E-7 : f32
    %49 = vector.broadcast %cst_36 : f32 to vector<1x128xf32>
    %50 = arith.maximumf %48, %49 : vector<1x128xf32>
    %51 = math.sqrt %50 : vector<1x128xf32>
    %c0_37 = arith.constant 0 : index
    %c128_38 = arith.constant 128 : index
    %c0_39 = arith.constant 0 : index
    %52 = vector.load %arg5[%c0_37, %c128_38, %c0_39] : memref<1x129x128xf32, #tpu.memory_space<vmem>>, vector<1x1x128xf32>
    %53 = vector.shape_cast %52 : vector<1x1x128xf32> to vector<1x128xf32>
    %54 = vector.shape_cast %51 : vector<1x128xf32> to vector<1x1x128xf32>
    tpu.vector_store %arg5[%c0_37, %c128_38, %c0_39], %54 {strides = array<i32>} : memref<1x129x128xf32, #tpu.memory_space<vmem>>, vector<1x1x128xf32>,
    %cst_40 = arith.constant 1.1920929E-7 : f32
    %55 = vector.broadcast %cst_40 : f32 to vector<128x128xf32>
    %56 = arith.addf %35, %55 : vector<128x128xf32>
    %cst_41 = arith.constant 1.1920929E-7 : f32
    %57 = vector.broadcast %cst_41 : f32 to vector<128x128xf32>
    %58 = arith.addf %28, %57 : vector<128x128xf32>
    %59 = math.absf %58 : vector<128x128xf32>
    %60 = math.absf %56 : vector<128x128xf32>
    %61 = arith.minimumf %59, %60 : vector<128x128xf32>
    %62 = arith.maximumf %59, %60 : vector<128x128xf32>
    %cst_42 = arith.constant 1.000000e-30 : f32
    %63 = vector.broadcast %cst_42 : f32 to vector<128x128xf32>
    %64 = arith.maximumf %62, %63 : vector<128x128xf32>
    %65 = arith.divf %61, %64 : vector<128x128xf32>
    %66 = arith.mulf %65, %65 : vector<128x128xf32>
    %cst_43 = arith.constant -0.0134804696 : f32
    %67 = vector.broadcast %cst_43 : f32 to vector<128x128xf32>
    %68 = arith.mulf %67, %66 : vector<128x128xf32>
    %cst_44 = arith.constant 0.057477314 : f32
    %69 = vector.broadcast %cst_44 : f32 to vector<128x128xf32>
    %70 = arith.addf %68, %69 : vector<128x128xf32>
    %71 = arith.mulf %70, %66 : vector<128x128xf32>
    %cst_45 = arith.constant 0.121239074 : f32
    %72 = vector.broadcast %cst_45 : f32 to vector<128x128xf32>
    %73 = arith.subf %71, %72 : vector<128x128xf32>
    %74 = arith.mulf %73, %66 : vector<128x128xf32>
    %cst_46 = arith.constant 0.19563593 : f32
    %75 = vector.broadcast %cst_46 : f32 to vector<128x128xf32>
    %76 = arith.addf %74, %75 : vector<128x128xf32>
    %77 = arith.mulf %76, %66 : vector<128x128xf32>
    %cst_47 = arith.constant 0.33299461 : f32
    %78 = vector.broadcast %cst_47 : f32 to vector<128x128xf32>
    %79 = arith.subf %77, %78 : vector<128x128xf32>
    %80 = arith.mulf %79, %66 : vector<128x128xf32>
    %cst_48 = arith.constant 0.999995648 : f32
    %81 = vector.broadcast %cst_48 : f32 to vector<128x128xf32>
    %82 = arith.addf %80, %81 : vector<128x128xf32>
    %83 = arith.mulf %82, %65 : vector<128x128xf32>
    %84 = arith.cmpf ogt, %60, %59 : vector<128x128xf32>
    %cst_49 = arith.constant 1.57079637 : f32
    %85 = vector.broadcast %cst_49 : f32 to vector<128x128xf32>
    %86 = arith.subf %85, %83 : vector<128x128xf32>
    %87 = arith.select %84, %86, %83 : vector<128x128xi1>, vector<128x128xf32>
    %cst_50 = arith.constant 0.000000e+00 : f32
    %88 = vector.broadcast %cst_50 : f32 to vector<128x128xf32>
    %89 = arith.cmpf olt, %58, %88 : vector<128x128xf32>
    %cst_51 = arith.constant 3.14159274 : f32
    %90 = vector.broadcast %cst_51 : f32 to vector<128x128xf32>
    %91 = arith.subf %90, %87 : vector<128x128xf32>
    %92 = arith.select %89, %91, %87 : vector<128x128xi1>, vector<128x128xf32>
    %cst_52 = arith.constant 0.000000e+00 : f32
    %93 = vector.broadcast %cst_52 : f32 to vector<128x128xf32>
    %94 = arith.cmpf olt, %56, %93 : vector<128x128xf32>
    %cst_53 = arith.constant 0.000000e+00 : f32
    %95 = vector.broadcast %cst_53 : f32 to vector<128x128xf32>
    %96 = arith.subf %95, %92 : vector<128x128xf32>
    %97 = arith.select %94, %96, %92 : vector<128x128xi1>, vector<128x128xf32>
    %c0_54 = arith.constant 0 : index
    %c0_55 = arith.constant 0 : index
    %c0_56 = arith.constant 0 : index
    %98 = vector.load %arg6[%c0_54, %c0_55, %c0_56] : memref<1x129x128xf32, #tpu.memory_space<vmem>>, vector<1x128x128xf32>
    %99 = vector.shape_cast %98 : vector<1x128x128xf32> to vector<128x128xf32>
    %100 = vector.shape_cast %97 : vector<128x128xf32> to vector<1x128x128xf32>
    tpu.vector_store %arg6[%c0_54, %c0_55, %c0_56], %100 {strides = array<i32>} : memref<1x129x128xf32, #tpu.memory_space<vmem>>, vector<1x128x128xf32>,
    %cst_57 = arith.constant 1.1920929E-7 : f32
    %101 = vector.broadcast %cst_57 : f32 to vector<1x128xf32>
    %102 = arith.addf %36, %101 : vector<1x128xf32>
    %cst_58 = arith.constant 1.1920929E-7 : f32
    %103 = vector.broadcast %cst_58 : f32 to vector<1x128xf32>
    %104 = arith.addf %30, %103 : vector<1x128xf32>
    %105 = math.absf %104 : vector<1x128xf32>
    %106 = math.absf %102 : vector<1x128xf32>
    %107 = arith.minimumf %105, %106 : vector<1x128xf32>
    %108 = arith.maximumf %105, %106 : vector<1x128xf32>
    %cst_59 = arith.constant 1.000000e-30 : f32
    %109 = vector.broadcast %cst_59 : f32 to vector<1x128xf32>
    %110 = arith.maximumf %108, %109 : vector<1x128xf32>
    %111 = arith.divf %107, %110 : vector<1x128xf32>
    %112 = arith.mulf %111, %111 : vector<1x128xf32>
    %cst_60 = arith.constant -0.0134804696 : f32
    %113 = vector.broadcast %cst_60 : f32 to vector<1x128xf32>
    %114 = arith.mulf %113, %112 : vector<1x128xf32>
    %cst_61 = arith.constant 0.057477314 : f32
    %115 = vector.broadcast %cst_61 : f32 to vector<1x128xf32>
    %116 = arith.addf %114, %115 : vector<1x128xf32>
    %117 = arith.mulf %116, %112 : vector<1x128xf32>
    %cst_62 = arith.constant 0.121239074 : f32
    %118 = vector.broadcast %cst_62 : f32 to vector<1x128xf32>
    %119 = arith.subf %117, %118 : vector<1x128xf32>
    %120 = arith.mulf %119, %112 : vector<1x128xf32>
    %cst_63 = arith.constant 0.19563593 : f32
    %121 = vector.broadcast %cst_63 : f32 to vector<1x128xf32>
    %122 = arith.addf %120, %121 : vector<1x128xf32>
    %123 = arith.mulf %122, %112 : vector<1x128xf32>
    %cst_64 = arith.constant 0.33299461 : f32
    %124 = vector.broadcast %cst_64 : f32 to vector<1x128xf32>
    %125 = arith.subf %123, %124 : vector<1x128xf32>
    %126 = arith.mulf %125, %112 : vector<1x128xf32>
    %cst_65 = arith.constant 0.999995648 : f32
    %127 = vector.broadcast %cst_65 : f32 to vector<1x128xf32>
    %128 = arith.addf %126, %127 : vector<1x128xf32>
    %129 = arith.mulf %128, %111 : vector<1x128xf32>
    %130 = arith.cmpf ogt, %106, %105 : vector<1x128xf32>
    %cst_66 = arith.constant 1.57079637 : f32
    %131 = vector.broadcast %cst_66 : f32 to vector<1x128xf32>
    %132 = arith.subf %131, %129 : vector<1x128xf32>
    %133 = arith.select %130, %132, %129 : vector<1x128xi1>, vector<1x128xf32>
    %cst_67 = arith.constant 0.000000e+00 : f32
    %134 = vector.broadcast %cst_67 : f32 to vector<1x128xf32>
    %135 = arith.cmpf olt, %104, %134 : vector<1x128xf32>
    %cst_68 = arith.constant 3.14159274 : f32
    %136 = vector.broadcast %cst_68 : f32 to vector<1x128xf32>
    %137 = arith.subf %136, %133 : vector<1x128xf32>
    %138 = arith.select %135, %137, %133 : vector<1x128xi1>, vector<1x128xf32>
    %cst_69 = arith.constant 0.000000e+00 : f32
    %139 = vector.broadcast %cst_69 : f32 to vector<1x128xf32>
    %140 = arith.cmpf olt, %102, %139 : vector<1x128xf32>
    %cst_70 = arith.constant 0.000000e+00 : f32
    %141 = vector.broadcast %cst_70 : f32 to vector<1x128xf32>
    %142 = arith.subf %141, %138 : vector<1x128xf32>
    %143 = arith.select %140, %142, %138 : vector<1x128xi1>, vector<1x128xf32>
    %c0_71 = arith.constant 0 : index
    %c128_72 = arith.constant 128 : index
    %c0_73 = arith.constant 0 : index
    %144 = vector.load %arg6[%c0_71, %c128_72, %c0_73] : memref<1x129x128xf32, #tpu.memory_space<vmem>>, vector<1x1x128xf32>
    %145 = vector.shape_cast %144 : vector<1x1x128xf32> to vector<1x128xf32>
    %146 = vector.shape_cast %143 : vector<1x128xf32> to vector<1x1x128xf32>
    tpu.vector_store %arg6[%c0_71, %c128_72, %c0_73], %146 {strides = array<i32>} : memref<1x129x128xf32, #tpu.memory_space<vmem>>, vector<1x1x128xf32>,
    return
  }
  func.func @transform_0(%arg0: i32, %arg1: i32) -> (i32, i32, i32) {
    %c0_i32 = arith.constant 0 : i32
    %c0_i32_0 = arith.constant 0 : i32
    return %arg0, %arg1, %c0_i32 : i32, i32, i32
  }
  func.func @transform_1(%arg0: i32, %arg1: i32) -> (i32, i32, i32, i32) {
    %c0_i32 = arith.constant 0 : i32
    %c0_i32_0 = arith.constant 0 : i32
    %c0_i32_1 = arith.constant 0 : i32
    return %arg0, %arg1, %c0_i32, %c0_i32_0 : i32, i32, i32, i32
  }
  func.func @transform_2(%arg0: i32, %arg1: i32) -> (i32, i32, i32) {
    %c0_i32 = arith.constant 0 : i32
    %c0_i32_0 = arith.constant 0 : i32
    %c0_i32_1 = arith.constant 0 : i32
    %c0_i32_2 = arith.constant 0 : i32
    return %c0_i32, %c0_i32_0, %c0_i32_1 : i32, i32, i32
  }
  func.func @transform_3(%arg0: i32, %arg1: i32) -> (i32, i32, i32) {
    %c0_i32 = arith.constant 0 : i32
    %c0_i32_0 = arith.constant 0 : i32
    return %arg0, %c0_i32, %arg1 : i32, i32, i32
  }
  func.func @transform_4(%arg0: i32, %arg1: i32) -> (i32, i32, i32) {
    %c0_i32 = arith.constant 0 : i32
    %c0_i32_0 = arith.constant 0 : i32
    return %arg0, %c0_i32, %arg1 : i32, i32, i32
  }
}

</mosaic_0001>

<llo_original>
// kernel: tpu_custom_call.1
$region0: #{tpu_custom_call.1}
  #allocation0 [shape = 'u32[]', space=smem, size = 0x4, offset = 0x4, fixed_abs, tag = 'smem constant byte address 0x4 - core index']
  #allocation1 [shape = 'u32[144,128]{1,0:T(1,128)}', space=vmem, size = 0x12000, scoped, tag = 'internal scratch']
  #allocation2 [shape = 'f32[131,64]{1,0:T(8,128)}', space=vmem, size = 0x11000, scoped, tag = 'scratch operand']
  %s0 = inlined_call_operand.vmem [shape: f32[2,131,64], index: 0, kind: input, shape index: {}]
  %s1 = inlined_call_operand.vmem [shape: f32[2,1,3,64], index: 1, kind: input, shape index: {}]
  %s2 = inlined_call_operand.vmem [shape: f32[4,64,256], index: 2, kind: input, shape index: {}]
  %s3 = inlined_call_operand.vmem [shape: f32[2,129,128], index: 3, kind: output, shape index: {0}]
  %s4 = inlined_call_operand.vmem [shape: f32[2,129,128], index: 4, kind: output, shape index: {1}]
  %5 = xla_tuple %s3, %s4
  %s6 = sld [smem:[#allocation0]]
  $region53: #{tpu_custom_call.1} parent=0
    _
  %s8 = ssub.s32 1, %s6
  %s9 = scalar_select 0, %s8, %s6
  loop: start=0, step=1, limit=4
  $region2: #{tpu_custom_call.1} parent=0 // loop_pre_header
    _
  $region3: #{tpu_custom_call.1} parent=0 // loop_header
    %s11 = sphi 0, %s15
    %p12 = scmp.ge.s32.totalorder %s11, 4
    %s18 = sphi 0, %s30
    %s19 = sphi 0, %s26
    %s20 = sphi 0, %s18
    %s21 = sphi 0, %s19
    %s22 = sphi 0, %s20
    %s23 = sphi 0, %s21
    %s35 = sphi 0, %s37
    %s38 = sphi 0, %s35
    %s39 = sphi 0, %s38
    %s55 = sphi 0, %s39
    %s63 = sphi 0, %s65
    %s66 = sphi 0, %s63
    %s67 = sphi 0, %s66
    %s83 = sphi 0, %s67
    %s87 = sphi 0, %s87
    %s89 = sphi 0, %s87
    %s90 = sphi 0, %s89
    %s104 = sphi 0, %s90
    %s112 = sphi 0, %s114
    %s115 = sphi 0, %s112
    %s116 = sphi 0, %s115
    %s132 = sphi 0, %s116
    %s140 = sphi 0, %s142
    %s143 = sphi 0, %s140
    %s144 = sphi 0, %s143
    %s160 = sphi 0, %s144
  $region4: #{tpu_custom_call.1} parent=0 // loop_header_branch
    %14 = sbr.rel (%p12) target = $region8
  $region5: #{tpu_custom_call.1} parent=0 // loop_body
    %s16 = ssub.s32 %s11, 1
    %s17 = ssub.s32 %s11, 2
    %s24 = sadd.s32 1, %s19
    %p25 = scmp.ge.s32.totalorder %s24, 1
    %s26 = scalar_select %p25, 0, %s24
    %s27 = sadd.s32 1, %s18
    %s28 = scalar_select %p25, %s27, %s18
    %p29 = scmp.ge.s32.totalorder %s28, 2
    %s30 = scalar_select %p29, 0, %s28
    %s31 = ssub.s32 %s18, %s30
    %s32 = ssub.s32 %s19, %s26
    %s33 = sor.u32 %s31, %s32
    %p34 = scmp.eq.s32.totalorder %s33, 0
    %s36 = sadd.s32 %s35, 1
    %s37 = scalar_select %p34, %s35, %s36
    %p40 = pneg %p34
    %p41 = scmp.eq.s32.totalorder %s11, 1
    %p42 = por %p40, %p41
    %p43 = scmp.ne.s32.totalorder %s35, %s38
    %p44 = scmp.eq.s32.totalorder %s11, 0
    %p45 = por %p43, %p44
    %p46 = scmp.ne.s32.totalorder %s35, %s38
    %p47 = scmp.eq.s32.totalorder %s16, 1
    %p48 = por %p46, %p47
    %p49 = scmp.ne.s32.totalorder %s38, %s39
    %p50 = scmp.eq.s32.totalorder %s16, 0
    %p51 = por %p49, %p50
    %p52 = scmp.ne.s32.totalorder %s38, %s39
    %p53 = scmp.eq.s32.totalorder %s17, 1
    %p54 = por %p52, %p53
    %p56 = scmp.ne.s32.totalorder %s39, %s55
    %p57 = scmp.eq.s32.totalorder %s17, 0
    %p58 = por %p56, %p57
    %s59 = ssub.s32 %s18, %s30
    %s60 = ssub.s32 %s19, %s26
    %s61 = sor.u32 %s59, %s60
    %p62 = scmp.eq.s32.totalorder %s61, 0
    %s64 = sadd.s32 %s63, 1
    %s65 = scalar_select %p62, %s63, %s64
    %p68 = pneg %p62
    %p69 = scmp.eq.s32.totalorder %s11, 1
    %p70 = por %p68, %p69
    %p71 = scmp.ne.s32.totalorder %s63, %s66
    %p72 = scmp.eq.s32.totalorder %s11, 0
    %p73 = por %p71, %p72
    %p74 = scmp.ne.s32.totalorder %s63, %s66
    %p75 = scmp.eq.s32.totalorder %s16, 1
    %p76 = por %p74, %p75
    %p77 = scmp.ne.s32.totalorder %s66, %s67
    %p78 = scmp.eq.s32.totalorder %s16, 0
    %p79 = por %p77, %p78
    %p80 = scmp.ne.s32.totalorder %s66, %s67
    %p81 = scmp.eq.s32.totalorder %s17, 1
    %p82 = por %p80, %p81
    %p84 = scmp.ne.s32.totalorder %s67, %s83
    %p85 = scmp.eq.s32.totalorder %s17, 0
    %p86 = por %p84, %p85
    %s88 = sadd.s32 %s87, 1
    %p91 = scmp.eq.s32.totalorder %s11, 1
    %p92 = scmp.ne.s32.totalorder %s87, %s89
    %p93 = scmp.eq.s32.totalorder %s11, 0
    %p94 = por %p92, %p93
    %p95 = scmp.ne.s32.totalorder %s87, %s89
    %p96 = scmp.eq.s32.totalorder %s16, 1
    %p97 = por %p95, %p96
    %p98 = scmp.ne.s32.totalorder %s89, %s90
    %p99 = scmp.eq.s32.totalorder %s16, 0
    %p100 = por %p98, %p99
    %p101 = scmp.ne.s32.totalorder %s89, %s90
    %p102 = scmp.eq.s32.totalorder %s17, 1
    %p103 = por %p101, %p102
    %p105 = scmp.ne.s32.totalorder %s90, %s104
    %p106 = scmp.eq.s32.totalorder %s17, 0
    %p107 = por %p105, %p106
    %s108 = ssub.s32 %s18, %s30
    %s109 = ssub.s32 %s19, %s26
    %s110 = sor.u32 %s108, %s109
    %p111 = scmp.eq.s32.totalorder %s110, 0
    %s113 = sadd.s32 %s112, 1
    %s114 = scalar_select %p111, %s112, %s113
    %p117 = pneg %p111
    %p118 = scmp.eq.s32.totalorder %s11, 1
    %p119 = por %p117, %p118
    %p120 = scmp.ne.s32.totalorder %s112, %s115
    %p121 = scmp.eq.s32.totalorder %s11, 0
    %p122 = por %p120, %p121
    %p123 = scmp.ne.s32.totalorder %s112, %s115
    %p124 = scmp.eq.s32.totalorder %s16, 1
    %p125 = por %p123, %p124
    %p126 = scmp.ne.s32.totalorder %s115, %s116
    %p127 = scmp.eq.s32.totalorder %s16, 0
    %p128 = por %p126, %p127
    %p129 = scmp.ne.s32.totalorder %s115, %s116
    %p130 = scmp.eq.s32.totalorder %s17, 1
    %p131 = por %p129, %p130
    %p133 = scmp.ne.s32.totalorder %s116, %s132
    %p134 = scmp.eq.s32.totalorder %s17, 0
    %p135 = por %p133, %p134
    %s136 = ssub.s32 %s18, %s30
    %s137 = ssub.s32 %s19, %s26
    %s138 = sor.u32 %s136, %s137
    %p139 = scmp.eq.s32.totalorder %s138, 0
    %s141 = sadd.s32 %s140, 1
    %s142 = scalar_select %p139, %s140, %s141
    %p145 = pneg %p139
    %p146 = scmp.eq.s32.totalorder %s11, 1
    %p147 = por %p145, %p146
    %p148 = scmp.ne.s32.totalorder %s140, %s143
    %p149 = scmp.eq.s32.totalorder %s11, 0
    %p150 = por %p148, %p149
    %p151 = scmp.ne.s32.totalorder %s140, %s143
    %p152 = scmp.eq.s32.totalorder %s16, 1
    %p153 = por %p151, %p152
    %p154 = scmp.ne.s32.totalorder %s143, %s144
    %p155 = scmp.eq.s32.totalorder %s16, 0
    %p156 = por %p154, %p155
    %p157 = scmp.ne.s32.totalorder %s143, %s144
    %p158 = scmp.eq.s32.totalorder %s17, 1
    %p159 = por %p157, %p158
    %p161 = scmp.ne.s32.totalorder %s144, %s160
    %p162 = scmp.eq.s32.totalorder %s17, 0
    %p163 = por %p161, %p162
    %p164 = scmp.le.s32.totalorder 1, %s11
    %p165 = scmp.lt.s32.totalorder %s11, 3
    %p166 = pnand %p164, %p165
    %p167 = pneg %p166
    // Predicated region
    $region9: #{tpu_custom_call.1} parent=5 // pred_check
      _
    $region10: #{tpu_custom_call.1} parent=5 // pred_check_branch
      %169 = sbr.rel (%p166) target = $region12
    $region11: #{tpu_custom_call.1} parent=5 // pred_region
      %s170 = ssub.s32 %s11, 1
      // Predicated region
      $region13: #{tpu_custom_call.1} parent=11 // pred_check
        %p171 = pneg %p100
      $region14: #{tpu_custom_call.1} parent=11 // pred_check_branch
        %173 = sbr.rel (%p171) target = $region16
      $region15: #{tpu_custom_call.1} parent=11 // pred_region
        _
      $region16: #{tpu_custom_call.1} parent=11 // pred_fallthru
        _
    $region12: #{tpu_custom_call.1} parent=5 // pred_fallthru
      _
    %p174 = scmp.lt.s32.totalorder %s11, 2
    // Predicated region
    $region17: #{tpu_custom_call.1} parent=5 // pred_check
      %p175 = pneg %p174
    $region18: #{tpu_custom_call.1} parent=5 // pred_check_branch
      %177 = sbr.rel (%p175) target = $region20
    $region19: #{tpu_custom_call.1} parent=5 // pred_region
      // Predicated region
      $region21: #{tpu_custom_call.1} parent=19 // pred_check
        %p178 = pneg %p45
      $region22: #{tpu_custom_call.1} parent=19 // pred_check_branch
        %180 = sbr.rel (%p178) target = $region24
      $region23: #{tpu_custom_call.1} parent=19 // pred_region
        %s181 = smul.u32 16, %s19
        %s182 = ssub.s32 17, %s181
        %p183 = scmp.lt.s32.totalorder %s182, 16
        %s184 = scalar_select %p183, %s182, 16
        %s185 = smul.u32 128, %s184
        %p186 = scmp.lt.s32.totalorder %s18, 1
        %s187 = scalar_select %p186, %s18, 1
        %p188 = scmp.lt.s32.totalorder %s181, 16
        %s189 = scalar_select %p188, %s181, 16
        %s190 = smul.addr %s187, 17
        %s191 = sadd.s32 %s189, %s190
        %s192 = smul.addr %s191, 8
        %s193 = scalar_lea.vmem %s0, %s192
        %s194 = smul.u32 16, %s19
        %s195 = ssub.s32 17, %s194
        %p196 = scmp.lt.s32.totalorder %s195, 16
        %s197 = scalar_select %p196, %s195, 16
        %s198 = smul.u32 128, %s197
      $region24: #{tpu_custom_call.1} parent=19 // pred_fallthru
        _
      // Predicated region
      $region25: #{tpu_custom_call.1} parent=19 // pred_check
        %p199 = pneg %p73
      $region26: #{tpu_custom_call.1} parent=19 // pred_check_branch
        %201 = sbr.rel (%p199) target = $region28
      $region27: #{tpu_custom_call.1} parent=19 // pred_region
        %p202 = scmp.lt.s32.totalorder %s18, 1
        %s203 = scalar_select %p202, %s18, 1
        %p204 = scmp.lt.s32.totalorder %s19, 0
        %s205 = scalar_select %p204, %s19, 0
        %s206 = sadd.s32 %s205, %s203
        %s207 = smul.addr %s206, 4
        %s208 = scalar_lea.vmem %s1, %s207
      $region28: #{tpu_custom_call.1} parent=19 // pred_fallthru
        _
    $region20: #{tpu_custom_call.1} parent=5 // pred_fallthru
      _
    %p209 = scmp.le.s32.totalorder 1, %s11
    %p210 = scmp.lt.s32.totalorder %s11, 3
    %p211 = pnand %p209, %p210
    %p212 = pneg %p211
    // Predicated region
    $region29: #{tpu_custom_call.1} parent=5 // pred_check
      _
    $region30: #{tpu_custom_call.1} parent=5 // pred_check_branch
      %214 = sbr.rel (%p211) target = $region32
    $region31: #{tpu_custom_call.1} parent=5 // pred_region
      %s215 = ssub.s32 %s11, 1
      %s216 = smul.u32 16, %s21
      %s217 = ssub.s32 17, %s216
      %p218 = scmp.lt.s32.totalorder %s217, 16
      %s219 = scalar_select %p218, %s217, 16
      %s220 = smul.u32 128, %s219
      %p221 = scmp.lt.s32.totalorder %s20, 1
      %s222 = scalar_select %p221, %s20, 1
      %p223 = scmp.lt.s32.totalorder %s216, 16
      %s224 = scalar_select %p223, %s216, 16
      %s225 = smul.addr %s222, 17
      %s226 = sadd.s32 %s224, %s225
      %s227 = smul.addr %s226, 8
      %s228 = scalar_lea.vmem %s0, %s227
      %p229 = pneg %p51
      %p230 = pneg %p48
      %p231 = scmp.lt.s32.totalorder %s20, 1
      %s232 = scalar_select %p231, %s20, 1
      %p233 = scmp.lt.s32.totalorder %s21, 0
      %s234 = scalar_select %p233, %s21, 0
      %s235 = sadd.s32 %s234, %s232
      %s236 = smul.addr %s235, 4
      %s237 = scalar_lea.vmem %s1, %s236
      %p238 = pneg %p79
      %p239 = pneg %p76
      %p240 = pneg %p100
      %p241 = pneg %p97
      %p242 = pneg %p128
      %p243 = pneg %p125
      %p244 = scmp.lt.s32.totalorder %s20, 1
      %s245 = scalar_select %p244, %s20, 1
      %p246 = scmp.lt.s32.totalorder %s21, 0
      %s247 = scalar_select %p246, %s21, 0
      %s248 = smul.addr %s245, 17
      %s249 = sadd.s32 %s247, %s248
      %s250 = smul.addr %s249, 8
      %s251 = scalar_lea.vmem %s3, %s250
      %p252 = pneg %p156
      %p253 = pneg %p153
      %p254 = scmp.lt.s32.totalorder %s20, 1
      %s255 = scalar_select %p254, %s20, 1
      %p256 = scmp.lt.s32.totalorder %s21, 0
      %s257 = scalar_select %p256, %s21, 0
      %s258 = smul.addr %s255, 17
      %s259 = sadd.s32 %s257, %s258
      %s260 = smul.addr %s259, 8
      %s261 = scalar_lea.vmem %s4, %s260
      %s262 = smul.u32 16, %s21
      %s263 = ssub.s32 17, %s262
      %p264 = scmp.lt.s32.totalorder %s263, 16
      %s265 = scalar_select %p264, %s263, 16
      %s266 = smul.u32 128, %s265
      %p267 = scmp.lt.s32.totalorder %s20, 1
      %s268 = scalar_select %p267, %s20, 1
      %p269 = scmp.lt.s32.totalorder %s262, 16
      %s270 = scalar_select %p269, %s262, 16
      %s271 = smul.addr %s268, 17
      %s272 = sadd.s32 %s270, %s271
      %s273 = smul.addr %s272, 8
      %s274 = scalar_lea.vmem %s0, %s273
      %s275 = smul.u32 16, %s21
      %s276 = ssub.s32 17, %s275
      %p277 = scmp.lt.s32.totalorder %s276, 16
      %s278 = scalar_select %p277, %s276, 16
      %s279 = smul.u32 128, %s278
      %p280 = scmp.lt.s32.totalorder %s20, 1
      %s281 = scalar_select %p280, %s20, 1
      %p282 = scmp.lt.s32.totalorder %s21, 0
      %s283 = scalar_select %p282, %s21, 0
      %s284 = sadd.s32 %s283, %s281
      %s285 = smul.addr %s284, 4
      %s286 = scalar_lea.vmem %s1, %s285
      %p287 = scmp.lt.s32.totalorder %s20, 1
      %s288 = scalar_select %p287, %s20, 1
      %p289 = scmp.lt.s32.totalorder %s21, 0
      %s290 = scalar_select %p289, %s21, 0
      %s291 = smul.addr %s288, 17
      %s292 = sadd.s32 %s290, %s291
      %s293 = smul.addr %s292, 8
      %s294 = scalar_lea.vmem %s3, %s293
      %p295 = scmp.lt.s32.totalorder %s20, 1
      %s296 = scalar_select %p295, %s20, 1
      %p297 = scmp.lt.s32.totalorder %s21, 0
      %s298 = scalar_select %p297, %s21, 0
      %s299 = smul.addr %s296, 17
      %s300 = sadd.s32 %s298, %s299
      %s301 = smul.addr %s300, 8
      %s302 = scalar_lea.vmem %s4, %s301
      %v303 = vld [vmem:[%s274] sm:$0xff]
      %v304 = vld [vmem:[%s274 + $0x8] sm:$0xff]
      %v305 = vld [vmem:[%s274 + $0x10] sm:$0xff]
      %v306 = vld [vmem:[%s274 + $0x18] sm:$0xff]
      %v307 = vld [vmem:[%s274 + $0x20] sm:$0xff]
      %v308 = vld [vmem:[%s274 + $0x28] sm:$0xff]
      %v309 = vld [vmem:[%s274 + $0x30] sm:$0xff]
      %v310 = vld [vmem:[%s274 + $0x38] sm:$0xff]
      %v311 = vld [vmem:[%s274 + $0x40] sm:$0xff]
      %v312 = vld [vmem:[%s274 + $0x48] sm:$0xff]
      %v313 = vld [vmem:[%s274 + $0x50] sm:$0xff]
      %v314 = vld [vmem:[%s274 + $0x58] sm:$0xff]
      %v315 = vld [vmem:[%s274 + $0x60] sm:$0xff]
      %v316 = vld [vmem:[%s274 + $0x68] sm:$0xff]
      %v317 = vld [vmem:[%s274 + $0x70] sm:$0xff]
      %v318 = vld [vmem:[%s274 + $0x78] sm:$0xff]
      %vm319 = vcmask 523264
      %320 = vst.msk [vmem:[#allocation2] sm:$0xff] %vm319, %v303
      %321 = vst.msk [vmem:[#allocation2 + $0x8] sm:$0xff] %vm319, %v304
      %322 = vst.msk [vmem:[#allocation2 + $0x10] sm:$0xff] %vm319, %v305
      %323 = vst.msk [vmem:[#allocation2 + $0x18] sm:$0xff] %vm319, %v306
      %324 = vst.msk [vmem:[#allocation2 + $0x20] sm:$0xff] %vm319, %v307
      %325 = vst.msk [vmem:[#allocation2 + $0x28] sm:$0xff] %vm319, %v308
      %326 = vst.msk [vmem:[#allocation2 + $0x30] sm:$0xff] %vm319, %v309
      %327 = vst.msk [vmem:[#allocation2 + $0x38] sm:$0xff] %vm319, %v310
      %328 = vst.msk [vmem:[#allocation2 + $0x40] sm:$0xff] %vm319, %v311
      %329 = vst.msk [vmem:[#allocation2 + $0x48] sm:$0xff] %vm319, %v312
      %330 = vst.msk [vmem:[#allocation2 + $0x50] sm:$0xff] %vm319, %v313
      %331 = vst.msk [vmem:[#allocation2 + $0x58] sm:$0xff] %vm319, %v314
      %332 = vst.msk [vmem:[#allocation2 + $0x60] sm:$0xff] %vm319, %v315
      %333 = vst.msk [vmem:[#allocation2 + $0x68] sm:$0xff] %vm319, %v316
      %334 = vst.msk [vmem:[#allocation2 + $0x70] sm:$0xff] %vm319, %v317
      %335 = vst.msk [vmem:[#allocation2 + $0x78] sm:$0xff] %vm319, %v318
      %v336 = vld [vmem:[%s286] sm:$0x7]
      %vm337 = vcmask 518144
      %338 = vst.msk [vmem:[#allocation2 + $0x80] sm:$0x7] %vm337, %v336
      %v339 = vld [vmem:[#allocation2] sm:$0xff]
      %v340 = vld [vmem:[#allocation2 + $0x8] sm:$0xff]
      %v341 = vld [vmem:[#allocation2 + $0x10] sm:$0xff]
      %v342 = vld [vmem:[#allocation2 + $0x18] sm:$0xff]
      %v343 = vld [vmem:[#allocation2 + $0x20] sm:$0xff]
      %v344 = vld [vmem:[#allocation2 + $0x28] sm:$0xff]
      %v345 = vld [vmem:[#allocation2 + $0x30] sm:$0xff]
      %v346 = vld [vmem:[#allocation2 + $0x38] sm:$0xff]
      %v347 = vld [vmem:[#allocation2 + $0x40] sm:$0xff]
      %v348 = vld [vmem:[#allocation2 + $0x48] sm:$0xff]
      %v349 = vld [vmem:[#allocation2 + $0x50] sm:$0xff]
      %v350 = vld [vmem:[#allocation2 + $0x58] sm:$0xff]
      %v351 = vld [vmem:[#allocation2 + $0x60] sm:$0xff]
      %v352 = vld [vmem:[#allocation2 + $0x68] sm:$0xff]
      %v353 = vld [vmem:[#allocation2 + $0x70] sm:$0xff]
      %v354 = vld [vmem:[#allocation2 + $0x78] sm:$0xff]
      %v355 = vld [vmem:[%s2] sm:$0xff]
      %v356 = vld [vmem:[%s2 + $0x8] sm:$0xff]
      %v357 = vld [vmem:[%s2 + $0x10] sm:$0xff]
      %v358 = vld [vmem:[%s2 + $0x18] sm:$0xff]
      %v359 = vld [vmem:[%s2 + $0x20] sm:$0xff]
      %v360 = vld [vmem:[%s2 + $0x28] sm:$0xff]
      %v361 = vld [vmem:[%s2 + $0x30] sm:$0xff]
      %v362 = vld [vmem:[%s2 + $0x38] sm:$0xff]
      %v363 = vld [vmem:[%s2 + $0x40] sm:$0xff]
      %v364 = vld [vmem:[%s2 + $0x48] sm:$0xff]
      %v365 = vld [vmem:[%s2 + $0x50] sm:$0xff]
      %v366 = vld [vmem:[%s2 + $0x58] sm:$0xff]
      %v367 = vld [vmem:[%s2 + $0x60] sm:$0xff]
      %v368 = vld [vmem:[%s2 + $0x68] sm:$0xff]
      %v369 = vld [vmem:[%s2 + $0x70] sm:$0xff]
      %v370 = vld [vmem:[%s2 + $0x78] sm:$0xff]
      %v371 = vld [vmem:[#allocation2 + $0x1] sm:$0xff]
      %v372 = vld [vmem:[#allocation2 + $0x9] sm:$0xff]
      %v373 = vld [vmem:[#allocation2 + $0x11] sm:$0xff]
      %v374 = vld [vmem:[#allocation2 + $0x19] sm:$0xff]
      %v375 = vld [vmem:[#allocation2 + $0x21] sm:$0xff]
      %v376 = vld [vmem:[#allocation2 + $0x29] sm:$0xff]
      %v377 = vld [vmem:[#allocation2 + $0x31] sm:$0xff]
      %v378 = vld [vmem:[#allocation2 + $0x39] sm:$0xff]
      %v379 = vld [vmem:[#allocation2 + $0x41] sm:$0xff]
      %v380 = vld [vmem:[#allocation2 + $0x49] sm:$0xff]
      %v381 = vld [vmem:[#allocation2 + $0x51] sm:$0xff]
      %v382 = vld [vmem:[#allocation2 + $0x59] sm:$0xff]
      %v383 = vld [vmem:[#allocation2 + $0x61] sm:$0xff]
      %v384 = vld [vmem:[#allocation2 + $0x69] sm:$0xff]
      %v385 = vld [vmem:[#allocation2 + $0x71] sm:$0xff]
      %v386 = vld [vmem:[#allocation2 + $0x79] sm:$0xff]
      %s387 = scalar_lea.vmem %s2, 128
      %v388 = vld [vmem:[%s387] sm:$0xff]
      %v389 = vld [vmem:[%s387 + $0x8] sm:$0xff]
      %v390 = vld [vmem:[%s387 + $0x10] sm:$0xff]
      %v391 = vld [vmem:[%s387 + $0x18] sm:$0xff]
      %v392 = vld [vmem:[%s387 + $0x20] sm:$0xff]
      %v393 = vld [vmem:[%s387 + $0x28] sm:$0xff]
      %v394 = vld [vmem:[%s387 + $0x30] sm:$0xff]
      %v395 = vld [vmem:[%s387 + $0x38] sm:$0xff]
      %v396 = vld [vmem:[%s387 + $0x40] sm:$0xff]
      %v397 = vld [vmem:[%s387 + $0x48] sm:$0xff]
      %v398 = vld [vmem:[%s387 + $0x50] sm:$0xff]
      %v399 = vld [vmem:[%s387 + $0x58] sm:$0xff]
      %v400 = vld [vmem:[%s387 + $0x60] sm:$0xff]
      %v401 = vld [vmem:[%s387 + $0x68] sm:$0xff]
      %v402 = vld [vmem:[%s387 + $0x70] sm:$0xff]
      %v403 = vld [vmem:[%s387 + $0x78] sm:$0xff]
      %v405 = vsel %vm319, %v371, 0
      %v408 = vsel %vm319, %v372, 0
      %v411 = vsel %vm319, %v373, 0
      %v414 = vsel %vm319, %v374, 0
      %v417 = vsel %vm319, %v375, 0
      %v420 = vsel %vm319, %v376, 0
      %v423 = vsel %vm319, %v377, 0
      %v426 = vsel %vm319, %v378, 0
      %v429 = vsel %vm319, %v379, 0
      %v432 = vsel %vm319, %v380, 0
      %v435 = vsel %vm319, %v381, 0
      %v438 = vsel %vm319, %v382, 0
      %v441 = vsel %vm319, %v383, 0
      %v444 = vsel %vm319, %v384, 0
      %v447 = vsel %vm319, %v385, 0
      %v450 = vsel %vm319, %v386, 0
      %v452 = vand.u32 %v389, 4294901760
      %453 = vmatprep.subr.mxu0 %v452
      %v454 = vand.u32 %v388, 4294901760
      %455 = vmatpush1.msra.mxu0 %v454
      %v456 = vand.u32 %v391, 4294901760
      %457 = vmatprep.subr.mxu0 %v456
      %v458 = vand.u32 %v390, 4294901760
      %459 = vmatpush1.msra.mxu0 %v458
      %v460 = vand.u32 %v393, 4294901760
      %461 = vmatprep.subr.mxu0 %v460
      %v462 = vand.u32 %v392, 4294901760
      %463 = vmatpush1.msra.mxu0 %v462
      %v464 = vand.u32 %v395, 4294901760
      %465 = vmatprep.subr.mxu0 %v464
      %v466 = vand.u32 %v394, 4294901760
      %467 = vmatpush1.msra.mxu0 %v466
      %v468 = vand.u32 %v397, 4294901760
      %469 = vmatprep.subr.mxu0 %v468
      %v470 = vand.u32 %v396, 4294901760
      %471 = vmatpush1.msra.mxu0 %v470
      %v472 = vand.u32 %v399, 4294901760
      %473 = vmatprep.subr.mxu0 %v472
      %v474 = vand.u32 %v398, 4294901760
      %475 = vmatpush1.msra.mxu0 %v474
      %v476 = vand.u32 %v401, 4294901760
      %477 = vmatprep.subr.mxu0 %v476
      %v478 = vand.u32 %v400, 4294901760
      %479 = vmatpush1.msra.mxu0 %v478
      %v480 = vand.u32 %v403, 4294901760
      %481 = vmatprep.subr.mxu0 %v480
      %v482 = vand.u32 %v402, 4294901760
      %483 = vmatpush1.msra.mxu0 %v482
      %484 = vmatprep.subr.mxu0 0.0
      %485 = vmatpush1.msra.mxu0 0.0
      %486 = vmatprep.subr.mxu0 0.0
      %487 = vmatpush1.msra.mxu0 0.0
      %488 = vmatprep.subr.mxu0 0.0
      %489 = vmatpush1.msra.mxu0 0.0
      %490 = vmatprep.subr.mxu0 0.0
      %491 = vmatpush1.msra.mxu0 0.0
      %492 = vmatprep.subr.mxu0 0.0
      %493 = vmatpush1.msra.mxu0 0.0
      %494 = vmatprep.subr.mxu0 0.0
      %495 = vmatpush1.msra.mxu0 0.0
      %496 = vmatprep.subr.mxu0 0.0
      %497 = vmatpush1.msra.mxu0 0.0
      %498 = vmatprep.subr.mxu0 0.0
      %499 = vmatpush1.msra.mxu0 0.0
      %500 = vmatprep.subr.mxu0 0.0
      %501 = vmatpush1.msra.mxu0 0.0
      %502 = vmatprep.subr.mxu0 0.0
      %503 = vmatpush1.msra.mxu0 0.0
      %504 = vmatprep.subr.mxu0 0.0
      %505 = vmatpush1.msra.mxu0 0.0
      %506 = vmatprep.subr.mxu0 0.0
      %507 = vmatpush1.msra.mxu0 0.0
      %508 = vmatprep.subr.mxu0 0.0
      %509 = vmatpush1.msra.mxu0 0.0
      %510 = vmatprep.subr.mxu0 0.0
      %511 = vmatpush1.msra.mxu0 0.0
      %512 = vmatprep.subr.mxu0 0.0
      %513 = vmatpush1.msra.mxu0 0.0
      %514 = vmatprep.subr.mxu0 0.0
      %515 = vmatpush1.msra.mxu0 0.0
      %516 = vmatprep.subr.mxu0 0.0
      %517 = vmatpush1.msra.mxu0 0.0
      %518 = vmatprep.subr.mxu0 0.0
      %519 = vmatpush1.msra.mxu0 0.0
      %520 = vmatprep.subr.mxu0 0.0
      %521 = vmatpush1.msra.mxu0 0.0
      %522 = vmatprep.subr.mxu0 0.0
      %523 = vmatpush1.msra.mxu0 0.0
      %524 = vmatprep.subr.mxu0 0.0
      %525 = vmatpush1.msra.mxu0 0.0
      %526 = vmatprep.subr.mxu0 0.0
      %527 = vmatpush1.msra.mxu0 0.0
      %528 = vmatprep.subr.mxu0 0.0
      %529 = vmatpush1.msra.mxu0 0.0
      %530 = vmatprep.subr.mxu0 0.0
      %531 = vmatpush1.msra.mxu0 0.0
      %532 = vmatprep.mubr.f32.mxu0 0.0
      %v533 = vand.u32 %v405, 4294901760
      %v534 = vsub.f32 %v405, %v533
      %v535 = vand.u32 %v534, 4294901760
      %v536 = vsub.f32 %v534, %v535
      %v537 = vand.u32 %v536, 4294901760
      %538 = vmatmul.mubr.f32.gmra.mrb[0].mxu0 %v537
      %v539 = vpop.f32.mrb[0].mxu0
      %v540 = vadd.f32 0.0, %v539
      %v541 = vpop.f32.mrb[0].mxu0
      %v542 = vadd.f32 0.0, %v541
      %543 = vmatprep.mubr.f32.mxu0 0.0
      %v544 = vand.u32 %v408, 4294901760
      %v545 = vsub.f32 %v408, %v544
      %v546 = vand.u32 %v545, 4294901760
      %v547 = vsub.f32 %v545, %v546
      %v548 = vand.u32 %v547, 4294901760
      %549 = vmatmul.mubr.f32.gmra.mrb[0].mxu0 %v548
      %v550 = vpop.f32.mrb[0].mxu0
      %v551 = vadd.f32 0.0, %v550
      %v552 = vpop.f32.mrb[0].mxu0
      %v553 = vadd.f32 0.0, %v552
      %554 = vmatprep.mubr.f32.mxu0 0.0
      %v555 = vand.u32 %v411, 4294901760
      %v556 = vsub.f32 %v411, %v555
      %v557 = vand.u32 %v556, 4294901760
      %v558 = vsub.f32 %v556, %v557
      %v559 = vand.u32 %v558, 4294901760
      %560 = vmatmul.mubr.f32.gmra.mrb[0].mxu0 %v559
      %v561 = vpop.f32.mrb[0].mxu0
      %v562 = vadd.f32 0.0, %v561
      %v563 = vpop.f32.mrb[0].mxu0
      %v564 = vadd.f32 0.0, %v563
      %565 = vmatprep.mubr.f32.mxu0 0.0
      %v566 = vand.u32 %v414, 4294901760
      %v567 = vsub.f32 %v414, %v566
      %v568 = vand.u32 %v567, 4294901760
      %v569 = vsub.f32 %v567, %v568
      %v570 = vand.u32 %v569, 4294901760
      %571 = vmatmul.mubr.f32.gmra.mrb[0].mxu0 %v570
      %v572 = vpop.f32.mrb[0].mxu0
      %v573 = vadd.f32 0.0, %v572
      %v574 = vpop.f32.mrb[0].mxu0
      %v575 = vadd.f32 0.0, %v574
      %576 = vmatprep.mubr.f32.mxu0 0.0
      %v577 = vand.u32 %v417, 4294901760
      %v578 = vsub.f32 %v417, %v577
      %v579 = vand.u32 %v578, 4294901760
      %v580 = vsub.f32 %v578, %v579
      %v581 = vand.u32 %v580, 4294901760
      %582 = vmatmul.mubr.f32.gmra.mrb[0].mxu0 %v581
      %v583 = vpop.f32.mrb[0].mxu0
      %v584 = vadd.f32 0.0, %v583
      %v585 = vpop.f32.mrb[0].mxu0
      %v586 = vadd.f32 0.0, %v585
      %587 = vmatprep.mubr.f32.mxu0 0.0
      %v588 = vand.u32 %v420, 4294901760
      %v589 = vsub.f32 %v420, %v588
      %v590 = vand.u32 %v589, 4294901760
      %v591 = vsub.f32 %v589, %v590
      %v592 = vand.u32 %v591, 4294901760
      %593 = vmatmul.mubr.f32.gmra.mrb[0].mxu0 %v592
      %v594 = vpop.f32.mrb[0].mxu0
      %v595 = vadd.f32 0.0, %v594
      %v596 = vpop.f32.mrb[0].mxu0
      %v597 = vadd.f32 0.0, %v596
      %598 = vmatprep.mubr.f32.mxu0 0.0
      %v599 = vand.u32 %v423, 4294901760
      %v600 = vsub.f32 %v423, %v599
      %v601 = vand.u32 %v600, 4294901760
      %v602 = vsub.f32 %v600, %v601
      %v603 = vand.u32 %v602, 4294901760
      %604 = vmatmul.mubr.f32.gmra.mrb[0].mxu0 %v603
      %v605 = vpop.f32.mrb[0].mxu0
      %v606 = vadd.f32 0.0, %v605
      %v607 = vpop.f32.mrb[0].mxu0
      %v608 = vadd.f32 0.0, %v607
      %609 = vmatprep.mubr.f32.mxu0 0.0
      %v610 = vand.u32 %v426, 4294901760
      %v611 = vsub.f32 %v426, %v610
      %v612 = vand.u32 %v611, 4294901760
      %v613 = vsub.f32 %v611, %v612
      %v614 = vand.u32 %v613, 4294901760
      %615 = vmatmul.mubr.f32.gmra.mrb[0].mxu0 %v614
      %v616 = vpop.f32.mrb[0].mxu0
      %v617 = vadd.f32 0.0, %v616
      %v618 = vpop.f32.mrb[0].mxu0
      %v619 = vadd.f32 0.0, %v618
      %620 = vmatprep.mubr.f32.mxu0 0.0
      %v621 = vand.u32 %v429, 4294901760
      %v622 = vsub.f32 %v429, %v621
      %v623 = vand.u32 %v622, 4294901760
      %v624 = vsub.f32 %v622, %v623
      %v625 = vand.u32 %v624, 4294901760
      %626 = vmatmul.mubr.f32.gmra.mrb[0].mxu0 %v625
      %v627 = vpop.f32.mrb[0].mxu0
      %v628 = vadd.f32 0.0, %v627
      %v629 = vpop.f32.mrb[0].mxu0
      %v630 = vadd.f32 0.0, %v629
      %631 = vmatprep.mubr.f32.mxu0 0.0
      %v632 = vand.u32 %v432, 4294901760
      %v633 = vsub.f32 %v432, %v632
      %v634 = vand.u32 %v633, 4294901760
      %v635 = vsub.f32 %v633, %v634
      %v636 = vand.u32 %v635, 4294901760
      %637 = vmatmul.mubr.f32.gmra.mrb[0].mxu0 %v636
      %v638 = vpop.f32.mrb[0].mxu0
      %v639 = vadd.f32 0.0, %v638
      %v640 = vpop.f32.mrb[0].mxu0
      %v641 = vadd.f32 0.0, %v640
      %642 = vmatprep.mubr.f32.mxu0 0.0
      %v643 = vand.u32 %v435, 4294901760
      %v644 = vsub.f32 %v435, %v643
      %v645 = vand.u32 %v644, 4294901760
      %v646 = vsub.f32 %v644, %v645
      %v647 = vand.u32 %v646, 4294901760
      %648 = vmatmul.mubr.f32.gmra.mrb[0].mxu0 %v647
      %v649 = vpop.f32.mrb[0].mxu0
      %v650 = vadd.f32 0.0, %v649
      %v651 = vpop.f32.mrb[0].mxu0
      %v652 = vadd.f32 0.0, %v651
      %653 = vmatprep.mubr.f32.mxu0 0.0
      %v654 = vand.u32 %v438, 4294901760
      %v655 = vsub.f32 %v438, %v654
      %v656 = vand.u32 %v655, 4294901760
      %v657 = vsub.f32 %v655, %v656
      %v658 = vand.u32 %v657, 4294901760
      %659 = vmatmul.mubr.f32.gmra.mrb[0].mxu0 %v658
      %v660 = vpop.f32.mrb[0].mxu0
      %v661 = vadd.f32 0.0, %v660
      %v662 = vpop.f32.mrb[0].mxu0
      %v663 = vadd.f32 0.0, %v662
      %664 = vmatprep.mubr.f32.mxu0 0.0
      %v665 = vand.u32 %v441, 4294901760
      %v666 = vsub.f32 %v441, %v665
      %v667 = vand.u32 %v666, 4294901760
      %v668 = vsub.f32 %v666, %v667
      %v669 = vand.u32 %v668, 4294901760
      %670 = vmatmul.mubr.f32.gmra.mrb[0].mxu0 %v669
      %v671 = vpop.f32.mrb[0].mxu0
      %v672 = vadd.f32 0.0, %v671
      %v673 = vpop.f32.mrb[0].mxu0
      %v674 = vadd.f32 0.0, %v673
      %675 = vmatprep.mubr.f32.mxu0 0.0
      %v676 = vand.u32 %v444, 4294901760
      %v677 = vsub.f32 %v444, %v676
      %v678 = vand.u32 %v677, 4294901760
      %v679 = vsub.f32 %v677, %v678
      %v680 = vand.u32 %v679, 4294901760
      %681 = vmatmul.mubr.f32.gmra.mrb[0].mxu0 %v680
      %v682 = vpop.f32.mrb[0].mxu0
      %v683 = vadd.f32 0.0, %v682
      %v684 = vpop.f32.mrb[0].mxu0
      %v685 = vadd.f32 0.0, %v684
      %686 = vmatprep.mubr.f32.mxu0 0.0
      %v687 = vand.u32 %v447, 4294901760
      %v688 = vsub.f32 %v447, %v687
      %v689 = vand.u32 %v688, 4294901760
      %v690 = vsub.f32 %v688, %v689
      %v691 = vand.u32 %v690, 4294901760
      %692 = vmatmul.mubr.f32.gmra.mrb[0].mxu0 %v691
      %v693 = vpop.f32.mrb[0].mxu0
      %v694 = vadd.f32 0.0, %v693
      %v695 = vpop.f32.mrb[0].mxu0
      %v696 = vadd.f32 0.0, %v695
      %697 = vmatprep.mubr.f32.mxu0 0.0
      %v698 = vand.u32 %v450, 4294901760
      %v699 = vsub.f32 %v450, %v698
      %v700 = vand.u32 %v699, 4294901760
      %v701 = vsub.f32 %v699, %v700
      %v702 = vand.u32 %v701, 4294901760
      %703 = vmatmul.mubr.f32.gmra.mrb[0].mxu0 %v702
      %v704 = vpop.f32.mrb[0].mxu0
      %v705 = vadd.f32 0.0, %v704
      %v706 = vpop.f32.mrb[0].mxu0
      %v707 = vadd.f32 0.0, %v706
      %708 = vdwg.mxu0
      %v709 = vand.u32 %v389, 4294901760
      %v710 = vsub.f32 %v389, %v709
      %v711 = vand.u32 %v710, 4294901760
      %v712 = vsub.f32 %v710, %v711
      %v713 = vand.u32 %v712, 4294901760
      %714 = vmatprep.subr.mxu0 %v713
      %v715 = vand.u32 %v388, 4294901760
      %v716 = vsub.f32 %v388, %v715
      %v717 = vand.u32 %v716, 4294901760
      %v718 = vsub.f32 %v716, %v717
      %v719 = vand.u32 %v718, 4294901760
      %720 = vmatpush1.msra.mxu0 %v719
      %v721 = vand.u32 %v391, 4294901760
      %v722 = vsub.f32 %v391, %v721
      %v723 = vand.u32 %v722, 4294901760
      %v724 = vsub.f32 %v722, %v723
      %v725 = vand.u32 %v724, 4294901760
      %726 = vmatprep.subr.mxu0 %v725
      %v727 = vand.u32 %v390, 4294901760
      %v728 = vsub.f32 %v390, %v727
      %v729 = vand.u32 %v728, 4294901760
      %v730 = vsub.f32 %v728, %v729
      %v731 = vand.u32 %v730, 4294901760
      %732 = vmatpush1.msra.mxu0 %v731
      %v733 = vand.u32 %v393, 4294901760
      %v734 = vsub.f32 %v393, %v733
      %v735 = vand.u32 %v734, 4294901760
      %v736 = vsub.f32 %v734, %v735
      %v737 = vand.u32 %v736, 4294901760
      %738 = vmatprep.subr.mxu0 %v737
      %v739 = vand.u32 %v392, 4294901760
      %v740 = vsub.f32 %v392, %v739
      %v741 = vand.u32 %v740, 4294901760
      %v742 = vsub.f32 %v740, %v741
      %v743 = vand.u32 %v742, 4294901760
      %744 = vmatpush1.msra.mxu0 %v743
      %v745 = vand.u32 %v395, 4294901760
      %v746 = vsub.f32 %v395, %v745
      %v747 = vand.u32 %v746, 4294901760
      %v748 = vsub.f32 %v746, %v747
      %v749 = vand.u32 %v748, 4294901760
      %750 = vmatprep.subr.mxu0 %v749
      %v751 = vand.u32 %v394, 4294901760
      %v752 = vsub.f32 %v394, %v751
      %v753 = vand.u32 %v752, 4294901760
      %v754 = vsub.f32 %v752, %v753
      %v755 = vand.u32 %v754, 4294901760
      %756 = vmatpush1.msra.mxu0 %v755
      %v757 = vand.u32 %v397, 4294901760
      %v758 = vsub.f32 %v397, %v757
      %v759 = vand.u32 %v758, 4294901760
      %v760 = vsub.f32 %v758, %v759
      %v761 = vand.u32 %v760, 4294901760
      %762 = vmatprep.subr.mxu0 %v761
      %v763 = vand.u32 %v396, 4294901760
      %v764 = vsub.f32 %v396, %v763
      %v765 = vand.u32 %v764, 4294901760
      %v766 = vsub.f32 %v764, %v765
      %v767 = vand.u32 %v766, 4294901760
      %768 = vmatpush1.msra.mxu0 %v767
      %v769 = vand.u32 %v399, 4294901760
      %v770 = vsub.f32 %v399, %v769
      %v771 = vand.u32 %v770, 4294901760
      %v772 = vsub.f32 %v770, %v771
      %v773 = vand.u32 %v772, 4294901760
      %774 = vmatprep.subr.mxu0 %v773
      %v775 = vand.u32 %v398, 4294901760
      %v776 = vsub.f32 %v398, %v775
      %v777 = vand.u32 %v776, 4294901760
      %v778 = vsub.f32 %v776, %v777
      %v779 = vand.u32 %v778, 4294901760
      %780 = vmatpush1.msra.mxu0 %v779
      %v781 = vand.u32 %v401, 4294901760
      %v782 = vsub.f32 %v401, %v781
      %v783 = vand.u32 %v782, 4294901760
      %v784 = vsub.f32 %v782, %v783
      %v785 = vand.u32 %v784, 4294901760
      %786 = vmatprep.subr.mxu0 %v785
      %v787 = vand.u32 %v400, 4294901760
      %v788 = vsub.f32 %v400, %v787
      %v789 = vand.u32 %v788, 4294901760
      %v790 = vsub.f32 %v788, %v789
      %v791 = vand.u32 %v790, 4294901760
      %792 = vmatpush1.msra.mxu0 %v791
      %v793 = vand.u32 %v403, 4294901760
      %v794 = vsub.f32 %v403, %v793
      %v795 = vand.u32 %v794, 4294901760
      %v796 = vsub.f32 %v794, %v795
      %v797 = vand.u32 %v796, 4294901760
      %798 = vmatprep.subr.mxu0 %v797
      %v799 = vand.u32 %v402, 4294901760
      %v800 = vsub.f32 %v402, %v799
      %v801 = vand.u32 %v800, 4294901760
      %v802 = vsub.f32 %v800, %v801
      %v803 = vand.u32 %v802, 4294901760
      %804 = vmatpush1.msra.mxu0 %v803
      %805 = vmatprep.subr.mxu0 0.0
      %806 = vmatpush1.msra.mxu0 0.0
      %807 = vmatprep.subr.mxu0 0.0
      %808 = vmatpush1.msra.mxu0 0.0
      %809 = vmatprep.subr.mxu0 0.0
      %810 = vmatpush1.msra.mxu0 0.0
      %811 = vmatprep.subr.mxu0 0.0
      %812 = vmatpush1.msra.mxu0 0.0
      %813 = vmatprep.subr.mxu0 0.0
      %814 = vmatpush1.msra.mxu0 0.0
      %815 = vmatprep.subr.mxu0 0.0
      %816 = vmatpush1.msra.mxu0 0.0
      %817 = vmatprep.subr.mxu0 0.0
      %818 = vmatpush1.msra.mxu0 0.0
      %819 = vmatprep.subr.mxu0 0.0
      %820 = vmatpush1.msra.mxu0 0.0
      %821 = vmatprep.subr.mxu0 0.0
      %822 = vmatpush1.msra.mxu0 0.0
      %823 = vmatprep.subr.mxu0 0.0
      %824 = vmatpush1.msra.mxu0 0.0
      %825 = vmatprep.subr.mxu0 0.0
      %826 = vmatpush1.msra.mxu0 0.0
      %827 = vmatprep.subr.mxu0 0.0
      %828 = vmatpush1.msra.mxu0 0.0
      %829 = vmatprep.subr.mxu0 0.0
      %830 = vmatpush1.msra.mxu0 0.0
      %831 = vmatprep.subr.mxu0 0.0
      %832 = vmatpush1.msra.mxu0 0.0
      %833 = vmatprep.subr.mxu0 0.0
      %834 = vmatpush1.msra.mxu0 0.0
      %835 = vmatprep.subr.mxu0 0.0
      %836 = vmatpush1.msra.mxu0 0.0
      %837 = vmatprep.subr.mxu0 0.0
      %838 = vmatpush1.msra.mxu0 0.0
      %839 = vmatprep.subr.mxu0 0.0
      %840 = vmatpush1.msra.mxu0 0.0
      %841 = vmatprep.subr.mxu0 0.0
      %842 = vmatpush1.msra.mxu0 0.0
      %843 = vmatprep.subr.mxu0 0.0
      %844 = vmatpush1.msra.mxu0 0.0
      %845 = vmatprep.subr.mxu0 0.0
      %846 = vmatpush1.msra.mxu0 0.0
      %847 = vmatprep.subr.mxu0 0.0
      %848 = vmatpush1.msra.mxu0 0.0
      %849 = vmatprep.subr.mxu0 0.0
      %850 = vmatpush1.msra.mxu0 0.0
      %851 = vmatprep.subr.mxu0 0.0
      %852 = vmatpush1.msra.mxu0 0.0
      %853 = vmatprep.mubr.f32.mxu0 0.0
      %v854 = vand.u32 %v405, 4294901760
      %855 = vmatmul.mubr.f32.gmra.mrb[0].mxu0 %v854
      %v856 = vpop.f32.mrb[0].mxu0
      %v857 = vadd.f32 %v540, %v856
      %v858 = vpop.f32.mrb[0].mxu0
      %v859 = vadd.f32 %v542, %v858
      %860 = vmatprep.mubr.f32.mxu0 0.0
      %v861 = vand.u32 %v408, 4294901760
      %862 = vmatmul.mubr.f32.gmra.mrb[0].mxu0 %v861
      %v863 = vpop.f32.mrb[0].mxu0
      %v864 = vadd.f32 %v551, %v863
      %v865 = vpop.f32.mrb[0].mxu0
      %v866 = vadd.f32 %v553, %v865
      %867 = vmatprep.mubr.f32.mxu0 0.0
      %v868 = vand.u32 %v411, 4294901760
      %869 = vmatmul.mubr.f32.gmra.mrb[0].mxu0 %v868
      %v870 = vpop.f32.mrb[0].mxu0
      %v871 = vadd.f32 %v562, %v870
      %v872 = vpop.f32.mrb[0].mxu0
      %v873 = vadd.f32 %v564, %v872
      %874 = vmatprep.mubr.f32.mxu0 0.0
      %v875 = vand.u32 %v414, 4294901760
      %876 = vmatmul.mubr.f32.gmra.mrb[0].mxu0 %v875
      %v877 = vpop.f32.mrb[0].mxu0
      %v878 = vadd.f32 %v573, %v877
      %v879 = vpop.f32.mrb[0].mxu0
      %v880 = vadd.f32 %v575, %v879
      %881 = vmatprep.mubr.f32.mxu0 0.0
      %v882 = vand.u32 %v417, 4294901760
      %883 = vmatmul.mubr.f32.gmra.mrb[0].mxu0 %v882
      %v884 = vpop.f32.mrb[0].mxu0
      %v885 = vadd.f32 %v584, %v884
      %v886 = vpop.f32.mrb[0].mxu0
      %v887 = vadd.f32 %v586, %v886
      %888 = vmatprep.mubr.f32.mxu0 0.0
      %v889 = vand.u32 %v420, 4294901760
      %890 = vmatmul.mubr.f32.gmra.mrb[0].mxu0 %v889
      %v891 = vpop.f32.mrb[0].mxu0
      %v892 = vadd.f32 %v595, %v891
      %v893 = vpop.f32.mrb[0].mxu0
      %v894 = vadd.f32 %v597, %v893
      %895 = vmatprep.mubr.f32.mxu0 0.0
      %v896 = vand.u32 %v423, 4294901760
      %897 = vmatmul.mubr.f32.gmra.mrb[0].mxu0 %v896
      %v898 = vpop.f32.mrb[0].mxu0
      %v899 = vadd.f32 %v606, %v898
      %v900 = vpop.f32.mrb[0].mxu0
      %v901 = vadd.f32 %v608, %v900
      %902 = vmatprep.mubr.f32.mxu0 0.0
      %v903 = vand.u32 %v426, 4294901760
      %904 = vmatmul.mubr.f32.gmra.mrb[0].mxu0 %v903
      %v905 = vpop.f32.mrb[0].mxu0
      %v906 = vadd.f32 %v617, %v905
      %v907 = vpop.f32.mrb[0].mxu0
      %v908 = vadd.f32 %v619, %v907
      %909 = vmatprep.mubr.f32.mxu0 0.0
      %v910 = vand.u32 %v429, 4294901760
      %911 = vmatmul.mubr.f32.gmra.mrb[0].mxu0 %v910
      %v912 = vpop.f32.mrb[0].mxu0
      %v913 = vadd.f32 %v628, %v912
      %v914 = vpop.f32.mrb[0].mxu0
      %v915 = vadd.f32 %v630, %v914
      %916 = vmatprep.mubr.f32.mxu0 0.0
      %v917 = vand.u32 %v432, 4294901760
      %918 = vmatmul.mubr.f32.gmra.mrb[0].mxu0 %v917
      %v919 = vpop.f32.mrb[0].mxu0
      %v920 = vadd.f32 %v639, %v919
      %v921 = vpop.f32.mrb[0].mxu0
      %v922 = vadd.f32 %v641, %v921
      %923 = vmatprep.mubr.f32.mxu0 0.0
      %v924 = vand.u32 %v435, 4294901760
      %925 = vmatmul.mubr.f32.gmra.mrb[0].mxu0 %v924
      %v926 = vpop.f32.mrb[0].mxu0
      %v927 = vadd.f32 %v650, %v926
      %v928 = vpop.f32.mrb[0].mxu0
      %v929 = vadd.f32 %v652, %v928
      %930 = vmatprep.mubr.f32.mxu0 0.0
      %v931 = vand.u32 %v438, 4294901760
      %932 = vmatmul.mubr.f32.gmra.mrb[0].mxu0 %v931
      %v933 = vpop.f32.mrb[0].mxu0
      %v934 = vadd.f32 %v661, %v933
      %v935 = vpop.f32.mrb[0].mxu0
      %v936 = vadd.f32 %v663, %v935
      %937 = vmatprep.mubr.f32.mxu0 0.0
      %v938 = vand.u32 %v441, 4294901760
      %939 = vmatmul.mubr.f32.gmra.mrb[0].mxu0 %v938
      %v940 = vpop.f32.mrb[0].mxu0
      %v941 = vadd.f32 %v672, %v940
      %v942 = vpop.f32.mrb[0].mxu0
      %v943 = vadd.f32 %v674, %v942
      %944 = vmatprep.mubr.f32.mxu0 0.0
      %v945 = vand.u32 %v444, 4294901760
      %946 = vmatmul.mubr.f32.gmra.mrb[0].mxu0 %v945
      %v947 = vpop.f32.mrb[0].mxu0
      %v948 = vadd.f32 %v683, %v947
      %v949 = vpop.f32.mrb[0].mxu0
      %v950 = vadd.f32 %v685, %v949
      %951 = vmatprep.mubr.f32.mxu0 0.0
      %v952 = vand.u32 %v447, 4294901760
      %953 = vmatmul.mubr.f32.gmra.mrb[0].mxu0 %v952
      %v954 = vpop.f32.mrb[0].mxu0
      %v955 = vadd.f32 %v694, %v954
      %v956 = vpop.f32.mrb[0].mxu0
      %v957 = vadd.f32 %v696, %v956
      %958 = vmatprep.mubr.f32.mxu0 0.0
      %v959 = vand.u32 %v450, 4294901760
      %960 = vmatmul.mubr.f32.gmra.mrb[0].mxu0 %v959
      %v961 = vpop.f32.mrb[0].mxu0
      %v962 = vadd.f32 %v705, %v961
      %v963 = vpop.f32.mrb[0].mxu0
      %v964 = vadd.f32 %v707, %v963
      %965 = vdwg.mxu0
      %v966 = vand.u32 %v389, 4294901760
      %v967 = vsub.f32 %v389, %v966
      %968 = vmatprep.subr.mxu0 %v967
      %v969 = vand.u32 %v388, 4294901760
      %v970 = vsub.f32 %v388, %v969
      %971 = vmatpush1.msra.mxu0 %v970
      %v972 = vand.u32 %v391, 4294901760
      %v973 = vsub.f32 %v391, %v972
      %974 = vmatprep.subr.mxu0 %v973
      %v975 = vand.u32 %v390, 4294901760
      %v976 = vsub.f32 %v390, %v975
      %977 = vmatpush1.msra.mxu0 %v976
      %v978 = vand.u32 %v393, 4294901760
      %v979 = vsub.f32 %v393, %v978
      %980 = vmatprep.subr.mxu0 %v979
      %v981 = vand.u32 %v392, 4294901760
      %v982 = vsub.f32 %v392, %v981
      %983 = vmatpush1.msra.mxu0 %v982
      %v984 = vand.u32 %v395, 4294901760
      %v985 = vsub.f32 %v395, %v984
      %986 = vmatprep.subr.mxu0 %v985
      %v987 = vand.u32 %v394, 4294901760
      %v988 = vsub.f32 %v394, %v987
      %989 = vmatpush1.msra.mxu0 %v988
      %v990 = vand.u32 %v397, 4294901760
      %v991 = vsub.f32 %v397, %v990
      %992 = vmatprep.subr.mxu0 %v991
      %v993 = vand.u32 %v396, 4294901760
      %v994 = vsub.f32 %v396, %v993
      %995 = vmatpush1.msra.mxu0 %v994
      %v996 = vand.u32 %v399, 4294901760
      %v997 = vsub.f32 %v399, %v996
      %998 = vmatprep.subr.mxu0 %v997
      %v999 = vand.u32 %v398, 4294901760
      %v1000 = vsub.f32 %v398, %v999
      %1001 = vmatpush1.msra.mxu0 %v1000
      %v1002 = vand.u32 %v401, 4294901760
      %v1003 = vsub.f32 %v401, %v1002
      %1004 = vmatprep.subr.mxu0 %v1003
      %v1005 = vand.u32 %v400, 4294901760
      %v1006 = vsub.f32 %v400, %v1005
      %1007 = vmatpush1.msra.mxu0 %v1006
      %v1008 = vand.u32 %v403, 4294901760
      %v1009 = vsub.f32 %v403, %v1008
      %1010 = vmatprep.subr.mxu0 %v1009
      %v1011 = vand.u32 %v402, 4294901760
      %v1012 = vsub.f32 %v402, %v1011
      %1013 = vmatpush1.msra.mxu0 %v1012
      %1014 = vmatprep.subr.mxu0 0.0
      %1015 = vmatpush1.msra.mxu0 0.0
      %1016 = vmatprep.subr.mxu0 0.0
      %1017 = vmatpush1.msra.mxu0 0.0
      %1018 = vmatprep.subr.mxu0 0.0
      %1019 = vmatpush1.msra.mxu0 0.0
      %1020 = vmatprep.subr.mxu0 0.0
      %1021 = vmatpush1.msra.mxu0 0.0
      %1022 = vmatprep.subr.mxu0 0.0
      %1023 = vmatpush1.msra.mxu0 0.0
      %1024 = vmatprep.subr.mxu0 0.0
      %1025 = vmatpush1.msra.mxu0 0.0
      %1026 = vmatprep.subr.mxu0 0.0
      %1027 = vmatpush1.msra.mxu0 0.0
      %1028 = vmatprep.subr.mxu0 0.0
      %1029 = vmatpush1.msra.mxu0 0.0
      %1030 = vmatprep.subr.mxu0 0.0
      %1031 = vmatpush1.msra.mxu0 0.0
      %1032 = vmatprep.subr.mxu0 0.0
      %1033 = vmatpush1.msra.mxu0 0.0
      %1034 = vmatprep.subr.mxu0 0.0
      %1035 = vmatpush1.msra.mxu0 0.0
      %1036 = vmatprep.subr.mxu0 0.0
      %1037 = vmatpush1.msra.mxu0 0.0
      %1038 = vmatprep.subr.mxu0 0.0
      %1039 = vmatpush1.msra.mxu0 0.0
      %1040 = vmatprep.subr.mxu0 0.0
      %1041 = vmatpush1.msra.mxu0 0.0
      %1042 = vmatprep.subr.mxu0 0.0
      %1043 = vmatpush1.msra.mxu0 0.0
      %1044 = vmatprep.subr.mxu0 0.0
      %1045 = vmatpush1.msra.mxu0 0.0
      %1046 = vmatprep.subr.mxu0 0.0
      %1047 = vmatpush1.msra.mxu0 0.0
      %1048 = vmatprep.subr.mxu0 0.0
      %1049 = vmatpush1.msra.mxu0 0.0
      %1050 = vmatprep.subr.mxu0 0.0
      %1051 = vmatpush1.msra.mxu0 0.0
      %1052 = vmatprep.subr.mxu0 0.0
      %1053 = vmatpush1.msra.mxu0 0.0
      %1054 = vmatprep.subr.mxu0 0.0
      %1055 = vmatpush1.msra.mxu0 0.0
      %1056 = vmatprep.subr.mxu0 0.0
      %1057 = vmatpush1.msra.mxu0 0.0
      %1058 = vmatprep.subr.mxu0 0.0
      %1059 = vmatpush1.msra.mxu0 0.0
      %1060 = vmatprep.subr.mxu0 0.0
      %1061 = vmatpush1.msra.mxu0 0.0
      %1062 = vmatprep.mubr.f32.mxu0 0.0
      %v1063 = vand.u32 %v405, 4294901760
      %v1064 = vsub.f32 %v405, %v1063
      %1065 = vmatmul.mubr.f32.gmra.mrb[0].mxu0 %v1064
      %v1066 = vpop.f32.mrb[0].mxu0
      %v1067 = vadd.f32 %v857, %v1066
      %v1068 = vpop.f32.mrb[0].mxu0
      %v1069 = vadd.f32 %v859, %v1068
      %1070 = vmatprep.mubr.f32.mxu0 0.0
      %v1071 = vand.u32 %v408, 4294901760
      %v1072 = vsub.f32 %v408, %v1071
      %1073 = vmatmul.mubr.f32.gmra.mrb[0].mxu0 %v1072
      %v1074 = vpop.f32.mrb[0].mxu0
      %v1075 = vadd.f32 %v864, %v1074
      %v1076 = vpop.f32.mrb[0].mxu0
      %v1077 = vadd.f32 %v866, %v1076
      %1078 = vmatprep.mubr.f32.mxu0 0.0
      %v1079 = vand.u32 %v411, 4294901760
      %v1080 = vsub.f32 %v411, %v1079
      %1081 = vmatmul.mubr.f32.gmra.mrb[0].mxu0 %v1080
      %v1082 = vpop.f32.mrb[0].mxu0
      %v1083 = vadd.f32 %v871, %v1082
      %v1084 = vpop.f32.mrb[0].mxu0
      %v1085 = vadd.f32 %v873, %v1084
      %1086 = vmatprep.mubr.f32.mxu0 0.0
      %v1087 = vand.u32 %v414, 4294901760
      %v1088 = vsub.f32 %v414, %v1087
      %1089 = vmatmul.mubr.f32.gmra.mrb[0].mxu0 %v1088
      %v1090 = vpop.f32.mrb[0].mxu0
      %v1091 = vadd.f32 %v878, %v1090
      %v1092 = vpop.f32.mrb[0].mxu0
      %v1093 = vadd.f32 %v880, %v1092
      %1094 = vmatprep.mubr.f32.mxu0 0.0
      %v1095 = vand.u32 %v417, 4294901760
      %v1096 = vsub.f32 %v417, %v1095
      %1097 = vmatmul.mubr.f32.gmra.mrb[0].mxu0 %v1096
      %v1098 = vpop.f32.mrb[0].mxu0
      %v1099 = vadd.f32 %v885, %v1098
      %v1100 = vpop.f32.mrb[0].mxu0
      %v1101 = vadd.f32 %v887, %v1100
      %1102 = vmatprep.mubr.f32.mxu0 0.0
      %v1103 = vand.u32 %v420, 4294901760
      %v1104 = vsub.f32 %v420, %v1103
      %1105 = vmatmul.mubr.f32.gmra.mrb[0].mxu0 %v1104
      %v1106 = vpop.f32.mrb[0].mxu0
      %v1107 = vadd.f32 %v892, %v1106
      %v1108 = vpop.f32.mrb[0].mxu0
      %v1109 = vadd.f32 %v894, %v1108
      %1110 = vmatprep.mubr.f32.mxu0 0.0
      %v1111 = vand.u32 %v423, 4294901760
      %v1112 = vsub.f32 %v423, %v1111
      %1113 = vmatmul.mubr.f32.gmra.mrb[0].mxu0 %v1112
      %v1114 = vpop.f32.mrb[0].mxu0
      %v1115 = vadd.f32 %v899, %v1114
      %v1116 = vpop.f32.mrb[0].mxu0
      %v1117 = vadd.f32 %v901, %v1116
      %1118 = vmatprep.mubr.f32.mxu0 0.0
      %v1119 = vand.u32 %v426, 4294901760
      %v1120 = vsub.f32 %v426, %v1119
      %1121 = vmatmul.mubr.f32.gmra.mrb[0].mxu0 %v1120
      %v1122 = vpop.f32.mrb[0].mxu0
      %v1123 = vadd.f32 %v906, %v1122
      %v1124 = vpop.f32.mrb[0].mxu0
      %v1125 = vadd.f32 %v908, %v1124
      %1126 = vmatprep.mubr.f32.mxu0 0.0
      %v1127 = vand.u32 %v429, 4294901760
      %v1128 = vsub.f32 %v429, %v1127
      %1129 = vmatmul.mubr.f32.gmra.mrb[0].mxu0 %v1128
      %v1130 = vpop.f32.mrb[0].mxu0
      %v1131 = vadd.f32 %v913, %v1130
      %v1132 = vpop.f32.mrb[0].mxu0
      %v1133 = vadd.f32 %v915, %v1132
      %1134 = vmatprep.mubr.f32.mxu0 0.0
      %v1135 = vand.u32 %v432, 4294901760
      %v1136 = vsub.f32 %v432, %v1135
      %1137 = vmatmul.mubr.f32.gmra.mrb[0].mxu0 %v1136
      %v1138 = vpop.f32.mrb[0].mxu0
      %v1139 = vadd.f32 %v920, %v1138
      %v1140 = vpop.f32.mrb[0].mxu0
      %v1141 = vadd.f32 %v922, %v1140
      %1142 = vmatprep.mubr.f32.mxu0 0.0
      %v1143 = vand.u32 %v435, 4294901760
      %v1144 = vsub.f32 %v435, %v1143
      %1145 = vmatmul.mubr.f32.gmra.mrb[0].mxu0 %v1144
      %v1146 = vpop.f32.mrb[0].mxu0
      %v1147 = vadd.f32 %v927, %v1146
      %v1148 = vpop.f32.mrb[0].mxu0
      %v1149 = vadd.f32 %v929, %v1148
      %1150 = vmatprep.mubr.f32.mxu0 0.0
      %v1151 = vand.u32 %v438, 4294901760
      %v1152 = vsub.f32 %v438, %v1151
      %1153 = vmatmul.mubr.f32.gmra.mrb[0].mxu0 %v1152
      %v1154 = vpop.f32.mrb[0].mxu0
      %v1155 = vadd.f32 %v934, %v1154
      %v1156 = vpop.f32.mrb[0].mxu0
      %v1157 = vadd.f32 %v936, %v1156
      %1158 = vmatprep.mubr.f32.mxu0 0.0
      %v1159 = vand.u32 %v441, 4294901760
      %v1160 = vsub.f32 %v441, %v1159
      %1161 = vmatmul.mubr.f32.gmra.mrb[0].mxu0 %v1160
      %v1162 = vpop.f32.mrb[0].mxu0
      %v1163 = vadd.f32 %v941, %v1162
      %v1164 = vpop.f32.mrb[0].mxu0
      %v1165 = vadd.f32 %v943, %v1164
      %1166 = vmatprep.mubr.f32.mxu0 0.0
      %v1167 = vand.u32 %v444, 4294901760
      %v1168 = vsub.f32 %v444, %v1167
      %1169 = vmatmul.mubr.f32.gmra.mrb[0].mxu0 %v1168
      %v1170 = vpop.f32.mrb[0].mxu0
      %v1171 = vadd.f32 %v948, %v1170
      %v1172 = vpop.f32.mrb[0].mxu0
      %v1173 = vadd.f32 %v950, %v1172
      %1174 = vmatprep.mubr.f32.mxu0 0.0
      %v1175 = vand.u32 %v447, 4294901760
      %v1176 = vsub.f32 %v447, %v1175
      %1177 = vmatmul.mubr.f32.gmra.mrb[0].mxu0 %v1176
      %v1178 = vpop.f32.mrb[0].mxu0
      %v1179 = vadd.f32 %v955, %v1178
      %v1180 = vpop.f32.mrb[0].mxu0
      %v1181 = vadd.f32 %v957, %v1180
      %1182 = vmatprep.mubr.f32.mxu0 0.0
      %v1183 = vand.u32 %v450, 4294901760
      %v1184 = vsub.f32 %v450, %v1183
      %1185 = vmatmul.mubr.f32.gmra.mrb[0].mxu0 %v1184
      %v1186 = vpop.f32.mrb[0].mxu0
      %v1187 = vadd.f32 %v962, %v1186
      %v1188 = vpop.f32.mrb[0].mxu0
      %v1189 = vadd.f32 %v964, %v1188
      %1190 = vdwg.mxu0
      %v1191 = vand.u32 %v389, 4294901760
      %1192 = vmatprep.subr.mxu0 %v1191
      %v1193 = vand.u32 %v388, 4294901760
      %1194 = vmatpush1.msra.mxu0 %v1193
      %v1195 = vand.u32 %v391, 4294901760
      %1196 = vmatprep.subr.mxu0 %v1195
      %v1197 = vand.u32 %v390, 4294901760
      %1198 = vmatpush1.msra.mxu0 %v1197
      %v1199 = vand.u32 %v393, 4294901760
      %1200 = vmatprep.subr.mxu0 %v1199
      %v1201 = vand.u32 %v392, 4294901760
      %1202 = vmatpush1.msra.mxu0 %v1201
      %v1203 = vand.u32 %v395, 4294901760
      %1204 = vmatprep.subr.mxu0 %v1203
      %v1205 = vand.u32 %v394, 4294901760
      %1206 = vmatpush1.msra.mxu0 %v1205
      %v1207 = vand.u32 %v397, 4294901760
      %1208 = vmatprep.subr.mxu0 %v1207
      %v1209 = vand.u32 %v396, 4294901760
      %1210 = vmatpush1.msra.mxu0 %v1209
      %v1211 = vand.u32 %v399, 4294901760
      %1212 = vmatprep.subr.mxu0 %v1211
      %v1213 = vand.u32 %v398, 4294901760
      %1214 = vmatpush1.msra.mxu0 %v1213
      %v1215 = vand.u32 %v401, 4294901760
      %1216 = vmatprep.subr.mxu0 %v1215
      %v1217 = vand.u32 %v400, 4294901760
      %1218 = vmatpush1.msra.mxu0 %v1217
      %v1219 = vand.u32 %v403, 4294901760
      %1220 = vmatprep.subr.mxu0 %v1219
      %v1221 = vand.u32 %v402, 4294901760
      %1222 = vmatpush1.msra.mxu0 %v1221
      %1223 = vmatprep.subr.mxu0 0.0
      %1224 = vmatpush1.msra.mxu0 0.0
      %1225 = vmatprep.subr.mxu0 0.0
      %1226 = vmatpush1.msra.mxu0 0.0
      %1227 = vmatprep.subr.mxu0 0.0
      %1228 = vmatpush1.msra.mxu0 0.0
      %1229 = vmatprep.subr.mxu0 0.0
      %1230 = vmatpush1.msra.mxu0 0.0
      %1231 = vmatprep.subr.mxu0 0.0
      %1232 = vmatpush1.msra.mxu0 0.0
      %1233 = vmatprep.subr.mxu0 0.0
      %1234 = vmatpush1.msra.mxu0 0.0
      %1235 = vmatprep.subr.mxu0 0.0
      %1236 = vmatpush1.msra.mxu0 0.0
      %1237 = vmatprep.subr.mxu0 0.0
      %1238 = vmatpush1.msra.mxu0 0.0
      %1239 = vmatprep.subr.mxu0 0.0
      %1240 = vmatpush1.msra.mxu0 0.0
      %1241 = vmatprep.subr.mxu0 0.0
      %1242 = vmatpush1.msra.mxu0 0.0
      %1243 = vmatprep.subr.mxu0 0.0
      %1244 = vmatpush1.msra.mxu0 0.0
      %1245 = vmatprep.subr.mxu0 0.0
      %1246 = vmatpush1.msra.mxu0 0.0
      %1247 = vmatprep.subr.mxu0 0.0
      %1248 = vmatpush1.msra.mxu0 0.0
      %1249 = vmatprep.subr.mxu0 0.0
      %1250 = vmatpush1.msra.mxu0 0.0
      %1251 = vmatprep.subr.mxu0 0.0
      %1252 = vmatpush1.msra.mxu0 0.0
      %1253 = vmatprep.subr.mxu0 0.0
      %1254 = vmatpush1.msra.mxu0 0.0
      %1255 = vmatprep.subr.mxu0 0.0
      %1256 = vmatpush1.msra.mxu0 0.0
      %1257 = vmatprep.subr.mxu0 0.0
      %1258 = vmatpush1.msra.mxu0 0.0
      %1259 = vmatprep.subr.mxu0 0.0
      %1260 = vmatpush1.msra.mxu0 0.0
      %1261 = vmatprep.subr.mxu0 0.0
      %1262 = vmatpush1.msra.mxu0 0.0
      %1263 = vmatprep.subr.mxu0 0.0
      %1264 = vmatpush1.msra.mxu0 0.0
      %1265 = vmatprep.subr.mxu0 0.0
      %1266 = vmatpush1.msra.mxu0 0.0
      %1267 = vmatprep.subr.mxu0 0.0
      %1268 = vmatpush1.msra.mxu0 0.0
      %1269 = vmatprep.subr.mxu0 0.0
      %1270 = vmatpush1.msra.mxu0 0.0
      %1271 = vmatprep.mubr.f32.mxu0 0.0
      %v1272 = vand.u32 %v405, 4294901760
      %v1273 = vsub.f32 %v405, %v1272
      %v1274 = vand.u32 %v1273, 4294901760
      %1275 = vmatmul.mubr.f32.gmra.mrb[0].mxu0 %v1274
      %v1276 = vpop.f32.mrb[0].mxu0
      %v1277 = vadd.f32 %v1067, %v1276
      %v1278 = vpop.f32.mrb[0].mxu0
      %v1279 = vadd.f32 %v1069, %v1278
      %1280 = vmatprep.mubr.f32.mxu0 0.0
      %v1281 = vand.u32 %v408, 4294901760
      %v1282 = vsub.f32 %v408, %v1281
      %v1283 = vand.u32 %v1282, 4294901760
      %1284 = vmatmul.mubr.f32.gmra.mrb[0].mxu0 %v1283
      %v1285 = vpop.f32.mrb[0].mxu0
      %v1286 = vadd.f32 %v1075, %v1285
      %v1287 = vpop.f32.mrb[0].mxu0
      %v1288 = vadd.f32 %v1077, %v1287
      %1289 = vmatprep.mubr.f32.mxu0 0.0
      %v1290 = vand.u32 %v411, 4294901760
      %v1291 = vsub.f32 %v411, %v1290
      %v1292 = vand.u32 %v1291, 4294901760
      %1293 = vmatmul.mubr.f32.gmra.mrb[0].mxu0 %v1292
      %v1294 = vpop.f32.mrb[0].mxu0
      %v1295 = vadd.f32 %v1083, %v1294
      %v1296 = vpop.f32.mrb[0].mxu0
      %v1297 = vadd.f32 %v1085, %v1296
      %1298 = vmatprep.mubr.f32.mxu0 0.0
      %v1299 = vand.u32 %v414, 4294901760
      %v1300 = vsub.f32 %v414, %v1299
      %v1301 = vand.u32 %v1300, 4294901760
      %1302 = vmatmul.mubr.f32.gmra.mrb[0].mxu0 %v1301
      %v1303 = vpop.f32.mrb[0].mxu0
      %v1304 = vadd.f32 %v1091, %v1303
      %v1305 = vpop.f32.mrb[0].mxu0
      %v1306 = vadd.f32 %v1093, %v1305
      %1307 = vmatprep.mubr.f32.mxu0 0.0
      %v1308 = vand.u32 %v417, 4294901760
      %v1309 = vsub.f32 %v417, %v1308
      %v1310 = vand.u32 %v1309, 4294901760
      %1311 = vmatmul.mubr.f32.gmra.mrb[0].mxu0 %v1310
      %v1312 = vpop.f32.mrb[0].mxu0
      %v1313 = vadd.f32 %v1099, %v1312
      %v1314 = vpop.f32.mrb[0].mxu0
      %v1315 = vadd.f32 %v1101, %v1314
      %1316 = vmatprep.mubr.f32.mxu0 0.0
      %v1317 = vand.u32 %v420, 4294901760
      %v1318 = vsub.f32 %v420, %v1317
      %v1319 = vand.u32 %v1318, 4294901760
      %1320 = vmatmul.mubr.f32.gmra.mrb[0].mxu0 %v1319
      %v1321 = vpop.f32.mrb[0].mxu0
      %v1322 = vadd.f32 %v1107, %v1321
      %v1323 = vpop.f32.mrb[0].mxu0
      %v1324 = vadd.f32 %v1109, %v1323
      %1325 = vmatprep.mubr.f32.mxu0 0.0
      %v1326 = vand.u32 %v423, 4294901760
      %v1327 = vsub.f32 %v423, %v1326
      %v1328 = vand.u32 %v1327, 4294901760
      %1329 = vmatmul.mubr.f32.gmra.mrb[0].mxu0 %v1328
      %v1330 = vpop.f32.mrb[0].mxu0
      %v1331 = vadd.f32 %v1115, %v1330
      %v1332 = vpop.f32.mrb[0].mxu0
      %v1333 = vadd.f32 %v1117, %v1332
      %1334 = vmatprep.mubr.f32.mxu0 0.0
      %v1335 = vand.u32 %v426, 4294901760
      %v1336 = vsub.f32 %v426, %v1335
      %v1337 = vand.u32 %v1336, 4294901760
      %1338 = vmatmul.mubr.f32.gmra.mrb[0].mxu0 %v1337
      %v1339 = vpop.f32.mrb[0].mxu0
      %v1340 = vadd.f32 %v1123, %v1339
      %v1341 = vpop.f32.mrb[0].mxu0
      %v1342 = vadd.f32 %v1125, %v1341
      %1343 = vmatprep.mubr.f32.mxu0 0.0
      %v1344 = vand.u32 %v429, 4294901760
      %v1345 = vsub.f32 %v429, %v1344
      %v1346 = vand.u32 %v1345, 4294901760
      %1347 = vmatmul.mubr.f32.gmra.mrb[0].mxu0 %v1346
      %v1348 = vpop.f32.mrb[0].mxu0
      %v1349 = vadd.f32 %v1131, %v1348
      %v1350 = vpop.f32.mrb[0].mxu0
      %v1351 = vadd.f32 %v1133, %v1350
      %1352 = vmatprep.mubr.f32.mxu0 0.0
      %v1353 = vand.u32 %v432, 4294901760
      %v1354 = vsub.f32 %v432, %v1353
      %v1355 = vand.u32 %v1354, 4294901760
      %1356 = vmatmul.mubr.f32.gmra.mrb[0].mxu0 %v1355
      %v1357 = vpop.f32.mrb[0].mxu0
      %v1358 = vadd.f32 %v1139, %v1357
      %v1359 = vpop.f32.mrb[0].mxu0
      %v1360 = vadd.f32 %v1141, %v1359
      %1361 = vmatprep.mubr.f32.mxu0 0.0
      %v1362 = vand.u32 %v435, 4294901760
      %v1363 = vsub.f32 %v435, %v1362
      %v1364 = vand.u32 %v1363, 4294901760
      %1365 = vmatmul.mubr.f32.gmra.mrb[0].mxu0 %v1364
      %v1366 = vpop.f32.mrb[0].mxu0
      %v1367 = vadd.f32 %v1147, %v1366
      %v1368 = vpop.f32.mrb[0].mxu0
      %v1369 = vadd.f32 %v1149, %v1368
      %1370 = vmatprep.mubr.f32.mxu0 0.0
      %v1371 = vand.u32 %v438, 4294901760
      %v1372 = vsub.f32 %v438, %v1371
      %v1373 = vand.u32 %v1372, 4294901760
      %1374 = vmatmul.mubr.f32.gmra.mrb[0].mxu0 %v1373
      %v1375 = vpop.f32.mrb[0].mxu0
      %v1376 = vadd.f32 %v1155, %v1375
      %v1377 = vpop.f32.mrb[0].mxu0
      %v1378 = vadd.f32 %v1157, %v1377
      %1379 = vmatprep.mubr.f32.mxu0 0.0
      %v1380 = vand.u32 %v441, 4294901760
      %v1381 = vsub.f32 %v441, %v1380
      %v1382 = vand.u32 %v1381, 4294901760
      %1383 = vmatmul.mubr.f32.gmra.mrb[0].mxu0 %v1382
      %v1384 = vpop.f32.mrb[0].mxu0
      %v1385 = vadd.f32 %v1163, %v1384
      %v1386 = vpop.f32.mrb[0].mxu0
      %v1387 = vadd.f32 %v1165, %v1386
      %1388 = vmatprep.mubr.f32.mxu0 0.0
      %v1389 = vand.u32 %v444, 4294901760
      %v1390 = vsub.f32 %v444, %v1389
      %v1391 = vand.u32 %v1390, 4294901760
      %1392 = vmatmul.mubr.f32.gmra.mrb[0].mxu0 %v1391
      %v1393 = vpop.f32.mrb[0].mxu0
      %v1394 = vadd.f32 %v1171, %v1393
      %v1395 = vpop.f32.mrb[0].mxu0
      %v1396 = vadd.f32 %v1173, %v1395
      %1397 = vmatprep.mubr.f32.mxu0 0.0
      %v1398 = vand.u32 %v447, 4294901760
      %v1399 = vsub.f32 %v447, %v1398
      %v1400 = vand.u32 %v1399, 4294901760
      %1401 = vmatmul.mubr.f32.gmra.mrb[0].mxu0 %v1400
      %v1402 = vpop.f32.mrb[0].mxu0
      %v1403 = vadd.f32 %v1179, %v1402
      %v1404 = vpop.f32.mrb[0].mxu0
      %v1405 = vadd.f32 %v1181, %v1404
      %1406 = vmatprep.mubr.f32.mxu0 0.0
      %v1407 = vand.u32 %v450, 4294901760
      %v1408 = vsub.f32 %v450, %v1407
      %v1409 = vand.u32 %v1408, 4294901760
      %1410 = vmatmul.mubr.f32.gmra.mrb[0].mxu0 %v1409
      %v1411 = vpop.f32.mrb[0].mxu0
      %v1412 = vadd.f32 %v1187, %v1411
      %v1413 = vpop.f32.mrb[0].mxu0
      %v1414 = vadd.f32 %v1189, %v1413
      %1415 = vdwg.mxu0
      %v1416 = vand.u32 %v389, 4294901760
      %v1417 = vsub.f32 %v389, %v1416
      %v1418 = vand.u32 %v1417, 4294901760
      %1419 = vmatprep.subr.mxu0 %v1418
      %v1420 = vand.u32 %v388, 4294901760
      %v1421 = vsub.f32 %v388, %v1420
      %v1422 = vand.u32 %v1421, 4294901760
      %1423 = vmatpush1.msra.mxu0 %v1422
      %v1424 = vand.u32 %v391, 4294901760
      %v1425 = vsub.f32 %v391, %v1424
      %v1426 = vand.u32 %v1425, 4294901760
      %1427 = vmatprep.subr.mxu0 %v1426
      %v1428 = vand.u32 %v390, 4294901760
      %v1429 = vsub.f32 %v390, %v1428
      %v1430 = vand.u32 %v1429, 4294901760
      %1431 = vmatpush1.msra.mxu0 %v1430
      %v1432 = vand.u32 %v393, 4294901760
      %v1433 = vsub.f32 %v393, %v1432
      %v1434 = vand.u32 %v1433, 4294901760
      %1435 = vmatprep.subr.mxu0 %v1434
      %v1436 = vand.u32 %v392, 4294901760
      %v1437 = vsub.f32 %v392, %v1436
      %v1438 = vand.u32 %v1437, 4294901760
      %1439 = vmatpush1.msra.mxu0 %v1438
      %v1440 = vand.u32 %v395, 4294901760
      %v1441 = vsub.f32 %v395, %v1440
      %v1442 = vand.u32 %v1441, 4294901760
      %1443 = vmatprep.subr.mxu0 %v1442
      %v1444 = vand.u32 %v394, 4294901760
      %v1445 = vsub.f32 %v394, %v1444
      %v1446 = vand.u32 %v1445, 4294901760
      %1447 = vmatpush1.msra.mxu0 %v1446
      %v1448 = vand.u32 %v397, 4294901760
      %v1449 = vsub.f32 %v397, %v1448
      %v1450 = vand.u32 %v1449, 4294901760
      %1451 = vmatprep.subr.mxu0 %v1450
      %v1452 = vand.u32 %v396, 4294901760
      %v1453 = vsub.f32 %v396, %v1452
      %v1454 = vand.u32 %v1453, 4294901760
      %1455 = vmatpush1.msra.mxu0 %v1454
      %v1456 = vand.u32 %v399, 4294901760
      %v1457 = vsub.f32 %v399, %v1456
      %v1458 = vand.u32 %v1457, 4294901760
      %1459 = vmatprep.subr.mxu0 %v1458
      %v1460 = vand.u32 %v398, 4294901760
      %v1461 = vsub.f32 %v398, %v1460
      %v1462 = vand.u32 %v1461, 4294901760
      %1463 = vmatpush1.msra.mxu0 %v1462
      %v1464 = vand.u32 %v401, 4294901760
      %v1465 = vsub.f32 %v401, %v1464
      %v1466 = vand.u32 %v1465, 4294901760
      %1467 = vmatprep.subr.mxu0 %v1466
      %v1468 = vand.u32 %v400, 4294901760
      %v1469 = vsub.f32 %v400, %v1468
      %v1470 = vand.u32 %v1469, 4294901760
      %1471 = vmatpush1.msra.mxu0 %v1470
      %v1472 = vand.u32 %v403, 4294901760
      %v1473 = vsub.f32 %v403, %v1472
      %v1474 = vand.u32 %v1473, 4294901760
      %1475 = vmatprep.subr.mxu0 %v1474
      %v1476 = vand.u32 %v402, 4294901760
      %v1477 = vsub.f32 %v402, %v1476
      %v1478 = vand.u32 %v1477, 4294901760
      %1479 = vmatpush1.msra.mxu0 %v1478
      %1480 = vmatprep.subr.mxu0 0.0
      %1481 = vmatpush1.msra.mxu0 0.0
      %1482 = vmatprep.subr.mxu0 0.0
      %1483 = vmatpush1.msra.mxu0 0.0
      %1484 = vmatprep.subr.mxu0 0.0
      %1485 = vmatpush1.msra.mxu0 0.0
      %1486 = vmatprep.subr.mxu0 0.0
      %1487 = vmatpush1.msra.mxu0 0.0
      %1488 = vmatprep.subr.mxu0 0.0
      %1489 = vmatpush1.msra.mxu0 0.0
      %1490 = vmatprep.subr.mxu0 0.0
      %1491 = vmatpush1.msra.mxu0 0.0
      %1492 = vmatprep.subr.mxu0 0.0
      %1493 = vmatpush1.msra.mxu0 0.0
      %1494 = vmatprep.subr.mxu0 0.0
      %1495 = vmatpush1.msra.mxu0 0.0
      %1496 = vmatprep.subr.mxu0 0.0
      %1497 = vmatpush1.msra.mxu0 0.0
      %1498 = vmatprep.subr.mxu0 0.0
      %1499 = vmatpush1.msra.mxu0 0.0
      %1500 = vmatprep.subr.mxu0 0.0
      %1501 = vmatpush1.msra.mxu0 0.0
      %1502 = vmatprep.subr.mxu0 0.0
      %1503 = vmatpush1.msra.mxu0 0.0
      %1504 = vmatprep.subr.mxu0 0.0
      %1505 = vmatpush1.msra.mxu0 0.0
      %1506 = vmatprep.subr.mxu0 0.0
      %1507 = vmatpush1.msra.mxu0 0.0
      %1508 = vmatprep.subr.mxu0 0.0
      %1509 = vmatpush1.msra.mxu0 0.0
      %1510 = vmatprep.subr.mxu0 0.0
      %1511 = vmatpush1.msra.mxu0 0.0
      %1512 = vmatprep.subr.mxu0 0.0
      %1513 = vmatpush1.msra.mxu0 0.0
      %1514 = vmatprep.subr.mxu0 0.0
      %1515 = vmatpush1.msra.mxu0 0.0
      %1516 = vmatprep.subr.mxu0 0.0
      %1517 = vmatpush1.msra.mxu0 0.0
      %1518 = vmatprep.subr.mxu0 0.0
      %1519 = vmatpush1.msra.mxu0 0.0
      %1520 = vmatprep.subr.mxu0 0.0
      %1521 = vmatpush1.msra.mxu0 0.0
      %1522 = vmatprep.subr.mxu0 0.0
      %1523 = vmatpush1.msra.mxu0 0.0
      %1524 = vmatprep.subr.mxu0 0.0
      %1525 = vmatpush1.msra.mxu0 0.0
      %1526 = vmatprep.subr.mxu0 0.0
      %1527 = vmatpush1.msra.mxu0 0.0
      %1528 = vmatprep.mubr.f32.mxu0 0.0
      %v1529 = vand.u32 %v405, 4294901760
      %1530 = vmatmul.mubr.f32.gmra.mrb[0].mxu0 %v1529
      %v1531 = vpop.f32.mrb[0].mxu0
      %v1532 = vadd.f32 %v1277, %v1531
      %v1533 = vpop.f32.mrb[0].mxu0
      %v1534 = vadd.f32 %v1279, %v1533
      %1535 = vmatprep.mubr.f32.mxu0 0.0
      %v1536 = vand.u32 %v408, 4294901760
      %1537 = vmatmul.mubr.f32.gmra.mrb[0].mxu0 %v1536
      %v1538 = vpop.f32.mrb[0].mxu0
      %v1539 = vadd.f32 %v1286, %v1538
      %v1540 = vpop.f32.mrb[0].mxu0
      %v1541 = vadd.f32 %v1288, %v1540
      %1542 = vmatprep.mubr.f32.mxu0 0.0
      %v1543 = vand.u32 %v411, 4294901760
      %1544 = vmatmul.mubr.f32.gmra.mrb[0].mxu0 %v1543
      %v1545 = vpop.f32.mrb[0].mxu0
      %v1546 = vadd.f32 %v1295, %v1545
      %v1547 = vpop.f32.mrb[0].mxu0
      %v1548 = vadd.f32 %v1297, %v1547
      %1549 = vmatprep.mubr.f32.mxu0 0.0
      %v1550 = vand.u32 %v414, 4294901760
      %1551 = vmatmul.mubr.f32.gmra.mrb[0].mxu0 %v1550
      %v1552 = vpop.f32.mrb[0].mxu0
      %v1553 = vadd.f32 %v1304, %v1552
      %v1554 = vpop.f32.mrb[0].mxu0
      %v1555 = vadd.f32 %v1306, %v1554
      %1556 = vmatprep.mubr.f32.mxu0 0.0
      %v1557 = vand.u32 %v417, 4294901760
      %1558 = vmatmul.mubr.f32.gmra.mrb[0].mxu0 %v1557
      %v1559 = vpop.f32.mrb[0].mxu0
      %v1560 = vadd.f32 %v1313, %v1559
      %v1561 = vpop.f32.mrb[0].mxu0
      %v1562 = vadd.f32 %v1315, %v1561
      %1563 = vmatprep.mubr.f32.mxu0 0.0
      %v1564 = vand.u32 %v420, 4294901760
      %1565 = vmatmul.mubr.f32.gmra.mrb[0].mxu0 %v1564
      %v1566 = vpop.f32.mrb[0].mxu0
      %v1567 = vadd.f32 %v1322, %v1566
      %v1568 = vpop.f32.mrb[0].mxu0
      %v1569 = vadd.f32 %v1324, %v1568
      %1570 = vmatprep.mubr.f32.mxu0 0.0
      %v1571 = vand.u32 %v423, 4294901760
      %1572 = vmatmul.mubr.f32.gmra.mrb[0].mxu0 %v1571
      %v1573 = vpop.f32.mrb[0].mxu0
      %v1574 = vadd.f32 %v1331, %v1573
      %v1575 = vpop.f32.mrb[0].mxu0
      %v1576 = vadd.f32 %v1333, %v1575
      %1577 = vmatprep.mubr.f32.mxu0 0.0
      %v1578 = vand.u32 %v426, 4294901760
      %1579 = vmatmul.mubr.f32.gmra.mrb[0].mxu0 %v1578
      %v1580 = vpop.f32.mrb[0].mxu0
      %v1581 = vadd.f32 %v1340, %v1580
      %v1582 = vpop.f32.mrb[0].mxu0
      %v1583 = vadd.f32 %v1342, %v1582
      %1584 = vmatprep.mubr.f32.mxu0 0.0
      %v1585 = vand.u32 %v429, 4294901760
      %1586 = vmatmul.mubr.f32.gmra.mrb[0].mxu0 %v1585
      %v1587 = vpop.f32.mrb[0].mxu0
      %v1588 = vadd.f32 %v1349, %v1587
      %v1589 = vpop.f32.mrb[0].mxu0
      %v1590 = vadd.f32 %v1351, %v1589
      %1591 = vmatprep.mubr.f32.mxu0 0.0
      %v1592 = vand.u32 %v432, 4294901760
      %1593 = vmatmul.mubr.f32.gmra.mrb[0].mxu0 %v1592
      %v1594 = vpop.f32.mrb[0].mxu0
      %v1595 = vadd.f32 %v1358, %v1594
      %v1596 = vpop.f32.mrb[0].mxu0
      %v1597 = vadd.f32 %v1360, %v1596
      %1598 = vmatprep.mubr.f32.mxu0 0.0
      %v1599 = vand.u32 %v435, 4294901760
      %1600 = vmatmul.mubr.f32.gmra.mrb[0].mxu0 %v1599
      %v1601 = vpop.f32.mrb[0].mxu0
      %v1602 = vadd.f32 %v1367, %v1601
      %v1603 = vpop.f32.mrb[0].mxu0
      %v1604 = vadd.f32 %v1369, %v1603
      %1605 = vmatprep.mubr.f32.mxu0 0.0
      %v1606 = vand.u32 %v438, 4294901760
      %1607 = vmatmul.mubr.f32.gmra.mrb[0].mxu0 %v1606
      %v1608 = vpop.f32.mrb[0].mxu0
      %v1609 = vadd.f32 %v1376, %v1608
      %v1610 = vpop.f32.mrb[0].mxu0
      %v1611 = vadd.f32 %v1378, %v1610
      %1612 = vmatprep.mubr.f32.mxu0 0.0
      %v1613 = vand.u32 %v441, 4294901760
      %1614 = vmatmul.mubr.f32.gmra.mrb[0].mxu0 %v1613
      %v1615 = vpop.f32.mrb[0].mxu0
      %v1616 = vadd.f32 %v1385, %v1615
      %v1617 = vpop.f32.mrb[0].mxu0
      %v1618 = vadd.f32 %v1387, %v1617
      %1619 = vmatprep.mubr.f32.mxu0 0.0
      %v1620 = vand.u32 %v444, 4294901760
      %1621 = vmatmul.mubr.f32.gmra.mrb[0].mxu0 %v1620
      %v1622 = vpop.f32.mrb[0].mxu0
      %v1623 = vadd.f32 %v1394, %v1622
      %v1624 = vpop.f32.mrb[0].mxu0
      %v1625 = vadd.f32 %v1396, %v1624
      %1626 = vmatprep.mubr.f32.mxu0 0.0
      %v1627 = vand.u32 %v447, 4294901760
      %1628 = vmatmul.mubr.f32.gmra.mrb[0].mxu0 %v1627
      %v1629 = vpop.f32.mrb[0].mxu0
      %v1630 = vadd.f32 %v1403, %v1629
      %v1631 = vpop.f32.mrb[0].mxu0
      %v1632 = vadd.f32 %v1405, %v1631
      %1633 = vmatprep.mubr.f32.mxu0 0.0
      %v1634 = vand.u32 %v450, 4294901760
      %1635 = vmatmul.mubr.f32.gmra.mrb[0].mxu0 %v1634
      %v1636 = vpop.f32.mrb[0].mxu0
      %v1637 = vadd.f32 %v1412, %v1636
      %v1638 = vpop.f32.mrb[0].mxu0
      %v1639 = vadd.f32 %v1414, %v1638
      %1640 = vdwg.mxu0
      %v1641 = vand.u32 %v389, 4294901760
      %1642 = vmatprep.subr.mxu0 %v1641
      %v1643 = vand.u32 %v388, 4294901760
      %1644 = vmatpush1.msra.mxu0 %v1643
      %v1645 = vand.u32 %v391, 4294901760
      %1646 = vmatprep.subr.mxu0 %v1645
      %v1647 = vand.u32 %v390, 4294901760
      %1648 = vmatpush1.msra.mxu0 %v1647
      %v1649 = vand.u32 %v393, 4294901760
      %1650 = vmatprep.subr.mxu0 %v1649
      %v1651 = vand.u32 %v392, 4294901760
      %1652 = vmatpush1.msra.mxu0 %v1651
      %v1653 = vand.u32 %v395, 4294901760
      %1654 = vmatprep.subr.mxu0 %v1653
      %v1655 = vand.u32 %v394, 4294901760
      %1656 = vmatpush1.msra.mxu0 %v1655
      %v1657 = vand.u32 %v397, 4294901760
      %1658 = vmatprep.subr.mxu0 %v1657
      %v1659 = vand.u32 %v396, 4294901760
      %1660 = vmatpush1.msra.mxu0 %v1659
      %v1661 = vand.u32 %v399, 4294901760
      %1662 = vmatprep.subr.mxu0 %v1661
      %v1663 = vand.u32 %v398, 4294901760
      %1664 = vmatpush1.msra.mxu0 %v1663
      %v1665 = vand.u32 %v401, 4294901760
      %1666 = vmatprep.subr.mxu0 %v1665
      %v1667 = vand.u32 %v400, 4294901760
      %1668 = vmatpush1.msra.mxu0 %v1667
      %v1669 = vand.u32 %v403, 4294901760
      %1670 = vmatprep.subr.mxu0 %v1669
      %v1671 = vand.u32 %v402, 4294901760
      %1672 = vmatpush1.msra.mxu0 %v1671
      %1673 = vmatprep.subr.mxu0 0.0
      %1674 = vmatpush1.msra.mxu0 0.0
      %1675 = vmatprep.subr.mxu0 0.0
      %1676 = vmatpush1.msra.mxu0 0.0
      %1677 = vmatprep.subr.mxu0 0.0
      %1678 = vmatpush1.msra.mxu0 0.0
      %1679 = vmatprep.subr.mxu0 0.0
      %1680 = vmatpush1.msra.mxu0 0.0
      %1681 = vmatprep.subr.mxu0 0.0
      %1682 = vmatpush1.msra.mxu0 0.0
      %1683 = vmatprep.subr.mxu0 0.0
      %1684 = vmatpush1.msra.mxu0 0.0
      %1685 = vmatprep.subr.mxu0 0.0
      %1686 = vmatpush1.msra.mxu0 0.0
      %1687 = vmatprep.subr.mxu0 0.0
      %1688 = vmatpush1.msra.mxu0 0.0
      %1689 = vmatprep.subr.mxu0 0.0
      %1690 = vmatpush1.msra.mxu0 0.0
      %1691 = vmatprep.subr.mxu0 0.0
      %1692 = vmatpush1.msra.mxu0 0.0
      %1693 = vmatprep.subr.mxu0 0.0
      %1694 = vmatpush1.msra.mxu0 0.0
      %1695 = vmatprep.subr.mxu0 0.0
      %1696 = vmatpush1.msra.mxu0 0.0
      %1697 = vmatprep.subr.mxu0 0.0
      %1698 = vmatpush1.msra.mxu0 0.0
      %1699 = vmatprep.subr.mxu0 0.0
      %1700 = vmatpush1.msra.mxu0 0.0
      %1701 = vmatprep.subr.mxu0 0.0
      %1702 = vmatpush1.msra.mxu0 0.0
      %1703 = vmatprep.subr.mxu0 0.0
      %1704 = vmatpush1.msra.mxu0 0.0
      %1705 = vmatprep.subr.mxu0 0.0
      %1706 = vmatpush1.msra.mxu0 0.0
      %1707 = vmatprep.subr.mxu0 0.0
      %1708 = vmatpush1.msra.mxu0 0.0
      %1709 = vmatprep.subr.mxu0 0.0
      %1710 = vmatpush1.msra.mxu0 0.0
      %1711 = vmatprep.subr.mxu0 0.0
      %1712 = vmatpush1.msra.mxu0 0.0
      %1713 = vmatprep.subr.mxu0 0.0
      %1714 = vmatpush1.msra.mxu0 0.0
      %1715 = vmatprep.subr.mxu0 0.0
      %1716 = vmatpush1.msra.mxu0 0.0
      %1717 = vmatprep.subr.mxu0 0.0
      %1718 = vmatpush1.msra.mxu0 0.0
      %1719 = vmatprep.subr.mxu0 0.0
      %1720 = vmatpush1.msra.mxu0 0.0
      %1721 = vmatprep.mubr.f32.mxu0 0.0
      %v1722 = vand.u32 %v405, 4294901760
      %1723 = vmatmul.mubr.f32.gmra.mrb[0].mxu0 %v1722
      %v1724 = vpop.f32.mrb[0].mxu0
      %v1725 = vadd.f32 %v1532, %v1724
      %v1726 = vpop.f32.mrb[0].mxu0
      %v1727 = vadd.f32 %v1534, %v1726
      %1728 = vmatprep.mubr.f32.mxu0 0.0
      %v1729 = vand.u32 %v408, 4294901760
      %1730 = vmatmul.mubr.f32.gmra.mrb[0].mxu0 %v1729
      %v1731 = vpop.f32.mrb[0].mxu0
      %v1732 = vadd.f32 %v1539, %v1731
      %v1733 = vpop.f32.mrb[0].mxu0
      %v1734 = vadd.f32 %v1541, %v1733
      %1735 = vmatprep.mubr.f32.mxu0 0.0
      %v1736 = vand.u32 %v411, 4294901760
      %1737 = vmatmul.mubr.f32.gmra.mrb[0].mxu0 %v1736
      %v1738 = vpop.f32.mrb[0].mxu0
      %v1739 = vadd.f32 %v1546, %v1738
      %v1740 = vpop.f32.mrb[0].mxu0
      %v1741 = vadd.f32 %v1548, %v1740
      %1742 = vmatprep.mubr.f32.mxu0 0.0
      %v1743 = vand.u32 %v414, 4294901760
      %1744 = vmatmul.mubr.f32.gmra.mrb[0].mxu0 %v1743
      %v1745 = vpop.f32.mrb[0].mxu0
      %v1746 = vadd.f32 %v1553, %v1745
      %v1747 = vpop.f32.mrb[0].mxu0
      %v1748 = vadd.f32 %v1555, %v1747
      %1749 = vmatprep.mubr.f32.mxu0 0.0
      %v1750 = vand.u32 %v417, 4294901760
      %1751 = vmatmul.mubr.f32.gmra.mrb[0].mxu0 %v1750
      %v1752 = vpop.f32.mrb[0].mxu0
      %v1753 = vadd.f32 %v1560, %v1752
      %v1754 = vpop.f32.mrb[0].mxu0
      %v1755 = vadd.f32 %v1562, %v1754
      %1756 = vmatprep.mubr.f32.mxu0 0.0
      %v1757 = vand.u32 %v420, 4294901760
      %1758 = vmatmul.mubr.f32.gmra.mrb[0].mxu0 %v1757
      %v1759 = vpop.f32.mrb[0].mxu0
      %v1760 = vadd.f32 %v1567, %v1759
      %v1761 = vpop.f32.mrb[0].mxu0
      %v1762 = vadd.f32 %v1569, %v1761
      %1763 = vmatprep.mubr.f32.mxu0 0.0
      %v1764 = vand.u32 %v423, 4294901760
      %1765 = vmatmul.mubr.f32.gmra.mrb[0].mxu0 %v1764
      %v1766 = vpop.f32.mrb[0].mxu0
      %v1767 = vadd.f32 %v1574, %v1766
      %v1768 = vpop.f32.mrb[0].mxu0
      %v1769 = vadd.f32 %v1576, %v1768
      %1770 = vmatprep.mubr.f32.mxu0 0.0
      %v1771 = vand.u32 %v426, 4294901760
      %1772 = vmatmul.mubr.f32.gmra.mrb[0].mxu0 %v1771
      %v1773 = vpop.f32.mrb[0].mxu0
      %v1774 = vadd.f32 %v1581, %v1773
      %v1775 = vpop.f32.mrb[0].mxu0
      %v1776 = vadd.f32 %v1583, %v1775
      %1777 = vmatprep.mubr.f32.mxu0 0.0
      %v1778 = vand.u32 %v429, 4294901760
      %1779 = vmatmul.mubr.f32.gmra.mrb[0].mxu0 %v1778
      %v1780 = vpop.f32.mrb[0].mxu0
      %v1781 = vadd.f32 %v1588, %v1780
      %v1782 = vpop.f32.mrb[0].mxu0
      %v1783 = vadd.f32 %v1590, %v1782
      %1784 = vmatprep.mubr.f32.mxu0 0.0
      %v1785 = vand.u32 %v432, 4294901760
      %1786 = vmatmul.mubr.f32.gmra.mrb[0].mxu0 %v1785
      %v1787 = vpop.f32.mrb[0].mxu0
      %v1788 = vadd.f32 %v1595, %v1787
      %v1789 = vpop.f32.mrb[0].mxu0
      %v1790 = vadd.f32 %v1597, %v1789
      %1791 = vmatprep.mubr.f32.mxu0 0.0
      %v1792 = vand.u32 %v435, 4294901760
      %1793 = vmatmul.mubr.f32.gmra.mrb[0].mxu0 %v1792
      %v1794 = vpop.f32.mrb[0].mxu0
      %v1795 = vadd.f32 %v1602, %v1794
      %v1796 = vpop.f32.mrb[0].mxu0
      %v1797 = vadd.f32 %v1604, %v1796
      %1798 = vmatprep.mubr.f32.mxu0 0.0
      %v1799 = vand.u32 %v438, 4294901760
      %1800 = vmatmul.mubr.f32.gmra.mrb[0].mxu0 %v1799
      %v1801 = vpop.f32.mrb[0].mxu0
      %v1802 = vadd.f32 %v1609, %v1801
      %v1803 = vpop.f32.mrb[0].mxu0
      %v1804 = vadd.f32 %v1611, %v1803
      %1805 = vmatprep.mubr.f32.mxu0 0.0
      %v1806 = vand.u32 %v441, 4294901760
      %1807 = vmatmul.mubr.f32.gmra.mrb[0].mxu0 %v1806
      %v1808 = vpop.f32.mrb[0].mxu0
      %v1809 = vadd.f32 %v1616, %v1808
      %v1810 = vpop.f32.mrb[0].mxu0
      %v1811 = vadd.f32 %v1618, %v1810
      %1812 = vmatprep.mubr.f32.mxu0 0.0
      %v1813 = vand.u32 %v444, 4294901760
      %1814 = vmatmul.mubr.f32.gmra.mrb[0].mxu0 %v1813
      %v1815 = vpop.f32.mrb[0].mxu0
      %v1816 = vadd.f32 %v1623, %v1815
      %v1817 = vpop.f32.mrb[0].mxu0
      %v1818 = vadd.f32 %v1625, %v1817
      %1819 = vmatprep.mubr.f32.mxu0 0.0
      %v1820 = vand.u32 %v447, 4294901760
      %1821 = vmatmul.mubr.f32.gmra.mrb[0].mxu0 %v1820
      %v1822 = vpop.f32.mrb[0].mxu0
      %v1823 = vadd.f32 %v1630, %v1822
      %v1824 = vpop.f32.mrb[0].mxu0
      %v1825 = vadd.f32 %v1632, %v1824
      %1826 = vmatprep.mubr.f32.mxu0 0.0
      %v1827 = vand.u32 %v450, 4294901760
      %1828 = vmatmul.mubr.f32.gmra.mrb[0].mxu0 %v1827
      %v1829 = vpop.f32.mrb[0].mxu0
      %v1830 = vadd.f32 %v1637, %v1829
      %v1831 = vpop.f32.mrb[0].mxu0
      %v1832 = vadd.f32 %v1639, %v1831
      %1833 = vdwg.mxu0
      %v1835 = vsel %vm319, %v339, 0
      %v1838 = vsel %vm319, %v340, 0
      %v1841 = vsel %vm319, %v341, 0
      %v1844 = vsel %vm319, %v342, 0
      %v1847 = vsel %vm319, %v343, 0
      %v1850 = vsel %vm319, %v344, 0
      %v1853 = vsel %vm319, %v345, 0
      %v1856 = vsel %vm319, %v346, 0
      %v1859 = vsel %vm319, %v347, 0
      %v1862 = vsel %vm319, %v348, 0
      %v1865 = vsel %vm319, %v349, 0
      %v1868 = vsel %vm319, %v350, 0
      %v1871 = vsel %vm319, %v351, 0
      %v1874 = vsel %vm319, %v352, 0
      %v1877 = vsel %vm319, %v353, 0
      %v1880 = vsel %vm319, %v354, 0
      %v1882 = vand.u32 %v356, 4294901760
      %1883 = vmatprep.subr.mxu0 %v1882
      %v1884 = vand.u32 %v355, 4294901760
      %1885 = vmatpush1.msra.mxu0 %v1884
      %v1886 = vand.u32 %v358, 4294901760
      %1887 = vmatprep.subr.mxu0 %v1886
      %v1888 = vand.u32 %v357, 4294901760
      %1889 = vmatpush1.msra.mxu0 %v1888
      %v1890 = vand.u32 %v360, 4294901760
      %1891 = vmatprep.subr.mxu0 %v1890
      %v1892 = vand.u32 %v359, 4294901760
      %1893 = vmatpush1.msra.mxu0 %v1892
      %v1894 = vand.u32 %v362, 4294901760
      %1895 = vmatprep.subr.mxu0 %v1894
      %v1896 = vand.u32 %v361, 4294901760
      %1897 = vmatpush1.msra.mxu0 %v1896
      %v1898 = vand.u32 %v364, 4294901760
      %1899 = vmatprep.subr.mxu0 %v1898
      %v1900 = vand.u32 %v363, 4294901760
      %1901 = vmatpush1.msra.mxu0 %v1900
      %v1902 = vand.u32 %v366, 4294901760
      %1903 = vmatprep.subr.mxu0 %v1902
      %v1904 = vand.u32 %v365, 4294901760
      %1905 = vmatpush1.msra.mxu0 %v1904
      %v1906 = vand.u32 %v368, 4294901760
      %1907 = vmatprep.subr.mxu0 %v1906
      %v1908 = vand.u32 %v367, 4294901760
      %1909 = vmatpush1.msra.mxu0 %v1908
      %v1910 = vand.u32 %v370, 4294901760
      %1911 = vmatprep.subr.mxu0 %v1910
      %v1912 = vand.u32 %v369, 4294901760
      %1913 = vmatpush1.msra.mxu0 %v1912
      %1914 = vmatprep.subr.mxu0 0.0
      %1915 = vmatpush1.msra.mxu0 0.0
      %1916 = vmatprep.subr.mxu0 0.0
      %1917 = vmatpush1.msra.mxu0 0.0
      %1918 = vmatprep.subr.mxu0 0.0
      %1919 = vmatpush1.msra.mxu0 0.0
      %1920 = vmatprep.subr.mxu0 0.0
      %1921 = vmatpush1.msra.mxu0 0.0
      %1922 = vmatprep.subr.mxu0 0.0
      %1923 = vmatpush1.msra.mxu0 0.0
      %1924 = vmatprep.subr.mxu0 0.0
      %1925 = vmatpush1.msra.mxu0 0.0
      %1926 = vmatprep.subr.mxu0 0.0
      %1927 = vmatpush1.msra.mxu0 0.0
      %1928 = vmatprep.subr.mxu0 0.0
      %1929 = vmatpush1.msra.mxu0 0.0
      %1930 = vmatprep.subr.mxu0 0.0
      %1931 = vmatpush1.msra.mxu0 0.0
      %1932 = vmatprep.subr.mxu0 0.0
      %1933 = vmatpush1.msra.mxu0 0.0
      %1934 = vmatprep.subr.mxu0 0.0
      %1935 = vmatpush1.msra.mxu0 0.0
      %1936 = vmatprep.subr.mxu0 0.0
      %1937 = vmatpush1.msra.mxu0 0.0
      %1938 = vmatprep.subr.mxu0 0.0
      %1939 = vmatpush1.msra.mxu0 0.0
      %1940 = vmatprep.subr.mxu0 0.0
      %1941 = vmatpush1.msra.mxu0 0.0
      %1942 = vmatprep.subr.mxu0 0.0
      %1943 = vmatpush1.msra.mxu0 0.0
      %1944 = vmatprep.subr.mxu0 0.0
      %1945 = vmatpush1.msra.mxu0 0.0
      %1946 = vmatprep.subr.mxu0 0.0
      %1947 = vmatpush1.msra.mxu0 0.0
      %1948 = vmatprep.subr.mxu0 0.0
      %1949 = vmatpush1.msra.mxu0 0.0
      %1950 = vmatprep.subr.mxu0 0.0
      %1951 = vmatpush1.msra.mxu0 0.0
      %1952 = vmatprep.subr.mxu0 0.0
      %1953 = vmatpush1.msra.mxu0 0.0
      %1954 = vmatprep.subr.mxu0 0.0
      %1955 = vmatpush1.msra.mxu0 0.0
      %1956 = vmatprep.subr.mxu0 0.0
      %1957 = vmatpush1.msra.mxu0 0.0
      %1958 = vmatprep.subr.mxu0 0.0
      %1959 = vmatpush1.msra.mxu0 0.0
      %1960 = vmatprep.subr.mxu0 0.0
      %1961 = vmatpush1.msra.mxu0 0.0
      %1962 = vmatprep.mubr.f32.mxu0 0.0
      %v1963 = vand.u32 %v1835, 4294901760
      %v1964 = vsub.f32 %v1835, %v1963
      %v1965 = vand.u32 %v1964, 4294901760
      %v1966 = vsub.f32 %v1964, %v1965
      %v1967 = vand.u32 %v1966, 4294901760
      %1968 = vmatmul.mubr.f32.gmra.mrb[0].mxu0 %v1967
      %v1969 = vpop.f32.mrb[0].mxu0
      %v1970 = vadd.f32 %v1725, %v1969
      %v1971 = vpop.f32.mrb[0].mxu0
      %v1972 = vadd.f32 %v1727, %v1971
      %1973 = vmatprep.mubr.f32.mxu0 0.0
      %v1974 = vand.u32 %v1838, 4294901760
      %v1975 = vsub.f32 %v1838, %v1974
      %v1976 = vand.u32 %v1975, 4294901760
      %v1977 = vsub.f32 %v1975, %v1976
      %v1978 = vand.u32 %v1977, 4294901760
      %1979 = vmatmul.mubr.f32.gmra.mrb[0].mxu0 %v1978
      %v1980 = vpop.f32.mrb[0].mxu0
      %v1981 = vadd.f32 %v1732, %v1980
      %v1982 = vpop.f32.mrb[0].mxu0
      %v1983 = vadd.f32 %v1734, %v1982
      %1984 = vmatprep.mubr.f32.mxu0 0.0
      %v1985 = vand.u32 %v1841, 4294901760
      %v1986 = vsub.f32 %v1841, %v1985
      %v1987 = vand.u32 %v1986, 4294901760
      %v1988 = vsub.f32 %v1986, %v1987
      %v1989 = vand.u32 %v1988, 4294901760
      %1990 = vmatmul.mubr.f32.gmra.mrb[0].mxu0 %v1989
      %v1991 = vpop.f32.mrb[0].mxu0
      %v1992 = vadd.f32 %v1739, %v1991
      %v1993 = vpop.f32.mrb[0].mxu0
      %v1994 = vadd.f32 %v1741, %v1993
      %1995 = vmatprep.mubr.f32.mxu0 0.0
      %v1996 = vand.u32 %v1844, 4294901760
      %v1997 = vsub.f32 %v1844, %v1996
      %v1998 = vand.u32 %v1997, 4294901760
      %v1999 = vsub.f32 %v1997, %v1998
      %v2000 = vand.u32 %v1999, 4294901760
      %2001 = vmatmul.mubr.f32.gmra.mrb[0].mxu0 %v2000
      %v2002 = vpop.f32.mrb[0].mxu0
      %v2003 = vadd.f32 %v1746, %v2002
      %v2004 = vpop.f32.mrb[0].mxu0
      %v2005 = vadd.f32 %v1748, %v2004
      %2006 = vmatprep.mubr.f32.mxu0 0.0
      %v2007 = vand.u32 %v1847, 4294901760
      %v2008 = vsub.f32 %v1847, %v2007
      %v2009 = vand.u32 %v2008, 4294901760
      %v2010 = vsub.f32 %v2008, %v2009
      %v2011 = vand.u32 %v2010, 4294901760
      %2012 = vmatmul.mubr.f32.gmra.mrb[0].mxu0 %v2011
      %v2013 = vpop.f32.mrb[0].mxu0
      %v2014 = vadd.f32 %v1753, %v2013
      %v2015 = vpop.f32.mrb[0].mxu0
      %v2016 = vadd.f32 %v1755, %v2015
      %2017 = vmatprep.mubr.f32.mxu0 0.0
      %v2018 = vand.u32 %v1850, 4294901760
      %v2019 = vsub.f32 %v1850, %v2018
      %v2020 = vand.u32 %v2019, 4294901760
      %v2021 = vsub.f32 %v2019, %v2020
      %v2022 = vand.u32 %v2021, 4294901760
      %2023 = vmatmul.mubr.f32.gmra.mrb[0].mxu0 %v2022
      %v2024 = vpop.f32.mrb[0].mxu0
      %v2025 = vadd.f32 %v1760, %v2024
      %v2026 = vpop.f32.mrb[0].mxu0
      %v2027 = vadd.f32 %v1762, %v2026
      %2028 = vmatprep.mubr.f32.mxu0 0.0
      %v2029 = vand.u32 %v1853, 4294901760
      %v2030 = vsub.f32 %v1853, %v2029
      %v2031 = vand.u32 %v2030, 4294901760
      %v2032 = vsub.f32 %v2030, %v2031
      %v2033 = vand.u32 %v2032, 4294901760
      %2034 = vmatmul.mubr.f32.gmra.mrb[0].mxu0 %v2033
      %v2035 = vpop.f32.mrb[0].mxu0
      %v2036 = vadd.f32 %v1767, %v2035
      %v2037 = vpop.f32.mrb[0].mxu0
      %v2038 = vadd.f32 %v1769, %v2037
      %2039 = vmatprep.mubr.f32.mxu0 0.0
      %v2040 = vand.u32 %v1856, 4294901760
      %v2041 = vsub.f32 %v1856, %v2040
      %v2042 = vand.u32 %v2041, 4294901760
      %v2043 = vsub.f32 %v2041, %v2042
      %v2044 = vand.u32 %v2043, 4294901760
      %2045 = vmatmul.mubr.f32.gmra.mrb[0].mxu0 %v2044
      %v2046 = vpop.f32.mrb[0].mxu0
      %v2047 = vadd.f32 %v1774, %v2046
      %v2048 = vpop.f32.mrb[0].mxu0
      %v2049 = vadd.f32 %v1776, %v2048
      %2050 = vmatprep.mubr.f32.mxu0 0.0
      %v2051 = vand.u32 %v1859, 4294901760
      %v2052 = vsub.f32 %v1859, %v2051
      %v2053 = vand.u32 %v2052, 4294901760
      %v2054 = vsub.f32 %v2052, %v2053
      %v2055 = vand.u32 %v2054, 4294901760
      %2056 = vmatmul.mubr.f32.gmra.mrb[0].mxu0 %v2055
      %v2057 = vpop.f32.mrb[0].mxu0
      %v2058 = vadd.f32 %v1781, %v2057
      %v2059 = vpop.f32.mrb[0].mxu0
      %v2060 = vadd.f32 %v1783, %v2059
      %2061 = vmatprep.mubr.f32.mxu0 0.0
      %v2062 = vand.u32 %v1862, 4294901760
      %v2063 = vsub.f32 %v1862, %v2062
      %v2064 = vand.u32 %v2063, 4294901760
      %v2065 = vsub.f32 %v2063, %v2064
      %v2066 = vand.u32 %v2065, 4294901760
      %2067 = vmatmul.mubr.f32.gmra.mrb[0].mxu0 %v2066
      %v2068 = vpop.f32.mrb[0].mxu0
      %v2069 = vadd.f32 %v1788, %v2068
      %v2070 = vpop.f32.mrb[0].mxu0
      %v2071 = vadd.f32 %v1790, %v2070
      %2072 = vmatprep.mubr.f32.mxu0 0.0
      %v2073 = vand.u32 %v1865, 4294901760
      %v2074 = vsub.f32 %v1865, %v2073
      %v2075 = vand.u32 %v2074, 4294901760
      %v2076 = vsub.f32 %v2074, %v2075
      %v2077 = vand.u32 %v2076, 4294901760
      %2078 = vmatmul.mubr.f32.gmra.mrb[0].mxu0 %v2077
      %v2079 = vpop.f32.mrb[0].mxu0
      %v2080 = vadd.f32 %v1795, %v2079
      %v2081 = vpop.f32.mrb[0].mxu0
      %v2082 = vadd.f32 %v1797, %v2081
      %2083 = vmatprep.mubr.f32.mxu0 0.0
      %v2084 = vand.u32 %v1868, 4294901760
      %v2085 = vsub.f32 %v1868, %v2084
      %v2086 = vand.u32 %v2085, 4294901760
      %v2087 = vsub.f32 %v2085, %v2086
      %v2088 = vand.u32 %v2087, 4294901760
      %2089 = vmatmul.mubr.f32.gmra.mrb[0].mxu0 %v2088
      %v2090 = vpop.f32.mrb[0].mxu0
      %v2091 = vadd.f32 %v1802, %v2090
      %v2092 = vpop.f32.mrb[0].mxu0
      %v2093 = vadd.f32 %v1804, %v2092
      %2094 = vmatprep.mubr.f32.mxu0 0.0
      %v2095 = vand.u32 %v1871, 4294901760
      %v2096 = vsub.f32 %v1871, %v2095
      %v2097 = vand.u32 %v2096, 4294901760
      %v2098 = vsub.f32 %v2096, %v2097
      %v2099 = vand.u32 %v2098, 4294901760
      %2100 = vmatmul.mubr.f32.gmra.mrb[0].mxu0 %v2099
      %v2101 = vpop.f32.mrb[0].mxu0
      %v2102 = vadd.f32 %v1809, %v2101
      %v2103 = vpop.f32.mrb[0].mxu0
      %v2104 = vadd.f32 %v1811, %v2103
      %2105 = vmatprep.mubr.f32.mxu0 0.0
      %v2106 = vand.u32 %v1874, 4294901760
      %v2107 = vsub.f32 %v1874, %v2106
      %v2108 = vand.u32 %v2107, 4294901760
      %v2109 = vsub.f32 %v2107, %v2108
      %v2110 = vand.u32 %v2109, 4294901760
      %2111 = vmatmul.mubr.f32.gmra.mrb[0].mxu0 %v2110
      %v2112 = vpop.f32.mrb[0].mxu0
      %v2113 = vadd.f32 %v1816, %v2112
      %v2114 = vpop.f32.mrb[0].mxu0
      %v2115 = vadd.f32 %v1818, %v2114
      %2116 = vmatprep.mubr.f32.mxu0 0.0
      %v2117 = vand.u32 %v1877, 4294901760
      %v2118 = vsub.f32 %v1877, %v2117
      %v2119 = vand.u32 %v2118, 4294901760
      %v2120 = vsub.f32 %v2118, %v2119
      %v2121 = vand.u32 %v2120, 4294901760
      %2122 = vmatmul.mubr.f32.gmra.mrb[0].mxu0 %v2121
      %v2123 = vpop.f32.mrb[0].mxu0
      %v2124 = vadd.f32 %v1823, %v2123
      %v2125 = vpop.f32.mrb[0].mxu0
      %v2126 = vadd.f32 %v1825, %v2125
      %2127 = vmatprep.mubr.f32.mxu0 0.0
      %v2128 = vand.u32 %v1880, 4294901760
      %v2129 = vsub.f32 %v1880, %v2128
      %v2130 = vand.u32 %v2129, 4294901760
      %v2131 = vsub.f32 %v2129, %v2130
      %v2132 = vand.u32 %v2131, 4294901760
      %2133 = vmatmul.mubr.f32.gmra.mrb[0].mxu0 %v2132
      %v2134 = vpop.f32.mrb[0].mxu0
      %v2135 = vadd.f32 %v1830, %v2134
      %v2136 = vpop.f32.mrb[0].mxu0
      %v2137 = vadd.f32 %v1832, %v2136
      %2138 = vdwg.mxu0
      %v2139 = vand.u32 %v356, 4294901760
      %v2140 = vsub.f32 %v356, %v2139
      %v2141 = vand.u32 %v2140, 4294901760
      %v2142 = vsub.f32 %v2140, %v2141
      %v2143 = vand.u32 %v2142, 4294901760
      %2144 = vmatprep.subr.mxu0 %v2143
      %v2145 = vand.u32 %v355, 4294901760
      %v2146 = vsub.f32 %v355, %v2145
      %v2147 = vand.u32 %v2146, 4294901760
      %v2148 = vsub.f32 %v2146, %v2147
      %v2149 = vand.u32 %v2148, 4294901760
      %2150 = vmatpush1.msra.mxu0 %v2149
      %v2151 = vand.u32 %v358, 4294901760
      %v2152 = vsub.f32 %v358, %v2151
      %v2153 = vand.u32 %v2152, 4294901760
      %v2154 = vsub.f32 %v2152, %v2153
      %v2155 = vand.u32 %v2154, 4294901760
      %2156 = vmatprep.subr.mxu0 %v2155
      %v2157 = vand.u32 %v357, 4294901760
      %v2158 = vsub.f32 %v357, %v2157
      %v2159 = vand.u32 %v2158, 4294901760
      %v2160 = vsub.f32 %v2158, %v2159
      %v2161 = vand.u32 %v2160, 4294901760
      %2162 = vmatpush1.msra.mxu0 %v2161
      %v2163 = vand.u32 %v360, 4294901760
      %v2164 = vsub.f32 %v360, %v2163
      %v2165 = vand.u32 %v2164, 4294901760
      %v2166 = vsub.f32 %v2164, %v2165
      %v2167 = vand.u32 %v2166, 4294901760
      %2168 = vmatprep.subr.mxu0 %v2167
      %v2169 = vand.u32 %v359, 4294901760
      %v2170 = vsub.f32 %v359, %v2169
      %v2171 = vand.u32 %v2170, 4294901760
      %v2172 = vsub.f32 %v2170, %v2171
      %v2173 = vand.u32 %v2172, 4294901760
      %2174 = vmatpush1.msra.mxu0 %v2173
      %v2175 = vand.u32 %v362, 4294901760
      %v2176 = vsub.f32 %v362, %v2175
      %v2177 = vand.u32 %v2176, 4294901760
      %v2178 = vsub.f32 %v2176, %v2177
      %v2179 = vand.u32 %v2178, 4294901760
      %2180 = vmatprep.subr.mxu0 %v2179
      %v2181 = vand.u32 %v361, 4294901760
      %v2182 = vsub.f32 %v361, %v2181
      %v2183 = vand.u32 %v2182, 4294901760
      %v2184 = vsub.f32 %v2182, %v2183
      %v2185 = vand.u32 %v2184, 4294901760
      %2186 = vmatpush1.msra.mxu0 %v2185
      %v2187 = vand.u32 %v364, 4294901760
      %v2188 = vsub.f32 %v364, %v2187
      %v2189 = vand.u32 %v2188, 4294901760
      %v2190 = vsub.f32 %v2188, %v2189
      %v2191 = vand.u32 %v2190, 4294901760
      %2192 = vmatprep.subr.mxu0 %v2191
      %v2193 = vand.u32 %v363, 4294901760
      %v2194 = vsub.f32 %v363, %v2193
      %v2195 = vand.u32 %v2194, 4294901760
      %v2196 = vsub.f32 %v2194, %v2195
      %v2197 = vand.u32 %v2196, 4294901760
      %2198 = vmatpush1.msra.mxu0 %v2197
      %v2199 = vand.u32 %v366, 4294901760
      %v2200 = vsub.f32 %v366, %v2199
      %v2201 = vand.u32 %v2200, 4294901760
      %v2202 = vsub.f32 %v2200, %v2201
      %v2203 = vand.u32 %v2202, 4294901760
      %2204 = vmatprep.subr.mxu0 %v2203
      %v2205 = vand.u32 %v365, 4294901760
      %v2206 = vsub.f32 %v365, %v2205
      %v2207 = vand.u32 %v2206, 4294901760
      %v2208 = vsub.f32 %v2206, %v2207
      %v2209 = vand.u32 %v2208, 4294901760
      %2210 = vmatpush1.msra.mxu0 %v2209
      %v2211 = vand.u32 %v368, 4294901760
      %v2212 = vsub.f32 %v368, %v2211
      %v2213 = vand.u32 %v2212, 4294901760
      %v2214 = vsub.f32 %v2212, %v2213
      %v2215 = vand.u32 %v2214, 4294901760
      %2216 = vmatprep.subr.mxu0 %v2215
      %v2217 = vand.u32 %v367, 4294901760
      %v2218 = vsub.f32 %v367, %v2217
      %v2219 = vand.u32 %v2218, 4294901760
      %v2220 = vsub.f32 %v2218, %v2219
      %v2221 = vand.u32 %v2220, 4294901760
      %2222 = vmatpush1.msra.mxu0 %v2221
      %v2223 = vand.u32 %v370, 4294901760
      %v2224 = vsub.f32 %v370, %v2223
      %v2225 = vand.u32 %v2224, 4294901760
      %v2226 = vsub.f32 %v2224, %v2225
      %v2227 = vand.u32 %v2226, 4294901760
      %2228 = vmatprep.subr.mxu0 %v2227
      %v2229 = vand.u32 %v369, 4294901760
      %v2230 = vsub.f32 %v369, %v2229
      %v2231 = vand.u32 %v2230, 4294901760
      %v2232 = vsub.f32 %v2230, %v2231
      %v2233 = vand.u32 %v2232, 4294901760
      %2234 = vmatpush1.msra.mxu0 %v2233
      %2235 = vmatprep.subr.mxu0 0.0
      %2236 = vmatpush1.msra.mxu0 0.0
      %2237 = vmatprep.subr.mxu0 0.0
      %2238 = vmatpush1.msra.mxu0 0.0
      %2239 = vmatprep.subr.mxu0 0.0
      %2240 = vmatpush1.msra.mxu0 0.0
      %2241 = vmatprep.subr.mxu0 0.0
      %2242 = vmatpush1.msra.mxu0 0.0
      %2243 = vmatprep.subr.mxu0 0.0
      %2244 = vmatpush1.msra.mxu0 0.0
      %2245 = vmatprep.subr.mxu0 0.0
      %2246 = vmatpush1.msra.mxu0 0.0
      %2247 = vmatprep.subr.mxu0 0.0
      %2248 = vmatpush1.msra.mxu0 0.0
      %2249 = vmatprep.subr.mxu0 0.0
      %2250 = vmatpush1.msra.mxu0 0.0
      %2251 = vmatprep.subr.mxu0 0.0
      %2252 = vmatpush1.msra.mxu0 0.0
      %2253 = vmatprep.subr.mxu0 0.0
      %2254 = vmatpush1.msra.mxu0 0.0
      %2255 = vmatprep.subr.mxu0 0.0
      %2256 = vmatpush1.msra.mxu0 0.0
      %2257 = vmatprep.subr.mxu0 0.0
      %2258 = vmatpush1.msra.mxu0 0.0
      %2259 = vmatprep.subr.mxu0 0.0
      %2260 = vmatpush1.msra.mxu0 0.0
      %2261 = vmatprep.subr.mxu0 0.0
      %2262 = vmatpush1.msra.mxu0 0.0
      %2263 = vmatprep.subr.mxu0 0.0
      %2264 = vmatpush1.msra.mxu0 0.0
      %2265 = vmatprep.subr.mxu0 0.0
      %2266 = vmatpush1.msra.mxu0 0.0
      %2267 = vmatprep.subr.mxu0 0.0
      %2268 = vmatpush1.msra.mxu0 0.0
      %2269 = vmatprep.subr.mxu0 0.0
      %2270 = vmatpush1.msra.mxu0 0.0
      %2271 = vmatprep.subr.mxu0 0.0
      %2272 = vmatpush1.msra.mxu0 0.0
      %2273 = vmatprep.subr.mxu0 0.0
      %2274 = vmatpush1.msra.mxu0 0.0
      %2275 = vmatprep.subr.mxu0 0.0
      %2276 = vmatpush1.msra.mxu0 0.0
      %2277 = vmatprep.subr.mxu0 0.0
      %2278 = vmatpush1.msra.mxu0 0.0
      %2279 = vmatprep.subr.mxu0 0.0
      %2280 = vmatpush1.msra.mxu0 0.0
      %2281 = vmatprep.subr.mxu0 0.0
      %2282 = vmatpush1.msra.mxu0 0.0
      %2283 = vmatprep.mubr.f32.mxu0 0.0
      %v2284 = vand.u32 %v1835, 4294901760
      %2285 = vmatmul.mubr.f32.gmra.mrb[0].mxu0 %v2284
      %v2286 = vpop.f32.mrb[0].mxu0
      %v2287 = vadd.f32 %v1970, %v2286
      %v2288 = vpop.f32.mrb[0].mxu0
      %v2289 = vadd.f32 %v1972, %v2288
      %2290 = vmatprep.mubr.f32.mxu0 0.0
      %v2291 = vand.u32 %v1838, 4294901760
      %2292 = vmatmul.mubr.f32.gmra.mrb[0].mxu0 %v2291
      %v2293 = vpop.f32.mrb[0].mxu0
      %v2294 = vadd.f32 %v1981, %v2293
      %v2295 = vpop.f32.mrb[0].mxu0
      %v2296 = vadd.f32 %v1983, %v2295
      %2297 = vmatprep.mubr.f32.mxu0 0.0
      %v2298 = vand.u32 %v1841, 4294901760
      %2299 = vmatmul.mubr.f32.gmra.mrb[0].mxu0 %v2298
      %v2300 = vpop.f32.mrb[0].mxu0
      %v2301 = vadd.f32 %v1992, %v2300
      %v2302 = vpop.f32.mrb[0].mxu0
      %v2303 = vadd.f32 %v1994, %v2302
      %2304 = vmatprep.mubr.f32.mxu0 0.0
      %v2305 = vand.u32 %v1844, 4294901760
      %2306 = vmatmul.mubr.f32.gmra.mrb[0].mxu0 %v2305
      %v2307 = vpop.f32.mrb[0].mxu0
      %v2308 = vadd.f32 %v2003, %v2307
      %v2309 = vpop.f32.mrb[0].mxu0
      %v2310 = vadd.f32 %v2005, %v2309
      %2311 = vmatprep.mubr.f32.mxu0 0.0
      %v2312 = vand.u32 %v1847, 4294901760
      %2313 = vmatmul.mubr.f32.gmra.mrb[0].mxu0 %v2312
      %v2314 = vpop.f32.mrb[0].mxu0
      %v2315 = vadd.f32 %v2014, %v2314
      %v2316 = vpop.f32.mrb[0].mxu0
      %v2317 = vadd.f32 %v2016, %v2316
      %2318 = vmatprep.mubr.f32.mxu0 0.0
      %v2319 = vand.u32 %v1850, 4294901760
      %2320 = vmatmul.mubr.f32.gmra.mrb[0].mxu0 %v2319
      %v2321 = vpop.f32.mrb[0].mxu0
      %v2322 = vadd.f32 %v2025, %v2321
      %v2323 = vpop.f32.mrb[0].mxu0
      %v2324 = vadd.f32 %v2027, %v2323
      %2325 = vmatprep.mubr.f32.mxu0 0.0
      %v2326 = vand.u32 %v1853, 4294901760
      %2327 = vmatmul.mubr.f32.gmra.mrb[0].mxu0 %v2326
      %v2328 = vpop.f32.mrb[0].mxu0
      %v2329 = vadd.f32 %v2036, %v2328
      %v2330 = vpop.f32.mrb[0].mxu0
      %v2331 = vadd.f32 %v2038, %v2330
      %2332 = vmatprep.mubr.f32.mxu0 0.0
      %v2333 = vand.u32 %v1856, 4294901760
      %2334 = vmatmul.mubr.f32.gmra.mrb[0].mxu0 %v2333
      %v2335 = vpop.f32.mrb[0].mxu0
      %v2336 = vadd.f32 %v2047, %v2335
      %v2337 = vpop.f32.mrb[0].mxu0
      %v2338 = vadd.f32 %v2049, %v2337
      %2339 = vmatprep.mubr.f32.mxu0 0.0
      %v2340 = vand.u32 %v1859, 4294901760
      %2341 = vmatmul.mubr.f32.gmra.mrb[0].mxu0 %v2340
      %v2342 = vpop.f32.mrb[0].mxu0
      %v2343 = vadd.f32 %v2058, %v2342
      %v2344 = vpop.f32.mrb[0].mxu0
      %v2345 = vadd.f32 %v2060, %v2344
      %2346 = vmatprep.mubr.f32.mxu0 0.0
      %v2347 = vand.u32 %v1862, 4294901760
      %2348 = vmatmul.mubr.f32.gmra.mrb[0].mxu0 %v2347
      %v2349 = vpop.f32.mrb[0].mxu0
      %v2350 = vadd.f32 %v2069, %v2349
      %v2351 = vpop.f32.mrb[0].mxu0
      %v2352 = vadd.f32 %v2071, %v2351
      %2353 = vmatprep.mubr.f32.mxu0 0.0
      %v2354 = vand.u32 %v1865, 4294901760
      %2355 = vmatmul.mubr.f32.gmra.mrb[0].mxu0 %v2354
      %v2356 = vpop.f32.mrb[0].mxu0
      %v2357 = vadd.f32 %v2080, %v2356
      %v2358 = vpop.f32.mrb[0].mxu0
      %v2359 = vadd.f32 %v2082, %v2358
      %2360 = vmatprep.mubr.f32.mxu0 0.0
      %v2361 = vand.u32 %v1868, 4294901760
      %2362 = vmatmul.mubr.f32.gmra.mrb[0].mxu0 %v2361
      %v2363 = vpop.f32.mrb[0].mxu0
      %v2364 = vadd.f32 %v2091, %v2363
      %v2365 = vpop.f32.mrb[0].mxu0
      %v2366 = vadd.f32 %v2093, %v2365
      %2367 = vmatprep.mubr.f32.mxu0 0.0
      %v2368 = vand.u32 %v1871, 4294901760
      %2369 = vmatmul.mubr.f32.gmra.mrb[0].mxu0 %v2368
      %v2370 = vpop.f32.mrb[0].mxu0
      %v2371 = vadd.f32 %v2102, %v2370
      %v2372 = vpop.f32.mrb[0].mxu0
      %v2373 = vadd.f32 %v2104, %v2372
      %2374 = vmatprep.mubr.f32.mxu0 0.0
      %v2375 = vand.u32 %v1874, 4294901760
      %2376 = vmatmul.mubr.f32.gmra.mrb[0].mxu0 %v2375
      %v2377 = vpop.f32.mrb[0].mxu0
      %v2378 = vadd.f32 %v2113, %v2377
      %v2379 = vpop.f32.mrb[0].mxu0
      %v2380 = vadd.f32 %v2115, %v2379
      %2381 = vmatprep.mubr.f32.mxu0 0.0
      %v2382 = vand.u32 %v1877, 4294901760
      %2383 = vmatmul.mubr.f32.gmra.mrb[0].mxu0 %v2382
      %v2384 = vpop.f32.mrb[0].mxu0
      %v2385 = vadd.f32 %v2124, %v2384
      %v2386 = vpop.f32.mrb[0].mxu0
      %v2387 = vadd.f32 %v2126, %v2386
      %2388 = vmatprep.mubr.f32.mxu0 0.0
      %v2389 = vand.u32 %v1880, 4294901760
      %2390 = vmatmul.mubr.f32.gmra.mrb[0].mxu0 %v2389
      %v2391 = vpop.f32.mrb[0].mxu0
      %v2392 = vadd.f32 %v2135, %v2391
      %v2393 = vpop.f32.mrb[0].mxu0
      %v2394 = vadd.f32 %v2137, %v2393
      %2395 = vdwg.mxu0
      %v2396 = vand.u32 %v356, 4294901760
      %v2397 = vsub.f32 %v356, %v2396
      %2398 = vmatprep.subr.mxu0 %v2397
      %v2399 = vand.u32 %v355, 4294901760
      %v2400 = vsub.f32 %v355, %v2399
      %2401 = vmatpush1.msra.mxu0 %v2400
      %v2402 = vand.u32 %v358, 4294901760
      %v2403 = vsub.f32 %v358, %v2402
      %2404 = vmatprep.subr.mxu0 %v2403
      %v2405 = vand.u32 %v357, 4294901760
      %v2406 = vsub.f32 %v357, %v2405
      %2407 = vmatpush1.msra.mxu0 %v2406
      %v2408 = vand.u32 %v360, 4294901760
      %v2409 = vsub.f32 %v360, %v2408
      %2410 = vmatprep.subr.mxu0 %v2409
      %v2411 = vand.u32 %v359, 4294901760
      %v2412 = vsub.f32 %v359, %v2411
      %2413 = vmatpush1.msra.mxu0 %v2412
      %v2414 = vand.u32 %v362, 4294901760
      %v2415 = vsub.f32 %v362, %v2414
      %2416 = vmatprep.subr.mxu0 %v2415
      %v2417 = vand.u32 %v361, 4294901760
      %v2418 = vsub.f32 %v361, %v2417
      %2419 = vmatpush1.msra.mxu0 %v2418
      %v2420 = vand.u32 %v364, 4294901760
      %v2421 = vsub.f32 %v364, %v2420
      %2422 = vmatprep.subr.mxu0 %v2421
      %v2423 = vand.u32 %v363, 4294901760
      %v2424 = vsub.f32 %v363, %v2423
      %2425 = vmatpush1.msra.mxu0 %v2424
      %v2426 = vand.u32 %v366, 4294901760
      %v2427 = vsub.f32 %v366, %v2426
      %2428 = vmatprep.subr.mxu0 %v2427
      %v2429 = vand.u32 %v365, 4294901760
      %v2430 = vsub.f32 %v365, %v2429
      %2431 = vmatpush1.msra.mxu0 %v2430
      %v2432 = vand.u32 %v368, 4294901760
      %v2433 = vsub.f32 %v368, %v2432
      %2434 = vmatprep.subr.mxu0 %v2433
      %v2435 = vand.u32 %v367, 4294901760
      %v2436 = vsub.f32 %v367, %v2435
      %2437 = vmatpush1.msra.mxu0 %v2436
      %v2438 = vand.u32 %v370, 4294901760
      %v2439 = vsub.f32 %v370, %v2438
      %2440 = vmatprep.subr.mxu0 %v2439
      %v2441 = vand.u32 %v369, 4294901760
      %v2442 = vsub.f32 %v369, %v2441
      %2443 = vmatpush1.msra.mxu0 %v2442
      %2444 = vmatprep.subr.mxu0 0.0
      %2445 = vmatpush1.msra.mxu0 0.0
      %2446 = vmatprep.subr.mxu0 0.0
      %2447 = vmatpush1.msra.mxu0 0.0
      %2448 = vmatprep.subr.mxu0 0.0
      %2449 = vmatpush1.msra.mxu0 0.0
      %2450 = vmatprep.subr.mxu0 0.0
      %2451 = vmatpush1.msra.mxu0 0.0
      %2452 = vmatprep.subr.mxu0 0.0
      %2453 = vmatpush1.msra.mxu0 0.0
      %2454 = vmatprep.subr.mxu0 0.0
      %2455 = vmatpush1.msra.mxu0 0.0
      %2456 = vmatprep.subr.mxu0 0.0
      %2457 = vmatpush1.msra.mxu0 0.0
      %2458 = vmatprep.subr.mxu0 0.0
      %2459 = vmatpush1.msra.mxu0 0.0
      %2460 = vmatprep.subr.mxu0 0.0
      %2461 = vmatpush1.msra.mxu0 0.0
      %2462 = vmatprep.subr.mxu0 0.0
      %2463 = vmatpush1.msra.mxu0 0.0
      %2464 = vmatprep.subr.mxu0 0.0
      %2465 = vmatpush1.msra.mxu0 0.0
      %2466 = vmatprep.subr.mxu0 0.0
      %2467 = vmatpush1.msra.mxu0 0.0
      %2468 = vmatprep.subr.mxu0 0.0
      %2469 = vmatpush1.msra.mxu0 0.0
      %2470 = vmatprep.subr.mxu0 0.0
      %2471 = vmatpush1.msra.mxu0 0.0
      %2472 = vmatprep.subr.mxu0 0.0
      %2473 = vmatpush1.msra.mxu0 0.0
      %2474 = vmatprep.subr.mxu0 0.0
      %2475 = vmatpush1.msra.mxu0 0.0
      %2476 = vmatprep.subr.mxu0 0.0
      %2477 = vmatpush1.msra.mxu0 0.0
      %2478 = vmatprep.subr.mxu0 0.0
      %2479 = vmatpush1.msra.mxu0 0.0
      %2480 = vmatprep.subr.mxu0 0.0
      %2481 = vmatpush1.msra.mxu0 0.0
      %2482 = vmatprep.subr.mxu0 0.0
      %2483 = vmatpush1.msra.mxu0 0.0
      %2484 = vmatprep.subr.mxu0 0.0
      %2485 = vmatpush1.msra.mxu0 0.0
      %2486 = vmatprep.subr.mxu0 0.0
      %2487 = vmatpush1.msra.mxu0 0.0
      %2488 = vmatprep.subr.mxu0 0.0
      %2489 = vmatpush1.msra.mxu0 0.0
      %2490 = vmatprep.subr.mxu0 0.0
      %2491 = vmatpush1.msra.mxu0 0.0
      %2492 = vmatprep.mubr.f32.mxu0 0.0
      %v2493 = vand.u32 %v1835, 4294901760
      %v2494 = vsub.f32 %v1835, %v2493
      %2495 = vmatmul.mubr.f32.gmra.mrb[0].mxu0 %v2494
      %v2496 = vpop.f32.mrb[0].mxu0
      %v2497 = vadd.f32 %v2287, %v2496
      %v2498 = vpop.f32.mrb[0].mxu0
      %v2499 = vadd.f32 %v2289, %v2498
      %2500 = vmatprep.mubr.f32.mxu0 0.0
      %v2501 = vand.u32 %v1838, 4294901760
      %v2502 = vsub.f32 %v1838, %v2501
      %2503 = vmatmul.mubr.f32.gmra.mrb[0].mxu0 %v2502
      %v2504 = vpop.f32.mrb[0].mxu0
      %v2505 = vadd.f32 %v2294, %v2504
      %v2506 = vpop.f32.mrb[0].mxu0
      %v2507 = vadd.f32 %v2296, %v2506
      %2508 = vmatprep.mubr.f32.mxu0 0.0
      %v2509 = vand.u32 %v1841, 4294901760
      %v2510 = vsub.f32 %v1841, %v2509
      %2511 = vmatmul.mubr.f32.gmra.mrb[0].mxu0 %v2510
      %v2512 = vpop.f32.mrb[0].mxu0
      %v2513 = vadd.f32 %v2301, %v2512
      %v2514 = vpop.f32.mrb[0].mxu0
      %v2515 = vadd.f32 %v2303, %v2514
      %2516 = vmatprep.mubr.f32.mxu0 0.0
      %v2517 = vand.u32 %v1844, 4294901760
      %v2518 = vsub.f32 %v1844, %v2517
      %2519 = vmatmul.mubr.f32.gmra.mrb[0].mxu0 %v2518
      %v2520 = vpop.f32.mrb[0].mxu0
      %v2521 = vadd.f32 %v2308, %v2520
      %v2522 = vpop.f32.mrb[0].mxu0
      %v2523 = vadd.f32 %v2310, %v2522
      %2524 = vmatprep.mubr.f32.mxu0 0.0
      %v2525 = vand.u32 %v1847, 4294901760
      %v2526 = vsub.f32 %v1847, %v2525
      %2527 = vmatmul.mubr.f32.gmra.mrb[0].mxu0 %v2526
      %v2528 = vpop.f32.mrb[0].mxu0
      %v2529 = vadd.f32 %v2315, %v2528
      %v2530 = vpop.f32.mrb[0].mxu0
      %v2531 = vadd.f32 %v2317, %v2530
      %2532 = vmatprep.mubr.f32.mxu0 0.0
      %v2533 = vand.u32 %v1850, 4294901760
      %v2534 = vsub.f32 %v1850, %v2533
      %2535 = vmatmul.mubr.f32.gmra.mrb[0].mxu0 %v2534
      %v2536 = vpop.f32.mrb[0].mxu0
      %v2537 = vadd.f32 %v2322, %v2536
      %v2538 = vpop.f32.mrb[0].mxu0
      %v2539 = vadd.f32 %v2324, %v2538
      %2540 = vmatprep.mubr.f32.mxu0 0.0
      %v2541 = vand.u32 %v1853, 4294901760
      %v2542 = vsub.f32 %v1853, %v2541
      %2543 = vmatmul.mubr.f32.gmra.mrb[0].mxu0 %v2542
      %v2544 = vpop.f32.mrb[0].mxu0
      %v2545 = vadd.f32 %v2329, %v2544
      %v2546 = vpop.f32.mrb[0].mxu0
      %v2547 = vadd.f32 %v2331, %v2546
      %2548 = vmatprep.mubr.f32.mxu0 0.0
      %v2549 = vand.u32 %v1856, 4294901760
      %v2550 = vsub.f32 %v1856, %v2549
      %2551 = vmatmul.mubr.f32.gmra.mrb[0].mxu0 %v2550
      %v2552 = vpop.f32.mrb[0].mxu0
      %v2553 = vadd.f32 %v2336, %v2552
      %v2554 = vpop.f32.mrb[0].mxu0
      %v2555 = vadd.f32 %v2338, %v2554
      %2556 = vmatprep.mubr.f32.mxu0 0.0
      %v2557 = vand.u32 %v1859, 4294901760
      %v2558 = vsub.f32 %v1859, %v2557
      %2559 = vmatmul.mubr.f32.gmra.mrb[0].mxu0 %v2558
      %v2560 = vpop.f32.mrb[0].mxu0
      %v2561 = vadd.f32 %v2343, %v2560
      %v2562 = vpop.f32.mrb[0].mxu0
      %v2563 = vadd.f32 %v2345, %v2562
      %2564 = vmatprep.mubr.f32.mxu0 0.0
      %v2565 = vand.u32 %v1862, 4294901760
      %v2566 = vsub.f32 %v1862, %v2565
      %2567 = vmatmul.mubr.f32.gmra.mrb[0].mxu0 %v2566
      %v2568 = vpop.f32.mrb[0].mxu0
      %v2569 = vadd.f32 %v2350, %v2568
      %v2570 = vpop.f32.mrb[0].mxu0
      %v2571 = vadd.f32 %v2352, %v2570
      %2572 = vmatprep.mubr.f32.mxu0 0.0
      %v2573 = vand.u32 %v1865, 4294901760
      %v2574 = vsub.f32 %v1865, %v2573
      %2575 = vmatmul.mubr.f32.gmra.mrb[0].mxu0 %v2574
      %v2576 = vpop.f32.mrb[0].mxu0
      %v2577 = vadd.f32 %v2357, %v2576
      %v2578 = vpop.f32.mrb[0].mxu0
      %v2579 = vadd.f32 %v2359, %v2578
      %2580 = vmatprep.mubr.f32.mxu0 0.0
      %v2581 = vand.u32 %v1868, 4294901760
      %v2582 = vsub.f32 %v1868, %v2581
      %2583 = vmatmul.mubr.f32.gmra.mrb[0].mxu0 %v2582
      %v2584 = vpop.f32.mrb[0].mxu0
      %v2585 = vadd.f32 %v2364, %v2584
      %v2586 = vpop.f32.mrb[0].mxu0
      %v2587 = vadd.f32 %v2366, %v2586
      %2588 = vmatprep.mubr.f32.mxu0 0.0
      %v2589 = vand.u32 %v1871, 4294901760
      %v2590 = vsub.f32 %v1871, %v2589
      %2591 = vmatmul.mubr.f32.gmra.mrb[0].mxu0 %v2590
      %v2592 = vpop.f32.mrb[0].mxu0
      %v2593 = vadd.f32 %v2371, %v2592
      %v2594 = vpop.f32.mrb[0].mxu0
      %v2595 = vadd.f32 %v2373, %v2594
      %2596 = vmatprep.mubr.f32.mxu0 0.0
      %v2597 = vand.u32 %v1874, 4294901760
      %v2598 = vsub.f32 %v1874, %v2597
      %2599 = vmatmul.mubr.f32.gmra.mrb[0].mxu0 %v2598
      %v2600 = vpop.f32.mrb[0].mxu0
      %v2601 = vadd.f32 %v2378, %v2600
      %v2602 = vpop.f32.mrb[0].mxu0
      %v2603 = vadd.f32 %v2380, %v2602
      %2604 = vmatprep.mubr.f32.mxu0 0.0
      %v2605 = vand.u32 %v1877, 4294901760
      %v2606 = vsub.f32 %v1877, %v2605
      %2607 = vmatmul.mubr.f32.gmra.mrb[0].mxu0 %v2606
      %v2608 = vpop.f32.mrb[0].mxu0
      %v2609 = vadd.f32 %v2385, %v2608
      %v2610 = vpop.f32.mrb[0].mxu0
      %v2611 = vadd.f32 %v2387, %v2610
      %2612 = vmatprep.mubr.f32.mxu0 0.0
      %v2613 = vand.u32 %v1880, 4294901760
      %v2614 = vsub.f32 %v1880, %v2613
      %2615 = vmatmul.mubr.f32.gmra.mrb[0].mxu0 %v2614
      %v2616 = vpop.f32.mrb[0].mxu0
      %v2617 = vadd.f32 %v2392, %v2616
      %v2618 = vpop.f32.mrb[0].mxu0
      %v2619 = vadd.f32 %v2394, %v2618
      %2620 = vdwg.mxu0
      %v2621 = vand.u32 %v356, 4294901760
      %2622 = vmatprep.subr.mxu0 %v2621
      %v2623 = vand.u32 %v355, 4294901760
      %2624 = vmatpush1.msra.mxu0 %v2623
      %v2625 = vand.u32 %v358, 4294901760
      %2626 = vmatprep.subr.mxu0 %v2625
      %v2627 = vand.u32 %v357, 4294901760
      %2628 = vmatpush1.msra.mxu0 %v2627
      %v2629 = vand.u32 %v360, 4294901760
      %2630 = vmatprep.subr.mxu0 %v2629
      %v2631 = vand.u32 %v359, 4294901760
      %2632 = vmatpush1.msra.mxu0 %v2631
      %v2633 = vand.u32 %v362, 4294901760
      %2634 = vmatprep.subr.mxu0 %v2633
      %v2635 = vand.u32 %v361, 4294901760
      %2636 = vmatpush1.msra.mxu0 %v2635
      %v2637 = vand.u32 %v364, 4294901760
      %2638 = vmatprep.subr.mxu0 %v2637
      %v2639 = vand.u32 %v363, 4294901760
      %2640 = vmatpush1.msra.mxu0 %v2639
      %v2641 = vand.u32 %v366, 4294901760
      %2642 = vmatprep.subr.mxu0 %v2641
      %v2643 = vand.u32 %v365, 4294901760
      %2644 = vmatpush1.msra.mxu0 %v2643
      %v2645 = vand.u32 %v368, 4294901760
      %2646 = vmatprep.subr.mxu0 %v2645
      %v2647 = vand.u32 %v367, 4294901760
      %2648 = vmatpush1.msra.mxu0 %v2647
      %v2649 = vand.u32 %v370, 4294901760
      %2650 = vmatprep.subr.mxu0 %v2649
      %v2651 = vand.u32 %v369, 4294901760
      %2652 = vmatpush1.msra.mxu0 %v2651
      %2653 = vmatprep.subr.mxu0 0.0
      %2654 = vmatpush1.msra.mxu0 0.0
      %2655 = vmatprep.subr.mxu0 0.0
      %2656 = vmatpush1.msra.mxu0 0.0
      %2657 = vmatprep.subr.mxu0 0.0
      %2658 = vmatpush1.msra.mxu0 0.0
      %2659 = vmatprep.subr.mxu0 0.0
      %2660 = vmatpush1.msra.mxu0 0.0
      %2661 = vmatprep.subr.mxu0 0.0
      %2662 = vmatpush1.msra.mxu0 0.0
      %2663 = vmatprep.subr.mxu0 0.0
      %2664 = vmatpush1.msra.mxu0 0.0
      %2665 = vmatprep.subr.mxu0 0.0
      %2666 = vmatpush1.msra.mxu0 0.0
      %2667 = vmatprep.subr.mxu0 0.0
      %2668 = vmatpush1.msra.mxu0 0.0
      %2669 = vmatprep.subr.mxu0 0.0
      %2670 = vmatpush1.msra.mxu0 0.0
      %2671 = vmatprep.subr.mxu0 0.0
      %2672 = vmatpush1.msra.mxu0 0.0
      %2673 = vmatprep.subr.mxu0 0.0
      %2674 = vmatpush1.msra.mxu0 0.0
      %2675 = vmatprep.subr.mxu0 0.0
      %2676 = vmatpush1.msra.mxu0 0.0
      %2677 = vmatprep.subr.mxu0 0.0
      %2678 = vmatpush1.msra.mxu0 0.0
      %2679 = vmatprep.subr.mxu0 0.0
      %2680 = vmatpush1.msra.mxu0 0.0
      %2681 = vmatprep.subr.mxu0 0.0
      %2682 = vmatpush1.msra.mxu0 0.0
      %2683 = vmatprep.subr.mxu0 0.0
      %2684 = vmatpush1.msra.mxu0 0.0
      %2685 = vmatprep.subr.mxu0 0.0
      %2686 = vmatpush1.msra.mxu0 0.0
      %2687 = vmatprep.subr.mxu0 0.0
      %2688 = vmatpush1.msra.mxu0 0.0
      %2689 = vmatprep.subr.mxu0 0.0
      %2690 = vmatpush1.msra.mxu0 0.0
      %2691 = vmatprep.subr.mxu0 0.0
      %2692 = vmatpush1.msra.mxu0 0.0
      %2693 = vmatprep.subr.mxu0 0.0
      %2694 = vmatpush1.msra.mxu0 0.0
      %2695 = vmatprep.subr.mxu0 0.0
      %2696 = vmatpush1.msra.mxu0 0.0
      %2697 = vmatprep.subr.mxu0 0.0
      %2698 = vmatpush1.msra.mxu0 0.0
      %2699 = vmatprep.subr.mxu0 0.0
      %2700 = vmatpush1.msra.mxu0 0.0
      %2701 = vmatprep.mubr.f32.mxu0 0.0
      %v2702 = vand.u32 %v1835, 4294901760
      %v2703 = vsub.f32 %v1835, %v2702
      %v2704 = vand.u32 %v2703, 4294901760
      %2705 = vmatmul.mubr.f32.gmra.mrb[0].mxu0 %v2704
      %v2706 = vpop.f32.mrb[0].mxu0
      %v2707 = vadd.f32 %v2497, %v2706
      %v2708 = vpop.f32.mrb[0].mxu0
      %v2709 = vadd.f32 %v2499, %v2708
      %2710 = vmatprep.mubr.f32.mxu0 0.0
      %v2711 = vand.u32 %v1838, 4294901760
      %v2712 = vsub.f32 %v1838, %v2711
      %v2713 = vand.u32 %v2712, 4294901760
      %2714 = vmatmul.mubr.f32.gmra.mrb[0].mxu0 %v2713
      %v2715 = vpop.f32.mrb[0].mxu0
      %v2716 = vadd.f32 %v2505, %v2715
      %v2717 = vpop.f32.mrb[0].mxu0
      %v2718 = vadd.f32 %v2507, %v2717
      %2719 = vmatprep.mubr.f32.mxu0 0.0
      %v2720 = vand.u32 %v1841, 4294901760
      %v2721 = vsub.f32 %v1841, %v2720
      %v2722 = vand.u32 %v2721, 4294901760
      %2723 = vmatmul.mubr.f32.gmra.mrb[0].mxu0 %v2722
      %v2724 = vpop.f32.mrb[0].mxu0
      %v2725 = vadd.f32 %v2513, %v2724
      %v2726 = vpop.f32.mrb[0].mxu0
      %v2727 = vadd.f32 %v2515, %v2726
      %2728 = vmatprep.mubr.f32.mxu0 0.0
      %v2729 = vand.u32 %v1844, 4294901760
      %v2730 = vsub.f32 %v1844, %v2729
      %v2731 = vand.u32 %v2730, 4294901760
      %2732 = vmatmul.mubr.f32.gmra.mrb[0].mxu0 %v2731
      %v2733 = vpop.f32.mrb[0].mxu0
      %v2734 = vadd.f32 %v2521, %v2733
      %v2735 = vpop.f32.mrb[0].mxu0
      %v2736 = vadd.f32 %v2523, %v2735
      %2737 = vmatprep.mubr.f32.mxu0 0.0
      %v2738 = vand.u32 %v1847, 4294901760
      %v2739 = vsub.f32 %v1847, %v2738
      %v2740 = vand.u32 %v2739, 4294901760
      %2741 = vmatmul.mubr.f32.gmra.mrb[0].mxu0 %v2740
      %v2742 = vpop.f32.mrb[0].mxu0
      %v2743 = vadd.f32 %v2529, %v2742
      %v2744 = vpop.f32.mrb[0].mxu0
      %v2745 = vadd.f32 %v2531, %v2744
      %2746 = vmatprep.mubr.f32.mxu0 0.0
      %v2747 = vand.u32 %v1850, 4294901760
      %v2748 = vsub.f32 %v1850, %v2747
      %v2749 = vand.u32 %v2748, 4294901760
      %2750 = vmatmul.mubr.f32.gmra.mrb[0].mxu0 %v2749
      %v2751 = vpop.f32.mrb[0].mxu0
      %v2752 = vadd.f32 %v2537, %v2751
      %v2753 = vpop.f32.mrb[0].mxu0
      %v2754 = vadd.f32 %v2539, %v2753
      %2755 = vmatprep.mubr.f32.mxu0 0.0
      %v2756 = vand.u32 %v1853, 4294901760
      %v2757 = vsub.f32 %v1853, %v2756
      %v2758 = vand.u32 %v2757, 4294901760
      %2759 = vmatmul.mubr.f32.gmra.mrb[0].mxu0 %v2758
      %v2760 = vpop.f32.mrb[0].mxu0
      %v2761 = vadd.f32 %v2545, %v2760
      %v2762 = vpop.f32.mrb[0].mxu0
      %v2763 = vadd.f32 %v2547, %v2762
      %2764 = vmatprep.mubr.f32.mxu0 0.0
      %v2765 = vand.u32 %v1856, 4294901760
      %v2766 = vsub.f32 %v1856, %v2765
      %v2767 = vand.u32 %v2766, 4294901760
      %2768 = vmatmul.mubr.f32.gmra.mrb[0].mxu0 %v2767
      %v2769 = vpop.f32.mrb[0].mxu0
      %v2770 = vadd.f32 %v2553, %v2769
      %v2771 = vpop.f32.mrb[0].mxu0
      %v2772 = vadd.f32 %v2555, %v2771
      %2773 = vmatprep.mubr.f32.mxu0 0.0
      %v2774 = vand.u32 %v1859, 4294901760
      %v2775 = vsub.f32 %v1859, %v2774
      %v2776 = vand.u32 %v2775, 4294901760
      %2777 = vmatmul.mubr.f32.gmra.mrb[0].mxu0 %v2776
      %v2778 = vpop.f32.mrb[0].mxu0
      %v2779 = vadd.f32 %v2561, %v2778
      %v2780 = vpop.f32.mrb[0].mxu0
      %v2781 = vadd.f32 %v2563, %v2780
      %2782 = vmatprep.mubr.f32.mxu0 0.0
      %v2783 = vand.u32 %v1862, 4294901760
      %v2784 = vsub.f32 %v1862, %v2783
      %v2785 = vand.u32 %v2784, 4294901760
      %2786 = vmatmul.mubr.f32.gmra.mrb[0].mxu0 %v2785
      %v2787 = vpop.f32.mrb[0].mxu0
      %v2788 = vadd.f32 %v2569, %v2787
      %v2789 = vpop.f32.mrb[0].mxu0
      %v2790 = vadd.f32 %v2571, %v2789
      %2791 = vmatprep.mubr.f32.mxu0 0.0
      %v2792 = vand.u32 %v1865, 4294901760
      %v2793 = vsub.f32 %v1865, %v2792
      %v2794 = vand.u32 %v2793, 4294901760
      %2795 = vmatmul.mubr.f32.gmra.mrb[0].mxu0 %v2794
      %v2796 = vpop.f32.mrb[0].mxu0
      %v2797 = vadd.f32 %v2577, %v2796
      %v2798 = vpop.f32.mrb[0].mxu0
      %v2799 = vadd.f32 %v2579, %v2798
      %2800 = vmatprep.mubr.f32.mxu0 0.0
      %v2801 = vand.u32 %v1868, 4294901760
      %v2802 = vsub.f32 %v1868, %v2801
      %v2803 = vand.u32 %v2802, 4294901760
      %2804 = vmatmul.mubr.f32.gmra.mrb[0].mxu0 %v2803
      %v2805 = vpop.f32.mrb[0].mxu0
      %v2806 = vadd.f32 %v2585, %v2805
      %v2807 = vpop.f32.mrb[0].mxu0
      %v2808 = vadd.f32 %v2587, %v2807
      %2809 = vmatprep.mubr.f32.mxu0 0.0
      %v2810 = vand.u32 %v1871, 4294901760
      %v2811 = vsub.f32 %v1871, %v2810
      %v2812 = vand.u32 %v2811, 4294901760
      %2813 = vmatmul.mubr.f32.gmra.mrb[0].mxu0 %v2812
      %v2814 = vpop.f32.mrb[0].mxu0
      %v2815 = vadd.f32 %v2593, %v2814
      %v2816 = vpop.f32.mrb[0].mxu0
      %v2817 = vadd.f32 %v2595, %v2816
      %2818 = vmatprep.mubr.f32.mxu0 0.0
      %v2819 = vand.u32 %v1874, 4294901760
      %v2820 = vsub.f32 %v1874, %v2819
      %v2821 = vand.u32 %v2820, 4294901760
      %2822 = vmatmul.mubr.f32.gmra.mrb[0].mxu0 %v2821
      %v2823 = vpop.f32.mrb[0].mxu0
      %v2824 = vadd.f32 %v2601, %v2823
      %v2825 = vpop.f32.mrb[0].mxu0
      %v2826 = vadd.f32 %v2603, %v2825
      %2827 = vmatprep.mubr.f32.mxu0 0.0
      %v2828 = vand.u32 %v1877, 4294901760
      %v2829 = vsub.f32 %v1877, %v2828
      %v2830 = vand.u32 %v2829, 4294901760
      %2831 = vmatmul.mubr.f32.gmra.mrb[0].mxu0 %v2830
      %v2832 = vpop.f32.mrb[0].mxu0
      %v2833 = vadd.f32 %v2609, %v2832
      %v2834 = vpop.f32.mrb[0].mxu0
      %v2835 = vadd.f32 %v2611, %v2834
      %2836 = vmatprep.mubr.f32.mxu0 0.0
      %v2837 = vand.u32 %v1880, 4294901760
      %v2838 = vsub.f32 %v1880, %v2837
      %v2839 = vand.u32 %v2838, 4294901760
      %2840 = vmatmul.mubr.f32.gmra.mrb[0].mxu0 %v2839
      %v2841 = vpop.f32.mrb[0].mxu0
      %v2842 = vadd.f32 %v2617, %v2841
      %v2843 = vpop.f32.mrb[0].mxu0
      %v2844 = vadd.f32 %v2619, %v2843
      %2845 = vdwg.mxu0
      %v2846 = vand.u32 %v356, 4294901760
      %v2847 = vsub.f32 %v356, %v2846
      %v2848 = vand.u32 %v2847, 4294901760
      %2849 = vmatprep.subr.mxu0 %v2848
      %v2850 = vand.u32 %v355, 4294901760
      %v2851 = vsub.f32 %v355, %v2850
      %v2852 = vand.u32 %v2851, 4294901760
      %2853 = vmatpush1.msra.mxu0 %v2852
      %v2854 = vand.u32 %v358, 4294901760
      %v2855 = vsub.f32 %v358, %v2854
      %v2856 = vand.u32 %v2855, 4294901760
      %2857 = vmatprep.subr.mxu0 %v2856
      %v2858 = vand.u32 %v357, 4294901760
      %v2859 = vsub.f32 %v357, %v2858
      %v2860 = vand.u32 %v2859, 4294901760
      %2861 = vmatpush1.msra.mxu0 %v2860
      %v2862 = vand.u32 %v360, 4294901760
      %v2863 = vsub.f32 %v360, %v2862
      %v2864 = vand.u32 %v2863, 4294901760
      %2865 = vmatprep.subr.mxu0 %v2864
      %v2866 = vand.u32 %v359, 4294901760
      %v2867 = vsub.f32 %v359, %v2866
      %v2868 = vand.u32 %v2867, 4294901760
      %2869 = vmatpush1.msra.mxu0 %v2868
      %v2870 = vand.u32 %v362, 4294901760
      %v2871 = vsub.f32 %v362, %v2870
      %v2872 = vand.u32 %v2871, 4294901760
      %2873 = vmatprep.subr.mxu0 %v2872
      %v2874 = vand.u32 %v361, 4294901760
      %v2875 = vsub.f32 %v361, %v2874
      %v2876 = vand.u32 %v2875, 4294901760
      %2877 = vmatpush1.msra.mxu0 %v2876
      %v2878 = vand.u32 %v364, 4294901760
      %v2879 = vsub.f32 %v364, %v2878
      %v2880 = vand.u32 %v2879, 4294901760
      %2881 = vmatprep.subr.mxu0 %v2880
      %v2882 = vand.u32 %v363, 4294901760
      %v2883 = vsub.f32 %v363, %v2882
      %v2884 = vand.u32 %v2883, 4294901760
      %2885 = vmatpush1.msra.mxu0 %v2884
      %v2886 = vand.u32 %v366, 4294901760
      %v2887 = vsub.f32 %v366, %v2886
      %v2888 = vand.u32 %v2887, 4294901760
      %2889 = vmatprep.subr.mxu0 %v2888
      %v2890 = vand.u32 %v365, 4294901760
      %v2891 = vsub.f32 %v365, %v2890
      %v2892 = vand.u32 %v2891, 4294901760
      %2893 = vmatpush1.msra.mxu0 %v2892
      %v2894 = vand.u32 %v368, 4294901760
      %v2895 = vsub.f32 %v368, %v2894
      %v2896 = vand.u32 %v2895, 4294901760
      %2897 = vmatprep.subr.mxu0 %v2896
      %v2898 = vand.u32 %v367, 4294901760
      %v2899 = vsub.f32 %v367, %v2898
      %v2900 = vand.u32 %v2899, 4294901760
      %2901 = vmatpush1.msra.mxu0 %v2900
      %v2902 = vand.u32 %v370, 4294901760
      %v2903 = vsub.f32 %v370, %v2902
      %v2904 = vand.u32 %v2903, 4294901760
      %2905 = vmatprep.subr.mxu0 %v2904
      %v2906 = vand.u32 %v369, 4294901760
      %v2907 = vsub.f32 %v369, %v2906
      %v2908 = vand.u32 %v2907, 4294901760
      %2909 = vmatpush1.msra.mxu0 %v2908
      %2910 = vmatprep.subr.mxu0 0.0
      %2911 = vmatpush1.msra.mxu0 0.0
      %2912 = vmatprep.subr.mxu0 0.0
      %2913 = vmatpush1.msra.mxu0 0.0
      %2914 = vmatprep.subr.mxu0 0.0
      %2915 = vmatpush1.msra.mxu0 0.0
      %2916 = vmatprep.subr.mxu0 0.0
      %2917 = vmatpush1.msra.mxu0 0.0
      %2918 = vmatprep.subr.mxu0 0.0
      %2919 = vmatpush1.msra.mxu0 0.0
      %2920 = vmatprep.subr.mxu0 0.0
      %2921 = vmatpush1.msra.mxu0 0.0
      %2922 = vmatprep.subr.mxu0 0.0
      %2923 = vmatpush1.msra.mxu0 0.0
      %2924 = vmatprep.subr.mxu0 0.0
      %2925 = vmatpush1.msra.mxu0 0.0
      %2926 = vmatprep.subr.mxu0 0.0
      %2927 = vmatpush1.msra.mxu0 0.0
      %2928 = vmatprep.subr.mxu0 0.0
      %2929 = vmatpush1.msra.mxu0 0.0
      %2930 = vmatprep.subr.mxu0 0.0
      %2931 = vmatpush1.msra.mxu0 0.0
      %2932 = vmatprep.subr.mxu0 0.0
      %2933 = vmatpush1.msra.mxu0 0.0
      %2934 = vmatprep.subr.mxu0 0.0
      %2935 = vmatpush1.msra.mxu0 0.0
      %2936 = vmatprep.subr.mxu0 0.0
      %2937 = vmatpush1.msra.mxu0 0.0
      %2938 = vmatprep.subr.mxu0 0.0
      %2939 = vmatpush1.msra.mxu0 0.0
      %2940 = vmatprep.subr.mxu0 0.0
      %2941 = vmatpush1.msra.mxu0 0.0
      %2942 = vmatprep.subr.mxu0 0.0
      %2943 = vmatpush1.msra.mxu0 0.0
      %2944 = vmatprep.subr.mxu0 0.0
      %2945 = vmatpush1.msra.mxu0 0.0
      %2946 = vmatprep.subr.mxu0 0.0
      %2947 = vmatpush1.msra.mxu0 0.0
      %2948 = vmatprep.subr.mxu0 0.0
      %2949 = vmatpush1.msra.mxu0 0.0
      %2950 = vmatprep.subr.mxu0 0.0
      %2951 = vmatpush1.msra.mxu0 0.0
      %2952 = vmatprep.subr.mxu0 0.0
      %2953 = vmatpush1.msra.mxu0 0.0
      %2954 = vmatprep.subr.mxu0 0.0
      %2955 = vmatpush1.msra.mxu0 0.0
      %2956 = vmatprep.subr.mxu0 0.0
      %2957 = vmatpush1.msra.mxu0 0.0
      %2958 = vmatprep.mubr.f32.mxu0 0.0
      %v2959 = vand.u32 %v1835, 4294901760
      %2960 = vmatmul.mubr.f32.gmra.mrb[0].mxu0 %v2959
      %v2961 = vpop.f32.mrb[0].mxu0
      %v2962 = vadd.f32 %v2707, %v2961
      %v2963 = vpop.f32.mrb[0].mxu0
      %v2964 = vadd.f32 %v2709, %v2963
      %2965 = vmatprep.mubr.f32.mxu0 0.0
      %v2966 = vand.u32 %v1838, 4294901760
      %2967 = vmatmul.mubr.f32.gmra.mrb[0].mxu0 %v2966
      %v2968 = vpop.f32.mrb[0].mxu0
      %v2969 = vadd.f32 %v2716, %v2968
      %v2970 = vpop.f32.mrb[0].mxu0
      %v2971 = vadd.f32 %v2718, %v2970
      %2972 = vmatprep.mubr.f32.mxu0 0.0
      %v2973 = vand.u32 %v1841, 4294901760
      %2974 = vmatmul.mubr.f32.gmra.mrb[0].mxu0 %v2973
      %v2975 = vpop.f32.mrb[0].mxu0
      %v2976 = vadd.f32 %v2725, %v2975
      %v2977 = vpop.f32.mrb[0].mxu0
      %v2978 = vadd.f32 %v2727, %v2977
      %2979 = vmatprep.mubr.f32.mxu0 0.0
      %v2980 = vand.u32 %v1844, 4294901760
      %2981 = vmatmul.mubr.f32.gmra.mrb[0].mxu0 %v2980
      %v2982 = vpop.f32.mrb[0].mxu0
      %v2983 = vadd.f32 %v2734, %v2982
      %v2984 = vpop.f32.mrb[0].mxu0
      %v2985 = vadd.f32 %v2736, %v2984
      %2986 = vmatprep.mubr.f32.mxu0 0.0
      %v2987 = vand.u32 %v1847, 4294901760
      %2988 = vmatmul.mubr.f32.gmra.mrb[0].mxu0 %v2987
      %v2989 = vpop.f32.mrb[0].mxu0
      %v2990 = vadd.f32 %v2743, %v2989
      %v2991 = vpop.f32.mrb[0].mxu0
      %v2992 = vadd.f32 %v2745, %v2991
      %2993 = vmatprep.mubr.f32.mxu0 0.0
      %v2994 = vand.u32 %v1850, 4294901760
      %2995 = vmatmul.mubr.f32.gmra.mrb[0].mxu0 %v2994
      %v2996 = vpop.f32.mrb[0].mxu0
      %v2997 = vadd.f32 %v2752, %v2996
      %v2998 = vpop.f32.mrb[0].mxu0
      %v2999 = vadd.f32 %v2754, %v2998
      %3000 = vmatprep.mubr.f32.mxu0 0.0
      %v3001 = vand.u32 %v1853, 4294901760
      %3002 = vmatmul.mubr.f32.gmra.mrb[0].mxu0 %v3001
      %v3003 = vpop.f32.mrb[0].mxu0
      %v3004 = vadd.f32 %v2761, %v3003
      %v3005 = vpop.f32.mrb[0].mxu0
      %v3006 = vadd.f32 %v2763, %v3005
      %3007 = vmatprep.mubr.f32.mxu0 0.0
      %v3008 = vand.u32 %v1856, 4294901760
      %3009 = vmatmul.mubr.f32.gmra.mrb[0].mxu0 %v3008
      %v3010 = vpop.f32.mrb[0].mxu0
      %v3011 = vadd.f32 %v2770, %v3010
      %v3012 = vpop.f32.mrb[0].mxu0
      %v3013 = vadd.f32 %v2772, %v3012
      %3014 = vmatprep.mubr.f32.mxu0 0.0
      %v3015 = vand.u32 %v1859, 4294901760
      %3016 = vmatmul.mubr.f32.gmra.mrb[0].mxu0 %v3015
      %v3017 = vpop.f32.mrb[0].mxu0
      %v3018 = vadd.f32 %v2779, %v3017
      %v3019 = vpop.f32.mrb[0].mxu0
      %v3020 = vadd.f32 %v2781, %v3019
      %3021 = vmatprep.mubr.f32.mxu0 0.0
      %v3022 = vand.u32 %v1862, 4294901760
      %3023 = vmatmul.mubr.f32.gmra.mrb[0].mxu0 %v3022
      %v3024 = vpop.f32.mrb[0].mxu0
      %v3025 = vadd.f32 %v2788, %v3024
      %v3026 = vpop.f32.mrb[0].mxu0
      %v3027 = vadd.f32 %v2790, %v3026
      %3028 = vmatprep.mubr.f32.mxu0 0.0
      %v3029 = vand.u32 %v1865, 4294901760
      %3030 = vmatmul.mubr.f32.gmra.mrb[0].mxu0 %v3029
      %v3031 = vpop.f32.mrb[0].mxu0
      %v3032 = vadd.f32 %v2797, %v3031
      %v3033 = vpop.f32.mrb[0].mxu0
      %v3034 = vadd.f32 %v2799, %v3033
      %3035 = vmatprep.mubr.f32.mxu0 0.0
      %v3036 = vand.u32 %v1868, 4294901760
      %3037 = vmatmul.mubr.f32.gmra.mrb[0].mxu0 %v3036
      %v3038 = vpop.f32.mrb[0].mxu0
      %v3039 = vadd.f32 %v2806, %v3038
      %v3040 = vpop.f32.mrb[0].mxu0
      %v3041 = vadd.f32 %v2808, %v3040
      %3042 = vmatprep.mubr.f32.mxu0 0.0
      %v3043 = vand.u32 %v1871, 4294901760
      %3044 = vmatmul.mubr.f32.gmra.mrb[0].mxu0 %v3043
      %v3045 = vpop.f32.mrb[0].mxu0
      %v3046 = vadd.f32 %v2815, %v3045
      %v3047 = vpop.f32.mrb[0].mxu0
      %v3048 = vadd.f32 %v2817, %v3047
      %3049 = vmatprep.mubr.f32.mxu0 0.0
      %v3050 = vand.u32 %v1874, 4294901760
      %3051 = vmatmul.mubr.f32.gmra.mrb[0].mxu0 %v3050
      %v3052 = vpop.f32.mrb[0].mxu0
      %v3053 = vadd.f32 %v2824, %v3052
      %v3054 = vpop.f32.mrb[0].mxu0
      %v3055 = vadd.f32 %v2826, %v3054
      %3056 = vmatprep.mubr.f32.mxu0 0.0
      %v3057 = vand.u32 %v1877, 4294901760
      %3058 = vmatmul.mubr.f32.gmra.mrb[0].mxu0 %v3057
      %v3059 = vpop.f32.mrb[0].mxu0
      %v3060 = vadd.f32 %v2833, %v3059
      %v3061 = vpop.f32.mrb[0].mxu0
      %v3062 = vadd.f32 %v2835, %v3061
      %3063 = vmatprep.mubr.f32.mxu0 0.0
      %v3064 = vand.u32 %v1880, 4294901760
      %3065 = vmatmul.mubr.f32.gmra.mrb[0].mxu0 %v3064
      %v3066 = vpop.f32.mrb[0].mxu0
      %v3067 = vadd.f32 %v2842, %v3066
      %v3068 = vpop.f32.mrb[0].mxu0
      %v3069 = vadd.f32 %v2844, %v3068
      %3070 = vdwg.mxu0
      %v3071 = vand.u32 %v356, 4294901760
      %3072 = vmatprep.subr.mxu0 %v3071
      %v3073 = vand.u32 %v355, 4294901760
      %3074 = vmatpush1.msra.mxu0 %v3073
      %v3075 = vand.u32 %v358, 4294901760
      %3076 = vmatprep.subr.mxu0 %v3075
      %v3077 = vand.u32 %v357, 4294901760
      %3078 = vmatpush1.msra.mxu0 %v3077
      %v3079 = vand.u32 %v360, 4294901760
      %3080 = vmatprep.subr.mxu0 %v3079
      %v3081 = vand.u32 %v359, 4294901760
      %3082 = vmatpush1.msra.mxu0 %v3081
      %v3083 = vand.u32 %v362, 4294901760
      %3084 = vmatprep.subr.mxu0 %v3083
      %v3085 = vand.u32 %v361, 4294901760
      %3086 = vmatpush1.msra.mxu0 %v3085
      %v3087 = vand.u32 %v364, 4294901760
      %3088 = vmatprep.subr.mxu0 %v3087
      %v3089 = vand.u32 %v363, 4294901760
      %3090 = vmatpush1.msra.mxu0 %v3089
      %v3091 = vand.u32 %v366, 4294901760
      %3092 = vmatprep.subr.mxu0 %v3091
      %v3093 = vand.u32 %v365, 4294901760
      %3094 = vmatpush1.msra.mxu0 %v3093
      %v3095 = vand.u32 %v368, 4294901760
      %3096 = vmatprep.subr.mxu0 %v3095
      %v3097 = vand.u32 %v367, 4294901760
      %3098 = vmatpush1.msra.mxu0 %v3097
      %v3099 = vand.u32 %v370, 4294901760
      %3100 = vmatprep.subr.mxu0 %v3099
      %v3101 = vand.u32 %v369, 4294901760
      %3102 = vmatpush1.msra.mxu0 %v3101
      %3103 = vmatprep.subr.mxu0 0.0
      %3104 = vmatpush1.msra.mxu0 0.0
      %3105 = vmatprep.subr.mxu0 0.0
      %3106 = vmatpush1.msra.mxu0 0.0
      %3107 = vmatprep.subr.mxu0 0.0
      %3108 = vmatpush1.msra.mxu0 0.0
      %3109 = vmatprep.subr.mxu0 0.0
      %3110 = vmatpush1.msra.mxu0 0.0
      %3111 = vmatprep.subr.mxu0 0.0
      %3112 = vmatpush1.msra.mxu0 0.0
      %3113 = vmatprep.subr.mxu0 0.0
      %3114 = vmatpush1.msra.mxu0 0.0
      %3115 = vmatprep.subr.mxu0 0.0
      %3116 = vmatpush1.msra.mxu0 0.0
      %3117 = vmatprep.subr.mxu0 0.0
      %3118 = vmatpush1.msra.mxu0 0.0
      %3119 = vmatprep.subr.mxu0 0.0
      %3120 = vmatpush1.msra.mxu0 0.0
      %3121 = vmatprep.subr.mxu0 0.0
      %3122 = vmatpush1.msra.mxu0 0.0
      %3123 = vmatprep.subr.mxu0 0.0
      %3124 = vmatpush1.msra.mxu0 0.0
      %3125 = vmatprep.subr.mxu0 0.0
      %3126 = vmatpush1.msra.mxu0 0.0
      %3127 = vmatprep.subr.mxu0 0.0
      %3128 = vmatpush1.msra.mxu0 0.0
      %3129 = vmatprep.subr.mxu0 0.0
      %3130 = vmatpush1.msra.mxu0 0.0
      %3131 = vmatprep.subr.mxu0 0.0
      %3132 = vmatpush1.msra.mxu0 0.0
      %3133 = vmatprep.subr.mxu0 0.0
      %3134 = vmatpush1.msra.mxu0 0.0
      %3135 = vmatprep.subr.mxu0 0.0
      %3136 = vmatpush1.msra.mxu0 0.0
      %3137 = vmatprep.subr.mxu0 0.0
      %3138 = vmatpush1.msra.mxu0 0.0
      %3139 = vmatprep.subr.mxu0 0.0
      %3140 = vmatpush1.msra.mxu0 0.0
      %3141 = vmatprep.subr.mxu0 0.0
      %3142 = vmatpush1.msra.mxu0 0.0
      %3143 = vmatprep.subr.mxu0 0.0
      %3144 = vmatpush1.msra.mxu0 0.0
      %3145 = vmatprep.subr.mxu0 0.0
      %3146 = vmatpush1.msra.mxu0 0.0
      %3147 = vmatprep.subr.mxu0 0.0
      %3148 = vmatpush1.msra.mxu0 0.0
      %3149 = vmatprep.subr.mxu0 0.0
      %3150 = vmatpush1.msra.mxu0 0.0
      %3151 = vmatprep.mubr.f32.mxu0 0.0
      %v3152 = vand.u32 %v1835, 4294901760
      %3153 = vmatmul.mubr.f32.gmra.mrb[0].mxu0 %v3152
      %v3154 = vpop.f32.mrb[0].mxu0
      %v3155 = vadd.f32 %v2962, %v3154
      %v3156 = vpop.f32.mrb[0].mxu0
      %v3157 = vadd.f32 %v2964, %v3156
      %3158 = vmatprep.mubr.f32.mxu0 0.0
      %v3159 = vand.u32 %v1838, 4294901760
      %3160 = vmatmul.mubr.f32.gmra.mrb[0].mxu0 %v3159
      %v3161 = vpop.f32.mrb[0].mxu0
      %v3162 = vadd.f32 %v2969, %v3161
      %v3163 = vpop.f32.mrb[0].mxu0
      %v3164 = vadd.f32 %v2971, %v3163
      %3165 = vmatprep.mubr.f32.mxu0 0.0
      %v3166 = vand.u32 %v1841, 4294901760
      %3167 = vmatmul.mubr.f32.gmra.mrb[0].mxu0 %v3166
      %v3168 = vpop.f32.mrb[0].mxu0
      %v3169 = vadd.f32 %v2976, %v3168
      %v3170 = vpop.f32.mrb[0].mxu0
      %v3171 = vadd.f32 %v2978, %v3170
      %3172 = vmatprep.mubr.f32.mxu0 0.0
      %v3173 = vand.u32 %v1844, 4294901760
      %3174 = vmatmul.mubr.f32.gmra.mrb[0].mxu0 %v3173
      %v3175 = vpop.f32.mrb[0].mxu0
      %v3176 = vadd.f32 %v2983, %v3175
      %v3177 = vpop.f32.mrb[0].mxu0
      %v3178 = vadd.f32 %v2985, %v3177
      %3179 = vmatprep.mubr.f32.mxu0 0.0
      %v3180 = vand.u32 %v1847, 4294901760
      %3181 = vmatmul.mubr.f32.gmra.mrb[0].mxu0 %v3180
      %v3182 = vpop.f32.mrb[0].mxu0
      %v3183 = vadd.f32 %v2990, %v3182
      %v3184 = vpop.f32.mrb[0].mxu0
      %v3185 = vadd.f32 %v2992, %v3184
      %3186 = vmatprep.mubr.f32.mxu0 0.0
      %v3187 = vand.u32 %v1850, 4294901760
      %3188 = vmatmul.mubr.f32.gmra.mrb[0].mxu0 %v3187
      %v3189 = vpop.f32.mrb[0].mxu0
      %v3190 = vadd.f32 %v2997, %v3189
      %v3191 = vpop.f32.mrb[0].mxu0
      %v3192 = vadd.f32 %v2999, %v3191
      %3193 = vmatprep.mubr.f32.mxu0 0.0
      %v3194 = vand.u32 %v1853, 4294901760
      %3195 = vmatmul.mubr.f32.gmra.mrb[0].mxu0 %v3194
      %v3196 = vpop.f32.mrb[0].mxu0
      %v3197 = vadd.f32 %v3004, %v3196
      %v3198 = vpop.f32.mrb[0].mxu0
      %v3199 = vadd.f32 %v3006, %v3198
      %3200 = vmatprep.mubr.f32.mxu0 0.0
      %v3201 = vand.u32 %v1856, 4294901760
      %3202 = vmatmul.mubr.f32.gmra.mrb[0].mxu0 %v3201
      %v3203 = vpop.f32.mrb[0].mxu0
      %v3204 = vadd.f32 %v3011, %v3203
      %v3205 = vpop.f32.mrb[0].mxu0
      %v3206 = vadd.f32 %v3013, %v3205
      %3207 = vmatprep.mubr.f32.mxu0 0.0
      %v3208 = vand.u32 %v1859, 4294901760
      %3209 = vmatmul.mubr.f32.gmra.mrb[0].mxu0 %v3208
      %v3210 = vpop.f32.mrb[0].mxu0
      %v3211 = vadd.f32 %v3018, %v3210
      %v3212 = vpop.f32.mrb[0].mxu0
      %v3213 = vadd.f32 %v3020, %v3212
      %3214 = vmatprep.mubr.f32.mxu0 0.0
      %v3215 = vand.u32 %v1862, 4294901760
      %3216 = vmatmul.mubr.f32.gmra.mrb[0].mxu0 %v3215
      %v3217 = vpop.f32.mrb[0].mxu0
      %v3218 = vadd.f32 %v3025, %v3217
      %v3219 = vpop.f32.mrb[0].mxu0
      %v3220 = vadd.f32 %v3027, %v3219
      %3221 = vmatprep.mubr.f32.mxu0 0.0
      %v3222 = vand.u32 %v1865, 4294901760
      %3223 = vmatmul.mubr.f32.gmra.mrb[0].mxu0 %v3222
      %v3224 = vpop.f32.mrb[0].mxu0
      %v3225 = vadd.f32 %v3032, %v3224
      %v3226 = vpop.f32.mrb[0].mxu0
      %v3227 = vadd.f32 %v3034, %v3226
      %3228 = vmatprep.mubr.f32.mxu0 0.0
      %v3229 = vand.u32 %v1868, 4294901760
      %3230 = vmatmul.mubr.f32.gmra.mrb[0].mxu0 %v3229
      %v3231 = vpop.f32.mrb[0].mxu0
      %v3232 = vadd.f32 %v3039, %v3231
      %v3233 = vpop.f32.mrb[0].mxu0
      %v3234 = vadd.f32 %v3041, %v3233
      %3235 = vmatprep.mubr.f32.mxu0 0.0
      %v3236 = vand.u32 %v1871, 4294901760
      %3237 = vmatmul.mubr.f32.gmra.mrb[0].mxu0 %v3236
      %v3238 = vpop.f32.mrb[0].mxu0
      %v3239 = vadd.f32 %v3046, %v3238
      %v3240 = vpop.f32.mrb[0].mxu0
      %v3241 = vadd.f32 %v3048, %v3240
      %3242 = vmatprep.mubr.f32.mxu0 0.0
      %v3243 = vand.u32 %v1874, 4294901760
      %3244 = vmatmul.mubr.f32.gmra.mrb[0].mxu0 %v3243
      %v3245 = vpop.f32.mrb[0].mxu0
      %v3246 = vadd.f32 %v3053, %v3245
      %v3247 = vpop.f32.mrb[0].mxu0
      %v3248 = vadd.f32 %v3055, %v3247
      %3249 = vmatprep.mubr.f32.mxu0 0.0
      %v3250 = vand.u32 %v1877, 4294901760
      %3251 = vmatmul.mubr.f32.gmra.mrb[0].mxu0 %v3250
      %v3252 = vpop.f32.mrb[0].mxu0
      %v3253 = vadd.f32 %v3060, %v3252
      %v3254 = vpop.f32.mrb[0].mxu0
      %v3255 = vadd.f32 %v3062, %v3254
      %3256 = vmatprep.mubr.f32.mxu0 0.0
      %v3257 = vand.u32 %v1880, 4294901760
      %3258 = vmatmul.mubr.f32.gmra.mrb[0].mxu0 %v3257
      %v3259 = vpop.f32.mrb[0].mxu0
      %v3260 = vadd.f32 %v3067, %v3259
      %v3261 = vpop.f32.mrb[0].mxu0
      %v3262 = vadd.f32 %v3069, %v3261
      %3263 = vdwg.mxu0
      %v3264 = vld [vmem:[#allocation2 + $0x2] sm:$0xff]
      %v3265 = vld [vmem:[#allocation2 + $0xa] sm:$0xff]
      %v3266 = vld [vmem:[#allocation2 + $0x12] sm:$0xff]
      %v3267 = vld [vmem:[#allocation2 + $0x1a] sm:$0xff]
      %v3268 = vld [vmem:[#allocation2 + $0x22] sm:$0xff]
      %v3269 = vld [vmem:[#allocation2 + $0x2a] sm:$0xff]
      %v3270 = vld [vmem:[#allocation2 + $0x32] sm:$0xff]
      %v3271 = vld [vmem:[#allocation2 + $0x3a] sm:$0xff]
      %v3272 = vld [vmem:[#allocation2 + $0x42] sm:$0xff]
      %v3273 = vld [vmem:[#allocation2 + $0x4a] sm:$0xff]
      %v3274 = vld [vmem:[#allocation2 + $0x52] sm:$0xff]
      %v3275 = vld [vmem:[#allocation2 + $0x5a] sm:$0xff]
      %v3276 = vld [vmem:[#allocation2 + $0x62] sm:$0xff]
      %v3277 = vld [vmem:[#allocation2 + $0x6a] sm:$0xff]
      %v3278 = vld [vmem:[#allocation2 + $0x72] sm:$0xff]
      %v3279 = vld [vmem:[#allocation2 + $0x7a] sm:$0xff]
      %s3280 = scalar_lea.vmem %s2, 256
      %v3281 = vld [vmem:[%s3280] sm:$0xff]
      %v3282 = vld [vmem:[%s3280 + $0x8] sm:$0xff]
      %v3283 = vld [vmem:[%s3280 + $0x10] sm:$0xff]
      %v3284 = vld [vmem:[%s3280 + $0x18] sm:$0xff]
      %v3285 = vld [vmem:[%s3280 + $0x20] sm:$0xff]
      %v3286 = vld [vmem:[%s3280 + $0x28] sm:$0xff]
      %v3287 = vld [vmem:[%s3280 + $0x30] sm:$0xff]
      %v3288 = vld [vmem:[%s3280 + $0x38] sm:$0xff]
      %v3289 = vld [vmem:[%s3280 + $0x40] sm:$0xff]
      %v3290 = vld [vmem:[%s3280 + $0x48] sm:$0xff]
      %v3291 = vld [vmem:[%s3280 + $0x50] sm:$0xff]
      %v3292 = vld [vmem:[%s3280 + $0x58] sm:$0xff]
      %v3293 = vld [vmem:[%s3280 + $0x60] sm:$0xff]
      %v3294 = vld [vmem:[%s3280 + $0x68] sm:$0xff]
      %v3295 = vld [vmem:[%s3280 + $0x70] sm:$0xff]
      %v3296 = vld [vmem:[%s3280 + $0x78] sm:$0xff]
      %v3298 = vsel %vm319, %v3264, 0
      %v3301 = vsel %vm319, %v3265, 0
      %v3304 = vsel %vm319, %v3266, 0
      %v3307 = vsel %vm319, %v3267, 0
      %v3310 = vsel %vm319, %v3268, 0
      %v3313 = vsel %vm319, %v3269, 0
      %v3316 = vsel %vm319, %v3270, 0
      %v3319 = vsel %vm319, %v3271, 0
      %v3322 = vsel %vm319, %v3272, 0
      %v3325 = vsel %vm319, %v3273, 0
      %v3328 = vsel %vm319, %v3274, 0
      %v3331 = vsel %vm319, %v3275, 0
      %v3334 = vsel %vm319, %v3276, 0
      %v3337 = vsel %vm319, %v3277, 0
      %v3340 = vsel %vm319, %v3278, 0
      %v3343 = vsel %vm319, %v3279, 0
      %v3345 = vand.u32 %v3282, 4294901760
      %3346 = vmatprep.subr.mxu0 %v3345
      %v3347 = vand.u32 %v3281, 4294901760
      %3348 = vmatpush1.msra.mxu0 %v3347
      %v3349 = vand.u32 %v3284, 4294901760
      %3350 = vmatprep.subr.mxu0 %v3349
      %v3351 = vand.u32 %v3283, 4294901760
      %3352 = vmatpush1.msra.mxu0 %v3351
      %v3353 = vand.u32 %v3286, 4294901760
      %3354 = vmatprep.subr.mxu0 %v3353
      %v3355 = vand.u32 %v3285, 4294901760
      %3356 = vmatpush1.msra.mxu0 %v3355
      %v3357 = vand.u32 %v3288, 4294901760
      %3358 = vmatprep.subr.mxu0 %v3357
      %v3359 = vand.u32 %v3287, 4294901760
      %3360 = vmatpush1.msra.mxu0 %v3359
      %v3361 = vand.u32 %v3290, 4294901760
      %3362 = vmatprep.subr.mxu0 %v3361
      %v3363 = vand.u32 %v3289, 4294901760
      %3364 = vmatpush1.msra.mxu0 %v3363
      %v3365 = vand.u32 %v3292, 4294901760
      %3366 = vmatprep.subr.mxu0 %v3365
      %v3367 = vand.u32 %v3291, 4294901760
      %3368 = vmatpush1.msra.mxu0 %v3367
      %v3369 = vand.u32 %v3294, 4294901760
      %3370 = vmatprep.subr.mxu0 %v3369
      %v3371 = vand.u32 %v3293, 4294901760
      %3372 = vmatpush1.msra.mxu0 %v3371
      %v3373 = vand.u32 %v3296, 4294901760
      %3374 = vmatprep.subr.mxu0 %v3373
      %v3375 = vand.u32 %v3295, 4294901760
      %3376 = vmatpush1.msra.mxu0 %v3375
      %3377 = vmatprep.subr.mxu0 0.0
      %3378 = vmatpush1.msra.mxu0 0.0
      %3379 = vmatprep.subr.mxu0 0.0
      %3380 = vmatpush1.msra.mxu0 0.0
      %3381 = vmatprep.subr.mxu0 0.0
      %3382 = vmatpush1.msra.mxu0 0.0
      %3383 = vmatprep.subr.mxu0 0.0
      %3384 = vmatpush1.msra.mxu0 0.0
      %3385 = vmatprep.subr.mxu0 0.0
      %3386 = vmatpush1.msra.mxu0 0.0
      %3387 = vmatprep.subr.mxu0 0.0
      %3388 = vmatpush1.msra.mxu0 0.0
      %3389 = vmatprep.subr.mxu0 0.0
      %3390 = vmatpush1.msra.mxu0 0.0
      %3391 = vmatprep.subr.mxu0 0.0
      %3392 = vmatpush1.msra.mxu0 0.0
      %3393 = vmatprep.subr.mxu0 0.0
      %3394 = vmatpush1.msra.mxu0 0.0
      %3395 = vmatprep.subr.mxu0 0.0
      %3396 = vmatpush1.msra.mxu0 0.0
      %3397 = vmatprep.subr.mxu0 0.0
      %3398 = vmatpush1.msra.mxu0 0.0
      %3399 = vmatprep.subr.mxu0 0.0
      %3400 = vmatpush1.msra.mxu0 0.0
      %3401 = vmatprep.subr.mxu0 0.0
      %3402 = vmatpush1.msra.mxu0 0.0
      %3403 = vmatprep.subr.mxu0 0.0
      %3404 = vmatpush1.msra.mxu0 0.0
      %3405 = vmatprep.subr.mxu0 0.0
      %3406 = vmatpush1.msra.mxu0 0.0
      %3407 = vmatprep.subr.mxu0 0.0
      %3408 = vmatpush1.msra.mxu0 0.0
      %3409 = vmatprep.subr.mxu0 0.0
      %3410 = vmatpush1.msra.mxu0 0.0
      %3411 = vmatprep.subr.mxu0 0.0
      %3412 = vmatpush1.msra.mxu0 0.0
      %3413 = vmatprep.subr.mxu0 0.0
      %3414 = vmatpush1.msra.mxu0 0.0
      %3415 = vmatprep.subr.mxu0 0.0
      %3416 = vmatpush1.msra.mxu0 0.0
      %3417 = vmatprep.subr.mxu0 0.0
      %3418 = vmatpush1.msra.mxu0 0.0
      %3419 = vmatprep.subr.mxu0 0.0
      %3420 = vmatpush1.msra.mxu0 0.0
      %3421 = vmatprep.subr.mxu0 0.0
      %3422 = vmatpush1.msra.mxu0 0.0
      %3423 = vmatprep.subr.mxu0 0.0
      %3424 = vmatpush1.msra.mxu0 0.0
      %3425 = vmatprep.mubr.f32.mxu0 0.0
      %v3426 = vand.u32 %v3298, 4294901760
      %v3427 = vsub.f32 %v3298, %v3426
      %v3428 = vand.u32 %v3427, 4294901760
      %v3429 = vsub.f32 %v3427, %v3428
      %v3430 = vand.u32 %v3429, 4294901760
      %3431 = vmatmul.mubr.f32.gmra.mrb[0].mxu0 %v3430
      %v3432 = vpop.f32.mrb[0].mxu0
      %v3433 = vadd.f32 0.0, %v3432
      %v3434 = vpop.f32.mrb[0].mxu0
      %v3435 = vadd.f32 0.0, %v3434
      %3436 = vmatprep.mubr.f32.mxu0 0.0
      %v3437 = vand.u32 %v3301, 4294901760
      %v3438 = vsub.f32 %v3301, %v3437
      %v3439 = vand.u32 %v3438, 4294901760
      %v3440 = vsub.f32 %v3438, %v3439
      %v3441 = vand.u32 %v3440, 4294901760
      %3442 = vmatmul.mubr.f32.gmra.mrb[0].mxu0 %v3441
      %v3443 = vpop.f32.mrb[0].mxu0
      %v3444 = vadd.f32 0.0, %v3443
      %v3445 = vpop.f32.mrb[0].mxu0
      %v3446 = vadd.f32 0.0, %v3445
      %3447 = vmatprep.mubr.f32.mxu0 0.0
      %v3448 = vand.u32 %v3304, 4294901760
      %v3449 = vsub.f32 %v3304, %v3448
      %v3450 = vand.u32 %v3449, 4294901760
      %v3451 = vsub.f32 %v3449, %v3450
      %v3452 = vand.u32 %v3451, 4294901760
      %3453 = vmatmul.mubr.f32.gmra.mrb[0].mxu0 %v3452
      %v3454 = vpop.f32.mrb[0].mxu0
      %v3455 = vadd.f32 0.0, %v3454
      %v3456 = vpop.f32.mrb[0].mxu0
      %v3457 = vadd.f32 0.0, %v3456
      %3458 = vmatprep.mubr.f32.mxu0 0.0
      %v3459 = vand.u32 %v3307, 4294901760
      %v3460 = vsub.f32 %v3307, %v3459
      %v3461 = vand.u32 %v3460, 4294901760
      %v3462 = vsub.f32 %v3460, %v3461
      %v3463 = vand.u32 %v3462, 4294901760
      %3464 = vmatmul.mubr.f32.gmra.mrb[0].mxu0 %v3463
      %v3465 = vpop.f32.mrb[0].mxu0
      %v3466 = vadd.f32 0.0, %v3465
      %v3467 = vpop.f32.mrb[0].mxu0
      %v3468 = vadd.f32 0.0, %v3467
      %3469 = vmatprep.mubr.f32.mxu0 0.0
      %v3470 = vand.u32 %v3310, 4294901760
      %v3471 = vsub.f32 %v3310, %v3470
      %v3472 = vand.u32 %v3471, 4294901760
      %v3473 = vsub.f32 %v3471, %v3472
      %v3474 = vand.u32 %v3473, 4294901760
      %3475 = vmatmul.mubr.f32.gmra.mrb[0].mxu0 %v3474
      %v3476 = vpop.f32.mrb[0].mxu0
      %v3477 = vadd.f32 0.0, %v3476
      %v3478 = vpop.f32.mrb[0].mxu0
      %v3479 = vadd.f32 0.0, %v3478
      %3480 = vmatprep.mubr.f32.mxu0 0.0
      %v3481 = vand.u32 %v3313, 4294901760
      %v3482 = vsub.f32 %v3313, %v3481
      %v3483 = vand.u32 %v3482, 4294901760
      %v3484 = vsub.f32 %v3482, %v3483
      %v3485 = vand.u32 %v3484, 4294901760
      %3486 = vmatmul.mubr.f32.gmra.mrb[0].mxu0 %v3485
      %v3487 = vpop.f32.mrb[0].mxu0
      %v3488 = vadd.f32 0.0, %v3487
      %v3489 = vpop.f32.mrb[0].mxu0
      %v3490 = vadd.f32 0.0, %v3489
      %3491 = vmatprep.mubr.f32.mxu0 0.0
      %v3492 = vand.u32 %v3316, 4294901760
      %v3493 = vsub.f32 %v3316, %v3492
      %v3494 = vand.u32 %v3493, 4294901760
      %v3495 = vsub.f32 %v3493, %v3494
      %v3496 = vand.u32 %v3495, 4294901760
      %3497 = vmatmul.mubr.f32.gmra.mrb[0].mxu0 %v3496
      %v3498 = vpop.f32.mrb[0].mxu0
      %v3499 = vadd.f32 0.0, %v3498
      %v3500 = vpop.f32.mrb[0].mxu0
      %v3501 = vadd.f32 0.0, %v3500
      %3502 = vmatprep.mubr.f32.mxu0 0.0
      %v3503 = vand.u32 %v3319, 4294901760
      %v3504 = vsub.f32 %v3319, %v3503
      %v3505 = vand.u32 %v3504, 4294901760
      %v3506 = vsub.f32 %v3504, %v3505
      %v3507 = vand.u32 %v3506, 4294901760
      %3508 = vmatmul.mubr.f32.gmra.mrb[0].mxu0 %v3507
      %v3509 = vpop.f32.mrb[0].mxu0
      %v3510 = vadd.f32 0.0, %v3509
      %v3511 = vpop.f32.mrb[0].mxu0
      %v3512 = vadd.f32 0.0, %v3511
      %3513 = vmatprep.mubr.f32.mxu0 0.0
      %v3514 = vand.u32 %v3322, 4294901760
      %v3515 = vsub.f32 %v3322, %v3514
      %v3516 = vand.u32 %v3515, 4294901760
      %v3517 = vsub.f32 %v3515, %v3516
      %v3518 = vand.u32 %v3517, 4294901760
      %3519 = vmatmul.mubr.f32.gmra.mrb[0].mxu0 %v3518
      %v3520 = vpop.f32.mrb[0].mxu0
      %v3521 = vadd.f32 0.0, %v3520
      %v3522 = vpop.f32.mrb[0].mxu0
      %v3523 = vadd.f32 0.0, %v3522
      %3524 = vmatprep.mubr.f32.mxu0 0.0
      %v3525 = vand.u32 %v3325, 4294901760
      %v3526 = vsub.f32 %v3325, %v3525
      %v3527 = vand.u32 %v3526, 4294901760
      %v3528 = vsub.f32 %v3526, %v3527
      %v3529 = vand.u32 %v3528, 4294901760
      %3530 = vmatmul.mubr.f32.gmra.mrb[0].mxu0 %v3529
      %v3531 = vpop.f32.mrb[0].mxu0
      %v3532 = vadd.f32 0.0, %v3531
      %v3533 = vpop.f32.mrb[0].mxu0
      %v3534 = vadd.f32 0.0, %v3533
      %3535 = vmatprep.mubr.f32.mxu0 0.0
      %v3536 = vand.u32 %v3328, 4294901760
      %v3537 = vsub.f32 %v3328, %v3536
      %v3538 = vand.u32 %v3537, 4294901760
      %v3539 = vsub.f32 %v3537, %v3538
      %v3540 = vand.u32 %v3539, 4294901760
      %3541 = vmatmul.mubr.f32.gmra.mrb[0].mxu0 %v3540
      %v3542 = vpop.f32.mrb[0].mxu0
      %v3543 = vadd.f32 0.0, %v3542
      %v3544 = vpop.f32.mrb[0].mxu0
      %v3545 = vadd.f32 0.0, %v3544
      %3546 = vmatprep.mubr.f32.mxu0 0.0
      %v3547 = vand.u32 %v3331, 4294901760
      %v3548 = vsub.f32 %v3331, %v3547
      %v3549 = vand.u32 %v3548, 4294901760
      %v3550 = vsub.f32 %v3548, %v3549
      %v3551 = vand.u32 %v3550, 4294901760
      %3552 = vmatmul.mubr.f32.gmra.mrb[0].mxu0 %v3551
      %v3553 = vpop.f32.mrb[0].mxu0
      %v3554 = vadd.f32 0.0, %v3553
      %v3555 = vpop.f32.mrb[0].mxu0
      %v3556 = vadd.f32 0.0, %v3555
      %3557 = vmatprep.mubr.f32.mxu0 0.0
      %v3558 = vand.u32 %v3334, 4294901760
      %v3559 = vsub.f32 %v3334, %v3558
      %v3560 = vand.u32 %v3559, 4294901760
      %v3561 = vsub.f32 %v3559, %v3560
      %v3562 = vand.u32 %v3561, 4294901760
      %3563 = vmatmul.mubr.f32.gmra.mrb[0].mxu0 %v3562
      %v3564 = vpop.f32.mrb[0].mxu0
      %v3565 = vadd.f32 0.0, %v3564
      %v3566 = vpop.f32.mrb[0].mxu0
      %v3567 = vadd.f32 0.0, %v3566
      %3568 = vmatprep.mubr.f32.mxu0 0.0
      %v3569 = vand.u32 %v3337, 4294901760
      %v3570 = vsub.f32 %v3337, %v3569
      %v3571 = vand.u32 %v3570, 4294901760
      %v3572 = vsub.f32 %v3570, %v3571
      %v3573 = vand.u32 %v3572, 4294901760
      %3574 = vmatmul.mubr.f32.gmra.mrb[0].mxu0 %v3573
      %v3575 = vpop.f32.mrb[0].mxu0
      %v3576 = vadd.f32 0.0, %v3575
      %v3577 = vpop.f32.mrb[0].mxu0
      %v3578 = vadd.f32 0.0, %v3577
      %3579 = vmatprep.mubr.f32.mxu0 0.0
      %v3580 = vand.u32 %v3340, 4294901760
      %v3581 = vsub.f32 %v3340, %v3580
      %v3582 = vand.u32 %v3581, 4294901760
      %v3583 = vsub.f32 %v3581, %v3582
      %v3584 = vand.u32 %v3583, 4294901760
      %3585 = vmatmul.mubr.f32.gmra.mrb[0].mxu0 %v3584
      %v3586 = vpop.f32.mrb[0].mxu0
      %v3587 = vadd.f32 0.0, %v3586
      %v3588 = vpop.f32.mrb[0].mxu0
      %v3589 = vadd.f32 0.0, %v3588
      %3590 = vmatprep.mubr.f32.mxu0 0.0
      %v3591 = vand.u32 %v3343, 4294901760
      %v3592 = vsub.f32 %v3343, %v3591
      %v3593 = vand.u32 %v3592, 4294901760
      %v3594 = vsub.f32 %v3592, %v3593
      %v3595 = vand.u32 %v3594, 4294901760
      %3596 = vmatmul.mubr.f32.gmra.mrb[0].mxu0 %v3595
      %v3597 = vpop.f32.mrb[0].mxu0
      %v3598 = vadd.f32 0.0, %v3597
      %v3599 = vpop.f32.mrb[0].mxu0
      %v3600 = vadd.f32 0.0, %v3599
      %3601 = vdwg.mxu0
      %v3602 = vand.u32 %v3282, 4294901760
      %v3603 = vsub.f32 %v3282, %v3602
      %v3604 = vand.u32 %v3603, 4294901760
      %v3605 = vsub.f32 %v3603, %v3604
      %v3606 = vand.u32 %v3605, 4294901760
      %3607 = vmatprep.subr.mxu0 %v3606
      %v3608 = vand.u32 %v3281, 4294901760
      %v3609 = vsub.f32 %v3281, %v3608
      %v3610 = vand.u32 %v3609, 4294901760
      %v3611 = vsub.f32 %v3609, %v3610
      %v3612 = vand.u32 %v3611, 4294901760
      %3613 = vmatpush1.msra.mxu0 %v3612
      %v3614 = vand.u32 %v3284, 4294901760
      %v3615 = vsub.f32 %v3284, %v3614
      %v3616 = vand.u32 %v3615, 4294901760
      %v3617 = vsub.f32 %v3615, %v3616
      %v3618 = vand.u32 %v3617, 4294901760
      %3619 = vmatprep.subr.mxu0 %v3618
      %v3620 = vand.u32 %v3283, 4294901760
      %v3621 = vsub.f32 %v3283, %v3620
      %v3622 = vand.u32 %v3621, 4294901760
      %v3623 = vsub.f32 %v3621, %v3622
      %v3624 = vand.u32 %v3623, 4294901760
      %3625 = vmatpush1.msra.mxu0 %v3624
      %v3626 = vand.u32 %v3286, 4294901760
      %v3627 = vsub.f32 %v3286, %v3626
      %v3628 = vand.u32 %v3627, 4294901760
      %v3629 = vsub.f32 %v3627, %v3628
      %v3630 = vand.u32 %v3629, 4294901760
      %3631 = vmatprep.subr.mxu0 %v3630
      %v3632 = vand.u32 %v3285, 4294901760
      %v3633 = vsub.f32 %v3285, %v3632
      %v3634 = vand.u32 %v3633, 4294901760
      %v3635 = vsub.f32 %v3633, %v3634
      %v3636 = vand.u32 %v3635, 4294901760
      %3637 = vmatpush1.msra.mxu0 %v3636
      %v3638 = vand.u32 %v3288, 4294901760
      %v3639 = vsub.f32 %v3288, %v3638
      %v3640 = vand.u32 %v3639, 4294901760
      %v3641 = vsub.f32 %v3639, %v3640
      %v3642 = vand.u32 %v3641, 4294901760
      %3643 = vmatprep.subr.mxu0 %v3642
      %v3644 = vand.u32 %v3287, 4294901760
      %v3645 = vsub.f32 %v3287, %v3644
      %v3646 = vand.u32 %v3645, 4294901760
      %v3647 = vsub.f32 %v3645, %v3646
      %v3648 = vand.u32 %v3647, 4294901760
      %3649 = vmatpush1.msra.mxu0 %v3648
      %v3650 = vand.u32 %v3290, 4294901760
      %v3651 = vsub.f32 %v3290, %v3650
      %v3652 = vand.u32 %v3651, 4294901760
      %v3653 = vsub.f32 %v3651, %v3652
      %v3654 = vand.u32 %v3653, 4294901760
      %3655 = vmatprep.subr.mxu0 %v3654
      %v3656 = vand.u32 %v3289, 4294901760
      %v3657 = vsub.f32 %v3289, %v3656
      %v3658 = vand.u32 %v3657, 4294901760
      %v3659 = vsub.f32 %v3657, %v3658
      %v3660 = vand.u32 %v3659, 4294901760
      %3661 = vmatpush1.msra.mxu0 %v3660
      %v3662 = vand.u32 %v3292, 4294901760
      %v3663 = vsub.f32 %v3292, %v3662
      %v3664 = vand.u32 %v3663, 4294901760
      %v3665 = vsub.f32 %v3663, %v3664
      %v3666 = vand.u32 %v3665, 4294901760
      %3667 = vmatprep.subr.mxu0 %v3666
      %v3668 = vand.u32 %v3291, 4294901760
      %v3669 = vsub.f32 %v3291, %v3668
      %v3670 = vand.u32 %v3669, 4294901760
      %v3671 = vsub.f32 %v3669, %v3670
      %v3672 = vand.u32 %v3671, 4294901760
      %3673 = vmatpush1.msra.mxu0 %v3672
      %v3674 = vand.u32 %v3294, 4294901760
      %v3675 = vsub.f32 %v3294, %v3674
      %v3676 = vand.u32 %v3675, 4294901760
      %v3677 = vsub.f32 %v3675, %v3676
      %v3678 = vand.u32 %v3677, 4294901760
      %3679 = vmatprep.subr.mxu0 %v3678
      %v3680 = vand.u32 %v3293, 4294901760
      %v3681 = vsub.f32 %v3293, %v3680
      %v3682 = vand.u32 %v3681, 4294901760
      %v3683 = vsub.f32 %v3681, %v3682
      %v3684 = vand.u32 %v3683, 4294901760
      %3685 = vmatpush1.msra.mxu0 %v3684
      %v3686 = vand.u32 %v3296, 4294901760
      %v3687 = vsub.f32 %v3296, %v3686
      %v3688 = vand.u32 %v3687, 4294901760
      %v3689 = vsub.f32 %v3687, %v3688
      %v3690 = vand.u32 %v3689, 4294901760
      %3691 = vmatprep.subr.mxu0 %v3690
      %v3692 = vand.u32 %v3295, 4294901760
      %v3693 = vsub.f32 %v3295, %v3692
      %v3694 = vand.u32 %v3693, 4294901760
      %v3695 = vsub.f32 %v3693, %v3694
      %v3696 = vand.u32 %v3695, 4294901760
      %3697 = vmatpush1.msra.mxu0 %v3696
      %3698 = vmatprep.subr.mxu0 0.0
      %3699 = vmatpush1.msra.mxu0 0.0
      %3700 = vmatprep.subr.mxu0 0.0
      %3701 = vmatpush1.msra.mxu0 0.0
      %3702 = vmatprep.subr.mxu0 0.0
      %3703 = vmatpush1.msra.mxu0 0.0
      %3704 = vmatprep.subr.mxu0 0.0
      %3705 = vmatpush1.msra.mxu0 0.0
      %3706 = vmatprep.subr.mxu0 0.0
      %3707 = vmatpush1.msra.mxu0 0.0
      %3708 = vmatprep.subr.mxu0 0.0
      %3709 = vmatpush1.msra.mxu0 0.0
      %3710 = vmatprep.subr.mxu0 0.0
      %3711 = vmatpush1.msra.mxu0 0.0
      %3712 = vmatprep.subr.mxu0 0.0
      %3713 = vmatpush1.msra.mxu0 0.0
      %3714 = vmatprep.subr.mxu0 0.0
      %3715 = vmatpush1.msra.mxu0 0.0
      %3716 = vmatprep.subr.mxu0 0.0
      %3717 = vmatpush1.msra.mxu0 0.0
      %3718 = vmatprep.subr.mxu0 0.0
      %3719 = vmatpush1.msra.mxu0 0.0
      %3720 = vmatprep.subr.mxu0 0.0
      %3721 = vmatpush1.msra.mxu0 0.0
      %3722 = vmatprep.subr.mxu0 0.0
      %3723 = vmatpush1.msra.mxu0 0.0
      %3724 = vmatprep.subr.mxu0 0.0
      %3725 = vmatpush1.msra.mxu0 0.0
      %3726 = vmatprep.subr.mxu0 0.0
      %3727 = vmatpush1.msra.mxu0 0.0
      %3728 = vmatprep.subr.mxu0 0.0
      %3729 = vmatpush1.msra.mxu0 0.0
      %3730 = vmatprep.subr.mxu0 0.0
      %3731 = vmatpush1.msra.mxu0 0.0
      %3732 = vmatprep.subr.mxu0 0.0
      %3733 = vmatpush1.msra.mxu0 0.0
      %3734 = vmatprep.subr.mxu0 0.0
      %3735 = vmatpush1.msra.mxu0 0.0
      %3736 = vmatprep.subr.mxu0 0.0
      %3737 = vmatpush1.msra.mxu0 0.0
      %3738 = vmatprep.subr.mxu0 0.0
      %3739 = vmatpush1.msra.mxu0 0.0
      %3740 = vmatprep.subr.mxu0 0.0
      %3741 = vmatpush1.msra.mxu0 0.0
      %3742 = vmatprep.subr.mxu0 0.0
      %3743 = vmatpush1.msra.mxu0 0.0
      %3744 = vmatprep.subr.mxu0 0.0
      %3745 = vmatpush1.msra.mxu0 0.0
      %3746 = vmatprep.mubr.f32.mxu0 0.0
      %v3747 = vand.u32 %v3298, 4294901760
      %3748 = vmatmul.mubr.f32.gmra.mrb[0].mxu0 %v3747
      %v3749 = vpop.f32.mrb[0].mxu0
      %v3750 = vadd.f32 %v3433, %v3749
      %v3751 = vpop.f32.mrb[0].mxu0
      %v3752 = vadd.f32 %v3435, %v3751
      %3753 = vmatprep.mubr.f32.mxu0 0.0
      %v3754 = vand.u32 %v3301, 4294901760
      %3755 = vmatmul.mubr.f32.gmra.mrb[0].mxu0 %v3754
      %v3756 = vpop.f32.mrb[0].mxu0
      %v3757 = vadd.f32 %v3444, %v3756
      %v3758 = vpop.f32.mrb[0].mxu0
      %v3759 = vadd.f32 %v3446, %v3758
      %3760 = vmatprep.mubr.f32.mxu0 0.0
      %v3761 = vand.u32 %v3304, 4294901760
      %3762 = vmatmul.mubr.f32.gmra.mrb[0].mxu0 %v3761
      %v3763 = vpop.f32.mrb[0].mxu0
      %v3764 = vadd.f32 %v3455, %v3763
      %v3765 = vpop.f32.mrb[0].mxu0
      %v3766 = vadd.f32 %v3457, %v3765
      %3767 = vmatprep.mubr.f32.mxu0 0.0
      %v3768 = vand.u32 %v3307, 4294901760
      %3769 = vmatmul.mubr.f32.gmra.mrb[0].mxu0 %v3768
      %v3770 = vpop.f32.mrb[0].mxu0
      %v3771 = vadd.f32 %v3466, %v3770
      %v3772 = vpop.f32.mrb[0].mxu0
      %v3773 = vadd.f32 %v3468, %v3772
      %3774 = vmatprep.mubr.f32.mxu0 0.0
      %v3775 = vand.u32 %v3310, 4294901760
      %3776 = vmatmul.mubr.f32.gmra.mrb[0].mxu0 %v3775
      %v3777 = vpop.f32.mrb[0].mxu0
      %v3778 = vadd.f32 %v3477, %v3777
      %v3779 = vpop.f32.mrb[0].mxu0
      %v3780 = vadd.f32 %v3479, %v3779
      %3781 = vmatprep.mubr.f32.mxu0 0.0
      %v3782 = vand.u32 %v3313, 4294901760
      %3783 = vmatmul.mubr.f32.gmra.mrb[0].mxu0 %v3782
      %v3784 = vpop.f32.mrb[0].mxu0
      %v3785 = vadd.f32 %v3488, %v3784
      %v3786 = vpop.f32.mrb[0].mxu0
      %v3787 = vadd.f32 %v3490, %v3786
      %3788 = vmatprep.mubr.f32.mxu0 0.0
      %v3789 = vand.u32 %v3316, 4294901760
      %3790 = vmatmul.mubr.f32.gmra.mrb[0].mxu0 %v3789
      %v3791 = vpop.f32.mrb[0].mxu0
      %v3792 = vadd.f32 %v3499, %v3791
      %v3793 = vpop.f32.mrb[0].mxu0
      %v3794 = vadd.f32 %v3501, %v3793
      %3795 = vmatprep.mubr.f32.mxu0 0.0
      %v3796 = vand.u32 %v3319, 4294901760
      %3797 = vmatmul.mubr.f32.gmra.mrb[0].mxu0 %v3796
      %v3798 = vpop.f32.mrb[0].mxu0
      %v3799 = vadd.f32 %v3510, %v3798
      %v3800 = vpop.f32.mrb[0].mxu0
      %v3801 = vadd.f32 %v3512, %v3800
      %3802 = vmatprep.mubr.f32.mxu0 0.0
      %v3803 = vand.u32 %v3322, 4294901760
      %3804 = vmatmul.mubr.f32.gmra.mrb[0].mxu0 %v3803
      %v3805 = vpop.f32.mrb[0].mxu0
      %v3806 = vadd.f32 %v3521, %v3805
      %v3807 = vpop.f32.mrb[0].mxu0
      %v3808 = vadd.f32 %v3523, %v3807
      %3809 = vmatprep.mubr.f32.mxu0 0.0
      %v3810 = vand.u32 %v3325, 4294901760
      %3811 = vmatmul.mubr.f32.gmra.mrb[0].mxu0 %v3810
      %v3812 = vpop.f32.mrb[0].mxu0
      %v3813 = vadd.f32 %v3532, %v3812
      %v3814 = vpop.f32.mrb[0].mxu0
      %v3815 = vadd.f32 %v3534, %v3814
      %3816 = vmatprep.mubr.f32.mxu0 0.0
      %v3817 = vand.u32 %v3328, 4294901760
      %3818 = vmatmul.mubr.f32.gmra.mrb[0].mxu0 %v3817
      %v3819 = vpop.f32.mrb[0].mxu0
      %v3820 = vadd.f32 %v3543, %v3819
      %v3821 = vpop.f32.mrb[0].mxu0
      %v3822 = vadd.f32 %v3545, %v3821
      %3823 = vmatprep.mubr.f32.mxu0 0.0
      %v3824 = vand.u32 %v3331, 4294901760
      %3825 = vmatmul.mubr.f32.gmra.mrb[0].mxu0 %v3824
      %v3826 = vpop.f32.mrb[0].mxu0
      %v3827 = vadd.f32 %v3554, %v3826
      %v3828 = vpop.f32.mrb[0].mxu0
      %v3829 = vadd.f32 %v3556, %v3828
      %3830 = vmatprep.mubr.f32.mxu0 0.0
      %v3831 = vand.u32 %v3334, 4294901760
      %3832 = vmatmul.mubr.f32.gmra.mrb[0].mxu0 %v3831
      %v3833 = vpop.f32.mrb[0].mxu0
      %v3834 = vadd.f32 %v3565, %v3833
      %v3835 = vpop.f32.mrb[0].mxu0
      %v3836 = vadd.f32 %v3567, %v3835
      %3837 = vmatprep.mubr.f32.mxu0 0.0
      %v3838 = vand.u32 %v3337, 4294901760
      %3839 = vmatmul.mubr.f32.gmra.mrb[0].mxu0 %v3838
      %v3840 = vpop.f32.mrb[0].mxu0
      %v3841 = vadd.f32 %v3576, %v3840
      %v3842 = vpop.f32.mrb[0].mxu0
      %v3843 = vadd.f32 %v3578, %v3842
      %3844 = vmatprep.mubr.f32.mxu0 0.0
      %v3845 = vand.u32 %v3340, 4294901760
      %3846 = vmatmul.mubr.f32.gmra.mrb[0].mxu0 %v3845
      %v3847 = vpop.f32.mrb[0].mxu0
      %v3848 = vadd.f32 %v3587, %v3847
      %v3849 = vpop.f32.mrb[0].mxu0
      %v3850 = vadd.f32 %v3589, %v3849
      %3851 = vmatprep.mubr.f32.mxu0 0.0
      %v3852 = vand.u32 %v3343, 4294901760
      %3853 = vmatmul.mubr.f32.gmra.mrb[0].mxu0 %v3852
      %v3854 = vpop.f32.mrb[0].mxu0
      %v3855 = vadd.f32 %v3598, %v3854
      %v3856 = vpop.f32.mrb[0].mxu0
      %v3857 = vadd.f32 %v3600, %v3856
      %3858 = vdwg.mxu0
      %v3859 = vand.u32 %v3282, 4294901760
      %v3860 = vsub.f32 %v3282, %v3859
      %3861 = vmatprep.subr.mxu0 %v3860
      %v3862 = vand.u32 %v3281, 4294901760
      %v3863 = vsub.f32 %v3281, %v3862
      %3864 = vmatpush1.msra.mxu0 %v3863
      %v3865 = vand.u32 %v3284, 4294901760
      %v3866 = vsub.f32 %v3284, %v3865
      %3867 = vmatprep.subr.mxu0 %v3866
      %v3868 = vand.u32 %v3283, 4294901760
      %v3869 = vsub.f32 %v3283, %v3868
      %3870 = vmatpush1.msra.mxu0 %v3869
      %v3871 = vand.u32 %v3286, 4294901760
      %v3872 = vsub.f32 %v3286, %v3871
      %3873 = vmatprep.subr.mxu0 %v3872
      %v3874 = vand.u32 %v3285, 4294901760
      %v3875 = vsub.f32 %v3285, %v3874
      %3876 = vmatpush1.msra.mxu0 %v3875
      %v3877 = vand.u32 %v3288, 4294901760
      %v3878 = vsub.f32 %v3288, %v3877
      %3879 = vmatprep.subr.mxu0 %v3878
      %v3880 = vand.u32 %v3287, 4294901760
      %v3881 = vsub.f32 %v3287, %v3880
      %3882 = vmatpush1.msra.mxu0 %v3881
      %v3883 = vand.u32 %v3290, 4294901760
      %v3884 = vsub.f32 %v3290, %v3883
      %3885 = vmatprep.subr.mxu0 %v3884
      %v3886 = vand.u32 %v3289, 4294901760
      %v3887 = vsub.f32 %v3289, %v3886
      %3888 = vmatpush1.msra.mxu0 %v3887
      %v3889 = vand.u32 %v3292, 4294901760
      %v3890 = vsub.f32 %v3292, %v3889
      %3891 = vmatprep.subr.mxu0 %v3890
      %v3892 = vand.u32 %v3291, 4294901760
      %v3893 = vsub.f32 %v3291, %v3892
      %3894 = vmatpush1.msra.mxu0 %v3893
      %v3895 = vand.u32 %v3294, 4294901760
      %v3896 = vsub.f32 %v3294, %v3895
      %3897 = vmatprep.subr.mxu0 %v3896
      %v3898 = vand.u32 %v3293, 4294901760
      %v3899 = vsub.f32 %v3293, %v3898
      %3900 = vmatpush1.msra.mxu0 %v3899
      %v3901 = vand.u32 %v3296, 4294901760
      %v3902 = vsub.f32 %v3296, %v3901
      %3903 = vmatprep.subr.mxu0 %v3902
      %v3904 = vand.u32 %v3295, 4294901760
      %v3905 = vsub.f32 %v3295, %v3904
      %3906 = vmatpush1.msra.mxu0 %v3905
      %3907 = vmatprep.subr.mxu0 0.0
      %3908 = vmatpush1.msra.mxu0 0.0
      %3909 = vmatprep.subr.mxu0 0.0
      %3910 = vmatpush1.msra.mxu0 0.0
      %3911 = vmatprep.subr.mxu0 0.0
      %3912 = vmatpush1.msra.mxu0 0.0
      %3913 = vmatprep.subr.mxu0 0.0
      %3914 = vmatpush1.msra.mxu0 0.0
      %3915 = vmatprep.subr.mxu0 0.0
      %3916 = vmatpush1.msra.mxu0 0.0
      %3917 = vmatprep.subr.mxu0 0.0
      %3918 = vmatpush1.msra.mxu0 0.0
      %3919 = vmatprep.subr.mxu0 0.0
      %3920 = vmatpush1.msra.mxu0 0.0
      %3921 = vmatprep.subr.mxu0 0.0
      %3922 = vmatpush1.msra.mxu0 0.0
      %3923 = vmatprep.subr.mxu0 0.0
      %3924 = vmatpush1.msra.mxu0 0.0
      %3925 = vmatprep.subr.mxu0 0.0
      %3926 = vmatpush1.msra.mxu0 0.0
      %3927 = vmatprep.subr.mxu0 0.0
      %3928 = vmatpush1.msra.mxu0 0.0
      %3929 = vmatprep.subr.mxu0 0.0
      %3930 = vmatpush1.msra.mxu0 0.0
      %3931 = vmatprep.subr.mxu0 0.0
      %3932 = vmatpush1.msra.mxu0 0.0
      %3933 = vmatprep.subr.mxu0 0.0
      %3934 = vmatpush1.msra.mxu0 0.0
      %3935 = vmatprep.subr.mxu0 0.0
      %3936 = vmatpush1.msra.mxu0 0.0
      %3937 = vmatprep.subr.mxu0 0.0
      %3938 = vmatpush1.msra.mxu0 0.0
      %3939 = vmatprep.subr.mxu0 0.0
      %3940 = vmatpush1.msra.mxu0 0.0
      %3941 = vmatprep.subr.mxu0 0.0
      %3942 = vmatpush1.msra.mxu0 0.0
      %3943 = vmatprep.subr.mxu0 0.0
      %3944 = vmatpush1.msra.mxu0 0.0
      %3945 = vmatprep.subr.mxu0 0.0
      %3946 = vmatpush1.msra.mxu0 0.0
      %3947 = vmatprep.subr.mxu0 0.0
      %3948 = vmatpush1.msra.mxu0 0.0
      %3949 = vmatprep.subr.mxu0 0.0
      %3950 = vmatpush1.msra.mxu0 0.0
      %3951 = vmatprep.subr.mxu0 0.0
      %3952 = vmatpush1.msra.mxu0 0.0
      %3953 = vmatprep.subr.mxu0 0.0
      %3954 = vmatpush1.msra.mxu0 0.0
      %3955 = vmatprep.mubr.f32.mxu0 0.0
      %v3956 = vand.u32 %v3298, 4294901760
      %v3957 = vsub.f32 %v3298, %v3956
      %3958 = vmatmul.mubr.f32.gmra.mrb[0].mxu0 %v3957
      %v3959 = vpop.f32.mrb[0].mxu0
      %v3960 = vadd.f32 %v3750, %v3959
      %v3961 = vpop.f32.mrb[0].mxu0
      %v3962 = vadd.f32 %v3752, %v3961
      %3963 = vmatprep.mubr.f32.mxu0 0.0
      %v3964 = vand.u32 %v3301, 4294901760
      %v3965 = vsub.f32 %v3301, %v3964
      %3966 = vmatmul.mubr.f32.gmra.mrb[0].mxu0 %v3965
      %v3967 = vpop.f32.mrb[0].mxu0
      %v3968 = vadd.f32 %v3757, %v3967
      %v3969 = vpop.f32.mrb[0].mxu0
      %v3970 = vadd.f32 %v3759, %v3969
      %3971 = vmatprep.mubr.f32.mxu0 0.0
      %v3972 = vand.u32 %v3304, 4294901760
      %v3973 = vsub.f32 %v3304, %v3972
      %3974 = vmatmul.mubr.f32.gmra.mrb[0].mxu0 %v3973
      %v3975 = vpop.f32.mrb[0].mxu0
      %v3976 = vadd.f32 %v3764, %v3975
      %v3977 = vpop.f32.mrb[0].mxu0
      %v3978 = vadd.f32 %v3766, %v3977
      %3979 = vmatprep.mubr.f32.mxu0 0.0
      %v3980 = vand.u32 %v3307, 4294901760
      %v3981 = vsub.f32 %v3307, %v3980
      %3982 = vmatmul.mubr.f32.gmra.mrb[0].mxu0 %v3981
      %v3983 = vpop.f32.mrb[0].mxu0
      %v3984 = vadd.f32 %v3771, %v3983
      %v3985 = vpop.f32.mrb[0].mxu0
      %v3986 = vadd.f32 %v3773, %v3985
      %3987 = vmatprep.mubr.f32.mxu0 0.0
      %v3988 = vand.u32 %v3310, 4294901760
      %v3989 = vsub.f32 %v3310, %v3988
      %3990 = vmatmul.mubr.f32.gmra.mrb[0].mxu0 %v3989
      %v3991 = vpop.f32.mrb[0].mxu0
      %v3992 = vadd.f32 %v3778, %v3991
      %v3993 = vpop.f32.mrb[0].mxu0
      %v3994 = vadd.f32 %v3780, %v3993
      %3995 = vmatprep.mubr.f32.mxu0 0.0
      %v3996 = vand.u32 %v3313, 4294901760
      %v3997 = vsub.f32 %v3313, %v3996
      %3998 = vmatmul.mubr.f32.gmra.mrb[0].mxu0 %v3997
      %v3999 = vpop.f32.mrb[0].mxu0
      %v4000 = vadd.f32 %v3785, %v3999
      %v4001 = vpop.f32.mrb[0].mxu0
      %v4002 = vadd.f32 %v3787, %v4001
      %4003 = vmatprep.mubr.f32.mxu0 0.0
      %v4004 = vand.u32 %v3316, 4294901760
      %v4005 = vsub.f32 %v3316, %v4004
      %4006 = vmatmul.mubr.f32.gmra.mrb[0].mxu0 %v4005
      %v4007 = vpop.f32.mrb[0].mxu0
      %v4008 = vadd.f32 %v3792, %v4007
      %v4009 = vpop.f32.mrb[0].mxu0
      %v4010 = vadd.f32 %v3794, %v4009
      %4011 = vmatprep.mubr.f32.mxu0 0.0
      %v4012 = vand.u32 %v3319, 4294901760
      %v4013 = vsub.f32 %v3319, %v4012
      %4014 = vmatmul.mubr.f32.gmra.mrb[0].mxu0 %v4013
      %v4015 = vpop.f32.mrb[0].mxu0
      %v4016 = vadd.f32 %v3799, %v4015
      %v4017 = vpop.f32.mrb[0].mxu0
      %v4018 = vadd.f32 %v3801, %v4017
      %4019 = vmatprep.mubr.f32.mxu0 0.0
      %v4020 = vand.u32 %v3322, 4294901760
      %v4021 = vsub.f32 %v3322, %v4020
      %4022 = vmatmul.mubr.f32.gmra.mrb[0].mxu0 %v4021
      %v4023 = vpop.f32.mrb[0].mxu0
      %v4024 = vadd.f32 %v3806, %v4023
      %v4025 = vpop.f32.mrb[0].mxu0
      %v4026 = vadd.f32 %v3808, %v4025
      %4027 = vmatprep.mubr.f32.mxu0 0.0
      %v4028 = vand.u32 %v3325, 4294901760
      %v4029 = vsub.f32 %v3325, %v4028
      %4030 = vmatmul.mubr.f32.gmra.mrb[0].mxu0 %v4029
      %v4031 = vpop.f32.mrb[0].mxu0
      %v4032 = vadd.f32 %v3813, %v4031
      %v4033 = vpop.f32.mrb[0].mxu0
      %v4034 = vadd.f32 %v3815, %v4033
      %4035 = vmatprep.mubr.f32.mxu0 0.0
      %v4036 = vand.u32 %v3328, 4294901760
      %v4037 = vsub.f32 %v3328, %v4036
      %4038 = vmatmul.mubr.f32.gmra.mrb[0].mxu0 %v4037
      %v4039 = vpop.f32.mrb[0].mxu0
      %v4040 = vadd.f32 %v3820, %v4039
      %v4041 = vpop.f32.mrb[0].mxu0
      %v4042 = vadd.f32 %v3822, %v4041
      %4043 = vmatprep.mubr.f32.mxu0 0.0
      %v4044 = vand.u32 %v3331, 4294901760
      %v4045 = vsub.f32 %v3331, %v4044
      %4046 = vmatmul.mubr.f32.gmra.mrb[0].mxu0 %v4045
      %v4047 = vpop.f32.mrb[0].mxu0
      %v4048 = vadd.f32 %v3827, %v4047
      %v4049 = vpop.f32.mrb[0].mxu0
      %v4050 = vadd.f32 %v3829, %v4049
      %4051 = vmatprep.mubr.f32.mxu0 0.0
      %v4052 = vand.u32 %v3334, 4294901760
      %v4053 = vsub.f32 %v3334, %v4052
      %4054 = vmatmul.mubr.f32.gmra.mrb[0].mxu0 %v4053
      %v4055 = vpop.f32.mrb[0].mxu0
      %v4056 = vadd.f32 %v3834, %v4055
      %v4057 = vpop.f32.mrb[0].mxu0
      %v4058 = vadd.f32 %v3836, %v4057
      %4059 = vmatprep.mubr.f32.mxu0 0.0
      %v4060 = vand.u32 %v3337, 4294901760
      %v4061 = vsub.f32 %v3337, %v4060
      %4062 = vmatmul.mubr.f32.gmra.mrb[0].mxu0 %v4061
      %v4063 = vpop.f32.mrb[0].mxu0
      %v4064 = vadd.f32 %v3841, %v4063
      %v4065 = vpop.f32.mrb[0].mxu0
      %v4066 = vadd.f32 %v3843, %v4065
      %4067 = vmatprep.mubr.f32.mxu0 0.0
      %v4068 = vand.u32 %v3340, 4294901760
      %v4069 = vsub.f32 %v3340, %v4068
      %4070 = vmatmul.mubr.f32.gmra.mrb[0].mxu0 %v4069
      %v4071 = vpop.f32.mrb[0].mxu0
      %v4072 = vadd.f32 %v3848, %v4071
      %v4073 = vpop.f32.mrb[0].mxu0
      %v4074 = vadd.f32 %v3850, %v4073
      %4075 = vmatprep.mubr.f32.mxu0 0.0
      %v4076 = vand.u32 %v3343, 4294901760
      %v4077 = vsub.f32 %v3343, %v4076
      %4078 = vmatmul.mubr.f32.gmra.mrb[0].mxu0 %v4077
      %v4079 = vpop.f32.mrb[0].mxu0
      %v4080 = vadd.f32 %v3855, %v4079
      %v4081 = vpop.f32.mrb[0].mxu0
      %v4082 = vadd.f32 %v3857, %v4081
      %4083 = vdwg.mxu0
      %v4084 = vand.u32 %v3282, 4294901760
      %4085 = vmatprep.subr.mxu0 %v4084
      %v4086 = vand.u32 %v3281, 4294901760
      %4087 = vmatpush1.msra.mxu0 %v4086
      %v4088 = vand.u32 %v3284, 4294901760
      %4089 = vmatprep.subr.mxu0 %v4088
      %v4090 = vand.u32 %v3283, 4294901760
      %4091 = vmatpush1.msra.mxu0 %v4090
      %v4092 = vand.u32 %v3286, 4294901760
      %4093 = vmatprep.subr.mxu0 %v4092
      %v4094 = vand.u32 %v3285, 4294901760
      %4095 = vmatpush1.msra.mxu0 %v4094
      %v4096 = vand.u32 %v3288, 4294901760
      %4097 = vmatprep.subr.mxu0 %v4096
      %v4098 = vand.u32 %v3287, 4294901760
      %4099 = vmatpush1.msra.mxu0 %v4098
      %v4100 = vand.u32 %v3290, 4294901760
      %4101 = vmatprep.subr.mxu0 %v4100
      %v4102 = vand.u32 %v3289, 4294901760
      %4103 = vmatpush1.msra.mxu0 %v4102
      %v4104 = vand.u32 %v3292, 4294901760
      %4105 = vmatprep.subr.mxu0 %v4104
      %v4106 = vand.u32 %v3291, 4294901760
      %4107 = vmatpush1.msra.mxu0 %v4106
      %v4108 = vand.u32 %v3294, 4294901760
      %4109 = vmatprep.subr.mxu0 %v4108
      %v4110 = vand.u32 %v3293, 4294901760
      %4111 = vmatpush1.msra.mxu0 %v4110
      %v4112 = vand.u32 %v3296, 4294901760
      %4113 = vmatprep.subr.mxu0 %v4112
      %v4114 = vand.u32 %v3295, 4294901760
      %4115 = vmatpush1.msra.mxu0 %v4114
      %4116 = vmatprep.subr.mxu0 0.0
      %4117 = vmatpush1.msra.mxu0 0.0
      %4118 = vmatprep.subr.mxu0 0.0
      %4119 = vmatpush1.msra.mxu0 0.0
      %4120 = vmatprep.subr.mxu0 0.0
      %4121 = vmatpush1.msra.mxu0 0.0
      %4122 = vmatprep.subr.mxu0 0.0
      %4123 = vmatpush1.msra.mxu0 0.0
      %4124 = vmatprep.subr.mxu0 0.0
      %4125 = vmatpush1.msra.mxu0 0.0
      %4126 = vmatprep.subr.mxu0 0.0
      %4127 = vmatpush1.msra.mxu0 0.0
      %4128 = vmatprep.subr.mxu0 0.0
      %4129 = vmatpush1.msra.mxu0 0.0
      %4130 = vmatprep.subr.mxu0 0.0
      %4131 = vmatpush1.msra.mxu0 0.0
      %4132 = vmatprep.subr.mxu0 0.0
      %4133 = vmatpush1.msra.mxu0 0.0
      %4134 = vmatprep.subr.mxu0 0.0
      %4135 = vmatpush1.msra.mxu0 0.0
      %4136 = vmatprep.subr.mxu0 0.0
      %4137 = vmatpush1.msra.mxu0 0.0
      %4138 = vmatprep.subr.mxu0 0.0
      %4139 = vmatpush1.msra.mxu0 0.0
      %4140 = vmatprep.subr.mxu0 0.0
      %4141 = vmatpush1.msra.mxu0 0.0
      %4142 = vmatprep.subr.mxu0 0.0
      %4143 = vmatpush1.msra.mxu0 0.0
      %4144 = vmatprep.subr.mxu0 0.0
      %4145 = vmatpush1.msra.mxu0 0.0
      %4146 = vmatprep.subr.mxu0 0.0
      %4147 = vmatpush1.msra.mxu0 0.0
      %4148 = vmatprep.subr.mxu0 0.0
      %4149 = vmatpush1.msra.mxu0 0.0
      %4150 = vmatprep.subr.mxu0 0.0
      %4151 = vmatpush1.msra.mxu0 0.0
      %4152 = vmatprep.subr.mxu0 0.0
      %4153 = vmatpush1.msra.mxu0 0.0
      %4154 = vmatprep.subr.mxu0 0.0
      %4155 = vmatpush1.msra.mxu0 0.0
      %4156 = vmatprep.subr.mxu0 0.0
      %4157 = vmatpush1.msra.mxu0 0.0
      %4158 = vmatprep.subr.mxu0 0.0
      %4159 = vmatpush1.msra.mxu0 0.0
      %4160 = vmatprep.subr.mxu0 0.0
      %4161 = vmatpush1.msra.mxu0 0.0
      %4162 = vmatprep.subr.mxu0 0.0
      %4163 = vmatpush1.msra.mxu0 0.0
      %4164 = vmatprep.mubr.f32.mxu0 0.0
      %v4165 = vand.u32 %v3298, 4294901760
      %v4166 = vsub.f32 %v3298, %v4165
      %v4167 = vand.u32 %v4166, 4294901760
      %4168 = vmatmul.mubr.f32.gmra.mrb[0].mxu0 %v4167
      %v4169 = vpop.f32.mrb[0].mxu0
      %v4170 = vadd.f32 %v3960, %v4169
      %v4171 = vpop.f32.mrb[0].mxu0
      %v4172 = vadd.f32 %v3962, %v4171
      %4173 = vmatprep.mubr.f32.mxu0 0.0
      %v4174 = vand.u32 %v3301, 4294901760
      %v4175 = vsub.f32 %v3301, %v4174
      %v4176 = vand.u32 %v4175, 4294901760
      %4177 = vmatmul.mubr.f32.gmra.mrb[0].mxu0 %v4176
      %v4178 = vpop.f32.mrb[0].mxu0
      %v4179 = vadd.f32 %v3968, %v4178
      %v4180 = vpop.f32.mrb[0].mxu0
      %v4181 = vadd.f32 %v3970, %v4180
      %4182 = vmatprep.mubr.f32.mxu0 0.0
      %v4183 = vand.u32 %v3304, 4294901760
      %v4184 = vsub.f32 %v3304, %v4183
      %v4185 = vand.u32 %v4184, 4294901760
      %4186 = vmatmul.mubr.f32.gmra.mrb[0].mxu0 %v4185
      %v4187 = vpop.f32.mrb[0].mxu0
      %v4188 = vadd.f32 %v3976, %v4187
      %v4189 = vpop.f32.mrb[0].mxu0
      %v4190 = vadd.f32 %v3978, %v4189
      %4191 = vmatprep.mubr.f32.mxu0 0.0
      %v4192 = vand.u32 %v3307, 4294901760
      %v4193 = vsub.f32 %v3307, %v4192
      %v4194 = vand.u32 %v4193, 4294901760
      %4195 = vmatmul.mubr.f32.gmra.mrb[0].mxu0 %v4194
      %v4196 = vpop.f32.mrb[0].mxu0
      %v4197 = vadd.f32 %v3984, %v4196
      %v4198 = vpop.f32.mrb[0].mxu0
      %v4199 = vadd.f32 %v3986, %v4198
      %4200 = vmatprep.mubr.f32.mxu0 0.0
      %v4201 = vand.u32 %v3310, 4294901760
      %v4202 = vsub.f32 %v3310, %v4201
      %v4203 = vand.u32 %v4202, 4294901760
      %4204 = vmatmul.mubr.f32.gmra.mrb[0].mxu0 %v4203
      %v4205 = vpop.f32.mrb[0].mxu0
      %v4206 = vadd.f32 %v3992, %v4205
      %v4207 = vpop.f32.mrb[0].mxu0
      %v4208 = vadd.f32 %v3994, %v4207
      %4209 = vmatprep.mubr.f32.mxu0 0.0
      %v4210 = vand.u32 %v3313, 4294901760
      %v4211 = vsub.f32 %v3313, %v4210
      %v4212 = vand.u32 %v4211, 4294901760
      %4213 = vmatmul.mubr.f32.gmra.mrb[0].mxu0 %v4212
      %v4214 = vpop.f32.mrb[0].mxu0
      %v4215 = vadd.f32 %v4000, %v4214
      %v4216 = vpop.f32.mrb[0].mxu0
      %v4217 = vadd.f32 %v4002, %v4216
      %4218 = vmatprep.mubr.f32.mxu0 0.0
      %v4219 = vand.u32 %v3316, 4294901760
      %v4220 = vsub.f32 %v3316, %v4219
      %v4221 = vand.u32 %v4220, 4294901760
      %4222 = vmatmul.mubr.f32.gmra.mrb[0].mxu0 %v4221
      %v4223 = vpop.f32.mrb[0].mxu0
      %v4224 = vadd.f32 %v4008, %v4223
      %v4225 = vpop.f32.mrb[0].mxu0
      %v4226 = vadd.f32 %v4010, %v4225
      %4227 = vmatprep.mubr.f32.mxu0 0.0
      %v4228 = vand.u32 %v3319, 4294901760
      %v4229 = vsub.f32 %v3319, %v4228
      %v4230 = vand.u32 %v4229, 4294901760
      %4231 = vmatmul.mubr.f32.gmra.mrb[0].mxu0 %v4230
      %v4232 = vpop.f32.mrb[0].mxu0
      %v4233 = vadd.f32 %v4016, %v4232
      %v4234 = vpop.f32.mrb[0].mxu0
      %v4235 = vadd.f32 %v4018, %v4234
      %4236 = vmatprep.mubr.f32.mxu0 0.0
      %v4237 = vand.u32 %v3322, 4294901760
      %v4238 = vsub.f32 %v3322, %v4237
      %v4239 = vand.u32 %v4238, 4294901760
      %4240 = vmatmul.mubr.f32.gmra.mrb[0].mxu0 %v4239
      %v4241 = vpop.f32.mrb[0].mxu0
      %v4242 = vadd.f32 %v4024, %v4241
      %v4243 = vpop.f32.mrb[0].mxu0
      %v4244 = vadd.f32 %v4026, %v4243
      %4245 = vmatprep.mubr.f32.mxu0 0.0
      %v4246 = vand.u32 %v3325, 4294901760
      %v4247 = vsub.f32 %v3325, %v4246
      %v4248 = vand.u32 %v4247, 4294901760
      %4249 = vmatmul.mubr.f32.gmra.mrb[0].mxu0 %v4248
      %v4250 = vpop.f32.mrb[0].mxu0
      %v4251 = vadd.f32 %v4032, %v4250
      %v4252 = vpop.f32.mrb[0].mxu0
      %v4253 = vadd.f32 %v4034, %v4252
      %4254 = vmatprep.mubr.f32.mxu0 0.0
      %v4255 = vand.u32 %v3328, 4294901760
      %v4256 = vsub.f32 %v3328, %v4255
      %v4257 = vand.u32 %v4256, 4294901760
      %4258 = vmatmul.mubr.f32.gmra.mrb[0].mxu0 %v4257
      %v4259 = vpop.f32.mrb[0].mxu0
      %v4260 = vadd.f32 %v4040, %v4259
      %v4261 = vpop.f32.mrb[0].mxu0
      %v4262 = vadd.f32 %v4042, %v4261
      %4263 = vmatprep.mubr.f32.mxu0 0.0
      %v4264 = vand.u32 %v3331, 4294901760
      %v4265 = vsub.f32 %v3331, %v4264
      %v4266 = vand.u32 %v4265, 4294901760
      %4267 = vmatmul.mubr.f32.gmra.mrb[0].mxu0 %v4266
      %v4268 = vpop.f32.mrb[0].mxu0
      %v4269 = vadd.f32 %v4048, %v4268
      %v4270 = vpop.f32.mrb[0].mxu0
      %v4271 = vadd.f32 %v4050, %v4270
      %4272 = vmatprep.mubr.f32.mxu0 0.0
      %v4273 = vand.u32 %v3334, 4294901760
      %v4274 = vsub.f32 %v3334, %v4273
      %v4275 = vand.u32 %v4274, 4294901760
      %4276 = vmatmul.mubr.f32.gmra.mrb[0].mxu0 %v4275
      %v4277 = vpop.f32.mrb[0].mxu0
      %v4278 = vadd.f32 %v4056, %v4277
      %v4279 = vpop.f32.mrb[0].mxu0
      %v4280 = vadd.f32 %v4058, %v4279
      %4281 = vmatprep.mubr.f32.mxu0 0.0
      %v4282 = vand.u32 %v3337, 4294901760
      %v4283 = vsub.f32 %v3337, %v4282
      %v4284 = vand.u32 %v4283, 4294901760
      %4285 = vmatmul.mubr.f32.gmra.mrb[0].mxu0 %v4284
      %v4286 = vpop.f32.mrb[0].mxu0
      %v4287 = vadd.f32 %v4064, %v4286
      %v4288 = vpop.f32.mrb[0].mxu0
      %v4289 = vadd.f32 %v4066, %v4288
      %4290 = vmatprep.mubr.f32.mxu0 0.0
      %v4291 = vand.u32 %v3340, 4294901760
      %v4292 = vsub.f32 %v3340, %v4291
      %v4293 = vand.u32 %v4292, 4294901760
      %4294 = vmatmul.mubr.f32.gmra.mrb[0].mxu0 %v4293
      %v4295 = vpop.f32.mrb[0].mxu0
      %v4296 = vadd.f32 %v4072, %v4295
      %v4297 = vpop.f32.mrb[0].mxu0
      %v4298 = vadd.f32 %v4074, %v4297
      %4299 = vmatprep.mubr.f32.mxu0 0.0
      %v4300 = vand.u32 %v3343, 4294901760
      %v4301 = vsub.f32 %v3343, %v4300
      %v4302 = vand.u32 %v4301, 4294901760
      %4303 = vmatmul.mubr.f32.gmra.mrb[0].mxu0 %v4302
      %v4304 = vpop.f32.mrb[0].mxu0
      %v4305 = vadd.f32 %v4080, %v4304
      %v4306 = vpop.f32.mrb[0].mxu0
      %v4307 = vadd.f32 %v4082, %v4306
      %4308 = vdwg.mxu0
      %v4309 = vand.u32 %v3282, 4294901760
      %v4310 = vsub.f32 %v3282, %v4309
      %v4311 = vand.u32 %v4310, 4294901760
      %4312 = vmatprep.subr.mxu0 %v4311
      %v4313 = vand.u32 %v3281, 4294901760
      %v4314 = vsub.f32 %v3281, %v4313
      %v4315 = vand.u32 %v4314, 4294901760
      %4316 = vmatpush1.msra.mxu0 %v4315
      %v4317 = vand.u32 %v3284, 4294901760
      %v4318 = vsub.f32 %v3284, %v4317
      %v4319 = vand.u32 %v4318, 4294901760
      %4320 = vmatprep.subr.mxu0 %v4319
      %v4321 = vand.u32 %v3283, 4294901760
      %v4322 = vsub.f32 %v3283, %v4321
      %v4323 = vand.u32 %v4322, 4294901760
      %4324 = vmatpush1.msra.mxu0 %v4323
      %v4325 = vand.u32 %v3286, 4294901760
      %v4326 = vsub.f32 %v3286, %v4325
      %v4327 = vand.u32 %v4326, 4294901760
      %4328 = vmatprep.subr.mxu0 %v4327
      %v4329 = vand.u32 %v3285, 4294901760
      %v4330 = vsub.f32 %v3285, %v4329
      %v4331 = vand.u32 %v4330, 4294901760
      %4332 = vmatpush1.msra.mxu0 %v4331
      %v4333 = vand.u32 %v3288, 4294901760
      %v4334 = vsub.f32 %v3288, %v4333
      %v4335 = vand.u32 %v4334, 4294901760
      %4336 = vmatprep.subr.mxu0 %v4335
      %v4337 = vand.u32 %v3287, 4294901760
      %v4338 = vsub.f32 %v3287, %v4337
      %v4339 = vand.u32 %v4338, 4294901760
      %4340 = vmatpush1.msra.mxu0 %v4339
      %v4341 = vand.u32 %v3290, 4294901760
      %v4342 = vsub.f32 %v3290, %v4341
      %v4343 = vand.u32 %v4342, 4294901760
      %4344 = vmatprep.subr.mxu0 %v4343
      %v4345 = vand.u32 %v3289, 4294901760
      %v4346 = vsub.f32 %v3289, %v4345
      %v4347 = vand.u32 %v4346, 4294901760
      %4348 = vmatpush1.msra.mxu0 %v4347
      %v4349 = vand.u32 %v3292, 4294901760
      %v4350 = vsub.f32 %v3292, %v4349
      %v4351 = vand.u32 %v4350, 4294901760
      %4352 = vmatprep.subr.mxu0 %v4351
      %v4353 = vand.u32 %v3291, 4294901760
      %v4354 = vsub.f32 %v3291, %v4353
      %v4355 = vand.u32 %v4354, 4294901760
      %4356 = vmatpush1.msra.mxu0 %v4355
      %v4357 = vand.u32 %v3294, 4294901760
      %v4358 = vsub.f32 %v3294, %v4357
      %v4359 = vand.u32 %v4358, 4294901760
      %4360 = vmatprep.subr.mxu0 %v4359
      %v4361 = vand.u32 %v3293, 4294901760
      %v4362 = vsub.f32 %v3293, %v4361
      %v4363 = vand.u32 %v4362, 4294901760
      %4364 = vmatpush1.msra.mxu0 %v4363
      %v4365 = vand.u32 %v3296, 4294901760
      %v4366 = vsub.f32 %v3296, %v4365
      %v4367 = vand.u32 %v4366, 4294901760
      %4368 = vmatprep.subr.mxu0 %v4367
      %v4369 = vand.u32 %v3295, 4294901760
      %v4370 = vsub.f32 %v3295, %v4369
      %v4371 = vand.u32 %v4370, 4294901760
      %4372 = vmatpush1.msra.mxu0 %v4371
      %4373 = vmatprep.subr.mxu0 0.0
      %4374 = vmatpush1.msra.mxu0 0.0
      %4375 = vmatprep.subr.mxu0 0.0
      %4376 = vmatpush1.msra.mxu0 0.0
      %4377 = vmatprep.subr.mxu0 0.0
      %4378 = vmatpush1.msra.mxu0 0.0
      %4379 = vmatprep.subr.mxu0 0.0
      %4380 = vmatpush1.msra.mxu0 0.0
      %4381 = vmatprep.subr.mxu0 0.0
      %4382 = vmatpush1.msra.mxu0 0.0
      %4383 = vmatprep.subr.mxu0 0.0
      %4384 = vmatpush1.msra.mxu0 0.0
      %4385 = vmatprep.subr.mxu0 0.0
      %4386 = vmatpush1.msra.mxu0 0.0
      %4387 = vmatprep.subr.mxu0 0.0
      %4388 = vmatpush1.msra.mxu0 0.0
      %4389 = vmatprep.subr.mxu0 0.0
      %4390 = vmatpush1.msra.mxu0 0.0
      %4391 = vmatprep.subr.mxu0 0.0
      %4392 = vmatpush1.msra.mxu0 0.0
      %4393 = vmatprep.subr.mxu0 0.0
      %4394 = vmatpush1.msra.mxu0 0.0
      %4395 = vmatprep.subr.mxu0 0.0
      %4396 = vmatpush1.msra.mxu0 0.0
      %4397 = vmatprep.subr.mxu0 0.0
      %4398 = vmatpush1.msra.mxu0 0.0
      %4399 = vmatprep.subr.mxu0 0.0
      %4400 = vmatpush1.msra.mxu0 0.0
      %4401 = vmatprep.subr.mxu0 0.0
      %4402 = vmatpush1.msra.mxu0 0.0
      %4403 = vmatprep.subr.mxu0 0.0
      %4404 = vmatpush1.msra.mxu0 0.0
      %4405 = vmatprep.subr.mxu0 0.0
      %4406 = vmatpush1.msra.mxu0 0.0
      %4407 = vmatprep.subr.mxu0 0.0
      %4408 = vmatpush1.msra.mxu0 0.0
      %4409 = vmatprep.subr.mxu0 0.0
      %4410 = vmatpush1.msra.mxu0 0.0
      %4411 = vmatprep.subr.mxu0 0.0
      %4412 = vmatpush1.msra.mxu0 0.0
      %4413 = vmatprep.subr.mxu0 0.0
      %4414 = vmatpush1.msra.mxu0 0.0
      %4415 = vmatprep.subr.mxu0 0.0
      %4416 = vmatpush1.msra.mxu0 0.0
      %4417 = vmatprep.subr.mxu0 0.0
      %4418 = vmatpush1.msra.mxu0 0.0
      %4419 = vmatprep.subr.mxu0 0.0
      %4420 = vmatpush1.msra.mxu0 0.0
      %4421 = vmatprep.mubr.f32.mxu0 0.0
      %v4422 = vand.u32 %v3298, 4294901760
      %4423 = vmatmul.mubr.f32.gmra.mrb[0].mxu0 %v4422
      %v4424 = vpop.f32.mrb[0].mxu0
      %v4425 = vadd.f32 %v4170, %v4424
      %v4426 = vpop.f32.mrb[0].mxu0
      %v4427 = vadd.f32 %v4172, %v4426
      %4428 = vmatprep.mubr.f32.mxu0 0.0
      %v4429 = vand.u32 %v3301, 4294901760
      %4430 = vmatmul.mubr.f32.gmra.mrb[0].mxu0 %v4429
      %v4431 = vpop.f32.mrb[0].mxu0
      %v4432 = vadd.f32 %v4179, %v4431
      %v4433 = vpop.f32.mrb[0].mxu0
      %v4434 = vadd.f32 %v4181, %v4433
      %4435 = vmatprep.mubr.f32.mxu0 0.0
      %v4436 = vand.u32 %v3304, 4294901760
      %4437 = vmatmul.mubr.f32.gmra.mrb[0].mxu0 %v4436
      %v4438 = vpop.f32.mrb[0].mxu0
      %v4439 = vadd.f32 %v4188, %v4438
      %v4440 = vpop.f32.mrb[0].mxu0
      %v4441 = vadd.f32 %v4190, %v4440
      %4442 = vmatprep.mubr.f32.mxu0 0.0
      %v4443 = vand.u32 %v3307, 4294901760
      %4444 = vmatmul.mubr.f32.gmra.mrb[0].mxu0 %v4443
      %v4445 = vpop.f32.mrb[0].mxu0
      %v4446 = vadd.f32 %v4197, %v4445
      %v4447 = vpop.f32.mrb[0].mxu0
      %v4448 = vadd.f32 %v4199, %v4447
      %4449 = vmatprep.mubr.f32.mxu0 0.0
      %v4450 = vand.u32 %v3310, 4294901760
      %4451 = vmatmul.mubr.f32.gmra.mrb[0].mxu0 %v4450
      %v4452 = vpop.f32.mrb[0].mxu0
      %v4453 = vadd.f32 %v4206, %v4452
      %v4454 = vpop.f32.mrb[0].mxu0
      %v4455 = vadd.f32 %v4208, %v4454
      %4456 = vmatprep.mubr.f32.mxu0 0.0
      %v4457 = vand.u32 %v3313, 4294901760
      %4458 = vmatmul.mubr.f32.gmra.mrb[0].mxu0 %v4457
      %v4459 = vpop.f32.mrb[0].mxu0
      %v4460 = vadd.f32 %v4215, %v4459
      %v4461 = vpop.f32.mrb[0].mxu0
      %v4462 = vadd.f32 %v4217, %v4461
      %4463 = vmatprep.mubr.f32.mxu0 0.0
      %v4464 = vand.u32 %v3316, 4294901760
      %4465 = vmatmul.mubr.f32.gmra.mrb[0].mxu0 %v4464
      %v4466 = vpop.f32.mrb[0].mxu0
      %v4467 = vadd.f32 %v4224, %v4466
      %v4468 = vpop.f32.mrb[0].mxu0
      %v4469 = vadd.f32 %v4226, %v4468
      %4470 = vmatprep.mubr.f32.mxu0 0.0
      %v4471 = vand.u32 %v3319, 4294901760
      %4472 = vmatmul.mubr.f32.gmra.mrb[0].mxu0 %v4471
      %v4473 = vpop.f32.mrb[0].mxu0
      %v4474 = vadd.f32 %v4233, %v4473
      %v4475 = vpop.f32.mrb[0].mxu0
      %v4476 = vadd.f32 %v4235, %v4475
      %4477 = vmatprep.mubr.f32.mxu0 0.0
      %v4478 = vand.u32 %v3322, 4294901760
      %4479 = vmatmul.mubr.f32.gmra.mrb[0].mxu0 %v4478
      %v4480 = vpop.f32.mrb[0].mxu0
      %v4481 = vadd.f32 %v4242, %v4480
      %v4482 = vpop.f32.mrb[0].mxu0
      %v4483 = vadd.f32 %v4244, %v4482
      %4484 = vmatprep.mubr.f32.mxu0 0.0
      %v4485 = vand.u32 %v3325, 4294901760
      %4486 = vmatmul.mubr.f32.gmra.mrb[0].mxu0 %v4485
      %v4487 = vpop.f32.mrb[0].mxu0
      %v4488 = vadd.f32 %v4251, %v4487
      %v4489 = vpop.f32.mrb[0].mxu0
      %v4490 = vadd.f32 %v4253, %v4489
      %4491 = vmatprep.mubr.f32.mxu0 0.0
      %v4492 = vand.u32 %v3328, 4294901760
      %4493 = vmatmul.mubr.f32.gmra.mrb[0].mxu0 %v4492
      %v4494 = vpop.f32.mrb[0].mxu0
      %v4495 = vadd.f32 %v4260, %v4494
      %v4496 = vpop.f32.mrb[0].mxu0
      %v4497 = vadd.f32 %v4262, %v4496
      %4498 = vmatprep.mubr.f32.mxu0 0.0
      %v4499 = vand.u32 %v3331, 4294901760
      %4500 = vmatmul.mubr.f32.gmra.mrb[0].mxu0 %v4499
      %v4501 = vpop.f32.mrb[0].mxu0
      %v4502 = vadd.f32 %v4269, %v4501
      %v4503 = vpop.f32.mrb[0].mxu0
      %v4504 = vadd.f32 %v4271, %v4503
      %4505 = vmatprep.mubr.f32.mxu0 0.0
      %v4506 = vand.u32 %v3334, 4294901760
      %4507 = vmatmul.mubr.f32.gmra.mrb[0].mxu0 %v4506
      %v4508 = vpop.f32.mrb[0].mxu0
      %v4509 = vadd.f32 %v4278, %v4508
      %v4510 = vpop.f32.mrb[0].mxu0
      %v4511 = vadd.f32 %v4280, %v4510
      %4512 = vmatprep.mubr.f32.mxu0 0.0
      %v4513 = vand.u32 %v3337, 4294901760
      %4514 = vmatmul.mubr.f32.gmra.mrb[0].mxu0 %v4513
      %v4515 = vpop.f32.mrb[0].mxu0
      %v4516 = vadd.f32 %v4287, %v4515
      %v4517 = vpop.f32.mrb[0].mxu0
      %v4518 = vadd.f32 %v4289, %v4517
      %4519 = vmatprep.mubr.f32.mxu0 0.0
      %v4520 = vand.u32 %v3340, 4294901760
      %4521 = vmatmul.mubr.f32.gmra.mrb[0].mxu0 %v4520
      %v4522 = vpop.f32.mrb[0].mxu0
      %v4523 = vadd.f32 %v4296, %v4522
      %v4524 = vpop.f32.mrb[0].mxu0
      %v4525 = vadd.f32 %v4298, %v4524
      %4526 = vmatprep.mubr.f32.mxu0 0.0
      %v4527 = vand.u32 %v3343, 4294901760
      %4528 = vmatmul.mubr.f32.gmra.mrb[0].mxu0 %v4527
      %v4529 = vpop.f32.mrb[0].mxu0
      %v4530 = vadd.f32 %v4305, %v4529
      %v4531 = vpop.f32.mrb[0].mxu0
      %v4532 = vadd.f32 %v4307, %v4531
      %4533 = vdwg.mxu0
      %v4534 = vand.u32 %v3282, 4294901760
      %4535 = vmatprep.subr.mxu0 %v4534
      %v4536 = vand.u32 %v3281, 4294901760
      %4537 = vmatpush1.msra.mxu0 %v4536
      %v4538 = vand.u32 %v3284, 4294901760
      %4539 = vmatprep.subr.mxu0 %v4538
      %v4540 = vand.u32 %v3283, 4294901760
      %4541 = vmatpush1.msra.mxu0 %v4540
      %v4542 = vand.u32 %v3286, 4294901760
      %4543 = vmatprep.subr.mxu0 %v4542
      %v4544 = vand.u32 %v3285, 4294901760
      %4545 = vmatpush1.msra.mxu0 %v4544
      %v4546 = vand.u32 %v3288, 4294901760
      %4547 = vmatprep.subr.mxu0 %v4546
      %v4548 = vand.u32 %v3287, 4294901760
      %4549 = vmatpush1.msra.mxu0 %v4548
      %v4550 = vand.u32 %v3290, 4294901760
      %4551 = vmatprep.subr.mxu0 %v4550
      %v4552 = vand.u32 %v3289, 4294901760
      %4553 = vmatpush1.msra.mxu0 %v4552
      %v4554 = vand.u32 %v3292, 4294901760
      %4555 = vmatprep.subr.mxu0 %v4554
      %v4556 = vand.u32 %v3291, 4294901760
      %4557 = vmatpush1.msra.mxu0 %v4556
      %v4558 = vand.u32 %v3294, 4294901760
      %4559 = vmatprep.subr.mxu0 %v4558
      %v4560 = vand.u32 %v3293, 4294901760
      %4561 = vmatpush1.msra.mxu0 %v4560
      %v4562 = vand.u32 %v3296, 4294901760
      %4563 = vmatprep.subr.mxu0 %v4562
      %v4564 = vand.u32 %v3295, 4294901760
      %4565 = vmatpush1.msra.mxu0 %v4564
      %4566 = vmatprep.subr.mxu0 0.0
      %4567 = vmatpush1.msra.mxu0 0.0
      %4568 = vmatprep.subr.mxu0 0.0
      %4569 = vmatpush1.msra.mxu0 0.0
      %4570 = vmatprep.subr.mxu0 0.0
      %4571 = vmatpush1.msra.mxu0 0.0
      %4572 = vmatprep.subr.mxu0 0.0
      %4573 = vmatpush1.msra.mxu0 0.0
      %4574 = vmatprep.subr.mxu0 0.0
      %4575 = vmatpush1.msra.mxu0 0.0
      %4576 = vmatprep.subr.mxu0 0.0
      %4577 = vmatpush1.msra.mxu0 0.0
      %4578 = vmatprep.subr.mxu0 0.0
      %4579 = vmatpush1.msra.mxu0 0.0
      %4580 = vmatprep.subr.mxu0 0.0
      %4581 = vmatpush1.msra.mxu0 0.0
      %4582 = vmatprep.subr.mxu0 0.0
      %4583 = vmatpush1.msra.mxu0 0.0
      %4584 = vmatprep.subr.mxu0 0.0
      %4585 = vmatpush1.msra.mxu0 0.0
      %4586 = vmatprep.subr.mxu0 0.0
      %4587 = vmatpush1.msra.mxu0 0.0
      %4588 = vmatprep.subr.mxu0 0.0
      %4589 = vmatpush1.msra.mxu0 0.0
      %4590 = vmatprep.subr.mxu0 0.0
      %4591 = vmatpush1.msra.mxu0 0.0
      %4592 = vmatprep.subr.mxu0 0.0
      %4593 = vmatpush1.msra.mxu0 0.0
      %4594 = vmatprep.subr.mxu0 0.0
      %4595 = vmatpush1.msra.mxu0 0.0
      %4596 = vmatprep.subr.mxu0 0.0
      %4597 = vmatpush1.msra.mxu0 0.0
      %4598 = vmatprep.subr.mxu0 0.0
      %4599 = vmatpush1.msra.mxu0 0.0
      %4600 = vmatprep.subr.mxu0 0.0
      %4601 = vmatpush1.msra.mxu0 0.0
      %4602 = vmatprep.subr.mxu0 0.0
      %4603 = vmatpush1.msra.mxu0 0.0
      %4604 = vmatprep.subr.mxu0 0.0
      %4605 = vmatpush1.msra.mxu0 0.0
      %4606 = vmatprep.subr.mxu0 0.0
      %4607 = vmatpush1.msra.mxu0 0.0
      %4608 = vmatprep.subr.mxu0 0.0
      %4609 = vmatpush1.msra.mxu0 0.0
      %4610 = vmatprep.subr.mxu0 0.0
      %4611 = vmatpush1.msra.mxu0 0.0
      %4612 = vmatprep.subr.mxu0 0.0
      %4613 = vmatpush1.msra.mxu0 0.0
      %4614 = vmatprep.mubr.f32.mxu0 0.0
      %v4615 = vand.u32 %v3298, 4294901760
      %4616 = vmatmul.mubr.f32.gmra.mrb[0].mxu0 %v4615
      %v4617 = vpop.f32.mrb[0].mxu0
      %v4618 = vadd.f32 %v4425, %v4617
      %v4619 = vpop.f32.mrb[0].mxu0
      %v4620 = vadd.f32 %v4427, %v4619
      %4621 = vmatprep.mubr.f32.mxu0 0.0
      %v4622 = vand.u32 %v3301, 4294901760
      %4623 = vmatmul.mubr.f32.gmra.mrb[0].mxu0 %v4622
      %v4624 = vpop.f32.mrb[0].mxu0
      %v4625 = vadd.f32 %v4432, %v4624
      %v4626 = vpop.f32.mrb[0].mxu0
      %v4627 = vadd.f32 %v4434, %v4626
      %4628 = vmatprep.mubr.f32.mxu0 0.0
      %v4629 = vand.u32 %v3304, 4294901760
      %4630 = vmatmul.mubr.f32.gmra.mrb[0].mxu0 %v4629
      %v4631 = vpop.f32.mrb[0].mxu0
      %v4632 = vadd.f32 %v4439, %v4631
      %v4633 = vpop.f32.mrb[0].mxu0
      %v4634 = vadd.f32 %v4441, %v4633
      %4635 = vmatprep.mubr.f32.mxu0 0.0
      %v4636 = vand.u32 %v3307, 4294901760
      %4637 = vmatmul.mubr.f32.gmra.mrb[0].mxu0 %v4636
      %v4638 = vpop.f32.mrb[0].mxu0
      %v4639 = vadd.f32 %v4446, %v4638
      %v4640 = vpop.f32.mrb[0].mxu0
      %v4641 = vadd.f32 %v4448, %v4640
      %4642 = vmatprep.mubr.f32.mxu0 0.0
      %v4643 = vand.u32 %v3310, 4294901760
      %4644 = vmatmul.mubr.f32.gmra.mrb[0].mxu0 %v4643
      %v4645 = vpop.f32.mrb[0].mxu0
      %v4646 = vadd.f32 %v4453, %v4645
      %v4647 = vpop.f32.mrb[0].mxu0
      %v4648 = vadd.f32 %v4455, %v4647
      %4649 = vmatprep.mubr.f32.mxu0 0.0
      %v4650 = vand.u32 %v3313, 4294901760
      %4651 = vmatmul.mubr.f32.gmra.mrb[0].mxu0 %v4650
      %v4652 = vpop.f32.mrb[0].mxu0
      %v4653 = vadd.f32 %v4460, %v4652
      %v4654 = vpop.f32.mrb[0].mxu0
      %v4655 = vadd.f32 %v4462, %v4654
      %4656 = vmatprep.mubr.f32.mxu0 0.0
      %v4657 = vand.u32 %v3316, 4294901760
      %4658 = vmatmul.mubr.f32.gmra.mrb[0].mxu0 %v4657
      %v4659 = vpop.f32.mrb[0].mxu0
      %v4660 = vadd.f32 %v4467, %v4659
      %v4661 = vpop.f32.mrb[0].mxu0
      %v4662 = vadd.f32 %v4469, %v4661
      %4663 = vmatprep.mubr.f32.mxu0 0.0
      %v4664 = vand.u32 %v3319, 4294901760
      %4665 = vmatmul.mubr.f32.gmra.mrb[0].mxu0 %v4664
      %v4666 = vpop.f32.mrb[0].mxu0
      %v4667 = vadd.f32 %v4474, %v4666
      %v4668 = vpop.f32.mrb[0].mxu0
      %v4669 = vadd.f32 %v4476, %v4668
      %4670 = vmatprep.mubr.f32.mxu0 0.0
      %v4671 = vand.u32 %v3322, 4294901760
      %4672 = vmatmul.mubr.f32.gmra.mrb[0].mxu0 %v4671
      %v4673 = vpop.f32.mrb[0].mxu0
      %v4674 = vadd.f32 %v4481, %v4673
      %v4675 = vpop.f32.mrb[0].mxu0
      %v4676 = vadd.f32 %v4483, %v4675
      %4677 = vmatprep.mubr.f32.mxu0 0.0
      %v4678 = vand.u32 %v3325, 4294901760
      %4679 = vmatmul.mubr.f32.gmra.mrb[0].mxu0 %v4678
      %v4680 = vpop.f32.mrb[0].mxu0
      %v4681 = vadd.f32 %v4488, %v4680
      %v4682 = vpop.f32.mrb[0].mxu0
      %v4683 = vadd.f32 %v4490, %v4682
      %4684 = vmatprep.mubr.f32.mxu0 0.0
      %v4685 = vand.u32 %v3328, 4294901760
      %4686 = vmatmul.mubr.f32.gmra.mrb[0].mxu0 %v4685
      %v4687 = vpop.f32.mrb[0].mxu0
      %v4688 = vadd.f32 %v4495, %v4687
      %v4689 = vpop.f32.mrb[0].mxu0
      %v4690 = vadd.f32 %v4497, %v4689
      %4691 = vmatprep.mubr.f32.mxu0 0.0
      %v4692 = vand.u32 %v3331, 4294901760
      %4693 = vmatmul.mubr.f32.gmra.mrb[0].mxu0 %v4692
      %v4694 = vpop.f32.mrb[0].mxu0
      %v4695 = vadd.f32 %v4502, %v4694
      %v4696 = vpop.f32.mrb[0].mxu0
      %v4697 = vadd.f32 %v4504, %v4696
      %4698 = vmatprep.mubr.f32.mxu0 0.0
      %v4699 = vand.u32 %v3334, 4294901760
      %4700 = vmatmul.mubr.f32.gmra.mrb[0].mxu0 %v4699
      %v4701 = vpop.f32.mrb[0].mxu0
      %v4702 = vadd.f32 %v4509, %v4701
      %v4703 = vpop.f32.mrb[0].mxu0
      %v4704 = vadd.f32 %v4511, %v4703
      %4705 = vmatprep.mubr.f32.mxu0 0.0
      %v4706 = vand.u32 %v3337, 4294901760
      %4707 = vmatmul.mubr.f32.gmra.mrb[0].mxu0 %v4706
      %v4708 = vpop.f32.mrb[0].mxu0
      %v4709 = vadd.f32 %v4516, %v4708
      %v4710 = vpop.f32.mrb[0].mxu0
      %v4711 = vadd.f32 %v4518, %v4710
      %4712 = vmatprep.mubr.f32.mxu0 0.0
      %v4713 = vand.u32 %v3340, 4294901760
      %4714 = vmatmul.mubr.f32.gmra.mrb[0].mxu0 %v4713
      %v4715 = vpop.f32.mrb[0].mxu0
      %v4716 = vadd.f32 %v4523, %v4715
      %v4717 = vpop.f32.mrb[0].mxu0
      %v4718 = vadd.f32 %v4525, %v4717
      %4719 = vmatprep.mubr.f32.mxu0 0.0
      %v4720 = vand.u32 %v3343, 4294901760
      %4721 = vmatmul.mubr.f32.gmra.mrb[0].mxu0 %v4720
      %v4722 = vpop.f32.mrb[0].mxu0
      %v4723 = vadd.f32 %v4530, %v4722
      %v4724 = vpop.f32.mrb[0].mxu0
      %v4725 = vadd.f32 %v4532, %v4724
      %4726 = vdwg.mxu0
      %v4727 = vadd.f32 %v3155, %v4618
      %v4728 = vadd.f32 %v3157, %v4620
      %v4729 = vadd.f32 %v3162, %v4625
      %v4730 = vadd.f32 %v3164, %v4627
      %v4731 = vadd.f32 %v3169, %v4632
      %v4732 = vadd.f32 %v3171, %v4634
      %v4733 = vadd.f32 %v3176, %v4639
      %v4734 = vadd.f32 %v3178, %v4641
      %v4735 = vadd.f32 %v3183, %v4646
      %v4736 = vadd.f32 %v3185, %v4648
      %v4737 = vadd.f32 %v3190, %v4653
      %v4738 = vadd.f32 %v3192, %v4655
      %v4739 = vadd.f32 %v3197, %v4660
      %v4740 = vadd.f32 %v3199, %v4662
      %v4741 = vadd.f32 %v3204, %v4667
      %v4742 = vadd.f32 %v3206, %v4669
      %v4743 = vadd.f32 %v3211, %v4674
      %v4744 = vadd.f32 %v3213, %v4676
      %v4745 = vadd.f32 %v3218, %v4681
      %v4746 = vadd.f32 %v3220, %v4683
      %v4747 = vadd.f32 %v3225, %v4688
      %v4748 = vadd.f32 %v3227, %v4690
      %v4749 = vadd.f32 %v3232, %v4695
      %v4750 = vadd.f32 %v3234, %v4697
      %v4751 = vadd.f32 %v3239, %v4702
      %v4752 = vadd.f32 %v3241, %v4704
      %v4753 = vadd.f32 %v3246, %v4709
      %v4754 = vadd.f32 %v3248, %v4711
      %v4755 = vadd.f32 %v3253, %v4716
      %v4756 = vadd.f32 %v3255, %v4718
      %v4757 = vadd.f32 %v3260, %v4723
      %v4758 = vadd.f32 %v3262, %v4725
      %v4759 = vld [vmem:[#allocation2 + $0x3] sm:$0xff]
      %v4760 = vld [vmem:[#allocation2 + $0xb] sm:$0xff]
      %v4761 = vld [vmem:[#allocation2 + $0x13] sm:$0xff]
      %v4762 = vld [vmem:[#allocation2 + $0x1b] sm:$0xff]
      %v4763 = vld [vmem:[#allocation2 + $0x23] sm:$0xff]
      %v4764 = vld [vmem:[#allocation2 + $0x2b] sm:$0xff]
      %v4765 = vld [vmem:[#allocation2 + $0x33] sm:$0xff]
      %v4766 = vld [vmem:[#allocation2 + $0x3b] sm:$0xff]
      %v4767 = vld [vmem:[#allocation2 + $0x43] sm:$0xff]
      %v4768 = vld [vmem:[#allocation2 + $0x4b] sm:$0xff]
      %v4769 = vld [vmem:[#allocation2 + $0x53] sm:$0xff]
      %v4770 = vld [vmem:[#allocation2 + $0x5b] sm:$0xff]
      %v4771 = vld [vmem:[#allocation2 + $0x63] sm:$0xff]
      %v4772 = vld [vmem:[#allocation2 + $0x6b] sm:$0xff]
      %v4773 = vld [vmem:[#allocation2 + $0x73] sm:$0xff]
      %v4774 = vld [vmem:[#allocation2 + $0x7b] sm:$0xff]
      %s4775 = scalar_lea.vmem %s2, 384
      %v4776 = vld [vmem:[%s4775] sm:$0xff]
      %v4777 = vld [vmem:[%s4775 + $0x8] sm:$0xff]
      %v4778 = vld [vmem:[%s4775 + $0x10] sm:$0xff]
      %v4779 = vld [vmem:[%s4775 + $0x18] sm:$0xff]
      %v4780 = vld [vmem:[%s4775 + $0x20] sm:$0xff]
      %v4781 = vld [vmem:[%s4775 + $0x28] sm:$0xff]
      %v4782 = vld [vmem:[%s4775 + $0x30] sm:$0xff]
      %v4783 = vld [vmem:[%s4775 + $0x38] sm:$0xff]
      %v4784 = vld [vmem:[%s4775 + $0x40] sm:$0xff]
      %v4785 = vld [vmem:[%s4775 + $0x48] sm:$0xff]
      %v4786 = vld [vmem:[%s4775 + $0x50] sm:$0xff]
      %v4787 = vld [vmem:[%s4775 + $0x58] sm:$0xff]
      %v4788 = vld [vmem:[%s4775 + $0x60] sm:$0xff]
      %v4789 = vld [vmem:[%s4775 + $0x68] sm:$0xff]
      %v4790 = vld [vmem:[%s4775 + $0x70] sm:$0xff]
      %v4791 = vld [vmem:[%s4775 + $0x78] sm:$0xff]
      %v4793 = vsel %vm319, %v4759, 0
      %v4796 = vsel %vm319, %v4760, 0
      %v4799 = vsel %vm319, %v4761, 0
      %v4802 = vsel %vm319, %v4762, 0
      %v4805 = vsel %vm319, %v4763, 0
      %v4808 = vsel %vm319, %v4764, 0
      %v4811 = vsel %vm319, %v4765, 0
      %v4814 = vsel %vm319, %v4766, 0
      %v4817 = vsel %vm319, %v4767, 0
      %v4820 = vsel %vm319, %v4768, 0
      %v4823 = vsel %vm319, %v4769, 0
      %v4826 = vsel %vm319, %v4770, 0
      %v4829 = vsel %vm319, %v4771, 0
      %v4832 = vsel %vm319, %v4772, 0
      %v4835 = vsel %vm319, %v4773, 0
      %v4838 = vsel %vm319, %v4774, 0
      %v4840 = vand.u32 %v4777, 4294901760
      %4841 = vmatprep.subr.mxu0 %v4840
      %v4842 = vand.u32 %v4776, 4294901760
      %4843 = vmatpush1.msra.mxu0 %v4842
      %v4844 = vand.u32 %v4779, 4294901760
      %4845 = vmatprep.subr.mxu0 %v4844
      %v4846 = vand.u32 %v4778, 4294901760
      %4847 = vmatpush1.msra.mxu0 %v4846
      %v4848 = vand.u32 %v4781, 4294901760
      %4849 = vmatprep.subr.mxu0 %v4848
      %v4850 = vand.u32 %v4780, 4294901760
      %4851 = vmatpush1.msra.mxu0 %v4850
      %v4852 = vand.u32 %v4783, 4294901760
      %4853 = vmatprep.subr.mxu0 %v4852
      %v4854 = vand.u32 %v4782, 4294901760
      %4855 = vmatpush1.msra.mxu0 %v4854
      %v4856 = vand.u32 %v4785, 4294901760
      %4857 = vmatprep.subr.mxu0 %v4856
      %v4858 = vand.u32 %v4784, 4294901760
      %4859 = vmatpush1.msra.mxu0 %v4858
      %v4860 = vand.u32 %v4787, 4294901760
      %4861 = vmatprep.subr.mxu0 %v4860
      %v4862 = vand.u32 %v4786, 4294901760
      %4863 = vmatpush1.msra.mxu0 %v4862
      %v4864 = vand.u32 %v4789, 4294901760
      %4865 = vmatprep.subr.mxu0 %v4864
      %v4866 = vand.u32 %v4788, 4294901760
      %4867 = vmatpush1.msra.mxu0 %v4866
      %v4868 = vand.u32 %v4791, 4294901760
      %4869 = vmatprep.subr.mxu0 %v4868
      %v4870 = vand.u32 %v4790, 4294901760
      %4871 = vmatpush1.msra.mxu0 %v4870
      %4872 = vmatprep.subr.mxu0 0.0
      %4873 = vmatpush1.msra.mxu0 0.0
      %4874 = vmatprep.subr.mxu0 0.0
      %4875 = vmatpush1.msra.mxu0 0.0
      %4876 = vmatprep.subr.mxu0 0.0
      %4877 = vmatpush1.msra.mxu0 0.0
      %4878 = vmatprep.subr.mxu0 0.0
      %4879 = vmatpush1.msra.mxu0 0.0
      %4880 = vmatprep.subr.mxu0 0.0
      %4881 = vmatpush1.msra.mxu0 0.0
      %4882 = vmatprep.subr.mxu0 0.0
      %4883 = vmatpush1.msra.mxu0 0.0
      %4884 = vmatprep.subr.mxu0 0.0
      %4885 = vmatpush1.msra.mxu0 0.0
      %4886 = vmatprep.subr.mxu0 0.0
      %4887 = vmatpush1.msra.mxu0 0.0
      %4888 = vmatprep.subr.mxu0 0.0
      %4889 = vmatpush1.msra.mxu0 0.0
      %4890 = vmatprep.subr.mxu0 0.0
      %4891 = vmatpush1.msra.mxu0 0.0
      %4892 = vmatprep.subr.mxu0 0.0
      %4893 = vmatpush1.msra.mxu0 0.0
      %4894 = vmatprep.subr.mxu0 0.0
      %4895 = vmatpush1.msra.mxu0 0.0
      %4896 = vmatprep.subr.mxu0 0.0
      %4897 = vmatpush1.msra.mxu0 0.0
      %4898 = vmatprep.subr.mxu0 0.0
      %4899 = vmatpush1.msra.mxu0 0.0
      %4900 = vmatprep.subr.mxu0 0.0
      %4901 = vmatpush1.msra.mxu0 0.0
      %4902 = vmatprep.subr.mxu0 0.0
      %4903 = vmatpush1.msra.mxu0 0.0
      %4904 = vmatprep.subr.mxu0 0.0
      %4905 = vmatpush1.msra.mxu0 0.0
      %4906 = vmatprep.subr.mxu0 0.0
      %4907 = vmatpush1.msra.mxu0 0.0
      %4908 = vmatprep.subr.mxu0 0.0
      %4909 = vmatpush1.msra.mxu0 0.0
      %4910 = vmatprep.subr.mxu0 0.0
      %4911 = vmatpush1.msra.mxu0 0.0
      %4912 = vmatprep.subr.mxu0 0.0
      %4913 = vmatpush1.msra.mxu0 0.0
      %4914 = vmatprep.subr.mxu0 0.0
      %4915 = vmatpush1.msra.mxu0 0.0
      %4916 = vmatprep.subr.mxu0 0.0
      %4917 = vmatpush1.msra.mxu0 0.0
      %4918 = vmatprep.subr.mxu0 0.0
      %4919 = vmatpush1.msra.mxu0 0.0
      %4920 = vmatprep.mubr.f32.mxu0 0.0
      %v4921 = vand.u32 %v4793, 4294901760
      %v4922 = vsub.f32 %v4793, %v4921
      %v4923 = vand.u32 %v4922, 4294901760
      %v4924 = vsub.f32 %v4922, %v4923
      %v4925 = vand.u32 %v4924, 4294901760
      %4926 = vmatmul.mubr.f32.gmra.mrb[0].mxu0 %v4925
      %v4927 = vpop.f32.mrb[0].mxu0
      %v4928 = vadd.f32 0.0, %v4927
      %v4929 = vpop.f32.mrb[0].mxu0
      %v4930 = vadd.f32 0.0, %v4929
      %4931 = vmatprep.mubr.f32.mxu0 0.0
      %v4932 = vand.u32 %v4796, 4294901760
      %v4933 = vsub.f32 %v4796, %v4932
      %v4934 = vand.u32 %v4933, 4294901760
      %v4935 = vsub.f32 %v4933, %v4934
      %v4936 = vand.u32 %v4935, 4294901760
      %4937 = vmatmul.mubr.f32.gmra.mrb[0].mxu0 %v4936
      %v4938 = vpop.f32.mrb[0].mxu0
      %v4939 = vadd.f32 0.0, %v4938
      %v4940 = vpop.f32.mrb[0].mxu0
      %v4941 = vadd.f32 0.0, %v4940
      %4942 = vmatprep.mubr.f32.mxu0 0.0
      %v4943 = vand.u32 %v4799, 4294901760
      %v4944 = vsub.f32 %v4799, %v4943
      %v4945 = vand.u32 %v4944, 4294901760
      %v4946 = vsub.f32 %v4944, %v4945
      %v4947 = vand.u32 %v4946, 4294901760
      %4948 = vmatmul.mubr.f32.gmra.mrb[0].mxu0 %v4947
      %v4949 = vpop.f32.mrb[0].mxu0
      %v4950 = vadd.f32 0.0, %v4949
      %v4951 = vpop.f32.mrb[0].mxu0
      %v4952 = vadd.f32 0.0, %v4951
      %4953 = vmatprep.mubr.f32.mxu0 0.0
      %v4954 = vand.u32 %v4802, 4294901760
      %v4955 = vsub.f32 %v4802, %v4954
      %v4956 = vand.u32 %v4955, 4294901760
      %v4957 = vsub.f32 %v4955, %v4956
      %v4958 = vand.u32 %v4957, 4294901760
      %4959 = vmatmul.mubr.f32.gmra.mrb[0].mxu0 %v4958
      %v4960 = vpop.f32.mrb[0].mxu0
      %v4961 = vadd.f32 0.0, %v4960
      %v4962 = vpop.f32.mrb[0].mxu0
      %v4963 = vadd.f32 0.0, %v4962
      %4964 = vmatprep.mubr.f32.mxu0 0.0
      %v4965 = vand.u32 %v4805, 4294901760
      %v4966 = vsub.f32 %v4805, %v4965
      %v4967 = vand.u32 %v4966, 4294901760
      %v4968 = vsub.f32 %v4966, %v4967
      %v4969 = vand.u32 %v4968, 4294901760
      %4970 = vmatmul.mubr.f32.gmra.mrb[0].mxu0 %v4969
      %v4971 = vpop.f32.mrb[0].mxu0
      %v4972 = vadd.f32 0.0, %v4971
      %v4973 = vpop.f32.mrb[0].mxu0
      %v4974 = vadd.f32 0.0, %v4973
      %4975 = vmatprep.mubr.f32.mxu0 0.0
      %v4976 = vand.u32 %v4808, 4294901760
      %v4977 = vsub.f32 %v4808, %v4976
      %v4978 = vand.u32 %v4977, 4294901760
      %v4979 = vsub.f32 %v4977, %v4978
      %v4980 = vand.u32 %v4979, 4294901760
      %4981 = vmatmul.mubr.f32.gmra.mrb[0].mxu0 %v4980
      %v4982 = vpop.f32.mrb[0].mxu0
      %v4983 = vadd.f32 0.0, %v4982
      %v4984 = vpop.f32.mrb[0].mxu0
      %v4985 = vadd.f32 0.0, %v4984
      %4986 = vmatprep.mubr.f32.mxu0 0.0
      %v4987 = vand.u32 %v4811, 4294901760
      %v4988 = vsub.f32 %v4811, %v4987
      %v4989 = vand.u32 %v4988, 4294901760
      %v4990 = vsub.f32 %v4988, %v4989
      %v4991 = vand.u32 %v4990, 4294901760
      %4992 = vmatmul.mubr.f32.gmra.mrb[0].mxu0 %v4991
      %v4993 = vpop.f32.mrb[0].mxu0
      %v4994 = vadd.f32 0.0, %v4993
      %v4995 = vpop.f32.mrb[0].mxu0
      %v4996 = vadd.f32 0.0, %v4995
      %4997 = vmatprep.mubr.f32.mxu0 0.0
      %v4998 = vand.u32 %v4814, 4294901760
      %v4999 = vsub.f32 %v4814, %v4998
      %v5000 = vand.u32 %v4999, 4294901760
      %v5001 = vsub.f32 %v4999, %v5000
      %v5002 = vand.u32 %v5001, 4294901760
      %5003 = vmatmul.mubr.f32.gmra.mrb[0].mxu0 %v5002
      %v5004 = vpop.f32.mrb[0].mxu0
      %v5005 = vadd.f32 0.0, %v5004
      %v5006 = vpop.f32.mrb[0].mxu0
      %v5007 = vadd.f32 0.0, %v5006
      %5008 = vmatprep.mubr.f32.mxu0 0.0
      %v5009 = vand.u32 %v4817, 4294901760
      %v5010 = vsub.f32 %v4817, %v5009
      %v5011 = vand.u32 %v5010, 4294901760
      %v5012 = vsub.f32 %v5010, %v5011
      %v5013 = vand.u32 %v5012, 4294901760
      %5014 = vmatmul.mubr.f32.gmra.mrb[0].mxu0 %v5013
      %v5015 = vpop.f32.mrb[0].mxu0
      %v5016 = vadd.f32 0.0, %v5015
      %v5017 = vpop.f32.mrb[0].mxu0
      %v5018 = vadd.f32 0.0, %v5017
      %5019 = vmatprep.mubr.f32.mxu0 0.0
      %v5020 = vand.u32 %v4820, 4294901760
      %v5021 = vsub.f32 %v4820, %v5020
      %v5022 = vand.u32 %v5021, 4294901760
      %v5023 = vsub.f32 %v5021, %v5022
      %v5024 = vand.u32 %v5023, 4294901760
      %5025 = vmatmul.mubr.f32.gmra.mrb[0].mxu0 %v5024
      %v5026 = vpop.f32.mrb[0].mxu0
      %v5027 = vadd.f32 0.0, %v5026
      %v5028 = vpop.f32.mrb[0].mxu0
      %v5029 = vadd.f32 0.0, %v5028
      %5030 = vmatprep.mubr.f32.mxu0 0.0
      %v5031 = vand.u32 %v4823, 4294901760
      %v5032 = vsub.f32 %v4823, %v5031
      %v5033 = vand.u32 %v5032, 4294901760
      %v5034 = vsub.f32 %v5032, %v5033
      %v5035 = vand.u32 %v5034, 4294901760
      %5036 = vmatmul.mubr.f32.gmra.mrb[0].mxu0 %v5035
      %v5037 = vpop.f32.mrb[0].mxu0
      %v5038 = vadd.f32 0.0, %v5037
      %v5039 = vpop.f32.mrb[0].mxu0
      %v5040 = vadd.f32 0.0, %v5039
      %5041 = vmatprep.mubr.f32.mxu0 0.0
      %v5042 = vand.u32 %v4826, 4294901760
      %v5043 = vsub.f32 %v4826, %v5042
      %v5044 = vand.u32 %v5043, 4294901760
      %v5045 = vsub.f32 %v5043, %v5044
      %v5046 = vand.u32 %v5045, 4294901760
      %5047 = vmatmul.mubr.f32.gmra.mrb[0].mxu0 %v5046
      %v5048 = vpop.f32.mrb[0].mxu0
      %v5049 = vadd.f32 0.0, %v5048
      %v5050 = vpop.f32.mrb[0].mxu0
      %v5051 = vadd.f32 0.0, %v5050
      %5052 = vmatprep.mubr.f32.mxu0 0.0
      %v5053 = vand.u32 %v4829, 4294901760
      %v5054 = vsub.f32 %v4829, %v5053
      %v5055 = vand.u32 %v5054, 4294901760
      %v5056 = vsub.f32 %v5054, %v5055
      %v5057 = vand.u32 %v5056, 4294901760
      %5058 = vmatmul.mubr.f32.gmra.mrb[0].mxu0 %v5057
      %v5059 = vpop.f32.mrb[0].mxu0
      %v5060 = vadd.f32 0.0, %v5059
      %v5061 = vpop.f32.mrb[0].mxu0
      %v5062 = vadd.f32 0.0, %v5061
      %5063 = vmatprep.mubr.f32.mxu0 0.0
      %v5064 = vand.u32 %v4832, 4294901760
      %v5065 = vsub.f32 %v4832, %v5064
      %v5066 = vand.u32 %v5065, 4294901760
      %v5067 = vsub.f32 %v5065, %v5066
      %v5068 = vand.u32 %v5067, 4294901760
      %5069 = vmatmul.mubr.f32.gmra.mrb[0].mxu0 %v5068
      %v5070 = vpop.f32.mrb[0].mxu0
      %v5071 = vadd.f32 0.0, %v5070
      %v5072 = vpop.f32.mrb[0].mxu0
      %v5073 = vadd.f32 0.0, %v5072
      %5074 = vmatprep.mubr.f32.mxu0 0.0
      %v5075 = vand.u32 %v4835, 4294901760
      %v5076 = vsub.f32 %v4835, %v5075
      %v5077 = vand.u32 %v5076, 4294901760
      %v5078 = vsub.f32 %v5076, %v5077
      %v5079 = vand.u32 %v5078, 4294901760
      %5080 = vmatmul.mubr.f32.gmra.mrb[0].mxu0 %v5079
      %v5081 = vpop.f32.mrb[0].mxu0
      %v5082 = vadd.f32 0.0, %v5081
      %v5083 = vpop.f32.mrb[0].mxu0
      %v5084 = vadd.f32 0.0, %v5083
      %5085 = vmatprep.mubr.f32.mxu0 0.0
      %v5086 = vand.u32 %v4838, 4294901760
      %v5087 = vsub.f32 %v4838, %v5086
      %v5088 = vand.u32 %v5087, 4294901760
      %v5089 = vsub.f32 %v5087, %v5088
      %v5090 = vand.u32 %v5089, 4294901760
      %5091 = vmatmul.mubr.f32.gmra.mrb[0].mxu0 %v5090
      %v5092 = vpop.f32.mrb[0].mxu0
      %v5093 = vadd.f32 0.0, %v5092
      %v5094 = vpop.f32.mrb[0].mxu0
      %v5095 = vadd.f32 0.0, %v5094
      %5096 = vdwg.mxu0
      %v5097 = vand.u32 %v4777, 4294901760
      %v5098 = vsub.f32 %v4777, %v5097
      %v5099 = vand.u32 %v5098, 4294901760
      %v5100 = vsub.f32 %v5098, %v5099
      %v5101 = vand.u32 %v5100, 4294901760
      %5102 = vmatprep.subr.mxu0 %v5101
      %v5103 = vand.u32 %v4776, 4294901760
      %v5104 = vsub.f32 %v4776, %v5103
      %v5105 = vand.u32 %v5104, 4294901760
      %v5106 = vsub.f32 %v5104, %v5105
      %v5107 = vand.u32 %v5106, 4294901760
      %5108 = vmatpush1.msra.mxu0 %v5107
      %v5109 = vand.u32 %v4779, 4294901760
      %v5110 = vsub.f32 %v4779, %v5109
      %v5111 = vand.u32 %v5110, 4294901760
      %v5112 = vsub.f32 %v5110, %v5111
      %v5113 = vand.u32 %v5112, 4294901760
      %5114 = vmatprep.subr.mxu0 %v5113
      %v5115 = vand.u32 %v4778, 4294901760
      %v5116 = vsub.f32 %v4778, %v5115
      %v5117 = vand.u32 %v5116, 4294901760
      %v5118 = vsub.f32 %v5116, %v5117
      %v5119 = vand.u32 %v5118, 4294901760
      %5120 = vmatpush1.msra.mxu0 %v5119
      %v5121 = vand.u32 %v4781, 4294901760
      %v5122 = vsub.f32 %v4781, %v5121
      %v5123 = vand.u32 %v5122, 4294901760
      %v5124 = vsub.f32 %v5122, %v5123
      %v5125 = vand.u32 %v5124, 4294901760
      %5126 = vmatprep.subr.mxu0 %v5125
      %v5127 = vand.u32 %v4780, 4294901760
      %v5128 = vsub.f32 %v4780, %v5127
      %v5129 = vand.u32 %v5128, 4294901760
      %v5130 = vsub.f32 %v5128, %v5129
      %v5131 = vand.u32 %v5130, 4294901760
      %5132 = vmatpush1.msra.mxu0 %v5131
      %v5133 = vand.u32 %v4783, 4294901760
      %v5134 = vsub.f32 %v4783, %v5133
      %v5135 = vand.u32 %v5134, 4294901760
      %v5136 = vsub.f32 %v5134, %v5135
      %v5137 = vand.u32 %v5136, 4294901760
      %5138 = vmatprep.subr.mxu0 %v5137
      %v5139 = vand.u32 %v4782, 4294901760
      %v5140 = vsub.f32 %v4782, %v5139
      %v5141 = vand.u32 %v5140, 4294901760
      %v5142 = vsub.f32 %v5140, %v5141
      %v5143 = vand.u32 %v5142, 4294901760
      %5144 = vmatpush1.msra.mxu0 %v5143
      %v5145 = vand.u32 %v4785, 4294901760
      %v5146 = vsub.f32 %v4785, %v5145
      %v5147 = vand.u32 %v5146, 4294901760
      %v5148 = vsub.f32 %v5146, %v5147
      %v5149 = vand.u32 %v5148, 4294901760
      %5150 = vmatprep.subr.mxu0 %v5149
      %v5151 = vand.u32 %v4784, 4294901760
      %v5152 = vsub.f32 %v4784, %v5151
      %v5153 = vand.u32 %v5152, 4294901760
      %v5154 = vsub.f32 %v5152, %v5153
      %v5155 = vand.u32 %v5154, 4294901760
      %5156 = vmatpush1.msra.mxu0 %v5155
      %v5157 = vand.u32 %v4787, 4294901760
      %v5158 = vsub.f32 %v4787, %v5157
      %v5159 = vand.u32 %v5158, 4294901760
      %v5160 = vsub.f32 %v5158, %v5159
      %v5161 = vand.u32 %v5160, 4294901760
      %5162 = vmatprep.subr.mxu0 %v5161
      %v5163 = vand.u32 %v4786, 4294901760
      %v5164 = vsub.f32 %v4786, %v5163
      %v5165 = vand.u32 %v5164, 4294901760
      %v5166 = vsub.f32 %v5164, %v5165
      %v5167 = vand.u32 %v5166, 4294901760
      %5168 = vmatpush1.msra.mxu0 %v5167
      %v5169 = vand.u32 %v4789, 4294901760
      %v5170 = vsub.f32 %v4789, %v5169
      %v5171 = vand.u32 %v5170, 4294901760
      %v5172 = vsub.f32 %v5170, %v5171
      %v5173 = vand.u32 %v5172, 4294901760
      %5174 = vmatprep.subr.mxu0 %v5173
      %v5175 = vand.u32 %v4788, 4294901760
      %v5176 = vsub.f32 %v4788, %v5175
      %v5177 = vand.u32 %v5176, 4294901760
      %v5178 = vsub.f32 %v5176, %v5177
      %v5179 = vand.u32 %v5178, 4294901760
      %5180 = vmatpush1.msra.mxu0 %v5179
      %v5181 = vand.u32 %v4791, 4294901760
      %v5182 = vsub.f32 %v4791, %v5181
      %v5183 = vand.u32 %v5182, 4294901760
      %v5184 = vsub.f32 %v5182, %v5183
      %v5185 = vand.u32 %v5184, 4294901760
      %5186 = vmatprep.subr.mxu0 %v5185
      %v5187 = vand.u32 %v4790, 4294901760
      %v5188 = vsub.f32 %v4790, %v5187
      %v5189 = vand.u32 %v5188, 4294901760
      %v5190 = vsub.f32 %v5188, %v5189
      %v5191 = vand.u32 %v5190, 4294901760
      %5192 = vmatpush1.msra.mxu0 %v5191
      %5193 = vmatprep.subr.mxu0 0.0
      %5194 = vmatpush1.msra.mxu0 0.0
      %5195 = vmatprep.subr.mxu0 0.0
      %5196 = vmatpush1.msra.mxu0 0.0
      %5197 = vmatprep.subr.mxu0 0.0
      %5198 = vmatpush1.msra.mxu0 0.0
      %5199 = vmatprep.subr.mxu0 0.0
      %5200 = vmatpush1.msra.mxu0 0.0
      %5201 = vmatprep.subr.mxu0 0.0
      %5202 = vmatpush1.msra.mxu0 0.0
      %5203 = vmatprep.subr.mxu0 0.0
      %5204 = vmatpush1.msra.mxu0 0.0
      %5205 = vmatprep.subr.mxu0 0.0
      %5206 = vmatpush1.msra.mxu0 0.0
      %5207 = vmatprep.subr.mxu0 0.0
      %5208 = vmatpush1.msra.mxu0 0.0
      %5209 = vmatprep.subr.mxu0 0.0
      %5210 = vmatpush1.msra.mxu0 0.0
      %5211 = vmatprep.subr.mxu0 0.0
      %5212 = vmatpush1.msra.mxu0 0.0
      %5213 = vmatprep.subr.mxu0 0.0
      %5214 = vmatpush1.msra.mxu0 0.0
      %5215 = vmatprep.subr.mxu0 0.0
      %5216 = vmatpush1.msra.mxu0 0.0
      %5217 = vmatprep.subr.mxu0 0.0
      %5218 = vmatpush1.msra.mxu0 0.0
      %5219 = vmatprep.subr.mxu0 0.0
      %5220 = vmatpush1.msra.mxu0 0.0
      %5221 = vmatprep.subr.mxu0 0.0
      %5222 = vmatpush1.msra.mxu0 0.0
      %5223 = vmatprep.subr.mxu0 0.0
      %5224 = vmatpush1.msra.mxu0 0.0
      %5225 = vmatprep.subr.mxu0 0.0
      %5226 = vmatpush1.msra.mxu0 0.0
      %5227 = vmatprep.subr.mxu0 0.0
      %5228 = vmatpush1.msra.mxu0 0.0
      %5229 = vmatprep.subr.mxu0 0.0
      %5230 = vmatpush1.msra.mxu0 0.0
      %5231 = vmatprep.subr.mxu0 0.0
      %5232 = vmatpush1.msra.mxu0 0.0
      %5233 = vmatprep.subr.mxu0 0.0
      %5234 = vmatpush1.msra.mxu0 0.0
      %5235 = vmatprep.subr.mxu0 0.0
      %5236 = vmatpush1.msra.mxu0 0.0
      %5237 = vmatprep.subr.mxu0 0.0
      %5238 = vmatpush1.msra.mxu0 0.0
      %5239 = vmatprep.subr.mxu0 0.0
      %5240 = vmatpush1.msra.mxu0 0.0
      %5241 = vmatprep.mubr.f32.mxu0 0.0
      %v5242 = vand.u32 %v4793, 4294901760
      %5243 = vmatmul.mubr.f32.gmra.mrb[0].mxu0 %v5242
      %v5244 = vpop.f32.mrb[0].mxu0
      %v5245 = vadd.f32 %v4928, %v5244
      %v5246 = vpop.f32.mrb[0].mxu0
      %v5247 = vadd.f32 %v4930, %v5246
      %5248 = vmatprep.mubr.f32.mxu0 0.0
      %v5249 = vand.u32 %v4796, 4294901760
      %5250 = vmatmul.mubr.f32.gmra.mrb[0].mxu0 %v5249
      %v5251 = vpop.f32.mrb[0].mxu0
      %v5252 = vadd.f32 %v4939, %v5251
      %v5253 = vpop.f32.mrb[0].mxu0
      %v5254 = vadd.f32 %v4941, %v5253
      %5255 = vmatprep.mubr.f32.mxu0 0.0
      %v5256 = vand.u32 %v4799, 4294901760
      %5257 = vmatmul.mubr.f32.gmra.mrb[0].mxu0 %v5256
      %v5258 = vpop.f32.mrb[0].mxu0
      %v5259 = vadd.f32 %v4950, %v5258
      %v5260 = vpop.f32.mrb[0].mxu0
      %v5261 = vadd.f32 %v4952, %v5260
      %5262 = vmatprep.mubr.f32.mxu0 0.0
      %v5263 = vand.u32 %v4802, 4294901760
      %5264 = vmatmul.mubr.f32.gmra.mrb[0].mxu0 %v5263
      %v5265 = vpop.f32.mrb[0].mxu0
      %v5266 = vadd.f32 %v4961, %v5265
      %v5267 = vpop.f32.mrb[0].mxu0
      %v5268 = vadd.f32 %v4963, %v5267
      %5269 = vmatprep.mubr.f32.mxu0 0.0
      %v5270 = vand.u32 %v4805, 4294901760
      %5271 = vmatmul.mubr.f32.gmra.mrb[0].mxu0 %v5270
      %v5272 = vpop.f32.mrb[0].mxu0
      %v5273 = vadd.f32 %v4972, %v5272
      %v5274 = vpop.f32.mrb[0].mxu0
      %v5275 = vadd.f32 %v4974, %v5274
      %5276 = vmatprep.mubr.f32.mxu0 0.0
      %v5277 = vand.u32 %v4808, 4294901760
      %5278 = vmatmul.mubr.f32.gmra.mrb[0].mxu0 %v5277
      %v5279 = vpop.f32.mrb[0].mxu0
      %v5280 = vadd.f32 %v4983, %v5279
      %v5281 = vpop.f32.mrb[0].mxu0
      %v5282 = vadd.f32 %v4985, %v5281
      %5283 = vmatprep.mubr.f32.mxu0 0.0
      %v5284 = vand.u32 %v4811, 4294901760
      %5285 = vmatmul.mubr.f32.gmra.mrb[0].mxu0 %v5284
      %v5286 = vpop.f32.mrb[0].mxu0
      %v5287 = vadd.f32 %v4994, %v5286
      %v5288 = vpop.f32.mrb[0].mxu0
      %v5289 = vadd.f32 %v4996, %v5288
      %5290 = vmatprep.mubr.f32.mxu0 0.0
      %v5291 = vand.u32 %v4814, 4294901760
      %5292 = vmatmul.mubr.f32.gmra.mrb[0].mxu0 %v5291
      %v5293 = vpop.f32.mrb[0].mxu0
      %v5294 = vadd.f32 %v5005, %v5293
      %v5295 = vpop.f32.mrb[0].mxu0
      %v5296 = vadd.f32 %v5007, %v5295
      %5297 = vmatprep.mubr.f32.mxu0 0.0
      %v5298 = vand.u32 %v4817, 4294901760
      %5299 = vmatmul.mubr.f32.gmra.mrb[0].mxu0 %v5298
      %v5300 = vpop.f32.mrb[0].mxu0
      %v5301 = vadd.f32 %v5016, %v5300
      %v5302 = vpop.f32.mrb[0].mxu0
      %v5303 = vadd.f32 %v5018, %v5302
      %5304 = vmatprep.mubr.f32.mxu0 0.0
      %v5305 = vand.u32 %v4820, 4294901760
      %5306 = vmatmul.mubr.f32.gmra.mrb[0].mxu0 %v5305
      %v5307 = vpop.f32.mrb[0].mxu0
      %v5308 = vadd.f32 %v5027, %v5307
      %v5309 = vpop.f32.mrb[0].mxu0
      %v5310 = vadd.f32 %v5029, %v5309
      %5311 = vmatprep.mubr.f32.mxu0 0.0
      %v5312 = vand.u32 %v4823, 4294901760
      %5313 = vmatmul.mubr.f32.gmra.mrb[0].mxu0 %v5312
      %v5314 = vpop.f32.mrb[0].mxu0
      %v5315 = vadd.f32 %v5038, %v5314
      %v5316 = vpop.f32.mrb[0].mxu0
      %v5317 = vadd.f32 %v5040, %v5316
      %5318 = vmatprep.mubr.f32.mxu0 0.0
      %v5319 = vand.u32 %v4826, 4294901760
      %5320 = vmatmul.mubr.f32.gmra.mrb[0].mxu0 %v5319
      %v5321 = vpop.f32.mrb[0].mxu0
      %v5322 = vadd.f32 %v5049, %v5321
      %v5323 = vpop.f32.mrb[0].mxu0
      %v5324 = vadd.f32 %v5051, %v5323
      %5325 = vmatprep.mubr.f32.mxu0 0.0
      %v5326 = vand.u32 %v4829, 4294901760
      %5327 = vmatmul.mubr.f32.gmra.mrb[0].mxu0 %v5326
      %v5328 = vpop.f32.mrb[0].mxu0
      %v5329 = vadd.f32 %v5060, %v5328
      %v5330 = vpop.f32.mrb[0].mxu0
      %v5331 = vadd.f32 %v5062, %v5330
      %5332 = vmatprep.mubr.f32.mxu0 0.0
      %v5333 = vand.u32 %v4832, 4294901760
      %5334 = vmatmul.mubr.f32.gmra.mrb[0].mxu0 %v5333
      %v5335 = vpop.f32.mrb[0].mxu0
      %v5336 = vadd.f32 %v5071, %v5335
      %v5337 = vpop.f32.mrb[0].mxu0
      %v5338 = vadd.f32 %v5073, %v5337
      %5339 = vmatprep.mubr.f32.mxu0 0.0
      %v5340 = vand.u32 %v4835, 4294901760
      %5341 = vmatmul.mubr.f32.gmra.mrb[0].mxu0 %v5340
      %v5342 = vpop.f32.mrb[0].mxu0
      %v5343 = vadd.f32 %v5082, %v5342
      %v5344 = vpop.f32.mrb[0].mxu0
      %v5345 = vadd.f32 %v5084, %v5344
      %5346 = vmatprep.mubr.f32.mxu0 0.0
      %v5347 = vand.u32 %v4838, 4294901760
      %5348 = vmatmul.mubr.f32.gmra.mrb[0].mxu0 %v5347
      %v5349 = vpop.f32.mrb[0].mxu0
      %v5350 = vadd.f32 %v5093, %v5349
      %v5351 = vpop.f32.mrb[0].mxu0
      %v5352 = vadd.f32 %v5095, %v5351
      %5353 = vdwg.mxu0
      %v5354 = vand.u32 %v4777, 4294901760
      %v5355 = vsub.f32 %v4777, %v5354
      %5356 = vmatprep.subr.mxu0 %v5355
      %v5357 = vand.u32 %v4776, 4294901760
      %v5358 = vsub.f32 %v4776, %v5357
      %5359 = vmatpush1.msra.mxu0 %v5358
      %v5360 = vand.u32 %v4779, 4294901760
      %v5361 = vsub.f32 %v4779, %v5360
      %5362 = vmatprep.subr.mxu0 %v5361
      %v5363 = vand.u32 %v4778, 4294901760
      %v5364 = vsub.f32 %v4778, %v5363
      %5365 = vmatpush1.msra.mxu0 %v5364
      %v5366 = vand.u32 %v4781, 4294901760
      %v5367 = vsub.f32 %v4781, %v5366
      %5368 = vmatprep.subr.mxu0 %v5367
      %v5369 = vand.u32 %v4780, 4294901760
      %v5370 = vsub.f32 %v4780, %v5369
      %5371 = vmatpush1.msra.mxu0 %v5370
      %v5372 = vand.u32 %v4783, 4294901760
      %v5373 = vsub.f32 %v4783, %v5372
      %5374 = vmatprep.subr.mxu0 %v5373
      %v5375 = vand.u32 %v4782, 4294901760
      %v5376 = vsub.f32 %v4782, %v5375
      %5377 = vmatpush1.msra.mxu0 %v5376
      %v5378 = vand.u32 %v4785, 4294901760
      %v5379 = vsub.f32 %v4785, %v5378
      %5380 = vmatprep.subr.mxu0 %v5379
      %v5381 = vand.u32 %v4784, 4294901760
      %v5382 = vsub.f32 %v4784, %v5381
      %5383 = vmatpush1.msra.mxu0 %v5382
      %v5384 = vand.u32 %v4787, 4294901760
      %v5385 = vsub.f32 %v4787, %v5384
      %5386 = vmatprep.subr.mxu0 %v5385
      %v5387 = vand.u32 %v4786, 4294901760
      %v5388 = vsub.f32 %v4786, %v5387
      %5389 = vmatpush1.msra.mxu0 %v5388
      %v5390 = vand.u32 %v4789, 4294901760
      %v5391 = vsub.f32 %v4789, %v5390
      %5392 = vmatprep.subr.mxu0 %v5391
      %v5393 = vand.u32 %v4788, 4294901760
      %v5394 = vsub.f32 %v4788, %v5393
      %5395 = vmatpush1.msra.mxu0 %v5394
      %v5396 = vand.u32 %v4791, 4294901760
      %v5397 = vsub.f32 %v4791, %v5396
      %5398 = vmatprep.subr.mxu0 %v5397
      %v5399 = vand.u32 %v4790, 4294901760
      %v5400 = vsub.f32 %v4790, %v5399
      %5401 = vmatpush1.msra.mxu0 %v5400
      %5402 = vmatprep.subr.mxu0 0.0
      %5403 = vmatpush1.msra.mxu0 0.0
      %5404 = vmatprep.subr.mxu0 0.0
      %5405 = vmatpush1.msra.mxu0 0.0
      %5406 = vmatprep.subr.mxu0 0.0
      %5407 = vmatpush1.msra.mxu0 0.0
      %5408 = vmatprep.subr.mxu0 0.0
      %5409 = vmatpush1.msra.mxu0 0.0
      %5410 = vmatprep.subr.mxu0 0.0
      %5411 = vmatpush1.msra.mxu0 0.0
      %5412 = vmatprep.subr.mxu0 0.0
      %5413 = vmatpush1.msra.mxu0 0.0
      %5414 = vmatprep.subr.mxu0 0.0
      %5415 = vmatpush1.msra.mxu0 0.0
      %5416 = vmatprep.subr.mxu0 0.0
      %5417 = vmatpush1.msra.mxu0 0.0
      %5418 = vmatprep.subr.mxu0 0.0
      %5419 = vmatpush1.msra.mxu0 0.0
      %5420 = vmatprep.subr.mxu0 0.0
      %5421 = vmatpush1.msra.mxu0 0.0
      %5422 = vmatprep.subr.mxu0 0.0
      %5423 = vmatpush1.msra.mxu0 0.0
      %5424 = vmatprep.subr.mxu0 0.0
      %5425 = vmatpush1.msra.mxu0 0.0
      %5426 = vmatprep.subr.mxu0 0.0
      %5427 = vmatpush1.msra.mxu0 0.0
      %5428 = vmatprep.subr.mxu0 0.0
      %5429 = vmatpush1.msra.mxu0 0.0
      %5430 = vmatprep.subr.mxu0 0.0
      %5431 = vmatpush1.msra.mxu0 0.0
      %5432 = vmatprep.subr.mxu0 0.0
      %5433 = vmatpush1.msra.mxu0 0.0
      %5434 = vmatprep.subr.mxu0 0.0
      %5435 = vmatpush1.msra.mxu0 0.0
      %5436 = vmatprep.subr.mxu0 0.0
      %5437 = vmatpush1.msra.mxu0 0.0
      %5438 = vmatprep.subr.mxu0 0.0
      %5439 = vmatpush1.msra.mxu0 0.0
      %5440 = vmatprep.subr.mxu0 0.0
      %5441 = vmatpush1.msra.mxu0 0.0
      %5442 = vmatprep.subr.mxu0 0.0
      %5443 = vmatpush1.msra.mxu0 0.0
      %5444 = vmatprep.subr.mxu0 0.0
      %5445 = vmatpush1.msra.mxu0 0.0
      %5446 = vmatprep.subr.mxu0 0.0
      %5447 = vmatpush1.msra.mxu0 0.0
      %5448 = vmatprep.subr.mxu0 0.0
      %5449 = vmatpush1.msra.mxu0 0.0
      %5450 = vmatprep.mubr.f32.mxu0 0.0
      %v5451 = vand.u32 %v4793, 4294901760
      %v5452 = vsub.f32 %v4793, %v5451
      %5453 = vmatmul.mubr.f32.gmra.mrb[0].mxu0 %v5452
      %v5454 = vpop.f32.mrb[0].mxu0
      %v5455 = vadd.f32 %v5245, %v5454
      %v5456 = vpop.f32.mrb[0].mxu0
      %v5457 = vadd.f32 %v5247, %v5456
      %5458 = vmatprep.mubr.f32.mxu0 0.0
      %v5459 = vand.u32 %v4796, 4294901760
      %v5460 = vsub.f32 %v4796, %v5459
      %5461 = vmatmul.mubr.f32.gmra.mrb[0].mxu0 %v5460
      %v5462 = vpop.f32.mrb[0].mxu0
      %v5463 = vadd.f32 %v5252, %v5462
      %v5464 = vpop.f32.mrb[0].mxu0
      %v5465 = vadd.f32 %v5254, %v5464
      %5466 = vmatprep.mubr.f32.mxu0 0.0
      %v5467 = vand.u32 %v4799, 4294901760
      %v5468 = vsub.f32 %v4799, %v5467
      %5469 = vmatmul.mubr.f32.gmra.mrb[0].mxu0 %v5468
      %v5470 = vpop.f32.mrb[0].mxu0
      %v5471 = vadd.f32 %v5259, %v5470
      %v5472 = vpop.f32.mrb[0].mxu0
      %v5473 = vadd.f32 %v5261, %v5472
      %5474 = vmatprep.mubr.f32.mxu0 0.0
      %v5475 = vand.u32 %v4802, 4294901760
      %v5476 = vsub.f32 %v4802, %v5475
      %5477 = vmatmul.mubr.f32.gmra.mrb[0].mxu0 %v5476
      %v5478 = vpop.f32.mrb[0].mxu0
      %v5479 = vadd.f32 %v5266, %v5478
      %v5480 = vpop.f32.mrb[0].mxu0
      %v5481 = vadd.f32 %v5268, %v5480
      %5482 = vmatprep.mubr.f32.mxu0 0.0
      %v5483 = vand.u32 %v4805, 4294901760
      %v5484 = vsub.f32 %v4805, %v5483
      %5485 = vmatmul.mubr.f32.gmra.mrb[0].mxu0 %v5484
      %v5486 = vpop.f32.mrb[0].mxu0
      %v5487 = vadd.f32 %v5273, %v5486
      %v5488 = vpop.f32.mrb[0].mxu0
      %v5489 = vadd.f32 %v5275, %v5488
      %5490 = vmatprep.mubr.f32.mxu0 0.0
      %v5491 = vand.u32 %v4808, 4294901760
      %v5492 = vsub.f32 %v4808, %v5491
      %5493 = vmatmul.mubr.f32.gmra.mrb[0].mxu0 %v5492
      %v5494 = vpop.f32.mrb[0].mxu0
      %v5495 = vadd.f32 %v5280, %v5494
      %v5496 = vpop.f32.mrb[0].mxu0
      %v5497 = vadd.f32 %v5282, %v5496
      %5498 = vmatprep.mubr.f32.mxu0 0.0
      %v5499 = vand.u32 %v4811, 4294901760
      %v5500 = vsub.f32 %v4811, %v5499
      %5501 = vmatmul.mubr.f32.gmra.mrb[0].mxu0 %v5500
      %v5502 = vpop.f32.mrb[0].mxu0
      %v5503 = vadd.f32 %v5287, %v5502
      %v5504 = vpop.f32.mrb[0].mxu0
      %v5505 = vadd.f32 %v5289, %v5504
      %5506 = vmatprep.mubr.f32.mxu0 0.0
      %v5507 = vand.u32 %v4814, 4294901760
      %v5508 = vsub.f32 %v4814, %v5507
      %5509 = vmatmul.mubr.f32.gmra.mrb[0].mxu0 %v5508
      %v5510 = vpop.f32.mrb[0].mxu0
      %v5511 = vadd.f32 %v5294, %v5510
      %v5512 = vpop.f32.mrb[0].mxu0
      %v5513 = vadd.f32 %v5296, %v5512
      %5514 = vmatprep.mubr.f32.mxu0 0.0
      %v5515 = vand.u32 %v4817, 4294901760
      %v5516 = vsub.f32 %v4817, %v5515
      %5517 = vmatmul.mubr.f32.gmra.mrb[0].mxu0 %v5516
      %v5518 = vpop.f32.mrb[0].mxu0
      %v5519 = vadd.f32 %v5301, %v5518
      %v5520 = vpop.f32.mrb[0].mxu0
      %v5521 = vadd.f32 %v5303, %v5520
      %5522 = vmatprep.mubr.f32.mxu0 0.0
      %v5523 = vand.u32 %v4820, 4294901760
      %v5524 = vsub.f32 %v4820, %v5523
      %5525 = vmatmul.mubr.f32.gmra.mrb[0].mxu0 %v5524
      %v5526 = vpop.f32.mrb[0].mxu0
      %v5527 = vadd.f32 %v5308, %v5526
      %v5528 = vpop.f32.mrb[0].mxu0
      %v5529 = vadd.f32 %v5310, %v5528
      %5530 = vmatprep.mubr.f32.mxu0 0.0
      %v5531 = vand.u32 %v4823, 4294901760
      %v5532 = vsub.f32 %v4823, %v5531
      %5533 = vmatmul.mubr.f32.gmra.mrb[0].mxu0 %v5532
      %v5534 = vpop.f32.mrb[0].mxu0
      %v5535 = vadd.f32 %v5315, %v5534
      %v5536 = vpop.f32.mrb[0].mxu0
      %v5537 = vadd.f32 %v5317, %v5536
      %5538 = vmatprep.mubr.f32.mxu0 0.0
      %v5539 = vand.u32 %v4826, 4294901760
      %v5540 = vsub.f32 %v4826, %v5539
      %5541 = vmatmul.mubr.f32.gmra.mrb[0].mxu0 %v5540
      %v5542 = vpop.f32.mrb[0].mxu0
      %v5543 = vadd.f32 %v5322, %v5542
      %v5544 = vpop.f32.mrb[0].mxu0
      %v5545 = vadd.f32 %v5324, %v5544
      %5546 = vmatprep.mubr.f32.mxu0 0.0
      %v5547 = vand.u32 %v4829, 4294901760
      %v5548 = vsub.f32 %v4829, %v5547
      %5549 = vmatmul.mubr.f32.gmra.mrb[0].mxu0 %v5548
      %v5550 = vpop.f32.mrb[0].mxu0
      %v5551 = vadd.f32 %v5329, %v5550
      %v5552 = vpop.f32.mrb[0].mxu0
      %v5553 = vadd.f32 %v5331, %v5552
      %5554 = vmatprep.mubr.f32.mxu0 0.0
      %v5555 = vand.u32 %v4832, 4294901760
      %v5556 = vsub.f32 %v4832, %v5555
      %5557 = vmatmul.mubr.f32.gmra.mrb[0].mxu0 %v5556
      %v5558 = vpop.f32.mrb[0].mxu0
      %v5559 = vadd.f32 %v5336, %v5558
      %v5560 = vpop.f32.mrb[0].mxu0
      %v5561 = vadd.f32 %v5338, %v5560
      %5562 = vmatprep.mubr.f32.mxu0 0.0
      %v5563 = vand.u32 %v4835, 4294901760
      %v5564 = vsub.f32 %v4835, %v5563
      %5565 = vmatmul.mubr.f32.gmra.mrb[0].mxu0 %v5564
      %v5566 = vpop.f32.mrb[0].mxu0
      %v5567 = vadd.f32 %v5343, %v5566
      %v5568 = vpop.f32.mrb[0].mxu0
      %v5569 = vadd.f32 %v5345, %v5568
      %5570 = vmatprep.mubr.f32.mxu0 0.0
      %v5571 = vand.u32 %v4838, 4294901760
      %v5572 = vsub.f32 %v4838, %v5571
      %5573 = vmatmul.mubr.f32.gmra.mrb[0].mxu0 %v5572
      %v5574 = vpop.f32.mrb[0].mxu0
      %v5575 = vadd.f32 %v5350, %v5574
      %v5576 = vpop.f32.mrb[0].mxu0
      %v5577 = vadd.f32 %v5352, %v5576
      %5578 = vdwg.mxu0
      %v5579 = vand.u32 %v4777, 4294901760
      %5580 = vmatprep.subr.mxu0 %v5579
      %v5581 = vand.u32 %v4776, 4294901760
      %5582 = vmatpush1.msra.mxu0 %v5581
      %v5583 = vand.u32 %v4779, 4294901760
      %5584 = vmatprep.subr.mxu0 %v5583
      %v5585 = vand.u32 %v4778, 4294901760
      %5586 = vmatpush1.msra.mxu0 %v5585
      %v5587 = vand.u32 %v4781, 4294901760
      %5588 = vmatprep.subr.mxu0 %v5587
      %v5589 = vand.u32 %v4780, 4294901760
      %5590 = vmatpush1.msra.mxu0 %v5589
      %v5591 = vand.u32 %v4783, 4294901760
      %5592 = vmatprep.subr.mxu0 %v5591
      %v5593 = vand.u32 %v4782, 4294901760
      %5594 = vmatpush1.msra.mxu0 %v5593
      %v5595 = vand.u32 %v4785, 4294901760
      %5596 = vmatprep.subr.mxu0 %v5595
      %v5597 = vand.u32 %v4784, 4294901760
      %5598 = vmatpush1.msra.mxu0 %v5597
      %v5599 = vand.u32 %v4787, 4294901760
      %5600 = vmatprep.subr.mxu0 %v5599
      %v5601 = vand.u32 %v4786, 4294901760
      %5602 = vmatpush1.msra.mxu0 %v5601
      %v5603 = vand.u32 %v4789, 4294901760
      %5604 = vmatprep.subr.mxu0 %v5603
      %v5605 = vand.u32 %v4788, 4294901760
      %5606 = vmatpush1.msra.mxu0 %v5605
      %v5607 = vand.u32 %v4791, 4294901760
      %5608 = vmatprep.subr.mxu0 %v5607
      %v5609 = vand.u32 %v4790, 4294901760
      %5610 = vmatpush1.msra.mxu0 %v5609
      %5611 = vmatprep.subr.mxu0 0.0
      %5612 = vmatpush1.msra.mxu0 0.0
      %5613 = vmatprep.subr.mxu0 0.0
      %5614 = vmatpush1.msra.mxu0 0.0
      %5615 = vmatprep.subr.mxu0 0.0
      %5616 = vmatpush1.msra.mxu0 0.0
      %5617 = vmatprep.subr.mxu0 0.0
      %5618 = vmatpush1.msra.mxu0 0.0
      %5619 = vmatprep.subr.mxu0 0.0
      %5620 = vmatpush1.msra.mxu0 0.0
      %5621 = vmatprep.subr.mxu0 0.0
      %5622 = vmatpush1.msra.mxu0 0.0
      %5623 = vmatprep.subr.mxu0 0.0
      %5624 = vmatpush1.msra.mxu0 0.0
      %5625 = vmatprep.subr.mxu0 0.0
      %5626 = vmatpush1.msra.mxu0 0.0
      %5627 = vmatprep.subr.mxu0 0.0
      %5628 = vmatpush1.msra.mxu0 0.0
      %5629 = vmatprep.subr.mxu0 0.0
      %5630 = vmatpush1.msra.mxu0 0.0
      %5631 = vmatprep.subr.mxu0 0.0
      %5632 = vmatpush1.msra.mxu0 0.0
      %5633 = vmatprep.subr.mxu0 0.0
      %5634 = vmatpush1.msra.mxu0 0.0
      %5635 = vmatprep.subr.mxu0 0.0
      %5636 = vmatpush1.msra.mxu0 0.0
      %5637 = vmatprep.subr.mxu0 0.0
      %5638 = vmatpush1.msra.mxu0 0.0
      %5639 = vmatprep.subr.mxu0 0.0
      %5640 = vmatpush1.msra.mxu0 0.0
      %5641 = vmatprep.subr.mxu0 0.0
      %5642 = vmatpush1.msra.mxu0 0.0
      %5643 = vmatprep.subr.mxu0 0.0
      %5644 = vmatpush1.msra.mxu0 0.0
      %5645 = vmatprep.subr.mxu0 0.0
      %5646 = vmatpush1.msra.mxu0 0.0
      %5647 = vmatprep.subr.mxu0 0.0
      %5648 = vmatpush1.msra.mxu0 0.0
      %5649 = vmatprep.subr.mxu0 0.0
      %5650 = vmatpush1.msra.mxu0 0.0
      %5651 = vmatprep.subr.mxu0 0.0
      %5652 = vmatpush1.msra.mxu0 0.0
      %5653 = vmatprep.subr.mxu0 0.0
      %5654 = vmatpush1.msra.mxu0 0.0
      %5655 = vmatprep.subr.mxu0 0.0
      %5656 = vmatpush1.msra.mxu0 0.0
      %5657 = vmatprep.subr.mxu0 0.0
      %5658 = vmatpush1.msra.mxu0 0.0
      %5659 = vmatprep.mubr.f32.mxu0 0.0
      %v5660 = vand.u32 %v4793, 4294901760
      %v5661 = vsub.f32 %v4793, %v5660
      %v5662 = vand.u32 %v5661, 4294901760
      %5663 = vmatmul.mubr.f32.gmra.mrb[0].mxu0 %v5662
      %v5664 = vpop.f32.mrb[0].mxu0
      %v5665 = vadd.f32 %v5455, %v5664
      %v5666 = vpop.f32.mrb[0].mxu0
      %v5667 = vadd.f32 %v5457, %v5666
      %5668 = vmatprep.mubr.f32.mxu0 0.0
      %v5669 = vand.u32 %v4796, 4294901760
      %v5670 = vsub.f32 %v4796, %v5669
      %v5671 = vand.u32 %v5670, 4294901760
      %5672 = vmatmul.mubr.f32.gmra.mrb[0].mxu0 %v5671
      %v5673 = vpop.f32.mrb[0].mxu0
      %v5674 = vadd.f32 %v5463, %v5673
      %v5675 = vpop.f32.mrb[0].mxu0
      %v5676 = vadd.f32 %v5465, %v5675
      %5677 = vmatprep.mubr.f32.mxu0 0.0
      %v5678 = vand.u32 %v4799, 4294901760
      %v5679 = vsub.f32 %v4799, %v5678
      %v5680 = vand.u32 %v5679, 4294901760
      %5681 = vmatmul.mubr.f32.gmra.mrb[0].mxu0 %v5680
      %v5682 = vpop.f32.mrb[0].mxu0
      %v5683 = vadd.f32 %v5471, %v5682
      %v5684 = vpop.f32.mrb[0].mxu0
      %v5685 = vadd.f32 %v5473, %v5684
      %5686 = vmatprep.mubr.f32.mxu0 0.0
      %v5687 = vand.u32 %v4802, 4294901760
      %v5688 = vsub.f32 %v4802, %v5687
      %v5689 = vand.u32 %v5688, 4294901760
      %5690 = vmatmul.mubr.f32.gmra.mrb[0].mxu0 %v5689
      %v5691 = vpop.f32.mrb[0].mxu0
      %v5692 = vadd.f32 %v5479, %v5691
      %v5693 = vpop.f32.mrb[0].mxu0
      %v5694 = vadd.f32 %v5481, %v5693
      %5695 = vmatprep.mubr.f32.mxu0 0.0
      %v5696 = vand.u32 %v4805, 4294901760
      %v5697 = vsub.f32 %v4805, %v5696
      %v5698 = vand.u32 %v5697, 4294901760
      %5699 = vmatmul.mubr.f32.gmra.mrb[0].mxu0 %v5698
      %v5700 = vpop.f32.mrb[0].mxu0
      %v5701 = vadd.f32 %v5487, %v5700
      %v5702 = vpop.f32.mrb[0].mxu0
      %v5703 = vadd.f32 %v5489, %v5702
      %5704 = vmatprep.mubr.f32.mxu0 0.0
      %v5705 = vand.u32 %v4808, 4294901760
      %v5706 = vsub.f32 %v4808, %v5705
      %v5707 = vand.u32 %v5706, 4294901760
      %5708 = vmatmul.mubr.f32.gmra.mrb[0].mxu0 %v5707
      %v5709 = vpop.f32.mrb[0].mxu0
      %v5710 = vadd.f32 %v5495, %v5709
      %v5711 = vpop.f32.mrb[0].mxu0
      %v5712 = vadd.f32 %v5497, %v5711
      %5713 = vmatprep.mubr.f32.mxu0 0.0
      %v5714 = vand.u32 %v4811, 4294901760
      %v5715 = vsub.f32 %v4811, %v5714
      %v5716 = vand.u32 %v5715, 4294901760
      %5717 = vmatmul.mubr.f32.gmra.mrb[0].mxu0 %v5716
      %v5718 = vpop.f32.mrb[0].mxu0
      %v5719 = vadd.f32 %v5503, %v5718
      %v5720 = vpop.f32.mrb[0].mxu0
      %v5721 = vadd.f32 %v5505, %v5720
      %5722 = vmatprep.mubr.f32.mxu0 0.0
      %v5723 = vand.u32 %v4814, 4294901760
      %v5724 = vsub.f32 %v4814, %v5723
      %v5725 = vand.u32 %v5724, 4294901760
      %5726 = vmatmul.mubr.f32.gmra.mrb[0].mxu0 %v5725
      %v5727 = vpop.f32.mrb[0].mxu0
      %v5728 = vadd.f32 %v5511, %v5727
      %v5729 = vpop.f32.mrb[0].mxu0
      %v5730 = vadd.f32 %v5513, %v5729
      %5731 = vmatprep.mubr.f32.mxu0 0.0
      %v5732 = vand.u32 %v4817, 4294901760
      %v5733 = vsub.f32 %v4817, %v5732
      %v5734 = vand.u32 %v5733, 4294901760
      %5735 = vmatmul.mubr.f32.gmra.mrb[0].mxu0 %v5734
      %v5736 = vpop.f32.mrb[0].mxu0
      %v5737 = vadd.f32 %v5519, %v5736
      %v5738 = vpop.f32.mrb[0].mxu0
      %v5739 = vadd.f32 %v5521, %v5738
      %5740 = vmatprep.mubr.f32.mxu0 0.0
      %v5741 = vand.u32 %v4820, 4294901760
      %v5742 = vsub.f32 %v4820, %v5741
      %v5743 = vand.u32 %v5742, 4294901760
      %5744 = vmatmul.mubr.f32.gmra.mrb[0].mxu0 %v5743
      %v5745 = vpop.f32.mrb[0].mxu0
      %v5746 = vadd.f32 %v5527, %v5745
      %v5747 = vpop.f32.mrb[0].mxu0
      %v5748 = vadd.f32 %v5529, %v5747
      %5749 = vmatprep.mubr.f32.mxu0 0.0
      %v5750 = vand.u32 %v4823, 4294901760
      %v5751 = vsub.f32 %v4823, %v5750
      %v5752 = vand.u32 %v5751, 4294901760
      %5753 = vmatmul.mubr.f32.gmra.mrb[0].mxu0 %v5752
      %v5754 = vpop.f32.mrb[0].mxu0
      %v5755 = vadd.f32 %v5535, %v5754
      %v5756 = vpop.f32.mrb[0].mxu0
      %v5757 = vadd.f32 %v5537, %v5756
      %5758 = vmatprep.mubr.f32.mxu0 0.0
      %v5759 = vand.u32 %v4826, 4294901760
      %v5760 = vsub.f32 %v4826, %v5759
      %v5761 = vand.u32 %v5760, 4294901760
      %5762 = vmatmul.mubr.f32.gmra.mrb[0].mxu0 %v5761
      %v5763 = vpop.f32.mrb[0].mxu0
      %v5764 = vadd.f32 %v5543, %v5763
      %v5765 = vpop.f32.mrb[0].mxu0
      %v5766 = vadd.f32 %v5545, %v5765
      %5767 = vmatprep.mubr.f32.mxu0 0.0
      %v5768 = vand.u32 %v4829, 4294901760
      %v5769 = vsub.f32 %v4829, %v5768
      %v5770 = vand.u32 %v5769, 4294901760
      %5771 = vmatmul.mubr.f32.gmra.mrb[0].mxu0 %v5770
      %v5772 = vpop.f32.mrb[0].mxu0
      %v5773 = vadd.f32 %v5551, %v5772
      %v5774 = vpop.f32.mrb[0].mxu0
      %v5775 = vadd.f32 %v5553, %v5774
      %5776 = vmatprep.mubr.f32.mxu0 0.0
      %v5777 = vand.u32 %v4832, 4294901760
      %v5778 = vsub.f32 %v4832, %v5777
      %v5779 = vand.u32 %v5778, 4294901760
      %5780 = vmatmul.mubr.f32.gmra.mrb[0].mxu0 %v5779
      %v5781 = vpop.f32.mrb[0].mxu0
      %v5782 = vadd.f32 %v5559, %v5781
      %v5783 = vpop.f32.mrb[0].mxu0
      %v5784 = vadd.f32 %v5561, %v5783
      %5785 = vmatprep.mubr.f32.mxu0 0.0
      %v5786 = vand.u32 %v4835, 4294901760
      %v5787 = vsub.f32 %v4835, %v5786
      %v5788 = vand.u32 %v5787, 4294901760
      %5789 = vmatmul.mubr.f32.gmra.mrb[0].mxu0 %v5788
      %v5790 = vpop.f32.mrb[0].mxu0
      %v5791 = vadd.f32 %v5567, %v5790
      %v5792 = vpop.f32.mrb[0].mxu0
      %v5793 = vadd.f32 %v5569, %v5792
      %5794 = vmatprep.mubr.f32.mxu0 0.0
      %v5795 = vand.u32 %v4838, 4294901760
      %v5796 = vsub.f32 %v4838, %v5795
      %v5797 = vand.u32 %v5796, 4294901760
      %5798 = vmatmul.mubr.f32.gmra.mrb[0].mxu0 %v5797
      %v5799 = vpop.f32.mrb[0].mxu0
      %v5800 = vadd.f32 %v5575, %v5799
      %v5801 = vpop.f32.mrb[0].mxu0
      %v5802 = vadd.f32 %v5577, %v5801
      %5803 = vdwg.mxu0
      %v5804 = vand.u32 %v4777, 4294901760
      %v5805 = vsub.f32 %v4777, %v5804
      %v5806 = vand.u32 %v5805, 4294901760
      %5807 = vmatprep.subr.mxu0 %v5806
      %v5808 = vand.u32 %v4776, 4294901760
      %v5809 = vsub.f32 %v4776, %v5808
      %v5810 = vand.u32 %v5809, 4294901760
      %5811 = vmatpush1.msra.mxu0 %v5810
      %v5812 = vand.u32 %v4779, 4294901760
      %v5813 = vsub.f32 %v4779, %v5812
      %v5814 = vand.u32 %v5813, 4294901760
      %5815 = vmatprep.subr.mxu0 %v5814
      %v5816 = vand.u32 %v4778, 4294901760
      %v5817 = vsub.f32 %v4778, %v5816
      %v5818 = vand.u32 %v5817, 4294901760
      %5819 = vmatpush1.msra.mxu0 %v5818
      %v5820 = vand.u32 %v4781, 4294901760
      %v5821 = vsub.f32 %v4781, %v5820
      %v5822 = vand.u32 %v5821, 4294901760
      %5823 = vmatprep.subr.mxu0 %v5822
      %v5824 = vand.u32 %v4780, 4294901760
      %v5825 = vsub.f32 %v4780, %v5824
      %v5826 = vand.u32 %v5825, 4294901760
      %5827 = vmatpush1.msra.mxu0 %v5826
      %v5828 = vand.u32 %v4783, 4294901760
      %v5829 = vsub.f32 %v4783, %v5828
      %v5830 = vand.u32 %v5829, 4294901760
      %5831 = vmatprep.subr.mxu0 %v5830
      %v5832 = vand.u32 %v4782, 4294901760
      %v5833 = vsub.f32 %v4782, %v5832
      %v5834 = vand.u32 %v5833, 4294901760
      %5835 = vmatpush1.msra.mxu0 %v5834
      %v5836 = vand.u32 %v4785, 4294901760
      %v5837 = vsub.f32 %v4785, %v5836
      %v5838 = vand.u32 %v5837, 4294901760
      %5839 = vmatprep.subr.mxu0 %v5838
      %v5840 = vand.u32 %v4784, 4294901760
      %v5841 = vsub.f32 %v4784, %v5840
      %v5842 = vand.u32 %v5841, 4294901760
      %5843 = vmatpush1.msra.mxu0 %v5842
      %v5844 = vand.u32 %v4787, 4294901760
      %v5845 = vsub.f32 %v4787, %v5844
      %v5846 = vand.u32 %v5845, 4294901760
      %5847 = vmatprep.subr.mxu0 %v5846
      %v5848 = vand.u32 %v4786, 4294901760
      %v5849 = vsub.f32 %v4786, %v5848
      %v5850 = vand.u32 %v5849, 4294901760
      %5851 = vmatpush1.msra.mxu0 %v5850
      %v5852 = vand.u32 %v4789, 4294901760
      %v5853 = vsub.f32 %v4789, %v5852
      %v5854 = vand.u32 %v5853, 4294901760
      %5855 = vmatprep.subr.mxu0 %v5854
      %v5856 = vand.u32 %v4788, 4294901760
      %v5857 = vsub.f32 %v4788, %v5856
      %v5858 = vand.u32 %v5857, 4294901760
      %5859 = vmatpush1.msra.mxu0 %v5858
      %v5860 = vand.u32 %v4791, 4294901760
      %v5861 = vsub.f32 %v4791, %v5860
      %v5862 = vand.u32 %v5861, 4294901760
      %5863 = vmatprep.subr.mxu0 %v5862
      %v5864 = vand.u32 %v4790, 4294901760
      %v5865 = vsub.f32 %v4790, %v5864
      %v5866 = vand.u32 %v5865, 4294901760
      %5867 = vmatpush1.msra.mxu0 %v5866
      %5868 = vmatprep.subr.mxu0 0.0
      %5869 = vmatpush1.msra.mxu0 0.0
      %5870 = vmatprep.subr.mxu0 0.0
      %5871 = vmatpush1.msra.mxu0 0.0
      %5872 = vmatprep.subr.mxu0 0.0
      %5873 = vmatpush1.msra.mxu0 0.0
      %5874 = vmatprep.subr.mxu0 0.0
      %5875 = vmatpush1.msra.mxu0 0.0
      %5876 = vmatprep.subr.mxu0 0.0
      %5877 = vmatpush1.msra.mxu0 0.0
      %5878 = vmatprep.subr.mxu0 0.0
      %5879 = vmatpush1.msra.mxu0 0.0
      %5880 = vmatprep.subr.mxu0 0.0
      %5881 = vmatpush1.msra.mxu0 0.0
      %5882 = vmatprep.subr.mxu0 0.0
      %5883 = vmatpush1.msra.mxu0 0.0
      %5884 = vmatprep.subr.mxu0 0.0
      %5885 = vmatpush1.msra.mxu0 0.0
      %5886 = vmatprep.subr.mxu0 0.0
      %5887 = vmatpush1.msra.mxu0 0.0
      %5888 = vmatprep.subr.mxu0 0.0
      %5889 = vmatpush1.msra.mxu0 0.0
      %5890 = vmatprep.subr.mxu0 0.0
      %5891 = vmatpush1.msra.mxu0 0.0
      %5892 = vmatprep.subr.mxu0 0.0
      %5893 = vmatpush1.msra.mxu0 0.0
      %5894 = vmatprep.subr.mxu0 0.0
      %5895 = vmatpush1.msra.mxu0 0.0
      %5896 = vmatprep.subr.mxu0 0.0
      %5897 = vmatpush1.msra.mxu0 0.0
      %5898 = vmatprep.subr.mxu0 0.0
      %5899 = vmatpush1.msra.mxu0 0.0
      %5900 = vmatprep.subr.mxu0 0.0
      %5901 = vmatpush1.msra.mxu0 0.0
      %5902 = vmatprep.subr.mxu0 0.0
      %5903 = vmatpush1.msra.mxu0 0.0
      %5904 = vmatprep.subr.mxu0 0.0
      %5905 = vmatpush1.msra.mxu0 0.0
      %5906 = vmatprep.subr.mxu0 0.0
      %5907 = vmatpush1.msra.mxu0 0.0
      %5908 = vmatprep.subr.mxu0 0.0
      %5909 = vmatpush1.msra.mxu0 0.0
      %5910 = vmatprep.subr.mxu0 0.0
      %5911 = vmatpush1.msra.mxu0 0.0
      %5912 = vmatprep.subr.mxu0 0.0
      %5913 = vmatpush1.msra.mxu0 0.0
      %5914 = vmatprep.subr.mxu0 0.0
      %5915 = vmatpush1.msra.mxu0 0.0
      %5916 = vmatprep.mubr.f32.mxu0 0.0
      %v5917 = vand.u32 %v4793, 4294901760
      %5918 = vmatmul.mubr.f32.gmra.mrb[0].mxu0 %v5917
      %v5919 = vpop.f32.mrb[0].mxu0
      %v5920 = vadd.f32 %v5665, %v5919
      %v5921 = vpop.f32.mrb[0].mxu0
      %v5922 = vadd.f32 %v5667, %v5921
      %5923 = vmatprep.mubr.f32.mxu0 0.0
      %v5924 = vand.u32 %v4796, 4294901760
      %5925 = vmatmul.mubr.f32.gmra.mrb[0].mxu0 %v5924
      %v5926 = vpop.f32.mrb[0].mxu0
      %v5927 = vadd.f32 %v5674, %v5926
      %v5928 = vpop.f32.mrb[0].mxu0
      %v5929 = vadd.f32 %v5676, %v5928
      %5930 = vmatprep.mubr.f32.mxu0 0.0
      %v5931 = vand.u32 %v4799, 4294901760
      %5932 = vmatmul.mubr.f32.gmra.mrb[0].mxu0 %v5931
      %v5933 = vpop.f32.mrb[0].mxu0
      %v5934 = vadd.f32 %v5683, %v5933
      %v5935 = vpop.f32.mrb[0].mxu0
      %v5936 = vadd.f32 %v5685, %v5935
      %5937 = vmatprep.mubr.f32.mxu0 0.0
      %v5938 = vand.u32 %v4802, 4294901760
      %5939 = vmatmul.mubr.f32.gmra.mrb[0].mxu0 %v5938
      %v5940 = vpop.f32.mrb[0].mxu0
      %v5941 = vadd.f32 %v5692, %v5940
      %v5942 = vpop.f32.mrb[0].mxu0
      %v5943 = vadd.f32 %v5694, %v5942
      %5944 = vmatprep.mubr.f32.mxu0 0.0
      %v5945 = vand.u32 %v4805, 4294901760
      %5946 = vmatmul.mubr.f32.gmra.mrb[0].mxu0 %v5945
      %v5947 = vpop.f32.mrb[0].mxu0
      %v5948 = vadd.f32 %v5701, %v5947
      %v5949 = vpop.f32.mrb[0].mxu0
      %v5950 = vadd.f32 %v5703, %v5949
      %5951 = vmatprep.mubr.f32.mxu0 0.0
      %v5952 = vand.u32 %v4808, 4294901760
      %5953 = vmatmul.mubr.f32.gmra.mrb[0].mxu0 %v5952
      %v5954 = vpop.f32.mrb[0].mxu0
      %v5955 = vadd.f32 %v5710, %v5954
      %v5956 = vpop.f32.mrb[0].mxu0
      %v5957 = vadd.f32 %v5712, %v5956
      %5958 = vmatprep.mubr.f32.mxu0 0.0
      %v5959 = vand.u32 %v4811, 4294901760
      %5960 = vmatmul.mubr.f32.gmra.mrb[0].mxu0 %v5959
      %v5961 = vpop.f32.mrb[0].mxu0
      %v5962 = vadd.f32 %v5719, %v5961
      %v5963 = vpop.f32.mrb[0].mxu0
      %v5964 = vadd.f32 %v5721, %v5963
      %5965 = vmatprep.mubr.f32.mxu0 0.0
      %v5966 = vand.u32 %v4814, 4294901760
      %5967 = vmatmul.mubr.f32.gmra.mrb[0].mxu0 %v5966
      %v5968 = vpop.f32.mrb[0].mxu0
      %v5969 = vadd.f32 %v5728, %v5968
      %v5970 = vpop.f32.mrb[0].mxu0
      %v5971 = vadd.f32 %v5730, %v5970
      %5972 = vmatprep.mubr.f32.mxu0 0.0
      %v5973 = vand.u32 %v4817, 4294901760
      %5974 = vmatmul.mubr.f32.gmra.mrb[0].mxu0 %v5973
      %v5975 = vpop.f32.mrb[0].mxu0
      %v5976 = vadd.f32 %v5737, %v5975
      %v5977 = vpop.f32.mrb[0].mxu0
      %v5978 = vadd.f32 %v5739, %v5977
      %5979 = vmatprep.mubr.f32.mxu0 0.0
      %v5980 = vand.u32 %v4820, 4294901760
      %5981 = vmatmul.mubr.f32.gmra.mrb[0].mxu0 %v5980
      %v5982 = vpop.f32.mrb[0].mxu0
      %v5983 = vadd.f32 %v5746, %v5982
      %v5984 = vpop.f32.mrb[0].mxu0
      %v5985 = vadd.f32 %v5748, %v5984
      %5986 = vmatprep.mubr.f32.mxu0 0.0
      %v5987 = vand.u32 %v4823, 4294901760
      %5988 = vmatmul.mubr.f32.gmra.mrb[0].mxu0 %v5987
      %v5989 = vpop.f32.mrb[0].mxu0
      %v5990 = vadd.f32 %v5755, %v5989
      %v5991 = vpop.f32.mrb[0].mxu0
      %v5992 = vadd.f32 %v5757, %v5991
      %5993 = vmatprep.mubr.f32.mxu0 0.0
      %v5994 = vand.u32 %v4826, 4294901760
      %5995 = vmatmul.mubr.f32.gmra.mrb[0].mxu0 %v5994
      %v5996 = vpop.f32.mrb[0].mxu0
      %v5997 = vadd.f32 %v5764, %v5996
      %v5998 = vpop.f32.mrb[0].mxu0
      %v5999 = vadd.f32 %v5766, %v5998
      %6000 = vmatprep.mubr.f32.mxu0 0.0
      %v6001 = vand.u32 %v4829, 4294901760
      %6002 = vmatmul.mubr.f32.gmra.mrb[0].mxu0 %v6001
      %v6003 = vpop.f32.mrb[0].mxu0
      %v6004 = vadd.f32 %v5773, %v6003
      %v6005 = vpop.f32.mrb[0].mxu0
      %v6006 = vadd.f32 %v5775, %v6005
      %6007 = vmatprep.mubr.f32.mxu0 0.0
      %v6008 = vand.u32 %v4832, 4294901760
      %6009 = vmatmul.mubr.f32.gmra.mrb[0].mxu0 %v6008
      %v6010 = vpop.f32.mrb[0].mxu0
      %v6011 = vadd.f32 %v5782, %v6010
      %v6012 = vpop.f32.mrb[0].mxu0
      %v6013 = vadd.f32 %v5784, %v6012
      %6014 = vmatprep.mubr.f32.mxu0 0.0
      %v6015 = vand.u32 %v4835, 4294901760
      %6016 = vmatmul.mubr.f32.gmra.mrb[0].mxu0 %v6015
      %v6017 = vpop.f32.mrb[0].mxu0
      %v6018 = vadd.f32 %v5791, %v6017
      %v6019 = vpop.f32.mrb[0].mxu0
      %v6020 = vadd.f32 %v5793, %v6019
      %6021 = vmatprep.mubr.f32.mxu0 0.0
      %v6022 = vand.u32 %v4838, 4294901760
      %6023 = vmatmul.mubr.f32.gmra.mrb[0].mxu0 %v6022
      %v6024 = vpop.f32.mrb[0].mxu0
      %v6025 = vadd.f32 %v5800, %v6024
      %v6026 = vpop.f32.mrb[0].mxu0
      %v6027 = vadd.f32 %v5802, %v6026
      %6028 = vdwg.mxu0
      %v6029 = vand.u32 %v4777, 4294901760
      %6030 = vmatprep.subr.mxu0 %v6029
      %v6031 = vand.u32 %v4776, 4294901760
      %6032 = vmatpush1.msra.mxu0 %v6031
      %v6033 = vand.u32 %v4779, 4294901760
      %6034 = vmatprep.subr.mxu0 %v6033
      %v6035 = vand.u32 %v4778, 4294901760
      %6036 = vmatpush1.msra.mxu0 %v6035
      %v6037 = vand.u32 %v4781, 4294901760
      %6038 = vmatprep.subr.mxu0 %v6037
      %v6039 = vand.u32 %v4780, 4294901760
      %6040 = vmatpush1.msra.mxu0 %v6039
      %v6041 = vand.u32 %v4783, 4294901760
      %6042 = vmatprep.subr.mxu0 %v6041
      %v6043 = vand.u32 %v4782, 4294901760
      %6044 = vmatpush1.msra.mxu0 %v6043
      %v6045 = vand.u32 %v4785, 4294901760
      %6046 = vmatprep.subr.mxu0 %v6045
      %v6047 = vand.u32 %v4784, 4294901760
      %6048 = vmatpush1.msra.mxu0 %v6047
      %v6049 = vand.u32 %v4787, 4294901760
      %6050 = vmatprep.subr.mxu0 %v6049
      %v6051 = vand.u32 %v4786, 4294901760
      %6052 = vmatpush1.msra.mxu0 %v6051
      %v6053 = vand.u32 %v4789, 4294901760
      %6054 = vmatprep.subr.mxu0 %v6053
      %v6055 = vand.u32 %v4788, 4294901760
      %6056 = vmatpush1.msra.mxu0 %v6055
      %v6057 = vand.u32 %v4791, 4294901760
      %6058 = vmatprep.subr.mxu0 %v6057
      %v6059 = vand.u32 %v4790, 4294901760
      %6060 = vmatpush1.msra.mxu0 %v6059
      %6061 = vmatprep.subr.mxu0 0.0
      %6062 = vmatpush1.msra.mxu0 0.0
      %6063 = vmatprep.subr.mxu0 0.0
      %6064 = vmatpush1.msra.mxu0 0.0
      %6065 = vmatprep.subr.mxu0 0.0
      %6066 = vmatpush1.msra.mxu0 0.0
      %6067 = vmatprep.subr.mxu0 0.0
      %6068 = vmatpush1.msra.mxu0 0.0
      %6069 = vmatprep.subr.mxu0 0.0
      %6070 = vmatpush1.msra.mxu0 0.0
      %6071 = vmatprep.subr.mxu0 0.0
      %6072 = vmatpush1.msra.mxu0 0.0
      %6073 = vmatprep.subr.mxu0 0.0
      %6074 = vmatpush1.msra.mxu0 0.0
      %6075 = vmatprep.subr.mxu0 0.0
      %6076 = vmatpush1.msra.mxu0 0.0
      %6077 = vmatprep.subr.mxu0 0.0
      %6078 = vmatpush1.msra.mxu0 0.0
      %6079 = vmatprep.subr.mxu0 0.0
      %6080 = vmatpush1.msra.mxu0 0.0
      %6081 = vmatprep.subr.mxu0 0.0
      %6082 = vmatpush1.msra.mxu0 0.0
      %6083 = vmatprep.subr.mxu0 0.0
      %6084 = vmatpush1.msra.mxu0 0.0
      %6085 = vmatprep.subr.mxu0 0.0
      %6086 = vmatpush1.msra.mxu0 0.0
      %6087 = vmatprep.subr.mxu0 0.0
      %6088 = vmatpush1.msra.mxu0 0.0
      %6089 = vmatprep.subr.mxu0 0.0
      %6090 = vmatpush1.msra.mxu0 0.0
      %6091 = vmatprep.subr.mxu0 0.0
      %6092 = vmatpush1.msra.mxu0 0.0
      %6093 = vmatprep.subr.mxu0 0.0
      %6094 = vmatpush1.msra.mxu0 0.0
      %6095 = vmatprep.subr.mxu0 0.0
      %6096 = vmatpush1.msra.mxu0 0.0
      %6097 = vmatprep.subr.mxu0 0.0
      %6098 = vmatpush1.msra.mxu0 0.0
      %6099 = vmatprep.subr.mxu0 0.0
      %6100 = vmatpush1.msra.mxu0 0.0
      %6101 = vmatprep.subr.mxu0 0.0
      %6102 = vmatpush1.msra.mxu0 0.0
      %6103 = vmatprep.subr.mxu0 0.0
      %6104 = vmatpush1.msra.mxu0 0.0
      %6105 = vmatprep.subr.mxu0 0.0
      %6106 = vmatpush1.msra.mxu0 0.0
      %6107 = vmatprep.subr.mxu0 0.0
      %6108 = vmatpush1.msra.mxu0 0.0
      %6109 = vmatprep.mubr.f32.mxu0 0.0
      %v6110 = vand.u32 %v4793, 4294901760
      %6111 = vmatmul.mubr.f32.gmra.mrb[0].mxu0 %v6110
      %v6112 = vpop.f32.mrb[0].mxu0
      %v6113 = vadd.f32 %v5920, %v6112
      %v6114 = vpop.f32.mrb[0].mxu0
      %v6115 = vadd.f32 %v5922, %v6114
      %6116 = vmatprep.mubr.f32.mxu0 0.0
      %v6117 = vand.u32 %v4796, 4294901760
      %6118 = vmatmul.mubr.f32.gmra.mrb[0].mxu0 %v6117
      %v6119 = vpop.f32.mrb[0].mxu0
      %v6120 = vadd.f32 %v5927, %v6119
      %v6121 = vpop.f32.mrb[0].mxu0
      %v6122 = vadd.f32 %v5929, %v6121
      %6123 = vmatprep.mubr.f32.mxu0 0.0
      %v6124 = vand.u32 %v4799, 4294901760
      %6125 = vmatmul.mubr.f32.gmra.mrb[0].mxu0 %v6124
      %v6126 = vpop.f32.mrb[0].mxu0
      %v6127 = vadd.f32 %v5934, %v6126
      %v6128 = vpop.f32.mrb[0].mxu0
      %v6129 = vadd.f32 %v5936, %v6128
      %6130 = vmatprep.mubr.f32.mxu0 0.0
      %v6131 = vand.u32 %v4802, 4294901760
      %6132 = vmatmul.mubr.f32.gmra.mrb[0].mxu0 %v6131
      %v6133 = vpop.f32.mrb[0].mxu0
      %v6134 = vadd.f32 %v5941, %v6133
      %v6135 = vpop.f32.mrb[0].mxu0
      %v6136 = vadd.f32 %v5943, %v6135
      %6137 = vmatprep.mubr.f32.mxu0 0.0
      %v6138 = vand.u32 %v4805, 4294901760
      %6139 = vmatmul.mubr.f32.gmra.mrb[0].mxu0 %v6138
      %v6140 = vpop.f32.mrb[0].mxu0
      %v6141 = vadd.f32 %v5948, %v6140
      %v6142 = vpop.f32.mrb[0].mxu0
      %v6143 = vadd.f32 %v5950, %v6142
      %6144 = vmatprep.mubr.f32.mxu0 0.0
      %v6145 = vand.u32 %v4808, 4294901760
      %6146 = vmatmul.mubr.f32.gmra.mrb[0].mxu0 %v6145
      %v6147 = vpop.f32.mrb[0].mxu0
      %v6148 = vadd.f32 %v5955, %v6147
      %v6149 = vpop.f32.mrb[0].mxu0
      %v6150 = vadd.f32 %v5957, %v6149
      %6151 = vmatprep.mubr.f32.mxu0 0.0
      %v6152 = vand.u32 %v4811, 4294901760
      %6153 = vmatmul.mubr.f32.gmra.mrb[0].mxu0 %v6152
      %v6154 = vpop.f32.mrb[0].mxu0
      %v6155 = vadd.f32 %v5962, %v6154
      %v6156 = vpop.f32.mrb[0].mxu0
      %v6157 = vadd.f32 %v5964, %v6156
      %6158 = vmatprep.mubr.f32.mxu0 0.0
      %v6159 = vand.u32 %v4814, 4294901760
      %6160 = vmatmul.mubr.f32.gmra.mrb[0].mxu0 %v6159
      %v6161 = vpop.f32.mrb[0].mxu0
      %v6162 = vadd.f32 %v5969, %v6161
      %v6163 = vpop.f32.mrb[0].mxu0
      %v6164 = vadd.f32 %v5971, %v6163
      %6165 = vmatprep.mubr.f32.mxu0 0.0
      %v6166 = vand.u32 %v4817, 4294901760
      %6167 = vmatmul.mubr.f32.gmra.mrb[0].mxu0 %v6166
      %v6168 = vpop.f32.mrb[0].mxu0
      %v6169 = vadd.f32 %v5976, %v6168
      %v6170 = vpop.f32.mrb[0].mxu0
      %v6171 = vadd.f32 %v5978, %v6170
      %6172 = vmatprep.mubr.f32.mxu0 0.0
      %v6173 = vand.u32 %v4820, 4294901760
      %6174 = vmatmul.mubr.f32.gmra.mrb[0].mxu0 %v6173
      %v6175 = vpop.f32.mrb[0].mxu0
      %v6176 = vadd.f32 %v5983, %v6175
      %v6177 = vpop.f32.mrb[0].mxu0
      %v6178 = vadd.f32 %v5985, %v6177
      %6179 = vmatprep.mubr.f32.mxu0 0.0
      %v6180 = vand.u32 %v4823, 4294901760
      %6181 = vmatmul.mubr.f32.gmra.mrb[0].mxu0 %v6180
      %v6182 = vpop.f32.mrb[0].mxu0
      %v6183 = vadd.f32 %v5990, %v6182
      %v6184 = vpop.f32.mrb[0].mxu0
      %v6185 = vadd.f32 %v5992, %v6184
      %6186 = vmatprep.mubr.f32.mxu0 0.0
      %v6187 = vand.u32 %v4826, 4294901760
      %6188 = vmatmul.mubr.f32.gmra.mrb[0].mxu0 %v6187
      %v6189 = vpop.f32.mrb[0].mxu0
      %v6190 = vadd.f32 %v5997, %v6189
      %v6191 = vpop.f32.mrb[0].mxu0
      %v6192 = vadd.f32 %v5999, %v6191
      %6193 = vmatprep.mubr.f32.mxu0 0.0
      %v6194 = vand.u32 %v4829, 4294901760
      %6195 = vmatmul.mubr.f32.gmra.mrb[0].mxu0 %v6194
      %v6196 = vpop.f32.mrb[0].mxu0
      %v6197 = vadd.f32 %v6004, %v6196
      %v6198 = vpop.f32.mrb[0].mxu0
      %v6199 = vadd.f32 %v6006, %v6198
      %6200 = vmatprep.mubr.f32.mxu0 0.0
      %v6201 = vand.u32 %v4832, 4294901760
      %6202 = vmatmul.mubr.f32.gmra.mrb[0].mxu0 %v6201
      %v6203 = vpop.f32.mrb[0].mxu0
      %v6204 = vadd.f32 %v6011, %v6203
      %v6205 = vpop.f32.mrb[0].mxu0
      %v6206 = vadd.f32 %v6013, %v6205
      %6207 = vmatprep.mubr.f32.mxu0 0.0
      %v6208 = vand.u32 %v4835, 4294901760
      %6209 = vmatmul.mubr.f32.gmra.mrb[0].mxu0 %v6208
      %v6210 = vpop.f32.mrb[0].mxu0
      %v6211 = vadd.f32 %v6018, %v6210
      %v6212 = vpop.f32.mrb[0].mxu0
      %v6213 = vadd.f32 %v6020, %v6212
      %6214 = vmatprep.mubr.f32.mxu0 0.0
      %v6215 = vand.u32 %v4838, 4294901760
      %6216 = vmatmul.mubr.f32.gmra.mrb[0].mxu0 %v6215
      %v6217 = vpop.f32.mrb[0].mxu0
      %v6218 = vadd.f32 %v6025, %v6217
      %v6219 = vpop.f32.mrb[0].mxu0
      %v6220 = vadd.f32 %v6027, %v6219
      %6221 = vdwg.mxu0
      %v6222 = vadd.f32 %v4727, %v6113
      %v6223 = vadd.f32 %v4728, %v6115
      %v6224 = vadd.f32 %v4729, %v6120
      %v6225 = vadd.f32 %v4730, %v6122
      %v6226 = vadd.f32 %v4731, %v6127
      %v6227 = vadd.f32 %v4732, %v6129
      %v6228 = vadd.f32 %v4733, %v6134
      %v6229 = vadd.f32 %v4734, %v6136
      %v6230 = vadd.f32 %v4735, %v6141
      %v6231 = vadd.f32 %v4736, %v6143
      %v6232 = vadd.f32 %v4737, %v6148
      %v6233 = vadd.f32 %v4738, %v6150
      %v6234 = vadd.f32 %v4739, %v6155
      %v6235 = vadd.f32 %v4740, %v6157
      %v6236 = vadd.f32 %v4741, %v6162
      %v6237 = vadd.f32 %v4742, %v6164
      %v6238 = vadd.f32 %v4743, %v6169
      %v6239 = vadd.f32 %v4744, %v6171
      %v6240 = vadd.f32 %v4745, %v6176
      %v6241 = vadd.f32 %v4746, %v6178
      %v6242 = vadd.f32 %v4747, %v6183
      %v6243 = vadd.f32 %v4748, %v6185
      %v6244 = vadd.f32 %v4749, %v6190
      %v6245 = vadd.f32 %v4750, %v6192
      %v6246 = vadd.f32 %v4751, %v6197
      %v6247 = vadd.f32 %v4752, %v6199
      %v6248 = vadd.f32 %v4753, %v6204
      %v6249 = vadd.f32 %v4754, %v6206
      %v6250 = vadd.f32 %v4755, %v6211
      %v6251 = vadd.f32 %v4756, %v6213
      %v6252 = vadd.f32 %v4757, %v6218
      %v6253 = vadd.f32 %v4758, %v6220
      %6254 = vxpose.xlu0.b32.start [1/16] %v6222, 128
      %6255 = vxpose.xlu0.b32.cont [2/16] %v6224, 128
      %6256 = vxpose.xlu0.b32.cont [3/16] %v6226, 128
      %6257 = vxpose.xlu0.b32.cont [4/16] %v6228, 128
      %6258 = vxpose.xlu0.b32.cont [5/16] %v6230, 128
      %6259 = vxpose.xlu0.b32.cont [6/16] %v6232, 128
      %6260 = vxpose.xlu0.b32.cont [7/16] %v6234, 128
      %6261 = vxpose.xlu0.b32.cont [8/16] %v6236, 128
      %6262 = vxpose.xlu0.b32.cont [9/16] %v6238, 128
      %6263 = vxpose.xlu0.b32.cont [10/16] %v6240, 128
      %6264 = vxpose.xlu0.b32.cont [11/16] %v6242, 128
      %6265 = vxpose.xlu0.b32.cont [12/16] %v6244, 128
      %6266 = vxpose.xlu0.b32.cont [13/16] %v6246, 128
      %6267 = vxpose.xlu0.b32.cont [14/16] %v6248, 128
      %6268 = vxpose.xlu0.b32.cont [15/16] %v6250, 128
      %6269 = vxpose.xlu0.b32.end [16/16] %v6252, 128
      %v6270 = vpop.trf.xlu0
      %v6271 = vpop.trf.xlu0
      %v6272 = vpop.trf.xlu0
      %v6273 = vpop.trf.xlu0
      %v6274 = vpop.trf.xlu0
      %v6275 = vpop.trf.xlu0
      %v6276 = vpop.trf.xlu0
      %v6277 = vpop.trf.xlu0
      %v6278 = vpop.trf.xlu0
      %v6279 = vpop.trf.xlu0
      %v6280 = vpop.trf.xlu0
      %v6281 = vpop.trf.xlu0
      %v6282 = vpop.trf.xlu0
      %v6283 = vpop.trf.xlu0
      %v6284 = vpop.trf.xlu0
      %v6285 = vpop.trf.xlu0
      %6286 = vxpose.xlu0.b32.start [1/16] %v6223, 128
      %6287 = vxpose.xlu0.b32.cont [2/16] %v6225, 128
      %6288 = vxpose.xlu0.b32.cont [3/16] %v6227, 128
      %6289 = vxpose.xlu0.b32.cont [4/16] %v6229, 128
      %6290 = vxpose.xlu0.b32.cont [5/16] %v6231, 128
      %6291 = vxpose.xlu0.b32.cont [6/16] %v6233, 128
      %6292 = vxpose.xlu0.b32.cont [7/16] %v6235, 128
      %6293 = vxpose.xlu0.b32.cont [8/16] %v6237, 128
      %6294 = vxpose.xlu0.b32.cont [9/16] %v6239, 128
      %6295 = vxpose.xlu0.b32.cont [10/16] %v6241, 128
      %6296 = vxpose.xlu0.b32.cont [11/16] %v6243, 128
      %6297 = vxpose.xlu0.b32.cont [12/16] %v6245, 128
      %6298 = vxpose.xlu0.b32.cont [13/16] %v6247, 128
      %6299 = vxpose.xlu0.b32.cont [14/16] %v6249, 128
      %6300 = vxpose.xlu0.b32.cont [15/16] %v6251, 128
      %6301 = vxpose.xlu0.b32.end [16/16] %v6253, 128
      %v6302 = vpop.trf.xlu0
      %v6303 = vpop.trf.xlu0
      %v6304 = vpop.trf.xlu0
      %v6305 = vpop.trf.xlu0
      %v6306 = vpop.trf.xlu0
      %v6307 = vpop.trf.xlu0
      %v6308 = vpop.trf.xlu0
      %v6309 = vpop.trf.xlu0
      %v6310 = vpop.trf.xlu0
      %v6311 = vpop.trf.xlu0
      %v6312 = vpop.trf.xlu0
      %v6313 = vpop.trf.xlu0
      %v6314 = vpop.trf.xlu0
      %v6315 = vpop.trf.xlu0
      %v6316 = vpop.trf.xlu0
      %v6317 = vpop.trf.xlu0
      %v6318 = vlaneseq
      %v6319 = vshrl.u32 %v6318, 7
      %v6320 = vadd.s32 %v6319, 8
      %v6321 = vadd.s32 %v6319, 16
      %v6322 = vadd.s32 %v6319, 24
      %v6323 = vadd.s32 %v6319, 32
      %v6324 = vadd.s32 %v6319, 40
      %v6325 = vadd.s32 %v6319, 48
      %v6326 = vadd.s32 %v6319, 56
      %v6327 = vadd.s32 %v6319, 64
      %v6328 = vadd.s32 %v6319, 72
      %v6329 = vadd.s32 %v6319, 80
      %v6330 = vadd.s32 %v6319, 88
      %v6331 = vadd.s32 %v6319, 96
      %v6332 = vadd.s32 %v6319, 104
      %v6333 = vadd.s32 %v6319, 112
      %v6334 = vadd.s32 %v6319, 120
      %vm6335 = vcmp.eq.s32.totalorder %v6319, 0
      %vm6336 = vcmp.eq.s32.totalorder %v6320, 0
      %vm6337 = vcmp.eq.s32.totalorder %v6321, 0
      %vm6338 = vcmp.eq.s32.totalorder %v6322, 0
      %vm6339 = vcmp.eq.s32.totalorder %v6323, 0
      %vm6340 = vcmp.eq.s32.totalorder %v6324, 0
      %vm6341 = vcmp.eq.s32.totalorder %v6325, 0
      %vm6342 = vcmp.eq.s32.totalorder %v6326, 0
      %vm6343 = vcmp.eq.s32.totalorder %v6327, 0
      %vm6344 = vcmp.eq.s32.totalorder %v6328, 0
      %vm6345 = vcmp.eq.s32.totalorder %v6329, 0
      %vm6346 = vcmp.eq.s32.totalorder %v6330, 0
      %vm6347 = vcmp.eq.s32.totalorder %v6331, 0
      %vm6348 = vcmp.eq.s32.totalorder %v6332, 0
      %vm6349 = vcmp.eq.s32.totalorder %v6333, 0
      %vm6350 = vcmp.eq.s32.totalorder %v6334, 0
      %v6351 = vsel %vm6335, 0.0, %v6302
      %v6352 = vsel %vm6336, 0.0, %v6303
      %v6353 = vsel %vm6337, 0.0, %v6304
      %v6354 = vsel %vm6338, 0.0, %v6305
      %v6355 = vsel %vm6339, 0.0, %v6306
      %v6356 = vsel %vm6340, 0.0, %v6307
      %v6357 = vsel %vm6341, 0.0, %v6308
      %v6358 = vsel %vm6342, 0.0, %v6309
      %v6359 = vsel %vm6343, 0.0, %v6310
      %v6360 = vsel %vm6344, 0.0, %v6311
      %v6361 = vsel %vm6345, 0.0, %v6312
      %v6362 = vsel %vm6346, 0.0, %v6313
      %v6363 = vsel %vm6347, 0.0, %v6314
      %v6364 = vsel %vm6348, 0.0, %v6315
      %v6365 = vsel %vm6349, 0.0, %v6316
      %v6366 = vsel %vm6350, 0.0, %v6317
      %v6367 = vmul.f32 %v6270, %v6270
      %v6368 = vmul.f32 %v6271, %v6271
      %v6369 = vmul.f32 %v6272, %v6272
      %v6370 = vmul.f32 %v6273, %v6273
      %v6371 = vmul.f32 %v6274, %v6274
      %v6372 = vmul.f32 %v6275, %v6275
      %v6373 = vmul.f32 %v6276, %v6276
      %v6374 = vmul.f32 %v6277, %v6277
      %v6375 = vmul.f32 %v6278, %v6278
      %v6376 = vmul.f32 %v6279, %v6279
      %v6377 = vmul.f32 %v6280, %v6280
      %v6378 = vmul.f32 %v6281, %v6281
      %v6379 = vmul.f32 %v6282, %v6282
      %v6380 = vmul.f32 %v6283, %v6283
      %v6381 = vmul.f32 %v6284, %v6284
      %v6382 = vmul.f32 %v6285, %v6285
      %v6383 = vmul.f32 %v6351, %v6351
      %v6384 = vmul.f32 %v6352, %v6352
      %v6385 = vmul.f32 %v6353, %v6353
      %v6386 = vmul.f32 %v6354, %v6354
      %v6387 = vmul.f32 %v6355, %v6355
      %v6388 = vmul.f32 %v6356, %v6356
      %v6389 = vmul.f32 %v6357, %v6357
      %v6390 = vmul.f32 %v6358, %v6358
      %v6391 = vmul.f32 %v6359, %v6359
      %v6392 = vmul.f32 %v6360, %v6360
      %v6393 = vmul.f32 %v6361, %v6361
      %v6394 = vmul.f32 %v6362, %v6362
      %v6395 = vmul.f32 %v6363, %v6363
      %v6396 = vmul.f32 %v6364, %v6364
      %v6397 = vmul.f32 %v6365, %v6365
      %v6398 = vmul.f32 %v6366, %v6366
      %v6399 = vadd.f32 %v6367, %v6383
      %v6400 = vadd.f32 %v6368, %v6384
      %v6401 = vadd.f32 %v6369, %v6385
      %v6402 = vadd.f32 %v6370, %v6386
      %v6403 = vadd.f32 %v6371, %v6387
      %v6404 = vadd.f32 %v6372, %v6388
      %v6405 = vadd.f32 %v6373, %v6389
      %v6406 = vadd.f32 %v6374, %v6390
      %v6407 = vadd.f32 %v6375, %v6391
      %v6408 = vadd.f32 %v6376, %v6392
      %v6409 = vadd.f32 %v6377, %v6393
      %v6410 = vadd.f32 %v6378, %v6394
      %v6411 = vadd.f32 %v6379, %v6395
      %v6412 = vadd.f32 %v6380, %v6396
      %v6413 = vadd.f32 %v6381, %v6397
      %v6414 = vadd.f32 %v6382, %v6398
      %v6415 = vmax.f32 %v6399, 1.1920929e-07
      %v6416 = vmax.f32 %v6400, 1.1920929e-07
      %v6417 = vmax.f32 %v6401, 1.1920929e-07
      %v6418 = vmax.f32 %v6402, 1.1920929e-07
      %v6419 = vmax.f32 %v6403, 1.1920929e-07
      %v6420 = vmax.f32 %v6404, 1.1920929e-07
      %v6421 = vmax.f32 %v6405, 1.1920929e-07
      %v6422 = vmax.f32 %v6406, 1.1920929e-07
      %v6423 = vmax.f32 %v6407, 1.1920929e-07
      %v6424 = vmax.f32 %v6408, 1.1920929e-07
      %v6425 = vmax.f32 %v6409, 1.1920929e-07
      %v6426 = vmax.f32 %v6410, 1.1920929e-07
      %v6427 = vmax.f32 %v6411, 1.1920929e-07
      %v6428 = vmax.f32 %v6412, 1.1920929e-07
      %v6429 = vmax.f32 %v6413, 1.1920929e-07
      %v6430 = vmax.f32 %v6414, 1.1920929e-07
      %v6431 = vrsqrt.pop %v6415
      %v6432 = vmul.f32 %v6415, %v6431
      %vm6433 = vcmp.eq.f32.partialorder %v6415, inf
      %v6434 = vsel %vm6433, %v6415, %v6432
      %vm6435 = vcmp.eq.f32.partialorder %v6415, 0.0
      %v6436 = vand.u32 %v6415, 2147483648
      %v6437 = vsel %vm6435, %v6436, %v6434
      %v6438 = vrsqrt.pop %v6416
      %v6439 = vmul.f32 %v6416, %v6438
      %vm6440 = vcmp.eq.f32.partialorder %v6416, inf
      %v6441 = vsel %vm6440, %v6416, %v6439
      %vm6442 = vcmp.eq.f32.partialorder %v6416, 0.0
      %v6443 = vand.u32 %v6416, 2147483648
      %v6444 = vsel %vm6442, %v6443, %v6441
      %v6445 = vrsqrt.pop %v6417
      %v6446 = vmul.f32 %v6417, %v6445
      %vm6447 = vcmp.eq.f32.partialorder %v6417, inf
      %v6448 = vsel %vm6447, %v6417, %v6446
      %vm6449 = vcmp.eq.f32.partialorder %v6417, 0.0
      %v6450 = vand.u32 %v6417, 2147483648
      %v6451 = vsel %vm6449, %v6450, %v6448
      %v6452 = vrsqrt.pop %v6418
      %v6453 = vmul.f32 %v6418, %v6452
      %vm6454 = vcmp.eq.f32.partialorder %v6418, inf
      %v6455 = vsel %vm6454, %v6418, %v6453
      %vm6456 = vcmp.eq.f32.partialorder %v6418, 0.0
      %v6457 = vand.u32 %v6418, 2147483648
      %v6458 = vsel %vm6456, %v6457, %v6455
      %v6459 = vrsqrt.pop %v6419
      %v6460 = vmul.f32 %v6419, %v6459
      %vm6461 = vcmp.eq.f32.partialorder %v6419, inf
      %v6462 = vsel %vm6461, %v6419, %v6460
      %vm6463 = vcmp.eq.f32.partialorder %v6419, 0.0
      %v6464 = vand.u32 %v6419, 2147483648
      %v6465 = vsel %vm6463, %v6464, %v6462
      %v6466 = vrsqrt.pop %v6420
      %v6467 = vmul.f32 %v6420, %v6466
      %vm6468 = vcmp.eq.f32.partialorder %v6420, inf
      %v6469 = vsel %vm6468, %v6420, %v6467
      %vm6470 = vcmp.eq.f32.partialorder %v6420, 0.0
      %v6471 = vand.u32 %v6420, 2147483648
      %v6472 = vsel %vm6470, %v6471, %v6469
      %v6473 = vrsqrt.pop %v6421
      %v6474 = vmul.f32 %v6421, %v6473
      %vm6475 = vcmp.eq.f32.partialorder %v6421, inf
      %v6476 = vsel %vm6475, %v6421, %v6474
      %vm6477 = vcmp.eq.f32.partialorder %v6421, 0.0
      %v6478 = vand.u32 %v6421, 2147483648
      %v6479 = vsel %vm6477, %v6478, %v6476
      %v6480 = vrsqrt.pop %v6422
      %v6481 = vmul.f32 %v6422, %v6480
      %vm6482 = vcmp.eq.f32.partialorder %v6422, inf
      %v6483 = vsel %vm6482, %v6422, %v6481
      %vm6484 = vcmp.eq.f32.partialorder %v6422, 0.0
      %v6485 = vand.u32 %v6422, 2147483648
      %v6486 = vsel %vm6484, %v6485, %v6483
      %v6487 = vrsqrt.pop %v6423
      %v6488 = vmul.f32 %v6423, %v6487
      %vm6489 = vcmp.eq.f32.partialorder %v6423, inf
      %v6490 = vsel %vm6489, %v6423, %v6488
      %vm6491 = vcmp.eq.f32.partialorder %v6423, 0.0
      %v6492 = vand.u32 %v6423, 2147483648
      %v6493 = vsel %vm6491, %v6492, %v6490
      %v6494 = vrsqrt.pop %v6424
      %v6495 = vmul.f32 %v6424, %v6494
      %vm6496 = vcmp.eq.f32.partialorder %v6424, inf
      %v6497 = vsel %vm6496, %v6424, %v6495
      %vm6498 = vcmp.eq.f32.partialorder %v6424, 0.0
      %v6499 = vand.u32 %v6424, 2147483648
      %v6500 = vsel %vm6498, %v6499, %v6497
      %v6501 = vrsqrt.pop %v6425
      %v6502 = vmul.f32 %v6425, %v6501
      %vm6503 = vcmp.eq.f32.partialorder %v6425, inf
      %v6504 = vsel %vm6503, %v6425, %v6502
      %vm6505 = vcmp.eq.f32.partialorder %v6425, 0.0
      %v6506 = vand.u32 %v6425, 2147483648
      %v6507 = vsel %vm6505, %v6506, %v6504
      %v6508 = vrsqrt.pop %v6426
      %v6509 = vmul.f32 %v6426, %v6508
      %vm6510 = vcmp.eq.f32.partialorder %v6426, inf
      %v6511 = vsel %vm6510, %v6426, %v6509
      %vm6512 = vcmp.eq.f32.partialorder %v6426, 0.0
      %v6513 = vand.u32 %v6426, 2147483648
      %v6514 = vsel %vm6512, %v6513, %v6511
      %v6515 = vrsqrt.pop %v6427
      %v6516 = vmul.f32 %v6427, %v6515
      %vm6517 = vcmp.eq.f32.partialorder %v6427, inf
      %v6518 = vsel %vm6517, %v6427, %v6516
      %vm6519 = vcmp.eq.f32.partialorder %v6427, 0.0
      %v6520 = vand.u32 %v6427, 2147483648
      %v6521 = vsel %vm6519, %v6520, %v6518
      %v6522 = vrsqrt.pop %v6428
      %v6523 = vmul.f32 %v6428, %v6522
      %vm6524 = vcmp.eq.f32.partialorder %v6428, inf
      %v6525 = vsel %vm6524, %v6428, %v6523
      %vm6526 = vcmp.eq.f32.partialorder %v6428, 0.0
      %v6527 = vand.u32 %v6428, 2147483648
      %v6528 = vsel %vm6526, %v6527, %v6525
      %v6529 = vrsqrt.pop %v6429
      %v6530 = vmul.f32 %v6429, %v6529
      %vm6531 = vcmp.eq.f32.partialorder %v6429, inf
      %v6532 = vsel %vm6531, %v6429, %v6530
      %vm6533 = vcmp.eq.f32.partialorder %v6429, 0.0
      %v6534 = vand.u32 %v6429, 2147483648
      %v6535 = vsel %vm6533, %v6534, %v6532
      %v6536 = vrsqrt.pop %v6430
      %v6537 = vmul.f32 %v6430, %v6536
      %vm6538 = vcmp.eq.f32.partialorder %v6430, inf
      %v6539 = vsel %vm6538, %v6430, %v6537
      %vm6540 = vcmp.eq.f32.partialorder %v6430, 0.0
      %v6541 = vand.u32 %v6430, 2147483648
      %v6542 = vsel %vm6540, %v6541, %v6539
      %6543 = vst [vmem:[%s294] sm:$0xff] %v6437
      %6544 = vst [vmem:[%s294 + $0x8] sm:$0xff] %v6444
      %6545 = vst [vmem:[%s294 + $0x10] sm:$0xff] %v6451
      %6546 = vst [vmem:[%s294 + $0x18] sm:$0xff] %v6458
      %6547 = vst [vmem:[%s294 + $0x20] sm:$0xff] %v6465
      %6548 = vst [vmem:[%s294 + $0x28] sm:$0xff] %v6472
      %6549 = vst [vmem:[%s294 + $0x30] sm:$0xff] %v6479
      %6550 = vst [vmem:[%s294 + $0x38] sm:$0xff] %v6486
      %6551 = vst [vmem:[%s294 + $0x40] sm:$0xff] %v6493
      %6552 = vst [vmem:[%s294 + $0x48] sm:$0xff] %v6500
      %6553 = vst [vmem:[%s294 + $0x50] sm:$0xff] %v6507
      %6554 = vst [vmem:[%s294 + $0x58] sm:$0xff] %v6514
      %6555 = vst [vmem:[%s294 + $0x60] sm:$0xff] %v6521
      %6556 = vst [vmem:[%s294 + $0x68] sm:$0xff] %v6528
      %6557 = vst [vmem:[%s294 + $0x70] sm:$0xff] %v6535
      %6558 = vst [vmem:[%s294 + $0x78] sm:$0xff] %v6542
      %v6559 = vmul.f32 %v6302, %v6302
      %v6560 = vadd.f32 %v6559, 0.0
      %v6561 = vmax.f32 %v6560, 1.1920929e-07
      %v6562 = vrsqrt.pop %v6561
      %v6563 = vmul.f32 %v6561, %v6562
      %vm6564 = vcmp.eq.f32.partialorder %v6561, inf
      %v6565 = vsel %vm6564, %v6561, %v6563
      %vm6566 = vcmp.eq.f32.partialorder %v6561, 0.0
      %v6567 = vand.u32 %v6561, 2147483648
      %v6568 = vsel %vm6566, %v6567, %v6565
      %6569 = vst [vmem:[%s294 + $0x80] sm:$0x1] %v6568
      %v6570 = vadd.f32 %v6351, 1.1920929e-07
      %v6571 = vadd.f32 %v6352, 1.1920929e-07
      %v6572 = vadd.f32 %v6353, 1.1920929e-07
      %v6573 = vadd.f32 %v6354, 1.1920929e-07
      %v6574 = vadd.f32 %v6355, 1.1920929e-07
      %v6575 = vadd.f32 %v6356, 1.1920929e-07
      %v6576 = vadd.f32 %v6357, 1.1920929e-07
      %v6577 = vadd.f32 %v6358, 1.1920929e-07
      %v6578 = vadd.f32 %v6359, 1.1920929e-07
      %v6579 = vadd.f32 %v6360, 1.1920929e-07
      %v6580 = vadd.f32 %v6361, 1.1920929e-07
      %v6581 = vadd.f32 %v6362, 1.1920929e-07
      %v6582 = vadd.f32 %v6363, 1.1920929e-07
      %v6583 = vadd.f32 %v6364, 1.1920929e-07
      %v6584 = vadd.f32 %v6365, 1.1920929e-07
      %v6585 = vadd.f32 %v6366, 1.1920929e-07
      %v6586 = vadd.f32 %v6270, 1.1920929e-07
      %v6587 = vadd.f32 %v6271, 1.1920929e-07
      %v6588 = vadd.f32 %v6272, 1.1920929e-07
      %v6589 = vadd.f32 %v6273, 1.1920929e-07
      %v6590 = vadd.f32 %v6274, 1.1920929e-07
      %v6591 = vadd.f32 %v6275, 1.1920929e-07
      %v6592 = vadd.f32 %v6276, 1.1920929e-07
      %v6593 = vadd.f32 %v6277, 1.1920929e-07
      %v6594 = vadd.f32 %v6278, 1.1920929e-07
      %v6595 = vadd.f32 %v6279, 1.1920929e-07
      %v6596 = vadd.f32 %v6280, 1.1920929e-07
      %v6597 = vadd.f32 %v6281, 1.1920929e-07
      %v6598 = vadd.f32 %v6282, 1.1920929e-07
      %v6599 = vadd.f32 %v6283, 1.1920929e-07
      %v6600 = vadd.f32 %v6284, 1.1920929e-07
      %v6601 = vadd.f32 %v6285, 1.1920929e-07
      %v6602 = vand.u32 2147483647, %v6586
      %v6603 = vand.u32 2147483647, %v6587
      %v6604 = vand.u32 2147483647, %v6588
      %v6605 = vand.u32 2147483647, %v6589
      %v6606 = vand.u32 2147483647, %v6590
      %v6607 = vand.u32 2147483647, %v6591
      %v6608 = vand.u32 2147483647, %v6592
      %v6609 = vand.u32 2147483647, %v6593
      %v6610 = vand.u32 2147483647, %v6594
      %v6611 = vand.u32 2147483647, %v6595
      %v6612 = vand.u32 2147483647, %v6596
      %v6613 = vand.u32 2147483647, %v6597
      %v6614 = vand.u32 2147483647, %v6598
      %v6615 = vand.u32 2147483647, %v6599
      %v6616 = vand.u32 2147483647, %v6600
      %v6617 = vand.u32 2147483647, %v6601
      %v6618 = vand.u32 2147483647, %v6570
      %v6619 = vand.u32 2147483647, %v6571
      %v6620 = vand.u32 2147483647, %v6572
      %v6621 = vand.u32 2147483647, %v6573
      %v6622 = vand.u32 2147483647, %v6574
      %v6623 = vand.u32 2147483647, %v6575
      %v6624 = vand.u32 2147483647, %v6576
      %v6625 = vand.u32 2147483647, %v6577
      %v6626 = vand.u32 2147483647, %v6578
      %v6627 = vand.u32 2147483647, %v6579
      %v6628 = vand.u32 2147483647, %v6580
      %v6629 = vand.u32 2147483647, %v6581
      %v6630 = vand.u32 2147483647, %v6582
      %v6631 = vand.u32 2147483647, %v6583
      %v6632 = vand.u32 2147483647, %v6584
      %v6633 = vand.u32 2147483647, %v6585
      %v6634 = vmin.f32 %v6602, %v6618
      %v6635 = vmin.f32 %v6603, %v6619
      %v6636 = vmin.f32 %v6604, %v6620
      %v6637 = vmin.f32 %v6605, %v6621
      %v6638 = vmin.f32 %v6606, %v6622
      %v6639 = vmin.f32 %v6607, %v6623
      %v6640 = vmin.f32 %v6608, %v6624
      %v6641 = vmin.f32 %v6609, %v6625
      %v6642 = vmin.f32 %v6610, %v6626
      %v6643 = vmin.f32 %v6611, %v6627
      %v6644 = vmin.f32 %v6612, %v6628
      %v6645 = vmin.f32 %v6613, %v6629
      %v6646 = vmin.f32 %v6614, %v6630
      %v6647 = vmin.f32 %v6615, %v6631
      %v6648 = vmin.f32 %v6616, %v6632
      %v6649 = vmin.f32 %v6617, %v6633
      %v6650 = vmax.f32 %v6602, %v6618
      %v6651 = vmax.f32 %v6603, %v6619
      %v6652 = vmax.f32 %v6604, %v6620
      %v6653 = vmax.f32 %v6605, %v6621
      %v6654 = vmax.f32 %v6606, %v6622
      %v6655 = vmax.f32 %v6607, %v6623
      %v6656 = vmax.f32 %v6608, %v6624
      %v6657 = vmax.f32 %v6609, %v6625
      %v6658 = vmax.f32 %v6610, %v6626
      %v6659 = vmax.f32 %v6611, %v6627
      %v6660 = vmax.f32 %v6612, %v6628
      %v6661 = vmax.f32 %v6613, %v6629
      %v6662 = vmax.f32 %v6614, %v6630
      %v6663 = vmax.f32 %v6615, %v6631
      %v6664 = vmax.f32 %v6616, %v6632
      %v6665 = vmax.f32 %v6617, %v6633
      %v6666 = vmax.f32 %v6650, 1e-30
      %v6667 = vmax.f32 %v6651, 1e-30
      %v6668 = vmax.f32 %v6652, 1e-30
      %v6669 = vmax.f32 %v6653, 1e-30
      %v6670 = vmax.f32 %v6654, 1e-30
      %v6671 = vmax.f32 %v6655, 1e-30
      %v6672 = vmax.f32 %v6656, 1e-30
      %v6673 = vmax.f32 %v6657, 1e-30
      %v6674 = vmax.f32 %v6658, 1e-30
      %v6675 = vmax.f32 %v6659, 1e-30
      %v6676 = vmax.f32 %v6660, 1e-30
      %v6677 = vmax.f32 %v6661, 1e-30
      %v6678 = vmax.f32 %v6662, 1e-30
      %v6679 = vmax.f32 %v6663, 1e-30
      %v6680 = vmax.f32 %v6664, 1e-30
      %v6681 = vmax.f32 %v6665, 1e-30
      %v6682 = vrcp.pop %v6666
      %v6683 = vmul.f32 %v6634, %v6682
      %v6684 = vrcp.pop %v6667
      %v6685 = vmul.f32 %v6635, %v6684
      %v6686 = vrcp.pop %v6668
      %v6687 = vmul.f32 %v6636, %v6686
      %v6688 = vrcp.pop %v6669
      %v6689 = vmul.f32 %v6637, %v6688
      %v6690 = vrcp.pop %v6670
      %v6691 = vmul.f32 %v6638, %v6690
      %v6692 = vrcp.pop %v6671
      %v6693 = vmul.f32 %v6639, %v6692
      %v6694 = vrcp.pop %v6672
      %v6695 = vmul.f32 %v6640, %v6694
      %v6696 = vrcp.pop %v6673
      %v6697 = vmul.f32 %v6641, %v6696
      %v6698 = vrcp.pop %v6674
      %v6699 = vmul.f32 %v6642, %v6698
      %v6700 = vrcp.pop %v6675
      %v6701 = vmul.f32 %v6643, %v6700
      %v6702 = vrcp.pop %v6676
      %v6703 = vmul.f32 %v6644, %v6702
      %v6704 = vrcp.pop %v6677
      %v6705 = vmul.f32 %v6645, %v6704
      %v6706 = vrcp.pop %v6678
      %v6707 = vmul.f32 %v6646, %v6706
      %v6708 = vrcp.pop %v6679
      %v6709 = vmul.f32 %v6647, %v6708
      %v6710 = vrcp.pop %v6680
      %v6711 = vmul.f32 %v6648, %v6710
      %v6712 = vrcp.pop %v6681
      %v6713 = vmul.f32 %v6649, %v6712
      %v6714 = vmul.f32 %v6683, %v6683
      %v6715 = vmul.f32 %v6685, %v6685
      %v6716 = vmul.f32 %v6687, %v6687
      %v6717 = vmul.f32 %v6689, %v6689
      %v6718 = vmul.f32 %v6691, %v6691
      %v6719 = vmul.f32 %v6693, %v6693
      %v6720 = vmul.f32 %v6695, %v6695
      %v6721 = vmul.f32 %v6697, %v6697
      %v6722 = vmul.f32 %v6699, %v6699
      %v6723 = vmul.f32 %v6701, %v6701
      %v6724 = vmul.f32 %v6703, %v6703
      %v6725 = vmul.f32 %v6705, %v6705
      %v6726 = vmul.f32 %v6707, %v6707
      %v6727 = vmul.f32 %v6709, %v6709
      %v6728 = vmul.f32 %v6711, %v6711
      %v6729 = vmul.f32 %v6713, %v6713
      %v6730 = vmul.f32 %v6714, -0.01348047
      %v6731 = vmul.f32 %v6715, -0.01348047
      %v6732 = vmul.f32 %v6716, -0.01348047
      %v6733 = vmul.f32 %v6717, -0.01348047
      %v6734 = vmul.f32 %v6718, -0.01348047
      %v6735 = vmul.f32 %v6719, -0.01348047
      %v6736 = vmul.f32 %v6720, -0.01348047
      %v6737 = vmul.f32 %v6721, -0.01348047
      %v6738 = vmul.f32 %v6722, -0.01348047
      %v6739 = vmul.f32 %v6723, -0.01348047
      %v6740 = vmul.f32 %v6724, -0.01348047
      %v6741 = vmul.f32 %v6725, -0.01348047
      %v6742 = vmul.f32 %v6726, -0.01348047
      %v6743 = vmul.f32 %v6727, -0.01348047
      %v6744 = vmul.f32 %v6728, -0.01348047
      %v6745 = vmul.f32 %v6729, -0.01348047
      %v6746 = vadd.f32 %v6730, 0.057477314
      %v6747 = vadd.f32 %v6731, 0.057477314
      %v6748 = vadd.f32 %v6732, 0.057477314
      %v6749 = vadd.f32 %v6733, 0.057477314
      %v6750 = vadd.f32 %v6734, 0.057477314
      %v6751 = vadd.f32 %v6735, 0.057477314
      %v6752 = vadd.f32 %v6736, 0.057477314
      %v6753 = vadd.f32 %v6737, 0.057477314
      %v6754 = vadd.f32 %v6738, 0.057477314
      %v6755 = vadd.f32 %v6739, 0.057477314
      %v6756 = vadd.f32 %v6740, 0.057477314
      %v6757 = vadd.f32 %v6741, 0.057477314
      %v6758 = vadd.f32 %v6742, 0.057477314
      %v6759 = vadd.f32 %v6743, 0.057477314
      %v6760 = vadd.f32 %v6744, 0.057477314
      %v6761 = vadd.f32 %v6745, 0.057477314
      %v6762 = vmul.f32 %v6746, %v6714
      %v6763 = vmul.f32 %v6747, %v6715
      %v6764 = vmul.f32 %v6748, %v6716
      %v6765 = vmul.f32 %v6749, %v6717
      %v6766 = vmul.f32 %v6750, %v6718
      %v6767 = vmul.f32 %v6751, %v6719
      %v6768 = vmul.f32 %v6752, %v6720
      %v6769 = vmul.f32 %v6753, %v6721
      %v6770 = vmul.f32 %v6754, %v6722
      %v6771 = vmul.f32 %v6755, %v6723
      %v6772 = vmul.f32 %v6756, %v6724
      %v6773 = vmul.f32 %v6757, %v6725
      %v6774 = vmul.f32 %v6758, %v6726
      %v6775 = vmul.f32 %v6759, %v6727
      %v6776 = vmul.f32 %v6760, %v6728
      %v6777 = vmul.f32 %v6761, %v6729
      %v6778 = vsub.f32 %v6762, 0.12123907
      %v6779 = vsub.f32 %v6763, 0.12123907
      %v6780 = vsub.f32 %v6764, 0.12123907
      %v6781 = vsub.f32 %v6765, 0.12123907
      %v6782 = vsub.f32 %v6766, 0.12123907
      %v6783 = vsub.f32 %v6767, 0.12123907
      %v6784 = vsub.f32 %v6768, 0.12123907
      %v6785 = vsub.f32 %v6769, 0.12123907
      %v6786 = vsub.f32 %v6770, 0.12123907
      %v6787 = vsub.f32 %v6771, 0.12123907
      %v6788 = vsub.f32 %v6772, 0.12123907
      %v6789 = vsub.f32 %v6773, 0.12123907
      %v6790 = vsub.f32 %v6774, 0.12123907
      %v6791 = vsub.f32 %v6775, 0.12123907
      %v6792 = vsub.f32 %v6776, 0.12123907
      %v6793 = vsub.f32 %v6777, 0.12123907
      %v6794 = vmul.f32 %v6778, %v6714
      %v6795 = vmul.f32 %v6779, %v6715
      %v6796 = vmul.f32 %v6780, %v6716
      %v6797 = vmul.f32 %v6781, %v6717
      %v6798 = vmul.f32 %v6782, %v6718
      %v6799 = vmul.f32 %v6783, %v6719
      %v6800 = vmul.f32 %v6784, %v6720
      %v6801 = vmul.f32 %v6785, %v6721
      %v6802 = vmul.f32 %v6786, %v6722
      %v6803 = vmul.f32 %v6787, %v6723
      %v6804 = vmul.f32 %v6788, %v6724
      %v6805 = vmul.f32 %v6789, %v6725
      %v6806 = vmul.f32 %v6790, %v6726
      %v6807 = vmul.f32 %v6791, %v6727
      %v6808 = vmul.f32 %v6792, %v6728
      %v6809 = vmul.f32 %v6793, %v6729
      %v6810 = vadd.f32 %v6794, 0.19563593
      %v6811 = vadd.f32 %v6795, 0.19563593
      %v6812 = vadd.f32 %v6796, 0.19563593
      %v6813 = vadd.f32 %v6797, 0.19563593
      %v6814 = vadd.f32 %v6798, 0.19563593
      %v6815 = vadd.f32 %v6799, 0.19563593
      %v6816 = vadd.f32 %v6800, 0.19563593
      %v6817 = vadd.f32 %v6801, 0.19563593
      %v6818 = vadd.f32 %v6802, 0.19563593
      %v6819 = vadd.f32 %v6803, 0.19563593
      %v6820 = vadd.f32 %v6804, 0.19563593
      %v6821 = vadd.f32 %v6805, 0.19563593
      %v6822 = vadd.f32 %v6806, 0.19563593
      %v6823 = vadd.f32 %v6807, 0.19563593
      %v6824 = vadd.f32 %v6808, 0.19563593
      %v6825 = vadd.f32 %v6809, 0.19563593
      %v6826 = vmul.f32 %v6810, %v6714
      %v6827 = vmul.f32 %v6811, %v6715
      %v6828 = vmul.f32 %v6812, %v6716
      %v6829 = vmul.f32 %v6813, %v6717
      %v6830 = vmul.f32 %v6814, %v6718
      %v6831 = vmul.f32 %v6815, %v6719
      %v6832 = vmul.f32 %v6816, %v6720
      %v6833 = vmul.f32 %v6817, %v6721
      %v6834 = vmul.f32 %v6818, %v6722
      %v6835 = vmul.f32 %v6819, %v6723
      %v6836 = vmul.f32 %v6820, %v6724
      %v6837 = vmul.f32 %v6821, %v6725
      %v6838 = vmul.f32 %v6822, %v6726
      %v6839 = vmul.f32 %v6823, %v6727
      %v6840 = vmul.f32 %v6824, %v6728
      %v6841 = vmul.f32 %v6825, %v6729
      %v6842 = vsub.f32 %v6826, 0.3329946
      %v6843 = vsub.f32 %v6827, 0.3329946
      %v6844 = vsub.f32 %v6828, 0.3329946
      %v6845 = vsub.f32 %v6829, 0.3329946
      %v6846 = vsub.f32 %v6830, 0.3329946
      %v6847 = vsub.f32 %v6831, 0.3329946
      %v6848 = vsub.f32 %v6832, 0.3329946
      %v6849 = vsub.f32 %v6833, 0.3329946
      %v6850 = vsub.f32 %v6834, 0.3329946
      %v6851 = vsub.f32 %v6835, 0.3329946
      %v6852 = vsub.f32 %v6836, 0.3329946
      %v6853 = vsub.f32 %v6837, 0.3329946
      %v6854 = vsub.f32 %v6838, 0.3329946
      %v6855 = vsub.f32 %v6839, 0.3329946
      %v6856 = vsub.f32 %v6840, 0.3329946
      %v6857 = vsub.f32 %v6841, 0.3329946
      %v6858 = vmul.f32 %v6842, %v6714
      %v6859 = vmul.f32 %v6843, %v6715
      %v6860 = vmul.f32 %v6844, %v6716
      %v6861 = vmul.f32 %v6845, %v6717
      %v6862 = vmul.f32 %v6846, %v6718
      %v6863 = vmul.f32 %v6847, %v6719
      %v6864 = vmul.f32 %v6848, %v6720
      %v6865 = vmul.f32 %v6849, %v6721
      %v6866 = vmul.f32 %v6850, %v6722
      %v6867 = vmul.f32 %v6851, %v6723
      %v6868 = vmul.f32 %v6852, %v6724
      %v6869 = vmul.f32 %v6853, %v6725
      %v6870 = vmul.f32 %v6854, %v6726
      %v6871 = vmul.f32 %v6855, %v6727
      %v6872 = vmul.f32 %v6856, %v6728
      %v6873 = vmul.f32 %v6857, %v6729
      %v6874 = vadd.f32 %v6858, 0.99999565
      %v6875 = vadd.f32 %v6859, 0.99999565
      %v6876 = vadd.f32 %v6860, 0.99999565
      %v6877 = vadd.f32 %v6861, 0.99999565
      %v6878 = vadd.f32 %v6862, 0.99999565
      %v6879 = vadd.f32 %v6863, 0.99999565
      %v6880 = vadd.f32 %v6864, 0.99999565
      %v6881 = vadd.f32 %v6865, 0.99999565
      %v6882 = vadd.f32 %v6866, 0.99999565
      %v6883 = vadd.f32 %v6867, 0.99999565
      %v6884 = vadd.f32 %v6868, 0.99999565
      %v6885 = vadd.f32 %v6869, 0.99999565
      %v6886 = vadd.f32 %v6870, 0.99999565
      %v6887 = vadd.f32 %v6871, 0.99999565
      %v6888 = vadd.f32 %v6872, 0.99999565
      %v6889 = vadd.f32 %v6873, 0.99999565
      %v6890 = vmul.f32 %v6874, %v6683
      %v6891 = vmul.f32 %v6875, %v6685
      %v6892 = vmul.f32 %v6876, %v6687
      %v6893 = vmul.f32 %v6877, %v6689
      %v6894 = vmul.f32 %v6878, %v6691
      %v6895 = vmul.f32 %v6879, %v6693
      %v6896 = vmul.f32 %v6880, %v6695
      %v6897 = vmul.f32 %v6881, %v6697
      %v6898 = vmul.f32 %v6882, %v6699
      %v6899 = vmul.f32 %v6883, %v6701
      %v6900 = vmul.f32 %v6884, %v6703
      %v6901 = vmul.f32 %v6885, %v6705
      %v6902 = vmul.f32 %v6886, %v6707
      %v6903 = vmul.f32 %v6887, %v6709
      %v6904 = vmul.f32 %v6888, %v6711
      %v6905 = vmul.f32 %v6889, %v6713
      %vm6906 = vcmp.gt.f32.partialorder %v6618, %v6602
      %vm6907 = vcmp.gt.f32.partialorder %v6619, %v6603
      %vm6908 = vcmp.gt.f32.partialorder %v6620, %v6604
      %vm6909 = vcmp.gt.f32.partialorder %v6621, %v6605
      %vm6910 = vcmp.gt.f32.partialorder %v6622, %v6606
      %vm6911 = vcmp.gt.f32.partialorder %v6623, %v6607
      %vm6912 = vcmp.gt.f32.partialorder %v6624, %v6608
      %vm6913 = vcmp.gt.f32.partialorder %v6625, %v6609
      %vm6914 = vcmp.gt.f32.partialorder %v6626, %v6610
      %vm6915 = vcmp.gt.f32.partialorder %v6627, %v6611
      %vm6916 = vcmp.gt.f32.partialorder %v6628, %v6612
      %vm6917 = vcmp.gt.f32.partialorder %v6629, %v6613
      %vm6918 = vcmp.gt.f32.partialorder %v6630, %v6614
      %vm6919 = vcmp.gt.f32.partialorder %v6631, %v6615
      %vm6920 = vcmp.gt.f32.partialorder %v6632, %v6616
      %vm6921 = vcmp.gt.f32.partialorder %v6633, %v6617
      %v6922 = vsub.f32 1.5707964, %v6890
      %v6923 = vsub.f32 1.5707964, %v6891
      %v6924 = vsub.f32 1.5707964, %v6892
      %v6925 = vsub.f32 1.5707964, %v6893
      %v6926 = vsub.f32 1.5707964, %v6894
      %v6927 = vsub.f32 1.5707964, %v6895
      %v6928 = vsub.f32 1.5707964, %v6896
      %v6929 = vsub.f32 1.5707964, %v6897
      %v6930 = vsub.f32 1.5707964, %v6898
      %v6931 = vsub.f32 1.5707964, %v6899
      %v6932 = vsub.f32 1.5707964, %v6900
      %v6933 = vsub.f32 1.5707964, %v6901
      %v6934 = vsub.f32 1.5707964, %v6902
      %v6935 = vsub.f32 1.5707964, %v6903
      %v6936 = vsub.f32 1.5707964, %v6904
      %v6937 = vsub.f32 1.5707964, %v6905
      %v6938 = vsel %vm6906, %v6922, %v6890
      %v6939 = vsel %vm6907, %v6923, %v6891
      %v6940 = vsel %vm6908, %v6924, %v6892
      %v6941 = vsel %vm6909, %v6925, %v6893
      %v6942 = vsel %vm6910, %v6926, %v6894
      %v6943 = vsel %vm6911, %v6927, %v6895
      %v6944 = vsel %vm6912, %v6928, %v6896
      %v6945 = vsel %vm6913, %v6929, %v6897
      %v6946 = vsel %vm6914, %v6930, %v6898
      %v6947 = vsel %vm6915, %v6931, %v6899
      %v6948 = vsel %vm6916, %v6932, %v6900
      %v6949 = vsel %vm6917, %v6933, %v6901
      %v6950 = vsel %vm6918, %v6934, %v6902
      %v6951 = vsel %vm6919, %v6935, %v6903
      %v6952 = vsel %vm6920, %v6936, %v6904
      %v6953 = vsel %vm6921, %v6937, %v6905
      %vm6954 = vcmp.lt.f32.partialorder %v6586, 0.0
      %vm6955 = vcmp.lt.f32.partialorder %v6587, 0.0
      %vm6956 = vcmp.lt.f32.partialorder %v6588, 0.0
      %vm6957 = vcmp.lt.f32.partialorder %v6589, 0.0
      %vm6958 = vcmp.lt.f32.partialorder %v6590, 0.0
      %vm6959 = vcmp.lt.f32.partialorder %v6591, 0.0
      %vm6960 = vcmp.lt.f32.partialorder %v6592, 0.0
      %vm6961 = vcmp.lt.f32.partialorder %v6593, 0.0
      %vm6962 = vcmp.lt.f32.partialorder %v6594, 0.0
      %vm6963 = vcmp.lt.f32.partialorder %v6595, 0.0
      %vm6964 = vcmp.lt.f32.partialorder %v6596, 0.0
      %vm6965 = vcmp.lt.f32.partialorder %v6597, 0.0
      %vm6966 = vcmp.lt.f32.partialorder %v6598, 0.0
      %vm6967 = vcmp.lt.f32.partialorder %v6599, 0.0
      %vm6968 = vcmp.lt.f32.partialorder %v6600, 0.0
      %vm6969 = vcmp.lt.f32.partialorder %v6601, 0.0
      %v6970 = vsub.f32 3.1415927, %v6938
      %v6971 = vsub.f32 3.1415927, %v6939
      %v6972 = vsub.f32 3.1415927, %v6940
      %v6973 = vsub.f32 3.1415927, %v6941
      %v6974 = vsub.f32 3.1415927, %v6942
      %v6975 = vsub.f32 3.1415927, %v6943
      %v6976 = vsub.f32 3.1415927, %v6944
      %v6977 = vsub.f32 3.1415927, %v6945
      %v6978 = vsub.f32 3.1415927, %v6946
      %v6979 = vsub.f32 3.1415927, %v6947
      %v6980 = vsub.f32 3.1415927, %v6948
      %v6981 = vsub.f32 3.1415927, %v6949
      %v6982 = vsub.f32 3.1415927, %v6950
      %v6983 = vsub.f32 3.1415927, %v6951
      %v6984 = vsub.f32 3.1415927, %v6952
      %v6985 = vsub.f32 3.1415927, %v6953
      %v6986 = vsel %vm6954, %v6970, %v6938
      %v6987 = vsel %vm6955, %v6971, %v6939
      %v6988 = vsel %vm6956, %v6972, %v6940
      %v6989 = vsel %vm6957, %v6973, %v6941
      %v6990 = vsel %vm6958, %v6974, %v6942
      %v6991 = vsel %vm6959, %v6975, %v6943
      %v6992 = vsel %vm6960, %v6976, %v6944
      %v6993 = vsel %vm6961, %v6977, %v6945
      %v6994 = vsel %vm6962, %v6978, %v6946
      %v6995 = vsel %vm6963, %v6979, %v6947
      %v6996 = vsel %vm6964, %v6980, %v6948
      %v6997 = vsel %vm6965, %v6981, %v6949
      %v6998 = vsel %vm6966, %v6982, %v6950
      %v6999 = vsel %vm6967, %v6983, %v6951
      %v7000 = vsel %vm6968, %v6984, %v6952
      %v7001 = vsel %vm6969, %v6985, %v6953
      %vm7002 = vcmp.lt.f32.partialorder %v6570, 0.0
      %vm7003 = vcmp.lt.f32.partialorder %v6571, 0.0
      %vm7004 = vcmp.lt.f32.partialorder %v6572, 0.0
      %vm7005 = vcmp.lt.f32.partialorder %v6573, 0.0
      %vm7006 = vcmp.lt.f32.partialorder %v6574, 0.0
      %vm7007 = vcmp.lt.f32.partialorder %v6575, 0.0
      %vm7008 = vcmp.lt.f32.partialorder %v6576, 0.0
      %vm7009 = vcmp.lt.f32.partialorder %v6577, 0.0
      %vm7010 = vcmp.lt.f32.partialorder %v6578, 0.0
      %vm7011 = vcmp.lt.f32.partialorder %v6579, 0.0
      %vm7012 = vcmp.lt.f32.partialorder %v6580, 0.0
      %vm7013 = vcmp.lt.f32.partialorder %v6581, 0.0
      %vm7014 = vcmp.lt.f32.partialorder %v6582, 0.0
      %vm7015 = vcmp.lt.f32.partialorder %v6583, 0.0
      %vm7016 = vcmp.lt.f32.partialorder %v6584, 0.0
      %vm7017 = vcmp.lt.f32.partialorder %v6585, 0.0
      %v7018 = vsub.f32 0.0, %v6986
      %v7019 = vsub.f32 0.0, %v6987
      %v7020 = vsub.f32 0.0, %v6988
      %v7021 = vsub.f32 0.0, %v6989
      %v7022 = vsub.f32 0.0, %v6990
      %v7023 = vsub.f32 0.0, %v6991
      %v7024 = vsub.f32 0.0, %v6992
      %v7025 = vsub.f32 0.0, %v6993
      %v7026 = vsub.f32 0.0, %v6994
      %v7027 = vsub.f32 0.0, %v6995
      %v7028 = vsub.f32 0.0, %v6996
      %v7029 = vsub.f32 0.0, %v6997
      %v7030 = vsub.f32 0.0, %v6998
      %v7031 = vsub.f32 0.0, %v6999
      %v7032 = vsub.f32 0.0, %v7000
      %v7033 = vsub.f32 0.0, %v7001
      %v7034 = vsel %vm7002, %v7018, %v6986
      %v7035 = vsel %vm7003, %v7019, %v6987
      %v7036 = vsel %vm7004, %v7020, %v6988
      %v7037 = vsel %vm7005, %v7021, %v6989
      %v7038 = vsel %vm7006, %v7022, %v6990
      %v7039 = vsel %vm7007, %v7023, %v6991
      %v7040 = vsel %vm7008, %v7024, %v6992
      %v7041 = vsel %vm7009, %v7025, %v6993
      %v7042 = vsel %vm7010, %v7026, %v6994
      %v7043 = vsel %vm7011, %v7027, %v6995
      %v7044 = vsel %vm7012, %v7028, %v6996
      %v7045 = vsel %vm7013, %v7029, %v6997
      %v7046 = vsel %vm7014, %v7030, %v6998
      %v7047 = vsel %vm7015, %v7031, %v6999
      %v7048 = vsel %vm7016, %v7032, %v7000
      %v7049 = vsel %vm7017, %v7033, %v7001
      %7050 = vst [vmem:[%s302] sm:$0xff] %v7034
      %7051 = vst [vmem:[%s302 + $0x8] sm:$0xff] %v7035
      %7052 = vst [vmem:[%s302 + $0x10] sm:$0xff] %v7036
      %7053 = vst [vmem:[%s302 + $0x18] sm:$0xff] %v7037
      %7054 = vst [vmem:[%s302 + $0x20] sm:$0xff] %v7038
      %7055 = vst [vmem:[%s302 + $0x28] sm:$0xff] %v7039
      %7056 = vst [vmem:[%s302 + $0x30] sm:$0xff] %v7040
      %7057 = vst [vmem:[%s302 + $0x38] sm:$0xff] %v7041
      %7058 = vst [vmem:[%s302 + $0x40] sm:$0xff] %v7042
      %7059 = vst [vmem:[%s302 + $0x48] sm:$0xff] %v7043
      %7060 = vst [vmem:[%s302 + $0x50] sm:$0xff] %v7044
      %7061 = vst [vmem:[%s302 + $0x58] sm:$0xff] %v7045
      %7062 = vst [vmem:[%s302 + $0x60] sm:$0xff] %v7046
      %7063 = vst [vmem:[%s302 + $0x68] sm:$0xff] %v7047
      %7064 = vst [vmem:[%s302 + $0x70] sm:$0xff] %v7048
      %7065 = vst [vmem:[%s302 + $0x78] sm:$0xff] %v7049
      %v7066 = vadd.f32 %v6302, 1.1920929e-07
      %v7067 = vand.u32 2147483647, %v7066
      %v7068 = vmin.f32 %v7067, 1.1920929e-07
      %v7069 = vmax.f32 %v7067, 1.1920929e-07
      %v7070 = vmax.f32 %v7069, 1e-30
      %v7071 = vrcp.pop %v7070
      %v7072 = vmul.f32 %v7068, %v7071
      %v7073 = vmul.f32 %v7072, %v7072
      %v7074 = vmul.f32 %v7073, -0.01348047
      %v7075 = vadd.f32 %v7074, 0.057477314
      %v7076 = vmul.f32 %v7075, %v7073
      %v7077 = vsub.f32 %v7076, 0.12123907
      %v7078 = vmul.f32 %v7077, %v7073
      %v7079 = vadd.f32 %v7078, 0.19563593
      %v7080 = vmul.f32 %v7079, %v7073
      %v7081 = vsub.f32 %v7080, 0.3329946
      %v7082 = vmul.f32 %v7081, %v7073
      %v7083 = vadd.f32 %v7082, 0.99999565
      %v7084 = vmul.f32 %v7083, %v7072
      %vm7085 = vcmp.gt.f32.partialorder 1.1920929e-07, %v7067
      %v7086 = vsub.f32 1.5707964, %v7084
      %v7087 = vsel %vm7085, %v7086, %v7084
      %vm7088 = vcmp.lt.f32.partialorder %v7066, 0.0
      %v7089 = vsub.f32 3.1415927, %v7087
      %v7090 = vsel %vm7088, %v7089, %v7087
      %vm7091 = vcmp.lt.f32.partialorder 1.1920929e-07, 0.0
      %v7092 = vsub.f32 0.0, %v7090
      %v7093 = vsel %vm7091, %v7092, %v7090
      %7094 = vst [vmem:[%s302 + $0x80] sm:$0x1] %v7093
      %p7095 = scmp.lt.s32.totalorder %s20, 1
      %s7096 = scalar_select %p7095, %s20, 1
      %p7097 = scmp.lt.s32.totalorder %s21, 0
      %s7098 = scalar_select %p7097, %s21, 0
      %s7099 = smul.addr %s7096, 17
      %s7100 = sadd.s32 %s7098, %s7099
      %s7101 = smul.addr %s7100, 8
      %s7102 = scalar_lea.vmem %s3, %s7101
      %p7103 = scmp.lt.s32.totalorder %s20, 1
      %s7104 = scalar_select %p7103, %s20, 1
      %p7105 = scmp.lt.s32.totalorder %s21, 0
      %s7106 = scalar_select %p7105, %s21, 0
      %s7107 = smul.addr %s7104, 17
      %s7108 = sadd.s32 %s7106, %s7107
      %s7109 = smul.addr %s7108, 8
      %s7110 = scalar_lea.vmem %s4, %s7109
      // Predicated region
      $region33: #{tpu_custom_call.1} parent=31 // pred_check
        %p7111 = pneg %p125
      $region34: #{tpu_custom_call.1} parent=31 // pred_check_branch
        %7113 = sbr.rel (%p7111) target = $region36
      $region35: #{tpu_custom_call.1} parent=31 // pred_region
        _
      $region36: #{tpu_custom_call.1} parent=31 // pred_fallthru
        _
      // Predicated region
      $region37: #{tpu_custom_call.1} parent=31 // pred_check
        %p7114 = pneg %p153
      $region38: #{tpu_custom_call.1} parent=31 // pred_check_branch
        %7116 = sbr.rel (%p7114) target = $region40
      $region39: #{tpu_custom_call.1} parent=31 // pred_region
        _
      $region40: #{tpu_custom_call.1} parent=31 // pred_fallthru
        _
    $region32: #{tpu_custom_call.1} parent=5 // pred_fallthru
      _
    %p7117 = scmp.le.s32.totalorder 2, %s11
    // Predicated region
    $region41: #{tpu_custom_call.1} parent=5 // pred_check
      %p7118 = pneg %p7117
    $region42: #{tpu_custom_call.1} parent=5 // pred_check_branch
      %7120 = sbr.rel (%p7118) target = $region44
    $region43: #{tpu_custom_call.1} parent=5 // pred_region
      %s7121 = ssub.s32 %s11, 2
      // Predicated region
      $region45: #{tpu_custom_call.1} parent=43 // pred_check
        %p7122 = pneg %p131
      $region46: #{tpu_custom_call.1} parent=43 // pred_check_branch
        %7124 = sbr.rel (%p7122) target = $region48
      $region47: #{tpu_custom_call.1} parent=43 // pred_region
        %p7125 = scmp.lt.s32.totalorder %s22, 1
        %s7126 = scalar_select %p7125, %s22, 1
        %p7127 = scmp.lt.s32.totalorder %s23, 0
        %s7128 = scalar_select %p7127, %s23, 0
        %s7129 = smul.addr %s7126, 17
        %s7130 = sadd.s32 %s7128, %s7129
        %s7131 = smul.addr %s7130, 8
        %s7132 = scalar_lea.vmem %s3, %s7131
      $region48: #{tpu_custom_call.1} parent=43 // pred_fallthru
        _
      // Predicated region
      $region49: #{tpu_custom_call.1} parent=43 // pred_check
        %p7133 = pneg %p159
      $region50: #{tpu_custom_call.1} parent=43 // pred_check_branch
        %7135 = sbr.rel (%p7133) target = $region52
      $region51: #{tpu_custom_call.1} parent=43 // pred_region
        %p7136 = scmp.lt.s32.totalorder %s22, 1
        %s7137 = scalar_select %p7136, %s22, 1
        %p7138 = scmp.lt.s32.totalorder %s23, 0
        %s7139 = scalar_select %p7138, %s23, 0
        %s7140 = smul.addr %s7137, 17
        %s7141 = sadd.s32 %s7139, %s7140
        %s7142 = smul.addr %s7141, 8
        %s7143 = scalar_lea.vmem %s4, %s7142
      $region52: #{tpu_custom_call.1} parent=43 // pred_fallthru
        _
    $region44: #{tpu_custom_call.1} parent=5 // pred_fallthru
      _
  $region6: #{tpu_custom_call.1} parent=0 // loop_footer
    %s15 = sadd.s32 1, %s11
  $region7: #{tpu_custom_call.1} parent=0 // loop_footer_branch
    %10 = sbr.rel target = $region3
  $region8: #{tpu_custom_call.1} parent=0 // loop_exit
    _

</llo_original>
